<compile_context>
chip_gen: v7x
topology: tpu7x:2x2x1
jax: 0.10.0
libtpu: 0.0.40
codegen_flags: <defaults>
</compile_context>

<pallas_src>
import functools
import math

import jax
import jax.numpy as jnp
from jax.experimental import pallas as pl
from jax.experimental.pallas import tpu as pltpu

# ------------------------- model config (small, deterministic) -------------------------
EMB_DIM = 32
N_HEADS = 4
HEAD_DIM = EMB_DIM // N_HEADS
FWD_EXP = 4
HID_DIM = FWD_EXP * EMB_DIM          # 128
NUM_LAYERS = 2
SRC_VOCAB = 50
TRG_VOCAB = 60
OUT_PAD = 128                        # lane-padded final projection width (sliced outside kernel)
MAX_LEN = 16
BATCH = 2
SRC_LEN = 8
TRG_LEN = 8
LN_EPS = 1e-5


# ================================ fused Pallas kernel ================================

def _transformer_kernel(
        src_ref, trg_ref,
        enc_wqkv_ref, enc_wfc_ref, enc_vec_ref, enc_w1_ref, enc_b1_ref, enc_w2_ref,
        dec_swqkv_ref, dec_swfc_ref, dec_cwq_ref, dec_cwkv_ref, dec_cwfc_ref,
        dec_vec_ref, dec_w1_ref, dec_b1_ref, dec_w2_ref,
        fcw_ref, fcb_ref,
        o_ref, *, n_layers, n_heads, head_dim, scale_src, scale_trg, eps):
    """Whole Transformer forward for one batch element (activations stay in VMEM)."""
    D = n_heads * head_dim

    def row(ref, i):
        # static (1, D)/(1, H) row slice of a packed parameter-vector stack
        return ref[i:i + 1, :]

    def ln(y, g, b):
        mean = jnp.mean(y, axis=-1, keepdims=True)
        var = jnp.mean((y - mean) ** 2, axis=-1, keepdims=True)
        return (y - mean) * jax.lax.rsqrt(var + eps) * g + b

    def attend(qh, kh, vh, scale):
        # qh: (Lq, D), kh/vh: (Lk, D) -- already per-head projected (block-diagonal weights).
        outs = []
        for h in range(n_heads):                       # static unrolled loop over heads
            sl = slice(h * head_dim, (h + 1) * head_dim)
            # reference: scores / Lk ** (-1/2)  ==  scores * sqrt(Lk)
            s = jax.lax.dot_general(qh[:, sl], kh[:, sl],
                                    (((1,), (1,)), ((), ())),
                                    preferred_element_type=jnp.float32) * scale
            s = s - jnp.max(s, axis=-1, keepdims=True)
            e = jnp.exp(s)
            p = e * pl.reciprocal(jnp.sum(e, axis=-1, keepdims=True), approx=True)
            outs.append(jnp.dot(p, vh[:, sl], preferred_element_type=jnp.float32))
        return jnp.concatenate(outs, axis=-1)          # (Lq, D)

    # ------------------------------- encoder stack -------------------------------
    x = src_ref[0]                                     # (Ls, D)
    for l in range(n_layers):
        v0 = 6 * l
        qkv = jnp.dot(x, enc_wqkv_ref[l], preferred_element_type=jnp.float32)      # (Ls, 3D)
        att = attend(qkv[:, :D], qkv[:, D:2 * D], qkv[:, 2 * D:], scale_src)
        att = jnp.dot(att, enc_wfc_ref[l], preferred_element_type=jnp.float32) + row(enc_vec_ref, v0 + 0)
        x1 = ln(att + x, row(enc_vec_ref, v0 + 1), row(enc_vec_ref, v0 + 2))       # norm1(att + q)
        # dropout: identity (eval mode)
        h1 = jnp.maximum(jnp.dot(x1, enc_w1_ref[l], preferred_element_type=jnp.float32)
                         + row(enc_b1_ref, l), 0.0)
        ff = jnp.dot(h1, enc_w2_ref[l], preferred_element_type=jnp.float32) + row(enc_vec_ref, v0 + 3)
        x = ln(ff + x1, row(enc_vec_ref, v0 + 4), row(enc_vec_ref, v0 + 5))         # norm2(ffn + x1)
    enc = x                                            # (Ls, D)

    # ------------------------------- decoder stack -------------------------------
    y = trg_ref[0]                                     # (Lt, D)
    for l in range(n_layers):
        v0 = 9 * l
        # masked self-attention (mask has no effect in the reference, see header note)
        qkv = jnp.dot(y, dec_swqkv_ref[l], preferred_element_type=jnp.float32)     # (Lt, 3D)
        att = attend(qkv[:, :D], qkv[:, D:2 * D], qkv[:, 2 * D:], scale_trg)
        att = jnp.dot(att, dec_swfc_ref[l], preferred_element_type=jnp.float32) + row(dec_vec_ref, v0 + 0)
        qn = ln(att + y, row(dec_vec_ref, v0 + 1), row(dec_vec_ref, v0 + 2))
        # dropout: identity (eval mode)
        # cross-attention against the encoder output
        qproj = jnp.dot(qn, dec_cwq_ref[l], preferred_element_type=jnp.float32)    # (Lt, D)
        kv = jnp.dot(enc, dec_cwkv_ref[l], preferred_element_type=jnp.float32)     # (Ls, 2D)
        att2 = attend(qproj, kv[:, :D], kv[:, D:], scale_src)
        att2 = jnp.dot(att2, dec_cwfc_ref[l], preferred_element_type=jnp.float32) + row(dec_vec_ref, v0 + 3)
        x1 = ln(att2 + qn, row(dec_vec_ref, v0 + 4), row(dec_vec_ref, v0 + 5))
        h1 = jnp.maximum(jnp.dot(x1, dec_w1_ref[l], preferred_element_type=jnp.float32)
                         + row(dec_b1_ref, l), 0.0)
        ff = jnp.dot(h1, dec_w2_ref[l], preferred_element_type=jnp.float32) + row(dec_vec_ref, v0 + 6)
        y = ln(ff + x1, row(dec_vec_ref, v0 + 7), row(dec_vec_ref, v0 + 8))

    # ------------------------------- final projection -------------------------------
    o_ref[0] = jnp.dot(y, fcw_ref[...], preferred_element_type=jnp.float32) + fcb_ref[...]


# ================================ Pallas wrapper ================================

WEIGHT_KEYS = ("enc_wqkv", "enc_wfc", "enc_vec", "enc_w1", "enc_b1", "enc_w2",
               "dec_swqkv", "dec_swfc", "dec_cwq", "dec_cwkv", "dec_cwfc",
               "dec_vec", "dec_w1", "dec_b1", "dec_w2", "fc_w", "fc_b")


def _wspec(arr):
    nd = arr.ndim
    return pl.BlockSpec(arr.shape, lambda b, _nd=nd: (0,) * _nd)


def transformer_forward_pallas(params, src_emb, trg_emb):
    B, Ls, D = src_emb.shape
    Lt = trg_emb.shape[1]
    weights = [params[k] for k in WEIGHT_KEYS]
    kern = functools.partial(
        _transformer_kernel, n_layers=NUM_LAYERS, n_heads=N_HEADS, head_dim=HEAD_DIM,
        scale_src=math.sqrt(float(Ls)), scale_trg=math.sqrt(float(Lt)), eps=LN_EPS)
    out = pl.pallas_call(
        kern,
        out_shape=jax.ShapeDtypeStruct((B, Lt, OUT_PAD), jnp.float32),
        grid=(B,),
        in_specs=[pl.BlockSpec((1, Ls, D), lambda b: (b, 0, 0)),
                  pl.BlockSpec((1, Lt, D), lambda b: (b, 0, 0))] + [_wspec(w) for w in weights],
        out_specs=pl.BlockSpec((1, Lt, OUT_PAD), lambda b: (b, 0, 0)),
        compiler_params=pltpu.CompilerParams(dimension_semantics=("parallel",)),
    )(src_emb, trg_emb, *weights)
    return out[:, :, :TRG_VOCAB]


@jax.jit
def transformer_apply(params, src, trg):
    # src_mask / trg_mask have no effect in the reference (masked_fill is not in-place).
    B, Ls = src.shape
    Lt = trg.shape[1]
    pos_s = jnp.arange(Ls)
    pos_t = jnp.arange(Lt)
    # Embedding lookups (gathers) stay in plain JAX; dropout is identity (eval mode).
    src_emb = jnp.take(params["enc_word_emb"], src, axis=0) + params["enc_pos_emb"][pos_s][None]
    trg_emb = jnp.take(params["dec_word_emb"], trg, axis=0) + params["dec_pos_emb"][pos_t][None]
    return transformer_forward_pallas(params, src_emb, trg_emb)


# ================================ parameter init ================================
# Weights stored kernel-ready: pre-transposed (x @ W.T form), per-head projections packed
# block-diagonally and fused across Q/K/V, per-layer params stacked, output lane-padded.

def _init_linear(key, out_f, in_f, bias=True):
    kw, kb = jax.random.split(key)
    bound = 1.0 / math.sqrt(in_f)
    w = jax.random.uniform(kw, (out_f, in_f), jnp.float32, -bound, bound)
    b = jax.random.uniform(kb, (out_f,), jnp.float32, -bound, bound) if bias \
        else jnp.zeros((out_f,), jnp.float32)
    return w, b


def _init_mha(key):
    ks = jax.random.split(key, 4)
    wq, _ = _init_linear(ks[0], HEAD_DIM, HEAD_DIM, bias=False)
    wk, _ = _init_linear(ks[1], HEAD_DIM, HEAD_DIM, bias=False)
    wv, _ = _init_linear(ks[2], HEAD_DIM, HEAD_DIM, bias=False)
    wfc, bfc = _init_linear(ks[3], EMB_DIM, EMB_DIM)
    eye = jnp.eye(N_HEADS, dtype=jnp.float32)
    # Block-diagonal (D, D): every head uses the same (head_dim, head_dim) weight, as in the ref.
    return {"wq_bd": jnp.kron(eye, wq.T), "wk_bd": jnp.kron(eye, wk.T),
            "wv_bd": jnp.kron(eye, wv.T), "wfc_t": wfc.T, "bfc": bfc}


def _init_enc_layer(key):
    k1, k2, k3 = jax.random.split(key, 3)
    w1, b1 = _init_linear(k2, HID_DIM, EMB_DIM)
    w2, b2 = _init_linear(k3, EMB_DIM, HID_DIM)
    ones = jnp.ones((EMB_DIM,), jnp.float32)
    zeros = jnp.zeros((EMB_DIM,), jnp.float32)
    return {"mha": _init_mha(k1), "w1_t": w1.T, "b1": b1, "w2_t": w2.T, "b2": b2,
            "ln1_g": ones, "ln1_b": zeros, "ln2_g": ones, "ln2_b": zeros}


def _init_dec_layer(key):
    k1, k2 = jax.random.split(key)
    return {"self_mha": _init_mha(k1),
            "ln_g": jnp.ones((EMB_DIM,), jnp.float32),
            "ln_b": jnp.zeros((EMB_DIM,), jnp.float32),
            "enc": _init_enc_layer(k2)}


def init_transformer(key):
    ke, kd, k1, k2, k3, k4, k5 = jax.random.split(key, 7)
    enc_layers = [_init_enc_layer(k) for k in jax.random.split(ke, NUM_LAYERS)]
    dec_layers = [_init_dec_layer(k) for k in jax.random.split(kd, NUM_LAYERS)]
    fc_w, fc_b = _init_linear(k5, TRG_VOCAB, EMB_DIM)

    def qkv_pack(m):
        return jnp.concatenate([m["wq_bd"], m["wk_bd"], m["wv_bd"]], axis=1)   # (D, 3D)

    params = {
        "enc_word_emb": jax.random.normal(k1, (SRC_VOCAB, EMB_DIM), jnp.float32),
        "enc_pos_emb": jax.random.normal(k2, (MAX_LEN, EMB_DIM), jnp.float32),
        "dec_word_emb": jax.random.normal(k3, (TRG_VOCAB, EMB_DIM), jnp.float32),
        "dec_pos_emb": jax.random.normal(k4, (MAX_LEN, EMB_DIM), jnp.float32),
        # ---- encoder, packed across layers ----
        "enc_wqkv": jnp.stack([qkv_pack(L["mha"]) for L in enc_layers]),            # (NL, D, 3D)
        "enc_wfc": jnp.stack([L["mha"]["wfc_t"] for L in enc_layers]),              # (NL, D, D)
        "enc_vec": jnp.stack([v for L in enc_layers for v in
                              (L["mha"]["bfc"], L["ln1_g"], L["ln1_b"],
                               L["b2"], L["ln2_g"], L["ln2_b"])]),                  # (NL*6, D)
        "enc_w1": jnp.stack([L["w1_t"] for L in enc_layers]),                       # (NL, D, H)
        "enc_b1": jnp.stack([L["b1"] for L in enc_layers]),                         # (NL, H)
        "enc_w2": jnp.stack([L["w2_t"] for L in enc_layers]),                       # (NL, H, D)
        # ---- decoder, packed across layers ----
        "dec_swqkv": jnp.stack([qkv_pack(L["self_mha"]) for L in dec_layers]),      # (NL, D, 3D)
        "dec_swfc": jnp.stack([L["self_mha"]["wfc_t"] for L in dec_layers]),        # (NL, D, D)
        "dec_cwq": jnp.stack([L["enc"]["mha"]["wq_bd"] for L in dec_layers]),       # (NL, D, D)
        "dec_cwkv": jnp.stack([jnp.concatenate([L["enc"]["mha"]["wk_bd"],
                                                L["enc"]["mha"]["wv_bd"]], axis=1)
                               for L in dec_layers]),                               # (NL, D, 2D)
        "dec_cwfc": jnp.stack([L["enc"]["mha"]["wfc_t"] for L in dec_layers]),      # (NL, D, D)
        "dec_vec": jnp.stack([v for L in dec_layers for v in
                              (L["self_mha"]["bfc"], L["ln_g"], L["ln_b"],
                               L["enc"]["mha"]["bfc"], L["enc"]["ln1_g"], L["enc"]["ln1_b"],
                               L["enc"]["b2"], L["enc"]["ln2_g"], L["enc"]["ln2_b"])]),  # (NL*9, D)
        "dec_w1": jnp.stack([L["enc"]["w1_t"] for L in dec_layers]),                # (NL, D, H)
        "dec_b1": jnp.stack([L["enc"]["b1"] for L in dec_layers]),                  # (NL, H)
        "dec_w2": jnp.stack([L["enc"]["w2_t"] for L in dec_layers]),                # (NL, H, D)
        # ---- final projection, lane-padded to OUT_PAD ----
        "fc_w": jnp.zeros((EMB_DIM, OUT_PAD), jnp.float32).at[:, :TRG_VOCAB].set(fc_w.T),
        "fc_b": jnp.zeros((1, OUT_PAD), jnp.float32).at[:, :TRG_VOCAB].set(fc_b),
    }
    return params


# ================================ main ================================

if __name__ == "__main__":
    key = jax.random.PRNGKey(0)
    kp, ks, kt = jax.random.split(key, 3)
    params = init_transformer(kp)
    src = jax.random.randint(ks, (BATCH, SRC_LEN), 0, SRC_VOCAB, dtype=jnp.int32)
    trg = jax.random.randint(kt, (BATCH, TRG_LEN), 0, TRG_VOCAB, dtype=jnp.int32)

    out = transformer_apply(params, src, trg)
    jax.block_until_ready(out)
    assert out.shape == (BATCH, TRG_LEN, TRG_VOCAB), out.shape
    assert bool(jnp.all(jnp.isfinite(out)))
    print("KERNEL_OK")
</pallas_src>

<mosaic_0001>
module attributes {stable_mosaic.version = 11 : i64} {
  func.func @_transformer_kernel(%arg0: i32, %arg1: memref<1x8x32xf32, #tpu.memory_space<vmem>>, %arg2: memref<1x8x32xf32, #tpu.memory_space<vmem>>, %arg3: memref<2x32x96xf32, #tpu.memory_space<vmem>>, %arg4: memref<2x32x32xf32, #tpu.memory_space<vmem>>, %arg5: memref<12x32xf32, #tpu.memory_space<vmem>>, %arg6: memref<2x32x128xf32, #tpu.memory_space<vmem>>, %arg7: memref<2x128xf32, #tpu.memory_space<vmem>>, %arg8: memref<2x128x32xf32, #tpu.memory_space<vmem>>, %arg9: memref<2x32x96xf32, #tpu.memory_space<vmem>>, %arg10: memref<2x32x32xf32, #tpu.memory_space<vmem>>, %arg11: memref<2x32x32xf32, #tpu.memory_space<vmem>>, %arg12: memref<2x32x64xf32, #tpu.memory_space<vmem>>, %arg13: memref<2x32x32xf32, #tpu.memory_space<vmem>>, %arg14: memref<18x32xf32, #tpu.memory_space<vmem>>, %arg15: memref<2x32x128xf32, #tpu.memory_space<vmem>>, %arg16: memref<2x128xf32, #tpu.memory_space<vmem>>, %arg17: memref<2x128x32xf32, #tpu.memory_space<vmem>>, %arg18: memref<32x128xf32, #tpu.memory_space<vmem>>, %arg19: memref<1x128xf32, #tpu.memory_space<vmem>>, %arg20: memref<1x8x128xf32, #tpu.memory_space<vmem>>) attributes {dimension_semantics = [#tpu.dimension_semantics<parallel>], iteration_bounds = array<i64: 2>, scalar_prefetch = 0 : i64, scratch_operands = 0 : i64, tpu.core_type = #tpu.core_type<tc>, window_params = [{transform_indices = @transform_0, window_bounds = array<i64: 1, 8, 32>}, {transform_indices = @transform_1, window_bounds = array<i64: 1, 8, 32>}, {pipeline_mode = #tpu.pipeline_mode<synchronous>, transform_indices = @transform_2, window_bounds = array<i64: 2, 32, 96>}, {pipeline_mode = #tpu.pipeline_mode<synchronous>, transform_indices = @transform_3, window_bounds = array<i64: 2, 32, 32>}, {pipeline_mode = #tpu.pipeline_mode<synchronous>, transform_indices = @transform_4, window_bounds = array<i64: 12, 32>}, {pipeline_mode = #tpu.pipeline_mode<synchronous>, transform_indices = @transform_5, window_bounds = array<i64: 2, 32, 128>}, {pipeline_mode = #tpu.pipeline_mode<synchronous>, transform_indices = @transform_6, window_bounds = array<i64: 2, 128>}, {pipeline_mode = #tpu.pipeline_mode<synchronous>, transform_indices = @transform_7, window_bounds = array<i64: 2, 128, 32>}, {pipeline_mode = #tpu.pipeline_mode<synchronous>, transform_indices = @transform_8, window_bounds = array<i64: 2, 32, 96>}, {pipeline_mode = #tpu.pipeline_mode<synchronous>, transform_indices = @transform_9, window_bounds = array<i64: 2, 32, 32>}, {pipeline_mode = #tpu.pipeline_mode<synchronous>, transform_indices = @transform_10, window_bounds = array<i64: 2, 32, 32>}, {pipeline_mode = #tpu.pipeline_mode<synchronous>, transform_indices = @transform_11, window_bounds = array<i64: 2, 32, 64>}, {pipeline_mode = #tpu.pipeline_mode<synchronous>, transform_indices = @transform_12, window_bounds = array<i64: 2, 32, 32>}, {pipeline_mode = #tpu.pipeline_mode<synchronous>, transform_indices = @transform_13, window_bounds = array<i64: 18, 32>}, {pipeline_mode = #tpu.pipeline_mode<synchronous>, transform_indices = @transform_14, window_bounds = array<i64: 2, 32, 128>}, {pipeline_mode = #tpu.pipeline_mode<synchronous>, transform_indices = @transform_15, window_bounds = array<i64: 2, 128>}, {pipeline_mode = #tpu.pipeline_mode<synchronous>, transform_indices = @transform_16, window_bounds = array<i64: 2, 128, 32>}, {pipeline_mode = #tpu.pipeline_mode<synchronous>, transform_indices = @transform_17, window_bounds = array<i64: 32, 128>}, {pipeline_mode = #tpu.pipeline_mode<synchronous>, transform_indices = @transform_18, window_bounds = array<i64: 1, 128>}, {transform_indices = @transform_19, window_bounds = array<i64: 1, 8, 128>}]} {
    %c0 = arith.constant 0 : index
    %c0_0 = arith.constant 0 : index
    %c0_1 = arith.constant 0 : index
    %0 = vector.load %arg1[%c0, %c0_0, %c0_1] : memref<1x8x32xf32, #tpu.memory_space<vmem>>, vector<1x8x32xf32>
    %1 = vector.shape_cast %0 : vector<1x8x32xf32> to vector<8x32xf32>
    %c0_2 = arith.constant 0 : index
    %c0_3 = arith.constant 0 : index
    %c0_4 = arith.constant 0 : index
    %2 = vector.load %arg3[%c0_2, %c0_3, %c0_4] : memref<2x32x96xf32, #tpu.memory_space<vmem>>, vector<1x32x96xf32>
    %3 = vector.shape_cast %2 : vector<1x32x96xf32> to vector<32x96xf32>
    %cst = arith.constant dense<0.000000e+00> : vector<8x96xf32>
    %4 = tpu.matmul %1, %3, %cst {dimension_numbers = #tpu.dot_dimension_numbers<[1], [0], [0], [1], [0, 0, 1, 1], [], []>} : vector<8x32xf32>, vector<32x96xf32>, vector<8x96xf32> -> vector<8x96xf32>
    %5 = vector.extract_strided_slice %4 {offsets = [0, 0], sizes = [8, 32], strides = [1, 1]} : vector<8x96xf32> to vector<8x32xf32>
    %6 = vector.extract_strided_slice %4 {offsets = [0, 32], sizes = [8, 32], strides = [1, 1]} : vector<8x96xf32> to vector<8x32xf32>
    %7 = vector.extract_strided_slice %4 {offsets = [0, 64], sizes = [8, 32], strides = [1, 1]} : vector<8x96xf32> to vector<8x32xf32>
    %8 = vector.extract_strided_slice %5 {offsets = [0, 0], sizes = [8, 8], strides = [1, 1]} : vector<8x32xf32> to vector<8x8xf32>
    %9 = vector.extract_strided_slice %6 {offsets = [0, 0], sizes = [8, 8], strides = [1, 1]} : vector<8x32xf32> to vector<8x8xf32>
    %cst_5 = arith.constant dense<0.000000e+00> : vector<8x8xf32>
    %10 = tpu.matmul %8, %9, %cst_5 {dimension_numbers = #tpu.dot_dimension_numbers<[1], [1], [0], [0], [0, 0, 1, 0], [], []>} : vector<8x8xf32>, vector<8x8xf32>, vector<8x8xf32> -> vector<8x8xf32>
    %cst_6 = arith.constant 2.82842708 : f32
    %11 = vector.broadcast %cst_6 : f32 to vector<8x8xf32>
    %12 = arith.mulf %10, %11 : vector<8x8xf32>
    %cst_7 = arith.constant dense<0xFF800000> : vector<8xf32>
    %13 = vector.multi_reduction <maximumf>, %12, %cst_7 [1] : vector<8x8xf32> to vector<8xf32>
    %14 = vector.shape_cast %13 : vector<8xf32> to vector<8x1xf32>
    %15 = vector.broadcast %14 : vector<8x1xf32> to vector<8x8xf32>
    %16 = arith.subf %12, %15 : vector<8x8xf32>
    %17 = math.exp %16 : vector<8x8xf32>
    %cst_8 = arith.constant dense<0.000000e+00> : vector<8xf32>
    %18 = vector.multi_reduction <add>, %17, %cst_8 [1] : vector<8x8xf32> to vector<8xf32>
    %19 = vector.shape_cast %18 : vector<8xf32> to vector<8x1xf32>
    %20 = tpu.reciprocal %19 {approx = true} : vector<8x1xf32> -> vector<8x1xf32>
    %21 = vector.broadcast %20 : vector<8x1xf32> to vector<8x8xf32>
    %22 = arith.mulf %17, %21 : vector<8x8xf32>
    %23 = vector.extract_strided_slice %7 {offsets = [0, 0], sizes = [8, 8], strides = [1, 1]} : vector<8x32xf32> to vector<8x8xf32>
    %cst_9 = arith.constant dense<0.000000e+00> : vector<8x8xf32>
    %24 = tpu.matmul %22, %23, %cst_9 {dimension_numbers = #tpu.dot_dimension_numbers<[1], [0], [0], [1], [0, 0, 1, 1], [], []>} : vector<8x8xf32>, vector<8x8xf32>, vector<8x8xf32> -> vector<8x8xf32>
    %25 = vector.extract_strided_slice %5 {offsets = [0, 8], sizes = [8, 8], strides = [1, 1]} : vector<8x32xf32> to vector<8x8xf32>
    %26 = vector.extract_strided_slice %6 {offsets = [0, 8], sizes = [8, 8], strides = [1, 1]} : vector<8x32xf32> to vector<8x8xf32>
    %cst_10 = arith.constant dense<0.000000e+00> : vector<8x8xf32>
    %27 = tpu.matmul %25, %26, %cst_10 {dimension_numbers = #tpu.dot_dimension_numbers<[1], [1], [0], [0], [0, 0, 1, 0], [], []>} : vector<8x8xf32>, vector<8x8xf32>, vector<8x8xf32> -> vector<8x8xf32>
    %cst_11 = arith.constant 2.82842708 : f32
    %28 = vector.broadcast %cst_11 : f32 to vector<8x8xf32>
    %29 = arith.mulf %27, %28 : vector<8x8xf32>
    %cst_12 = arith.constant dense<0xFF800000> : vector<8xf32>
    %30 = vector.multi_reduction <maximumf>, %29, %cst_12 [1] : vector<8x8xf32> to vector<8xf32>
    %31 = vector.shape_cast %30 : vector<8xf32> to vector<8x1xf32>
    %32 = vector.broadcast %31 : vector<8x1xf32> to vector<8x8xf32>
    %33 = arith.subf %29, %32 : vector<8x8xf32>
    %34 = math.exp %33 : vector<8x8xf32>
    %cst_13 = arith.constant dense<0.000000e+00> : vector<8xf32>
    %35 = vector.multi_reduction <add>, %34, %cst_13 [1] : vector<8x8xf32> to vector<8xf32>
    %36 = vector.shape_cast %35 : vector<8xf32> to vector<8x1xf32>
    %37 = tpu.reciprocal %36 {approx = true} : vector<8x1xf32> -> vector<8x1xf32>
    %38 = vector.broadcast %37 : vector<8x1xf32> to vector<8x8xf32>
    %39 = arith.mulf %34, %38 : vector<8x8xf32>
    %40 = vector.extract_strided_slice %7 {offsets = [0, 8], sizes = [8, 8], strides = [1, 1]} : vector<8x32xf32> to vector<8x8xf32>
    %cst_14 = arith.constant dense<0.000000e+00> : vector<8x8xf32>
    %41 = tpu.matmul %39, %40, %cst_14 {dimension_numbers = #tpu.dot_dimension_numbers<[1], [0], [0], [1], [0, 0, 1, 1], [], []>} : vector<8x8xf32>, vector<8x8xf32>, vector<8x8xf32> -> vector<8x8xf32>
    %42 = vector.extract_strided_slice %5 {offsets = [0, 16], sizes = [8, 8], strides = [1, 1]} : vector<8x32xf32> to vector<8x8xf32>
    %43 = vector.extract_strided_slice %6 {offsets = [0, 16], sizes = [8, 8], strides = [1, 1]} : vector<8x32xf32> to vector<8x8xf32>
    %cst_15 = arith.constant dense<0.000000e+00> : vector<8x8xf32>
    %44 = tpu.matmul %42, %43, %cst_15 {dimension_numbers = #tpu.dot_dimension_numbers<[1], [1], [0], [0], [0, 0, 1, 0], [], []>} : vector<8x8xf32>, vector<8x8xf32>, vector<8x8xf32> -> vector<8x8xf32>
    %cst_16 = arith.constant 2.82842708 : f32
    %45 = vector.broadcast %cst_16 : f32 to vector<8x8xf32>
    %46 = arith.mulf %44, %45 : vector<8x8xf32>
    %cst_17 = arith.constant dense<0xFF800000> : vector<8xf32>
    %47 = vector.multi_reduction <maximumf>, %46, %cst_17 [1] : vector<8x8xf32> to vector<8xf32>
    %48 = vector.shape_cast %47 : vector<8xf32> to vector<8x1xf32>
    %49 = vector.broadcast %48 : vector<8x1xf32> to vector<8x8xf32>
    %50 = arith.subf %46, %49 : vector<8x8xf32>
    %51 = math.exp %50 : vector<8x8xf32>
    %cst_18 = arith.constant dense<0.000000e+00> : vector<8xf32>
    %52 = vector.multi_reduction <add>, %51, %cst_18 [1] : vector<8x8xf32> to vector<8xf32>
    %53 = vector.shape_cast %52 : vector<8xf32> to vector<8x1xf32>
    %54 = tpu.reciprocal %53 {approx = true} : vector<8x1xf32> -> vector<8x1xf32>
    %55 = vector.broadcast %54 : vector<8x1xf32> to vector<8x8xf32>
    %56 = arith.mulf %51, %55 : vector<8x8xf32>
    %57 = vector.extract_strided_slice %7 {offsets = [0, 16], sizes = [8, 8], strides = [1, 1]} : vector<8x32xf32> to vector<8x8xf32>
    %cst_19 = arith.constant dense<0.000000e+00> : vector<8x8xf32>
    %58 = tpu.matmul %56, %57, %cst_19 {dimension_numbers = #tpu.dot_dimension_numbers<[1], [0], [0], [1], [0, 0, 1, 1], [], []>} : vector<8x8xf32>, vector<8x8xf32>, vector<8x8xf32> -> vector<8x8xf32>
    %59 = vector.extract_strided_slice %5 {offsets = [0, 24], sizes = [8, 8], strides = [1, 1]} : vector<8x32xf32> to vector<8x8xf32>
    %60 = vector.extract_strided_slice %6 {offsets = [0, 24], sizes = [8, 8], strides = [1, 1]} : vector<8x32xf32> to vector<8x8xf32>
    %cst_20 = arith.constant dense<0.000000e+00> : vector<8x8xf32>
    %61 = tpu.matmul %59, %60, %cst_20 {dimension_numbers = #tpu.dot_dimension_numbers<[1], [1], [0], [0], [0, 0, 1, 0], [], []>} : vector<8x8xf32>, vector<8x8xf32>, vector<8x8xf32> -> vector<8x8xf32>
    %cst_21 = arith.constant 2.82842708 : f32
    %62 = vector.broadcast %cst_21 : f32 to vector<8x8xf32>
    %63 = arith.mulf %61, %62 : vector<8x8xf32>
    %cst_22 = arith.constant dense<0xFF800000> : vector<8xf32>
    %64 = vector.multi_reduction <maximumf>, %63, %cst_22 [1] : vector<8x8xf32> to vector<8xf32>
    %65 = vector.shape_cast %64 : vector<8xf32> to vector<8x1xf32>
    %66 = vector.broadcast %65 : vector<8x1xf32> to vector<8x8xf32>
    %67 = arith.subf %63, %66 : vector<8x8xf32>
    %68 = math.exp %67 : vector<8x8xf32>
    %cst_23 = arith.constant dense<0.000000e+00> : vector<8xf32>
    %69 = vector.multi_reduction <add>, %68, %cst_23 [1] : vector<8x8xf32> to vector<8xf32>
    %70 = vector.shape_cast %69 : vector<8xf32> to vector<8x1xf32>
    %71 = tpu.reciprocal %70 {approx = true} : vector<8x1xf32> -> vector<8x1xf32>
    %72 = vector.broadcast %71 : vector<8x1xf32> to vector<8x8xf32>
    %73 = arith.mulf %68, %72 : vector<8x8xf32>
    %74 = vector.extract_strided_slice %7 {offsets = [0, 24], sizes = [8, 8], strides = [1, 1]} : vector<8x32xf32> to vector<8x8xf32>
    %cst_24 = arith.constant dense<0.000000e+00> : vector<8x8xf32>
    %75 = tpu.matmul %73, %74, %cst_24 {dimension_numbers = #tpu.dot_dimension_numbers<[1], [0], [0], [1], [0, 0, 1, 1], [], []>} : vector<8x8xf32>, vector<8x8xf32>, vector<8x8xf32> -> vector<8x8xf32>
    %76 = tpu.concatenate %24, %41, %58, %75 in 1 : vector<8x8xf32>, vector<8x8xf32>, vector<8x8xf32>, vector<8x8xf32> -> vector<8x32xf32>
    %c0_25 = arith.constant 0 : index
    %c0_26 = arith.constant 0 : index
    %c0_27 = arith.constant 0 : index
    %77 = vector.load %arg4[%c0_25, %c0_26, %c0_27] : memref<2x32x32xf32, #tpu.memory_space<vmem>>, vector<1x32x32xf32>
    %78 = vector.shape_cast %77 : vector<1x32x32xf32> to vector<32x32xf32>
    %cst_28 = arith.constant dense<0.000000e+00> : vector<8x32xf32>
    %79 = tpu.matmul %76, %78, %cst_28 {dimension_numbers = #tpu.dot_dimension_numbers<[1], [0], [0], [1], [0, 0, 1, 1], [], []>} : vector<8x32xf32>, vector<32x32xf32>, vector<8x32xf32> -> vector<8x32xf32>
    %c0_29 = arith.constant 0 : index
    %c0_30 = arith.constant 0 : index
    %80 = vector.load %arg5[%c0_29, %c0_30] : memref<12x32xf32, #tpu.memory_space<vmem>>, vector<1x32xf32>
    %81 = vector.broadcast %80 : vector<1x32xf32> to vector<8x32xf32>
    %82 = arith.addf %79, %81 : vector<8x32xf32>
    %83 = arith.addf %82, %1 : vector<8x32xf32>
    %c1 = arith.constant 1 : index
    %c0_31 = arith.constant 0 : index
    %84 = vector.load %arg5[%c1, %c0_31] : memref<12x32xf32, #tpu.memory_space<vmem>>, vector<1x32xf32>
    %c2 = arith.constant 2 : index
    %c0_32 = arith.constant 0 : index
    %85 = vector.load %arg5[%c2, %c0_32] : memref<12x32xf32, #tpu.memory_space<vmem>>, vector<1x32xf32>
    %cst_33 = arith.constant dense<0.000000e+00> : vector<8xf32>
    %86 = vector.multi_reduction <add>, %83, %cst_33 [1] : vector<8x32xf32> to vector<8xf32>
    %87 = vector.shape_cast %86 : vector<8xf32> to vector<8x1xf32>
    %cst_34 = arith.constant 3.200000e+01 : f32
    %88 = vector.broadcast %cst_34 : f32 to vector<8x1xf32>
    %89 = arith.divf %87, %88 : vector<8x1xf32>
    %90 = vector.broadcast %89 : vector<8x1xf32> to vector<8x32xf32>
    %91 = arith.subf %83, %90 : vector<8x32xf32>
    %92 = arith.mulf %91, %91 : vector<8x32xf32>
    %cst_35 = arith.constant dense<0.000000e+00> : vector<8xf32>
    %93 = vector.multi_reduction <add>, %92, %cst_35 [1] : vector<8x32xf32> to vector<8xf32>
    %94 = vector.shape_cast %93 : vector<8xf32> to vector<8x1xf32>
    %cst_36 = arith.constant 3.200000e+01 : f32
    %95 = vector.broadcast %cst_36 : f32 to vector<8x1xf32>
    %96 = arith.divf %94, %95 : vector<8x1xf32>
    %97 = vector.broadcast %89 : vector<8x1xf32> to vector<8x32xf32>
    %98 = arith.subf %83, %97 : vector<8x32xf32>
    %cst_37 = arith.constant 9.99999974E-6 : f32
    %99 = vector.broadcast %cst_37 : f32 to vector<8x1xf32>
    %100 = arith.addf %96, %99 : vector<8x1xf32>
    %101 = math.rsqrt %100 : vector<8x1xf32>
    %102 = vector.broadcast %101 : vector<8x1xf32> to vector<8x32xf32>
    %103 = arith.mulf %98, %102 : vector<8x32xf32>
    %104 = vector.broadcast %84 : vector<1x32xf32> to vector<8x32xf32>
    %105 = arith.mulf %103, %104 : vector<8x32xf32>
    %106 = vector.broadcast %85 : vector<1x32xf32> to vector<8x32xf32>
    %107 = arith.addf %105, %106 : vector<8x32xf32>
    %c0_38 = arith.constant 0 : index
    %c0_39 = arith.constant 0 : index
    %c0_40 = arith.constant 0 : index
    %108 = vector.load %arg6[%c0_38, %c0_39, %c0_40] : memref<2x32x128xf32, #tpu.memory_space<vmem>>, vector<1x32x128xf32>
    %109 = vector.shape_cast %108 : vector<1x32x128xf32> to vector<32x128xf32>
    %cst_41 = arith.constant dense<0.000000e+00> : vector<8x128xf32>
    %110 = tpu.matmul %107, %109, %cst_41 {dimension_numbers = #tpu.dot_dimension_numbers<[1], [0], [0], [1], [0, 0, 1, 1], [], []>} : vector<8x32xf32>, vector<32x128xf32>, vector<8x128xf32> -> vector<8x128xf32>
    %c0_42 = arith.constant 0 : index
    %c0_43 = arith.constant 0 : index
    %111 = vector.load %arg7[%c0_42, %c0_43] : memref<2x128xf32, #tpu.memory_space<vmem>>, vector<1x128xf32>
    %112 = vector.broadcast %111 : vector<1x128xf32> to vector<8x128xf32>
    %113 = arith.addf %110, %112 : vector<8x128xf32>
    %cst_44 = arith.constant 0.000000e+00 : f32
    %114 = vector.broadcast %cst_44 : f32 to vector<8x128xf32>
    %115 = arith.maximumf %113, %114 : vector<8x128xf32>
    %c0_45 = arith.constant 0 : index
    %c0_46 = arith.constant 0 : index
    %c0_47 = arith.constant 0 : index
    %116 = vector.load %arg8[%c0_45, %c0_46, %c0_47] : memref<2x128x32xf32, #tpu.memory_space<vmem>>, vector<1x128x32xf32>
    %117 = vector.shape_cast %116 : vector<1x128x32xf32> to vector<128x32xf32>
    %cst_48 = arith.constant dense<0.000000e+00> : vector<8x32xf32>
    %118 = tpu.matmul %115, %117, %cst_48 {dimension_numbers = #tpu.dot_dimension_numbers<[1], [0], [0], [1], [0, 0, 1, 1], [], []>} : vector<8x128xf32>, vector<128x32xf32>, vector<8x32xf32> -> vector<8x32xf32>
    %c3 = arith.constant 3 : index
    %c0_49 = arith.constant 0 : index
    %119 = vector.load %arg5[%c3, %c0_49] : memref<12x32xf32, #tpu.memory_space<vmem>>, vector<1x32xf32>
    %120 = vector.broadcast %119 : vector<1x32xf32> to vector<8x32xf32>
    %121 = arith.addf %118, %120 : vector<8x32xf32>
    %122 = arith.addf %121, %107 : vector<8x32xf32>
    %c4 = arith.constant 4 : index
    %c0_50 = arith.constant 0 : index
    %123 = vector.load %arg5[%c4, %c0_50] : memref<12x32xf32, #tpu.memory_space<vmem>>, vector<1x32xf32>
    %c5 = arith.constant 5 : index
    %c0_51 = arith.constant 0 : index
    %124 = vector.load %arg5[%c5, %c0_51] : memref<12x32xf32, #tpu.memory_space<vmem>>, vector<1x32xf32>
    %cst_52 = arith.constant dense<0.000000e+00> : vector<8xf32>
    %125 = vector.multi_reduction <add>, %122, %cst_52 [1] : vector<8x32xf32> to vector<8xf32>
    %126 = vector.shape_cast %125 : vector<8xf32> to vector<8x1xf32>
    %cst_53 = arith.constant 3.200000e+01 : f32
    %127 = vector.broadcast %cst_53 : f32 to vector<8x1xf32>
    %128 = arith.divf %126, %127 : vector<8x1xf32>
    %129 = vector.broadcast %128 : vector<8x1xf32> to vector<8x32xf32>
    %130 = arith.subf %122, %129 : vector<8x32xf32>
    %131 = arith.mulf %130, %130 : vector<8x32xf32>
    %cst_54 = arith.constant dense<0.000000e+00> : vector<8xf32>
    %132 = vector.multi_reduction <add>, %131, %cst_54 [1] : vector<8x32xf32> to vector<8xf32>
    %133 = vector.shape_cast %132 : vector<8xf32> to vector<8x1xf32>
    %cst_55 = arith.constant 3.200000e+01 : f32
    %134 = vector.broadcast %cst_55 : f32 to vector<8x1xf32>
    %135 = arith.divf %133, %134 : vector<8x1xf32>
    %136 = vector.broadcast %128 : vector<8x1xf32> to vector<8x32xf32>
    %137 = arith.subf %122, %136 : vector<8x32xf32>
    %cst_56 = arith.constant 9.99999974E-6 : f32
    %138 = vector.broadcast %cst_56 : f32 to vector<8x1xf32>
    %139 = arith.addf %135, %138 : vector<8x1xf32>
    %140 = math.rsqrt %139 : vector<8x1xf32>
    %141 = vector.broadcast %140 : vector<8x1xf32> to vector<8x32xf32>
    %142 = arith.mulf %137, %141 : vector<8x32xf32>
    %143 = vector.broadcast %123 : vector<1x32xf32> to vector<8x32xf32>
    %144 = arith.mulf %142, %143 : vector<8x32xf32>
    %145 = vector.broadcast %124 : vector<1x32xf32> to vector<8x32xf32>
    %146 = arith.addf %144, %145 : vector<8x32xf32>
    %c1_57 = arith.constant 1 : index
    %c0_58 = arith.constant 0 : index
    %c0_59 = arith.constant 0 : index
    %147 = vector.load %arg3[%c1_57, %c0_58, %c0_59] : memref<2x32x96xf32, #tpu.memory_space<vmem>>, vector<1x32x96xf32>
    %148 = vector.shape_cast %147 : vector<1x32x96xf32> to vector<32x96xf32>
    %cst_60 = arith.constant dense<0.000000e+00> : vector<8x96xf32>
    %149 = tpu.matmul %146, %148, %cst_60 {dimension_numbers = #tpu.dot_dimension_numbers<[1], [0], [0], [1], [0, 0, 1, 1], [], []>} : vector<8x32xf32>, vector<32x96xf32>, vector<8x96xf32> -> vector<8x96xf32>
    %150 = vector.extract_strided_slice %149 {offsets = [0, 0], sizes = [8, 32], strides = [1, 1]} : vector<8x96xf32> to vector<8x32xf32>
    %151 = vector.extract_strided_slice %149 {offsets = [0, 32], sizes = [8, 32], strides = [1, 1]} : vector<8x96xf32> to vector<8x32xf32>
    %152 = vector.extract_strided_slice %149 {offsets = [0, 64], sizes = [8, 32], strides = [1, 1]} : vector<8x96xf32> to vector<8x32xf32>
    %153 = vector.extract_strided_slice %150 {offsets = [0, 0], sizes = [8, 8], strides = [1, 1]} : vector<8x32xf32> to vector<8x8xf32>
    %154 = vector.extract_strided_slice %151 {offsets = [0, 0], sizes = [8, 8], strides = [1, 1]} : vector<8x32xf32> to vector<8x8xf32>
    %cst_61 = arith.constant dense<0.000000e+00> : vector<8x8xf32>
    %155 = tpu.matmul %153, %154, %cst_61 {dimension_numbers = #tpu.dot_dimension_numbers<[1], [1], [0], [0], [0, 0, 1, 0], [], []>} : vector<8x8xf32>, vector<8x8xf32>, vector<8x8xf32> -> vector<8x8xf32>
    %cst_62 = arith.constant 2.82842708 : f32
    %156 = vector.broadcast %cst_62 : f32 to vector<8x8xf32>
    %157 = arith.mulf %155, %156 : vector<8x8xf32>
    %cst_63 = arith.constant dense<0xFF800000> : vector<8xf32>
    %158 = vector.multi_reduction <maximumf>, %157, %cst_63 [1] : vector<8x8xf32> to vector<8xf32>
    %159 = vector.shape_cast %158 : vector<8xf32> to vector<8x1xf32>
    %160 = vector.broadcast %159 : vector<8x1xf32> to vector<8x8xf32>
    %161 = arith.subf %157, %160 : vector<8x8xf32>
    %162 = math.exp %161 : vector<8x8xf32>
    %cst_64 = arith.constant dense<0.000000e+00> : vector<8xf32>
    %163 = vector.multi_reduction <add>, %162, %cst_64 [1] : vector<8x8xf32> to vector<8xf32>
    %164 = vector.shape_cast %163 : vector<8xf32> to vector<8x1xf32>
    %165 = tpu.reciprocal %164 {approx = true} : vector<8x1xf32> -> vector<8x1xf32>
    %166 = vector.broadcast %165 : vector<8x1xf32> to vector<8x8xf32>
    %167 = arith.mulf %162, %166 : vector<8x8xf32>
    %168 = vector.extract_strided_slice %152 {offsets = [0, 0], sizes = [8, 8], strides = [1, 1]} : vector<8x32xf32> to vector<8x8xf32>
    %cst_65 = arith.constant dense<0.000000e+00> : vector<8x8xf32>
    %169 = tpu.matmul %167, %168, %cst_65 {dimension_numbers = #tpu.dot_dimension_numbers<[1], [0], [0], [1], [0, 0, 1, 1], [], []>} : vector<8x8xf32>, vector<8x8xf32>, vector<8x8xf32> -> vector<8x8xf32>
    %170 = vector.extract_strided_slice %150 {offsets = [0, 8], sizes = [8, 8], strides = [1, 1]} : vector<8x32xf32> to vector<8x8xf32>
    %171 = vector.extract_strided_slice %151 {offsets = [0, 8], sizes = [8, 8], strides = [1, 1]} : vector<8x32xf32> to vector<8x8xf32>
    %cst_66 = arith.constant dense<0.000000e+00> : vector<8x8xf32>
    %172 = tpu.matmul %170, %171, %cst_66 {dimension_numbers = #tpu.dot_dimension_numbers<[1], [1], [0], [0], [0, 0, 1, 0], [], []>} : vector<8x8xf32>, vector<8x8xf32>, vector<8x8xf32> -> vector<8x8xf32>
    %cst_67 = arith.constant 2.82842708 : f32
    %173 = vector.broadcast %cst_67 : f32 to vector<8x8xf32>
    %174 = arith.mulf %172, %173 : vector<8x8xf32>
    %cst_68 = arith.constant dense<0xFF800000> : vector<8xf32>
    %175 = vector.multi_reduction <maximumf>, %174, %cst_68 [1] : vector<8x8xf32> to vector<8xf32>
    %176 = vector.shape_cast %175 : vector<8xf32> to vector<8x1xf32>
    %177 = vector.broadcast %176 : vector<8x1xf32> to vector<8x8xf32>
    %178 = arith.subf %174, %177 : vector<8x8xf32>
    %179 = math.exp %178 : vector<8x8xf32>
    %cst_69 = arith.constant dense<0.000000e+00> : vector<8xf32>
    %180 = vector.multi_reduction <add>, %179, %cst_69 [1] : vector<8x8xf32> to vector<8xf32>
    %181 = vector.shape_cast %180 : vector<8xf32> to vector<8x1xf32>
    %182 = tpu.reciprocal %181 {approx = true} : vector<8x1xf32> -> vector<8x1xf32>
    %183 = vector.broadcast %182 : vector<8x1xf32> to vector<8x8xf32>
    %184 = arith.mulf %179, %183 : vector<8x8xf32>
    %185 = vector.extract_strided_slice %152 {offsets = [0, 8], sizes = [8, 8], strides = [1, 1]} : vector<8x32xf32> to vector<8x8xf32>
    %cst_70 = arith.constant dense<0.000000e+00> : vector<8x8xf32>
    %186 = tpu.matmul %184, %185, %cst_70 {dimension_numbers = #tpu.dot_dimension_numbers<[1], [0], [0], [1], [0, 0, 1, 1], [], []>} : vector<8x8xf32>, vector<8x8xf32>, vector<8x8xf32> -> vector<8x8xf32>
    %187 = vector.extract_strided_slice %150 {offsets = [0, 16], sizes = [8, 8], strides = [1, 1]} : vector<8x32xf32> to vector<8x8xf32>
    %188 = vector.extract_strided_slice %151 {offsets = [0, 16], sizes = [8, 8], strides = [1, 1]} : vector<8x32xf32> to vector<8x8xf32>
    %cst_71 = arith.constant dense<0.000000e+00> : vector<8x8xf32>
    %189 = tpu.matmul %187, %188, %cst_71 {dimension_numbers = #tpu.dot_dimension_numbers<[1], [1], [0], [0], [0, 0, 1, 0], [], []>} : vector<8x8xf32>, vector<8x8xf32>, vector<8x8xf32> -> vector<8x8xf32>
    %cst_72 = arith.constant 2.82842708 : f32
    %190 = vector.broadcast %cst_72 : f32 to vector<8x8xf32>
    %191 = arith.mulf %189, %190 : vector<8x8xf32>
    %cst_73 = arith.constant dense<0xFF800000> : vector<8xf32>
    %192 = vector.multi_reduction <maximumf>, %191, %cst_73 [1] : vector<8x8xf32> to vector<8xf32>
    %193 = vector.shape_cast %192 : vector<8xf32> to vector<8x1xf32>
    %194 = vector.broadcast %193 : vector<8x1xf32> to vector<8x8xf32>
    %195 = arith.subf %191, %194 : vector<8x8xf32>
    %196 = math.exp %195 : vector<8x8xf32>
    %cst_74 = arith.constant dense<0.000000e+00> : vector<8xf32>
    %197 = vector.multi_reduction <add>, %196, %cst_74 [1] : vector<8x8xf32> to vector<8xf32>
    %198 = vector.shape_cast %197 : vector<8xf32> to vector<8x1xf32>
    %199 = tpu.reciprocal %198 {approx = true} : vector<8x1xf32> -> vector<8x1xf32>
    %200 = vector.broadcast %199 : vector<8x1xf32> to vector<8x8xf32>
    %201 = arith.mulf %196, %200 : vector<8x8xf32>
    %202 = vector.extract_strided_slice %152 {offsets = [0, 16], sizes = [8, 8], strides = [1, 1]} : vector<8x32xf32> to vector<8x8xf32>
    %cst_75 = arith.constant dense<0.000000e+00> : vector<8x8xf32>
    %203 = tpu.matmul %201, %202, %cst_75 {dimension_numbers = #tpu.dot_dimension_numbers<[1], [0], [0], [1], [0, 0, 1, 1], [], []>} : vector<8x8xf32>, vector<8x8xf32>, vector<8x8xf32> -> vector<8x8xf32>
    %204 = vector.extract_strided_slice %150 {offsets = [0, 24], sizes = [8, 8], strides = [1, 1]} : vector<8x32xf32> to vector<8x8xf32>
    %205 = vector.extract_strided_slice %151 {offsets = [0, 24], sizes = [8, 8], strides = [1, 1]} : vector<8x32xf32> to vector<8x8xf32>
    %cst_76 = arith.constant dense<0.000000e+00> : vector<8x8xf32>
    %206 = tpu.matmul %204, %205, %cst_76 {dimension_numbers = #tpu.dot_dimension_numbers<[1], [1], [0], [0], [0, 0, 1, 0], [], []>} : vector<8x8xf32>, vector<8x8xf32>, vector<8x8xf32> -> vector<8x8xf32>
    %cst_77 = arith.constant 2.82842708 : f32
    %207 = vector.broadcast %cst_77 : f32 to vector<8x8xf32>
    %208 = arith.mulf %206, %207 : vector<8x8xf32>
    %cst_78 = arith.constant dense<0xFF800000> : vector<8xf32>
    %209 = vector.multi_reduction <maximumf>, %208, %cst_78 [1] : vector<8x8xf32> to vector<8xf32>
    %210 = vector.shape_cast %209 : vector<8xf32> to vector<8x1xf32>
    %211 = vector.broadcast %210 : vector<8x1xf32> to vector<8x8xf32>
    %212 = arith.subf %208, %211 : vector<8x8xf32>
    %213 = math.exp %212 : vector<8x8xf32>
    %cst_79 = arith.constant dense<0.000000e+00> : vector<8xf32>
    %214 = vector.multi_reduction <add>, %213, %cst_79 [1] : vector<8x8xf32> to vector<8xf32>
    %215 = vector.shape_cast %214 : vector<8xf32> to vector<8x1xf32>
    %216 = tpu.reciprocal %215 {approx = true} : vector<8x1xf32> -> vector<8x1xf32>
    %217 = vector.broadcast %216 : vector<8x1xf32> to vector<8x8xf32>
    %218 = arith.mulf %213, %217 : vector<8x8xf32>
    %219 = vector.extract_strided_slice %152 {offsets = [0, 24], sizes = [8, 8], strides = [1, 1]} : vector<8x32xf32> to vector<8x8xf32>
    %cst_80 = arith.constant dense<0.000000e+00> : vector<8x8xf32>
    %220 = tpu.matmul %218, %219, %cst_80 {dimension_numbers = #tpu.dot_dimension_numbers<[1], [0], [0], [1], [0, 0, 1, 1], [], []>} : vector<8x8xf32>, vector<8x8xf32>, vector<8x8xf32> -> vector<8x8xf32>
    %221 = tpu.concatenate %169, %186, %203, %220 in 1 : vector<8x8xf32>, vector<8x8xf32>, vector<8x8xf32>, vector<8x8xf32> -> vector<8x32xf32>
    %c1_81 = arith.constant 1 : index
    %c0_82 = arith.constant 0 : index
    %c0_83 = arith.constant 0 : index
    %222 = vector.load %arg4[%c1_81, %c0_82, %c0_83] : memref<2x32x32xf32, #tpu.memory_space<vmem>>, vector<1x32x32xf32>
    %223 = vector.shape_cast %222 : vector<1x32x32xf32> to vector<32x32xf32>
    %cst_84 = arith.constant dense<0.000000e+00> : vector<8x32xf32>
    %224 = tpu.matmul %221, %223, %cst_84 {dimension_numbers = #tpu.dot_dimension_numbers<[1], [0], [0], [1], [0, 0, 1, 1], [], []>} : vector<8x32xf32>, vector<32x32xf32>, vector<8x32xf32> -> vector<8x32xf32>
    %c6 = arith.constant 6 : index
    %c0_85 = arith.constant 0 : index
    %225 = vector.load %arg5[%c6, %c0_85] : memref<12x32xf32, #tpu.memory_space<vmem>>, vector<1x32xf32>
    %226 = vector.broadcast %225 : vector<1x32xf32> to vector<8x32xf32>
    %227 = arith.addf %224, %226 : vector<8x32xf32>
    %228 = arith.addf %227, %146 : vector<8x32xf32>
    %c7 = arith.constant 7 : index
    %c0_86 = arith.constant 0 : index
    %229 = vector.load %arg5[%c7, %c0_86] : memref<12x32xf32, #tpu.memory_space<vmem>>, vector<1x32xf32>
    %c8 = arith.constant 8 : index
    %c0_87 = arith.constant 0 : index
    %230 = vector.load %arg5[%c8, %c0_87] : memref<12x32xf32, #tpu.memory_space<vmem>>, vector<1x32xf32>
    %cst_88 = arith.constant dense<0.000000e+00> : vector<8xf32>
    %231 = vector.multi_reduction <add>, %228, %cst_88 [1] : vector<8x32xf32> to vector<8xf32>
    %232 = vector.shape_cast %231 : vector<8xf32> to vector<8x1xf32>
    %cst_89 = arith.constant 3.200000e+01 : f32
    %233 = vector.broadcast %cst_89 : f32 to vector<8x1xf32>
    %234 = arith.divf %232, %233 : vector<8x1xf32>
    %235 = vector.broadcast %234 : vector<8x1xf32> to vector<8x32xf32>
    %236 = arith.subf %228, %235 : vector<8x32xf32>
    %237 = arith.mulf %236, %236 : vector<8x32xf32>
    %cst_90 = arith.constant dense<0.000000e+00> : vector<8xf32>
    %238 = vector.multi_reduction <add>, %237, %cst_90 [1] : vector<8x32xf32> to vector<8xf32>
    %239 = vector.shape_cast %238 : vector<8xf32> to vector<8x1xf32>
    %cst_91 = arith.constant 3.200000e+01 : f32
    %240 = vector.broadcast %cst_91 : f32 to vector<8x1xf32>
    %241 = arith.divf %239, %240 : vector<8x1xf32>
    %242 = vector.broadcast %234 : vector<8x1xf32> to vector<8x32xf32>
    %243 = arith.subf %228, %242 : vector<8x32xf32>
    %cst_92 = arith.constant 9.99999974E-6 : f32
    %244 = vector.broadcast %cst_92 : f32 to vector<8x1xf32>
    %245 = arith.addf %241, %244 : vector<8x1xf32>
    %246 = math.rsqrt %245 : vector<8x1xf32>
    %247 = vector.broadcast %246 : vector<8x1xf32> to vector<8x32xf32>
    %248 = arith.mulf %243, %247 : vector<8x32xf32>
    %249 = vector.broadcast %229 : vector<1x32xf32> to vector<8x32xf32>
    %250 = arith.mulf %248, %249 : vector<8x32xf32>
    %251 = vector.broadcast %230 : vector<1x32xf32> to vector<8x32xf32>
    %252 = arith.addf %250, %251 : vector<8x32xf32>
    %c1_93 = arith.constant 1 : index
    %c0_94 = arith.constant 0 : index
    %c0_95 = arith.constant 0 : index
    %253 = vector.load %arg6[%c1_93, %c0_94, %c0_95] : memref<2x32x128xf32, #tpu.memory_space<vmem>>, vector<1x32x128xf32>
    %254 = vector.shape_cast %253 : vector<1x32x128xf32> to vector<32x128xf32>
    %cst_96 = arith.constant dense<0.000000e+00> : vector<8x128xf32>
    %255 = tpu.matmul %252, %254, %cst_96 {dimension_numbers = #tpu.dot_dimension_numbers<[1], [0], [0], [1], [0, 0, 1, 1], [], []>} : vector<8x32xf32>, vector<32x128xf32>, vector<8x128xf32> -> vector<8x128xf32>
    %c1_97 = arith.constant 1 : index
    %c0_98 = arith.constant 0 : index
    %256 = vector.load %arg7[%c1_97, %c0_98] : memref<2x128xf32, #tpu.memory_space<vmem>>, vector<1x128xf32>
    %257 = vector.broadcast %256 : vector<1x128xf32> to vector<8x128xf32>
    %258 = arith.addf %255, %257 : vector<8x128xf32>
    %cst_99 = arith.constant 0.000000e+00 : f32
    %259 = vector.broadcast %cst_99 : f32 to vector<8x128xf32>
    %260 = arith.maximumf %258, %259 : vector<8x128xf32>
    %c1_100 = arith.constant 1 : index
    %c0_101 = arith.constant 0 : index
    %c0_102 = arith.constant 0 : index
    %261 = vector.load %arg8[%c1_100, %c0_101, %c0_102] : memref<2x128x32xf32, #tpu.memory_space<vmem>>, vector<1x128x32xf32>
    %262 = vector.shape_cast %261 : vector<1x128x32xf32> to vector<128x32xf32>
    %cst_103 = arith.constant dense<0.000000e+00> : vector<8x32xf32>
    %263 = tpu.matmul %260, %262, %cst_103 {dimension_numbers = #tpu.dot_dimension_numbers<[1], [0], [0], [1], [0, 0, 1, 1], [], []>} : vector<8x128xf32>, vector<128x32xf32>, vector<8x32xf32> -> vector<8x32xf32>
    %c9 = arith.constant 9 : index
    %c0_104 = arith.constant 0 : index
    %264 = vector.load %arg5[%c9, %c0_104] : memref<12x32xf32, #tpu.memory_space<vmem>>, vector<1x32xf32>
    %265 = vector.broadcast %264 : vector<1x32xf32> to vector<8x32xf32>
    %266 = arith.addf %263, %265 : vector<8x32xf32>
    %267 = arith.addf %266, %252 : vector<8x32xf32>
    %c10 = arith.constant 10 : index
    %c0_105 = arith.constant 0 : index
    %268 = vector.load %arg5[%c10, %c0_105] : memref<12x32xf32, #tpu.memory_space<vmem>>, vector<1x32xf32>
    %c11 = arith.constant 11 : index
    %c0_106 = arith.constant 0 : index
    %269 = vector.load %arg5[%c11, %c0_106] : memref<12x32xf32, #tpu.memory_space<vmem>>, vector<1x32xf32>
    %cst_107 = arith.constant dense<0.000000e+00> : vector<8xf32>
    %270 = vector.multi_reduction <add>, %267, %cst_107 [1] : vector<8x32xf32> to vector<8xf32>
    %271 = vector.shape_cast %270 : vector<8xf32> to vector<8x1xf32>
    %cst_108 = arith.constant 3.200000e+01 : f32
    %272 = vector.broadcast %cst_108 : f32 to vector<8x1xf32>
    %273 = arith.divf %271, %272 : vector<8x1xf32>
    %274 = vector.broadcast %273 : vector<8x1xf32> to vector<8x32xf32>
    %275 = arith.subf %267, %274 : vector<8x32xf32>
    %276 = arith.mulf %275, %275 : vector<8x32xf32>
    %cst_109 = arith.constant dense<0.000000e+00> : vector<8xf32>
    %277 = vector.multi_reduction <add>, %276, %cst_109 [1] : vector<8x32xf32> to vector<8xf32>
    %278 = vector.shape_cast %277 : vector<8xf32> to vector<8x1xf32>
    %cst_110 = arith.constant 3.200000e+01 : f32
    %279 = vector.broadcast %cst_110 : f32 to vector<8x1xf32>
    %280 = arith.divf %278, %279 : vector<8x1xf32>
    %281 = vector.broadcast %273 : vector<8x1xf32> to vector<8x32xf32>
    %282 = arith.subf %267, %281 : vector<8x32xf32>
    %cst_111 = arith.constant 9.99999974E-6 : f32
    %283 = vector.broadcast %cst_111 : f32 to vector<8x1xf32>
    %284 = arith.addf %280, %283 : vector<8x1xf32>
    %285 = math.rsqrt %284 : vector<8x1xf32>
    %286 = vector.broadcast %285 : vector<8x1xf32> to vector<8x32xf32>
    %287 = arith.mulf %282, %286 : vector<8x32xf32>
    %288 = vector.broadcast %268 : vector<1x32xf32> to vector<8x32xf32>
    %289 = arith.mulf %287, %288 : vector<8x32xf32>
    %290 = vector.broadcast %269 : vector<1x32xf32> to vector<8x32xf32>
    %291 = arith.addf %289, %290 : vector<8x32xf32>
    %c0_112 = arith.constant 0 : index
    %c0_113 = arith.constant 0 : index
    %c0_114 = arith.constant 0 : index
    %292 = vector.load %arg2[%c0_112, %c0_113, %c0_114] : memref<1x8x32xf32, #tpu.memory_space<vmem>>, vector<1x8x32xf32>
    %293 = vector.shape_cast %292 : vector<1x8x32xf32> to vector<8x32xf32>
    %c0_115 = arith.constant 0 : index
    %c0_116 = arith.constant 0 : index
    %c0_117 = arith.constant 0 : index
    %294 = vector.load %arg9[%c0_115, %c0_116, %c0_117] : memref<2x32x96xf32, #tpu.memory_space<vmem>>, vector<1x32x96xf32>
    %295 = vector.shape_cast %294 : vector<1x32x96xf32> to vector<32x96xf32>
    %cst_118 = arith.constant dense<0.000000e+00> : vector<8x96xf32>
    %296 = tpu.matmul %293, %295, %cst_118 {dimension_numbers = #tpu.dot_dimension_numbers<[1], [0], [0], [1], [0, 0, 1, 1], [], []>} : vector<8x32xf32>, vector<32x96xf32>, vector<8x96xf32> -> vector<8x96xf32>
    %297 = vector.extract_strided_slice %296 {offsets = [0, 0], sizes = [8, 32], strides = [1, 1]} : vector<8x96xf32> to vector<8x32xf32>
    %298 = vector.extract_strided_slice %296 {offsets = [0, 32], sizes = [8, 32], strides = [1, 1]} : vector<8x96xf32> to vector<8x32xf32>
    %299 = vector.extract_strided_slice %296 {offsets = [0, 64], sizes = [8, 32], strides = [1, 1]} : vector<8x96xf32> to vector<8x32xf32>
    %300 = vector.extract_strided_slice %297 {offsets = [0, 0], sizes = [8, 8], strides = [1, 1]} : vector<8x32xf32> to vector<8x8xf32>
    %301 = vector.extract_strided_slice %298 {offsets = [0, 0], sizes = [8, 8], strides = [1, 1]} : vector<8x32xf32> to vector<8x8xf32>
    %cst_119 = arith.constant dense<0.000000e+00> : vector<8x8xf32>
    %302 = tpu.matmul %300, %301, %cst_119 {dimension_numbers = #tpu.dot_dimension_numbers<[1], [1], [0], [0], [0, 0, 1, 0], [], []>} : vector<8x8xf32>, vector<8x8xf32>, vector<8x8xf32> -> vector<8x8xf32>
    %cst_120 = arith.constant 2.82842708 : f32
    %303 = vector.broadcast %cst_120 : f32 to vector<8x8xf32>
    %304 = arith.mulf %302, %303 : vector<8x8xf32>
    %cst_121 = arith.constant dense<0xFF800000> : vector<8xf32>
    %305 = vector.multi_reduction <maximumf>, %304, %cst_121 [1] : vector<8x8xf32> to vector<8xf32>
    %306 = vector.shape_cast %305 : vector<8xf32> to vector<8x1xf32>
    %307 = vector.broadcast %306 : vector<8x1xf32> to vector<8x8xf32>
    %308 = arith.subf %304, %307 : vector<8x8xf32>
    %309 = math.exp %308 : vector<8x8xf32>
    %cst_122 = arith.constant dense<0.000000e+00> : vector<8xf32>
    %310 = vector.multi_reduction <add>, %309, %cst_122 [1] : vector<8x8xf32> to vector<8xf32>
    %311 = vector.shape_cast %310 : vector<8xf32> to vector<8x1xf32>
    %312 = tpu.reciprocal %311 {approx = true} : vector<8x1xf32> -> vector<8x1xf32>
    %313 = vector.broadcast %312 : vector<8x1xf32> to vector<8x8xf32>
    %314 = arith.mulf %309, %313 : vector<8x8xf32>
    %315 = vector.extract_strided_slice %299 {offsets = [0, 0], sizes = [8, 8], strides = [1, 1]} : vector<8x32xf32> to vector<8x8xf32>
    %cst_123 = arith.constant dense<0.000000e+00> : vector<8x8xf32>
    %316 = tpu.matmul %314, %315, %cst_123 {dimension_numbers = #tpu.dot_dimension_numbers<[1], [0], [0], [1], [0, 0, 1, 1], [], []>} : vector<8x8xf32>, vector<8x8xf32>, vector<8x8xf32> -> vector<8x8xf32>
    %317 = vector.extract_strided_slice %297 {offsets = [0, 8], sizes = [8, 8], strides = [1, 1]} : vector<8x32xf32> to vector<8x8xf32>
    %318 = vector.extract_strided_slice %298 {offsets = [0, 8], sizes = [8, 8], strides = [1, 1]} : vector<8x32xf32> to vector<8x8xf32>
    %cst_124 = arith.constant dense<0.000000e+00> : vector<8x8xf32>
    %319 = tpu.matmul %317, %318, %cst_124 {dimension_numbers = #tpu.dot_dimension_numbers<[1], [1], [0], [0], [0, 0, 1, 0], [], []>} : vector<8x8xf32>, vector<8x8xf32>, vector<8x8xf32> -> vector<8x8xf32>
    %cst_125 = arith.constant 2.82842708 : f32
    %320 = vector.broadcast %cst_125 : f32 to vector<8x8xf32>
    %321 = arith.mulf %319, %320 : vector<8x8xf32>
    %cst_126 = arith.constant dense<0xFF800000> : vector<8xf32>
    %322 = vector.multi_reduction <maximumf>, %321, %cst_126 [1] : vector<8x8xf32> to vector<8xf32>
    %323 = vector.shape_cast %322 : vector<8xf32> to vector<8x1xf32>
    %324 = vector.broadcast %323 : vector<8x1xf32> to vector<8x8xf32>
    %325 = arith.subf %321, %324 : vector<8x8xf32>
    %326 = math.exp %325 : vector<8x8xf32>
    %cst_127 = arith.constant dense<0.000000e+00> : vector<8xf32>
    %327 = vector.multi_reduction <add>, %326, %cst_127 [1] : vector<8x8xf32> to vector<8xf32>
    %328 = vector.shape_cast %327 : vector<8xf32> to vector<8x1xf32>
    %329 = tpu.reciprocal %328 {approx = true} : vector<8x1xf32> -> vector<8x1xf32>
    %330 = vector.broadcast %329 : vector<8x1xf32> to vector<8x8xf32>
    %331 = arith.mulf %326, %330 : vector<8x8xf32>
    %332 = vector.extract_strided_slice %299 {offsets = [0, 8], sizes = [8, 8], strides = [1, 1]} : vector<8x32xf32> to vector<8x8xf32>
    %cst_128 = arith.constant dense<0.000000e+00> : vector<8x8xf32>
    %333 = tpu.matmul %331, %332, %cst_128 {dimension_numbers = #tpu.dot_dimension_numbers<[1], [0], [0], [1], [0, 0, 1, 1], [], []>} : vector<8x8xf32>, vector<8x8xf32>, vector<8x8xf32> -> vector<8x8xf32>
    %334 = vector.extract_strided_slice %297 {offsets = [0, 16], sizes = [8, 8], strides = [1, 1]} : vector<8x32xf32> to vector<8x8xf32>
    %335 = vector.extract_strided_slice %298 {offsets = [0, 16], sizes = [8, 8], strides = [1, 1]} : vector<8x32xf32> to vector<8x8xf32>
    %cst_129 = arith.constant dense<0.000000e+00> : vector<8x8xf32>
    %336 = tpu.matmul %334, %335, %cst_129 {dimension_numbers = #tpu.dot_dimension_numbers<[1], [1], [0], [0], [0, 0, 1, 0], [], []>} : vector<8x8xf32>, vector<8x8xf32>, vector<8x8xf32> -> vector<8x8xf32>
    %cst_130 = arith.constant 2.82842708 : f32
    %337 = vector.broadcast %cst_130 : f32 to vector<8x8xf32>
    %338 = arith.mulf %336, %337 : vector<8x8xf32>
    %cst_131 = arith.constant dense<0xFF800000> : vector<8xf32>
    %339 = vector.multi_reduction <maximumf>, %338, %cst_131 [1] : vector<8x8xf32> to vector<8xf32>
    %340 = vector.shape_cast %339 : vector<8xf32> to vector<8x1xf32>
    %341 = vector.broadcast %340 : vector<8x1xf32> to vector<8x8xf32>
    %342 = arith.subf %338, %341 : vector<8x8xf32>
    %343 = math.exp %342 : vector<8x8xf32>
    %cst_132 = arith.constant dense<0.000000e+00> : vector<8xf32>
    %344 = vector.multi_reduction <add>, %343, %cst_132 [1] : vector<8x8xf32> to vector<8xf32>
    %345 = vector.shape_cast %344 : vector<8xf32> to vector<8x1xf32>
    %346 = tpu.reciprocal %345 {approx = true} : vector<8x1xf32> -> vector<8x1xf32>
    %347 = vector.broadcast %346 : vector<8x1xf32> to vector<8x8xf32>
    %348 = arith.mulf %343, %347 : vector<8x8xf32>
    %349 = vector.extract_strided_slice %299 {offsets = [0, 16], sizes = [8, 8], strides = [1, 1]} : vector<8x32xf32> to vector<8x8xf32>
    %cst_133 = arith.constant dense<0.000000e+00> : vector<8x8xf32>
    %350 = tpu.matmul %348, %349, %cst_133 {dimension_numbers = #tpu.dot_dimension_numbers<[1], [0], [0], [1], [0, 0, 1, 1], [], []>} : vector<8x8xf32>, vector<8x8xf32>, vector<8x8xf32> -> vector<8x8xf32>
    %351 = vector.extract_strided_slice %297 {offsets = [0, 24], sizes = [8, 8], strides = [1, 1]} : vector<8x32xf32> to vector<8x8xf32>
    %352 = vector.extract_strided_slice %298 {offsets = [0, 24], sizes = [8, 8], strides = [1, 1]} : vector<8x32xf32> to vector<8x8xf32>
    %cst_134 = arith.constant dense<0.000000e+00> : vector<8x8xf32>
    %353 = tpu.matmul %351, %352, %cst_134 {dimension_numbers = #tpu.dot_dimension_numbers<[1], [1], [0], [0], [0, 0, 1, 0], [], []>} : vector<8x8xf32>, vector<8x8xf32>, vector<8x8xf32> -> vector<8x8xf32>
    %cst_135 = arith.constant 2.82842708 : f32
    %354 = vector.broadcast %cst_135 : f32 to vector<8x8xf32>
    %355 = arith.mulf %353, %354 : vector<8x8xf32>
    %cst_136 = arith.constant dense<0xFF800000> : vector<8xf32>
    %356 = vector.multi_reduction <maximumf>, %355, %cst_136 [1] : vector<8x8xf32> to vector<8xf32>
    %357 = vector.shape_cast %356 : vector<8xf32> to vector<8x1xf32>
    %358 = vector.broadcast %357 : vector<8x1xf32> to vector<8x8xf32>
    %359 = arith.subf %355, %358 : vector<8x8xf32>
    %360 = math.exp %359 : vector<8x8xf32>
    %cst_137 = arith.constant dense<0.000000e+00> : vector<8xf32>
    %361 = vector.multi_reduction <add>, %360, %cst_137 [1] : vector<8x8xf32> to vector<8xf32>
    %362 = vector.shape_cast %361 : vector<8xf32> to vector<8x1xf32>
    %363 = tpu.reciprocal %362 {approx = true} : vector<8x1xf32> -> vector<8x1xf32>
    %364 = vector.broadcast %363 : vector<8x1xf32> to vector<8x8xf32>
    %365 = arith.mulf %360, %364 : vector<8x8xf32>
    %366 = vector.extract_strided_slice %299 {offsets = [0, 24], sizes = [8, 8], strides = [1, 1]} : vector<8x32xf32> to vector<8x8xf32>
    %cst_138 = arith.constant dense<0.000000e+00> : vector<8x8xf32>
    %367 = tpu.matmul %365, %366, %cst_138 {dimension_numbers = #tpu.dot_dimension_numbers<[1], [0], [0], [1], [0, 0, 1, 1], [], []>} : vector<8x8xf32>, vector<8x8xf32>, vector<8x8xf32> -> vector<8x8xf32>
    %368 = tpu.concatenate %316, %333, %350, %367 in 1 : vector<8x8xf32>, vector<8x8xf32>, vector<8x8xf32>, vector<8x8xf32> -> vector<8x32xf32>
    %c0_139 = arith.constant 0 : index
    %c0_140 = arith.constant 0 : index
    %c0_141 = arith.constant 0 : index
    %369 = vector.load %arg10[%c0_139, %c0_140, %c0_141] : memref<2x32x32xf32, #tpu.memory_space<vmem>>, vector<1x32x32xf32>
    %370 = vector.shape_cast %369 : vector<1x32x32xf32> to vector<32x32xf32>
    %cst_142 = arith.constant dense<0.000000e+00> : vector<8x32xf32>
    %371 = tpu.matmul %368, %370, %cst_142 {dimension_numbers = #tpu.dot_dimension_numbers<[1], [0], [0], [1], [0, 0, 1, 1], [], []>} : vector<8x32xf32>, vector<32x32xf32>, vector<8x32xf32> -> vector<8x32xf32>
    %c0_143 = arith.constant 0 : index
    %c0_144 = arith.constant 0 : index
    %372 = vector.load %arg14[%c0_143, %c0_144] : memref<18x32xf32, #tpu.memory_space<vmem>>, vector<1x32xf32>
    %373 = vector.broadcast %372 : vector<1x32xf32> to vector<8x32xf32>
    %374 = arith.addf %371, %373 : vector<8x32xf32>
    %375 = arith.addf %374, %293 : vector<8x32xf32>
    %c1_145 = arith.constant 1 : index
    %c0_146 = arith.constant 0 : index
    %376 = vector.load %arg14[%c1_145, %c0_146] : memref<18x32xf32, #tpu.memory_space<vmem>>, vector<1x32xf32>
    %c2_147 = arith.constant 2 : index
    %c0_148 = arith.constant 0 : index
    %377 = vector.load %arg14[%c2_147, %c0_148] : memref<18x32xf32, #tpu.memory_space<vmem>>, vector<1x32xf32>
    %cst_149 = arith.constant dense<0.000000e+00> : vector<8xf32>
    %378 = vector.multi_reduction <add>, %375, %cst_149 [1] : vector<8x32xf32> to vector<8xf32>
    %379 = vector.shape_cast %378 : vector<8xf32> to vector<8x1xf32>
    %cst_150 = arith.constant 3.200000e+01 : f32
    %380 = vector.broadcast %cst_150 : f32 to vector<8x1xf32>
    %381 = arith.divf %379, %380 : vector<8x1xf32>
    %382 = vector.broadcast %381 : vector<8x1xf32> to vector<8x32xf32>
    %383 = arith.subf %375, %382 : vector<8x32xf32>
    %384 = arith.mulf %383, %383 : vector<8x32xf32>
    %cst_151 = arith.constant dense<0.000000e+00> : vector<8xf32>
    %385 = vector.multi_reduction <add>, %384, %cst_151 [1] : vector<8x32xf32> to vector<8xf32>
    %386 = vector.shape_cast %385 : vector<8xf32> to vector<8x1xf32>
    %cst_152 = arith.constant 3.200000e+01 : f32
    %387 = vector.broadcast %cst_152 : f32 to vector<8x1xf32>
    %388 = arith.divf %386, %387 : vector<8x1xf32>
    %389 = vector.broadcast %381 : vector<8x1xf32> to vector<8x32xf32>
    %390 = arith.subf %375, %389 : vector<8x32xf32>
    %cst_153 = arith.constant 9.99999974E-6 : f32
    %391 = vector.broadcast %cst_153 : f32 to vector<8x1xf32>
    %392 = arith.addf %388, %391 : vector<8x1xf32>
    %393 = math.rsqrt %392 : vector<8x1xf32>
    %394 = vector.broadcast %393 : vector<8x1xf32> to vector<8x32xf32>
    %395 = arith.mulf %390, %394 : vector<8x32xf32>
    %396 = vector.broadcast %376 : vector<1x32xf32> to vector<8x32xf32>
    %397 = arith.mulf %395, %396 : vector<8x32xf32>
    %398 = vector.broadcast %377 : vector<1x32xf32> to vector<8x32xf32>
    %399 = arith.addf %397, %398 : vector<8x32xf32>
    %c0_154 = arith.constant 0 : index
    %c0_155 = arith.constant 0 : index
    %c0_156 = arith.constant 0 : index
    %400 = vector.load %arg11[%c0_154, %c0_155, %c0_156] : memref<2x32x32xf32, #tpu.memory_space<vmem>>, vector<1x32x32xf32>
    %401 = vector.shape_cast %400 : vector<1x32x32xf32> to vector<32x32xf32>
    %cst_157 = arith.constant dense<0.000000e+00> : vector<8x32xf32>
    %402 = tpu.matmul %399, %401, %cst_157 {dimension_numbers = #tpu.dot_dimension_numbers<[1], [0], [0], [1], [0, 0, 1, 1], [], []>} : vector<8x32xf32>, vector<32x32xf32>, vector<8x32xf32> -> vector<8x32xf32>
    %c0_158 = arith.constant 0 : index
    %c0_159 = arith.constant 0 : index
    %c0_160 = arith.constant 0 : index
    %403 = vector.load %arg12[%c0_158, %c0_159, %c0_160] : memref<2x32x64xf32, #tpu.memory_space<vmem>>, vector<1x32x64xf32>
    %404 = vector.shape_cast %403 : vector<1x32x64xf32> to vector<32x64xf32>
    %cst_161 = arith.constant dense<0.000000e+00> : vector<8x64xf32>
    %405 = tpu.matmul %291, %404, %cst_161 {dimension_numbers = #tpu.dot_dimension_numbers<[1], [0], [0], [1], [0, 0, 1, 1], [], []>} : vector<8x32xf32>, vector<32x64xf32>, vector<8x64xf32> -> vector<8x64xf32>
    %406 = vector.extract_strided_slice %405 {offsets = [0, 0], sizes = [8, 32], strides = [1, 1]} : vector<8x64xf32> to vector<8x32xf32>
    %407 = vector.extract_strided_slice %405 {offsets = [0, 32], sizes = [8, 32], strides = [1, 1]} : vector<8x64xf32> to vector<8x32xf32>
    %408 = vector.extract_strided_slice %402 {offsets = [0, 0], sizes = [8, 8], strides = [1, 1]} : vector<8x32xf32> to vector<8x8xf32>
    %409 = vector.extract_strided_slice %406 {offsets = [0, 0], sizes = [8, 8], strides = [1, 1]} : vector<8x32xf32> to vector<8x8xf32>
    %cst_162 = arith.constant dense<0.000000e+00> : vector<8x8xf32>
    %410 = tpu.matmul %408, %409, %cst_162 {dimension_numbers = #tpu.dot_dimension_numbers<[1], [1], [0], [0], [0, 0, 1, 0], [], []>} : vector<8x8xf32>, vector<8x8xf32>, vector<8x8xf32> -> vector<8x8xf32>
    %cst_163 = arith.constant 2.82842708 : f32
    %411 = vector.broadcast %cst_163 : f32 to vector<8x8xf32>
    %412 = arith.mulf %410, %411 : vector<8x8xf32>
    %cst_164 = arith.constant dense<0xFF800000> : vector<8xf32>
    %413 = vector.multi_reduction <maximumf>, %412, %cst_164 [1] : vector<8x8xf32> to vector<8xf32>
    %414 = vector.shape_cast %413 : vector<8xf32> to vector<8x1xf32>
    %415 = vector.broadcast %414 : vector<8x1xf32> to vector<8x8xf32>
    %416 = arith.subf %412, %415 : vector<8x8xf32>
    %417 = math.exp %416 : vector<8x8xf32>
    %cst_165 = arith.constant dense<0.000000e+00> : vector<8xf32>
    %418 = vector.multi_reduction <add>, %417, %cst_165 [1] : vector<8x8xf32> to vector<8xf32>
    %419 = vector.shape_cast %418 : vector<8xf32> to vector<8x1xf32>
    %420 = tpu.reciprocal %419 {approx = true} : vector<8x1xf32> -> vector<8x1xf32>
    %421 = vector.broadcast %420 : vector<8x1xf32> to vector<8x8xf32>
    %422 = arith.mulf %417, %421 : vector<8x8xf32>
    %423 = vector.extract_strided_slice %407 {offsets = [0, 0], sizes = [8, 8], strides = [1, 1]} : vector<8x32xf32> to vector<8x8xf32>
    %cst_166 = arith.constant dense<0.000000e+00> : vector<8x8xf32>
    %424 = tpu.matmul %422, %423, %cst_166 {dimension_numbers = #tpu.dot_dimension_numbers<[1], [0], [0], [1], [0, 0, 1, 1], [], []>} : vector<8x8xf32>, vector<8x8xf32>, vector<8x8xf32> -> vector<8x8xf32>
    %425 = vector.extract_strided_slice %402 {offsets = [0, 8], sizes = [8, 8], strides = [1, 1]} : vector<8x32xf32> to vector<8x8xf32>
    %426 = vector.extract_strided_slice %406 {offsets = [0, 8], sizes = [8, 8], strides = [1, 1]} : vector<8x32xf32> to vector<8x8xf32>
    %cst_167 = arith.constant dense<0.000000e+00> : vector<8x8xf32>
    %427 = tpu.matmul %425, %426, %cst_167 {dimension_numbers = #tpu.dot_dimension_numbers<[1], [1], [0], [0], [0, 0, 1, 0], [], []>} : vector<8x8xf32>, vector<8x8xf32>, vector<8x8xf32> -> vector<8x8xf32>
    %cst_168 = arith.constant 2.82842708 : f32
    %428 = vector.broadcast %cst_168 : f32 to vector<8x8xf32>
    %429 = arith.mulf %427, %428 : vector<8x8xf32>
    %cst_169 = arith.constant dense<0xFF800000> : vector<8xf32>
    %430 = vector.multi_reduction <maximumf>, %429, %cst_169 [1] : vector<8x8xf32> to vector<8xf32>
    %431 = vector.shape_cast %430 : vector<8xf32> to vector<8x1xf32>
    %432 = vector.broadcast %431 : vector<8x1xf32> to vector<8x8xf32>
    %433 = arith.subf %429, %432 : vector<8x8xf32>
    %434 = math.exp %433 : vector<8x8xf32>
    %cst_170 = arith.constant dense<0.000000e+00> : vector<8xf32>
    %435 = vector.multi_reduction <add>, %434, %cst_170 [1] : vector<8x8xf32> to vector<8xf32>
    %436 = vector.shape_cast %435 : vector<8xf32> to vector<8x1xf32>
    %437 = tpu.reciprocal %436 {approx = true} : vector<8x1xf32> -> vector<8x1xf32>
    %438 = vector.broadcast %437 : vector<8x1xf32> to vector<8x8xf32>
    %439 = arith.mulf %434, %438 : vector<8x8xf32>
    %440 = vector.extract_strided_slice %407 {offsets = [0, 8], sizes = [8, 8], strides = [1, 1]} : vector<8x32xf32> to vector<8x8xf32>
    %cst_171 = arith.constant dense<0.000000e+00> : vector<8x8xf32>
    %441 = tpu.matmul %439, %440, %cst_171 {dimension_numbers = #tpu.dot_dimension_numbers<[1], [0], [0], [1], [0, 0, 1, 1], [], []>} : vector<8x8xf32>, vector<8x8xf32>, vector<8x8xf32> -> vector<8x8xf32>
    %442 = vector.extract_strided_slice %402 {offsets = [0, 16], sizes = [8, 8], strides = [1, 1]} : vector<8x32xf32> to vector<8x8xf32>
    %443 = vector.extract_strided_slice %406 {offsets = [0, 16], sizes = [8, 8], strides = [1, 1]} : vector<8x32xf32> to vector<8x8xf32>
    %cst_172 = arith.constant dense<0.000000e+00> : vector<8x8xf32>
    %444 = tpu.matmul %442, %443, %cst_172 {dimension_numbers = #tpu.dot_dimension_numbers<[1], [1], [0], [0], [0, 0, 1, 0], [], []>} : vector<8x8xf32>, vector<8x8xf32>, vector<8x8xf32> -> vector<8x8xf32>
    %cst_173 = arith.constant 2.82842708 : f32
    %445 = vector.broadcast %cst_173 : f32 to vector<8x8xf32>
    %446 = arith.mulf %444, %445 : vector<8x8xf32>
    %cst_174 = arith.constant dense<0xFF800000> : vector<8xf32>
    %447 = vector.multi_reduction <maximumf>, %446, %cst_174 [1] : vector<8x8xf32> to vector<8xf32>
    %448 = vector.shape_cast %447 : vector<8xf32> to vector<8x1xf32>
    %449 = vector.broadcast %448 : vector<8x1xf32> to vector<8x8xf32>
    %450 = arith.subf %446, %449 : vector<8x8xf32>
    %451 = math.exp %450 : vector<8x8xf32>
    %cst_175 = arith.constant dense<0.000000e+00> : vector<8xf32>
    %452 = vector.multi_reduction <add>, %451, %cst_175 [1] : vector<8x8xf32> to vector<8xf32>
    %453 = vector.shape_cast %452 : vector<8xf32> to vector<8x1xf32>
    %454 = tpu.reciprocal %453 {approx = true} : vector<8x1xf32> -> vector<8x1xf32>
    %455 = vector.broadcast %454 : vector<8x1xf32> to vector<8x8xf32>
    %456 = arith.mulf %451, %455 : vector<8x8xf32>
    %457 = vector.extract_strided_slice %407 {offsets = [0, 16], sizes = [8, 8], strides = [1, 1]} : vector<8x32xf32> to vector<8x8xf32>
    %cst_176 = arith.constant dense<0.000000e+00> : vector<8x8xf32>
    %458 = tpu.matmul %456, %457, %cst_176 {dimension_numbers = #tpu.dot_dimension_numbers<[1], [0], [0], [1], [0, 0, 1, 1], [], []>} : vector<8x8xf32>, vector<8x8xf32>, vector<8x8xf32> -> vector<8x8xf32>
    %459 = vector.extract_strided_slice %402 {offsets = [0, 24], sizes = [8, 8], strides = [1, 1]} : vector<8x32xf32> to vector<8x8xf32>
    %460 = vector.extract_strided_slice %406 {offsets = [0, 24], sizes = [8, 8], strides = [1, 1]} : vector<8x32xf32> to vector<8x8xf32>
    %cst_177 = arith.constant dense<0.000000e+00> : vector<8x8xf32>
    %461 = tpu.matmul %459, %460, %cst_177 {dimension_numbers = #tpu.dot_dimension_numbers<[1], [1], [0], [0], [0, 0, 1, 0], [], []>} : vector<8x8xf32>, vector<8x8xf32>, vector<8x8xf32> -> vector<8x8xf32>
    %cst_178 = arith.constant 2.82842708 : f32
    %462 = vector.broadcast %cst_178 : f32 to vector<8x8xf32>
    %463 = arith.mulf %461, %462 : vector<8x8xf32>
    %cst_179 = arith.constant dense<0xFF800000> : vector<8xf32>
    %464 = vector.multi_reduction <maximumf>, %463, %cst_179 [1] : vector<8x8xf32> to vector<8xf32>
    %465 = vector.shape_cast %464 : vector<8xf32> to vector<8x1xf32>
    %466 = vector.broadcast %465 : vector<8x1xf32> to vector<8x8xf32>
    %467 = arith.subf %463, %466 : vector<8x8xf32>
    %468 = math.exp %467 : vector<8x8xf32>
    %cst_180 = arith.constant dense<0.000000e+00> : vector<8xf32>
    %469 = vector.multi_reduction <add>, %468, %cst_180 [1] : vector<8x8xf32> to vector<8xf32>
    %470 = vector.shape_cast %469 : vector<8xf32> to vector<8x1xf32>
    %471 = tpu.reciprocal %470 {approx = true} : vector<8x1xf32> -> vector<8x1xf32>
    %472 = vector.broadcast %471 : vector<8x1xf32> to vector<8x8xf32>
    %473 = arith.mulf %468, %472 : vector<8x8xf32>
    %474 = vector.extract_strided_slice %407 {offsets = [0, 24], sizes = [8, 8], strides = [1, 1]} : vector<8x32xf32> to vector<8x8xf32>
    %cst_181 = arith.constant dense<0.000000e+00> : vector<8x8xf32>
    %475 = tpu.matmul %473, %474, %cst_181 {dimension_numbers = #tpu.dot_dimension_numbers<[1], [0], [0], [1], [0, 0, 1, 1], [], []>} : vector<8x8xf32>, vector<8x8xf32>, vector<8x8xf32> -> vector<8x8xf32>
    %476 = tpu.concatenate %424, %441, %458, %475 in 1 : vector<8x8xf32>, vector<8x8xf32>, vector<8x8xf32>, vector<8x8xf32> -> vector<8x32xf32>
    %c0_182 = arith.constant 0 : index
    %c0_183 = arith.constant 0 : index
    %c0_184 = arith.constant 0 : index
    %477 = vector.load %arg13[%c0_182, %c0_183, %c0_184] : memref<2x32x32xf32, #tpu.memory_space<vmem>>, vector<1x32x32xf32>
    %478 = vector.shape_cast %477 : vector<1x32x32xf32> to vector<32x32xf32>
    %cst_185 = arith.constant dense<0.000000e+00> : vector<8x32xf32>
    %479 = tpu.matmul %476, %478, %cst_185 {dimension_numbers = #tpu.dot_dimension_numbers<[1], [0], [0], [1], [0, 0, 1, 1], [], []>} : vector<8x32xf32>, vector<32x32xf32>, vector<8x32xf32> -> vector<8x32xf32>
    %c3_186 = arith.constant 3 : index
    %c0_187 = arith.constant 0 : index
    %480 = vector.load %arg14[%c3_186, %c0_187] : memref<18x32xf32, #tpu.memory_space<vmem>>, vector<1x32xf32>
    %481 = vector.broadcast %480 : vector<1x32xf32> to vector<8x32xf32>
    %482 = arith.addf %479, %481 : vector<8x32xf32>
    %483 = arith.addf %482, %399 : vector<8x32xf32>
    %c4_188 = arith.constant 4 : index
    %c0_189 = arith.constant 0 : index
    %484 = vector.load %arg14[%c4_188, %c0_189] : memref<18x32xf32, #tpu.memory_space<vmem>>, vector<1x32xf32>
    %c5_190 = arith.constant 5 : index
    %c0_191 = arith.constant 0 : index
    %485 = vector.load %arg14[%c5_190, %c0_191] : memref<18x32xf32, #tpu.memory_space<vmem>>, vector<1x32xf32>
    %cst_192 = arith.constant dense<0.000000e+00> : vector<8xf32>
    %486 = vector.multi_reduction <add>, %483, %cst_192 [1] : vector<8x32xf32> to vector<8xf32>
    %487 = vector.shape_cast %486 : vector<8xf32> to vector<8x1xf32>
    %cst_193 = arith.constant 3.200000e+01 : f32
    %488 = vector.broadcast %cst_193 : f32 to vector<8x1xf32>
    %489 = arith.divf %487, %488 : vector<8x1xf32>
    %490 = vector.broadcast %489 : vector<8x1xf32> to vector<8x32xf32>
    %491 = arith.subf %483, %490 : vector<8x32xf32>
    %492 = arith.mulf %491, %491 : vector<8x32xf32>
    %cst_194 = arith.constant dense<0.000000e+00> : vector<8xf32>
    %493 = vector.multi_reduction <add>, %492, %cst_194 [1] : vector<8x32xf32> to vector<8xf32>
    %494 = vector.shape_cast %493 : vector<8xf32> to vector<8x1xf32>
    %cst_195 = arith.constant 3.200000e+01 : f32
    %495 = vector.broadcast %cst_195 : f32 to vector<8x1xf32>
    %496 = arith.divf %494, %495 : vector<8x1xf32>
    %497 = vector.broadcast %489 : vector<8x1xf32> to vector<8x32xf32>
    %498 = arith.subf %483, %497 : vector<8x32xf32>
    %cst_196 = arith.constant 9.99999974E-6 : f32
    %499 = vector.broadcast %cst_196 : f32 to vector<8x1xf32>
    %500 = arith.addf %496, %499 : vector<8x1xf32>
    %501 = math.rsqrt %500 : vector<8x1xf32>
    %502 = vector.broadcast %501 : vector<8x1xf32> to vector<8x32xf32>
    %503 = arith.mulf %498, %502 : vector<8x32xf32>
    %504 = vector.broadcast %484 : vector<1x32xf32> to vector<8x32xf32>
    %505 = arith.mulf %503, %504 : vector<8x32xf32>
    %506 = vector.broadcast %485 : vector<1x32xf32> to vector<8x32xf32>
    %507 = arith.addf %505, %506 : vector<8x32xf32>
    %c0_197 = arith.constant 0 : index
    %c0_198 = arith.constant 0 : index
    %c0_199 = arith.constant 0 : index
    %508 = vector.load %arg15[%c0_197, %c0_198, %c0_199] : memref<2x32x128xf32, #tpu.memory_space<vmem>>, vector<1x32x128xf32>
    %509 = vector.shape_cast %508 : vector<1x32x128xf32> to vector<32x128xf32>
    %cst_200 = arith.constant dense<0.000000e+00> : vector<8x128xf32>
    %510 = tpu.matmul %507, %509, %cst_200 {dimension_numbers = #tpu.dot_dimension_numbers<[1], [0], [0], [1], [0, 0, 1, 1], [], []>} : vector<8x32xf32>, vector<32x128xf32>, vector<8x128xf32> -> vector<8x128xf32>
    %c0_201 = arith.constant 0 : index
    %c0_202 = arith.constant 0 : index
    %511 = vector.load %arg16[%c0_201, %c0_202] : memref<2x128xf32, #tpu.memory_space<vmem>>, vector<1x128xf32>
    %512 = vector.broadcast %511 : vector<1x128xf32> to vector<8x128xf32>
    %513 = arith.addf %510, %512 : vector<8x128xf32>
    %cst_203 = arith.constant 0.000000e+00 : f32
    %514 = vector.broadcast %cst_203 : f32 to vector<8x128xf32>
    %515 = arith.maximumf %513, %514 : vector<8x128xf32>
    %c0_204 = arith.constant 0 : index
    %c0_205 = arith.constant 0 : index
    %c0_206 = arith.constant 0 : index
    %516 = vector.load %arg17[%c0_204, %c0_205, %c0_206] : memref<2x128x32xf32, #tpu.memory_space<vmem>>, vector<1x128x32xf32>
    %517 = vector.shape_cast %516 : vector<1x128x32xf32> to vector<128x32xf32>
    %cst_207 = arith.constant dense<0.000000e+00> : vector<8x32xf32>
    %518 = tpu.matmul %515, %517, %cst_207 {dimension_numbers = #tpu.dot_dimension_numbers<[1], [0], [0], [1], [0, 0, 1, 1], [], []>} : vector<8x128xf32>, vector<128x32xf32>, vector<8x32xf32> -> vector<8x32xf32>
    %c6_208 = arith.constant 6 : index
    %c0_209 = arith.constant 0 : index
    %519 = vector.load %arg14[%c6_208, %c0_209] : memref<18x32xf32, #tpu.memory_space<vmem>>, vector<1x32xf32>
    %520 = vector.broadcast %519 : vector<1x32xf32> to vector<8x32xf32>
    %521 = arith.addf %518, %520 : vector<8x32xf32>
    %522 = arith.addf %521, %507 : vector<8x32xf32>
    %c7_210 = arith.constant 7 : index
    %c0_211 = arith.constant 0 : index
    %523 = vector.load %arg14[%c7_210, %c0_211] : memref<18x32xf32, #tpu.memory_space<vmem>>, vector<1x32xf32>
    %c8_212 = arith.constant 8 : index
    %c0_213 = arith.constant 0 : index
    %524 = vector.load %arg14[%c8_212, %c0_213] : memref<18x32xf32, #tpu.memory_space<vmem>>, vector<1x32xf32>
    %cst_214 = arith.constant dense<0.000000e+00> : vector<8xf32>
    %525 = vector.multi_reduction <add>, %522, %cst_214 [1] : vector<8x32xf32> to vector<8xf32>
    %526 = vector.shape_cast %525 : vector<8xf32> to vector<8x1xf32>
    %cst_215 = arith.constant 3.200000e+01 : f32
    %527 = vector.broadcast %cst_215 : f32 to vector<8x1xf32>
    %528 = arith.divf %526, %527 : vector<8x1xf32>
    %529 = vector.broadcast %528 : vector<8x1xf32> to vector<8x32xf32>
    %530 = arith.subf %522, %529 : vector<8x32xf32>
    %531 = arith.mulf %530, %530 : vector<8x32xf32>
    %cst_216 = arith.constant dense<0.000000e+00> : vector<8xf32>
    %532 = vector.multi_reduction <add>, %531, %cst_216 [1] : vector<8x32xf32> to vector<8xf32>
    %533 = vector.shape_cast %532 : vector<8xf32> to vector<8x1xf32>
    %cst_217 = arith.constant 3.200000e+01 : f32
    %534 = vector.broadcast %cst_217 : f32 to vector<8x1xf32>
    %535 = arith.divf %533, %534 : vector<8x1xf32>
    %536 = vector.broadcast %528 : vector<8x1xf32> to vector<8x32xf32>
    %537 = arith.subf %522, %536 : vector<8x32xf32>
    %cst_218 = arith.constant 9.99999974E-6 : f32
    %538 = vector.broadcast %cst_218 : f32 to vector<8x1xf32>
    %539 = arith.addf %535, %538 : vector<8x1xf32>
    %540 = math.rsqrt %539 : vector<8x1xf32>
    %541 = vector.broadcast %540 : vector<8x1xf32> to vector<8x32xf32>
    %542 = arith.mulf %537, %541 : vector<8x32xf32>
    %543 = vector.broadcast %523 : vector<1x32xf32> to vector<8x32xf32>
    %544 = arith.mulf %542, %543 : vector<8x32xf32>
    %545 = vector.broadcast %524 : vector<1x32xf32> to vector<8x32xf32>
    %546 = arith.addf %544, %545 : vector<8x32xf32>
    %c1_219 = arith.constant 1 : index
    %c0_220 = arith.constant 0 : index
    %c0_221 = arith.constant 0 : index
    %547 = vector.load %arg9[%c1_219, %c0_220, %c0_221] : memref<2x32x96xf32, #tpu.memory_space<vmem>>, vector<1x32x96xf32>
    %548 = vector.shape_cast %547 : vector<1x32x96xf32> to vector<32x96xf32>
    %cst_222 = arith.constant dense<0.000000e+00> : vector<8x96xf32>
    %549 = tpu.matmul %546, %548, %cst_222 {dimension_numbers = #tpu.dot_dimension_numbers<[1], [0], [0], [1], [0, 0, 1, 1], [], []>} : vector<8x32xf32>, vector<32x96xf32>, vector<8x96xf32> -> vector<8x96xf32>
    %550 = vector.extract_strided_slice %549 {offsets = [0, 0], sizes = [8, 32], strides = [1, 1]} : vector<8x96xf32> to vector<8x32xf32>
    %551 = vector.extract_strided_slice %549 {offsets = [0, 32], sizes = [8, 32], strides = [1, 1]} : vector<8x96xf32> to vector<8x32xf32>
    %552 = vector.extract_strided_slice %549 {offsets = [0, 64], sizes = [8, 32], strides = [1, 1]} : vector<8x96xf32> to vector<8x32xf32>
    %553 = vector.extract_strided_slice %550 {offsets = [0, 0], sizes = [8, 8], strides = [1, 1]} : vector<8x32xf32> to vector<8x8xf32>
    %554 = vector.extract_strided_slice %551 {offsets = [0, 0], sizes = [8, 8], strides = [1, 1]} : vector<8x32xf32> to vector<8x8xf32>
    %cst_223 = arith.constant dense<0.000000e+00> : vector<8x8xf32>
    %555 = tpu.matmul %553, %554, %cst_223 {dimension_numbers = #tpu.dot_dimension_numbers<[1], [1], [0], [0], [0, 0, 1, 0], [], []>} : vector<8x8xf32>, vector<8x8xf32>, vector<8x8xf32> -> vector<8x8xf32>
    %cst_224 = arith.constant 2.82842708 : f32
    %556 = vector.broadcast %cst_224 : f32 to vector<8x8xf32>
    %557 = arith.mulf %555, %556 : vector<8x8xf32>
    %cst_225 = arith.constant dense<0xFF800000> : vector<8xf32>
    %558 = vector.multi_reduction <maximumf>, %557, %cst_225 [1] : vector<8x8xf32> to vector<8xf32>
    %559 = vector.shape_cast %558 : vector<8xf32> to vector<8x1xf32>
    %560 = vector.broadcast %559 : vector<8x1xf32> to vector<8x8xf32>
    %561 = arith.subf %557, %560 : vector<8x8xf32>
    %562 = math.exp %561 : vector<8x8xf32>
    %cst_226 = arith.constant dense<0.000000e+00> : vector<8xf32>
    %563 = vector.multi_reduction <add>, %562, %cst_226 [1] : vector<8x8xf32> to vector<8xf32>
    %564 = vector.shape_cast %563 : vector<8xf32> to vector<8x1xf32>
    %565 = tpu.reciprocal %564 {approx = true} : vector<8x1xf32> -> vector<8x1xf32>
    %566 = vector.broadcast %565 : vector<8x1xf32> to vector<8x8xf32>
    %567 = arith.mulf %562, %566 : vector<8x8xf32>
    %568 = vector.extract_strided_slice %552 {offsets = [0, 0], sizes = [8, 8], strides = [1, 1]} : vector<8x32xf32> to vector<8x8xf32>
    %cst_227 = arith.constant dense<0.000000e+00> : vector<8x8xf32>
    %569 = tpu.matmul %567, %568, %cst_227 {dimension_numbers = #tpu.dot_dimension_numbers<[1], [0], [0], [1], [0, 0, 1, 1], [], []>} : vector<8x8xf32>, vector<8x8xf32>, vector<8x8xf32> -> vector<8x8xf32>
    %570 = vector.extract_strided_slice %550 {offsets = [0, 8], sizes = [8, 8], strides = [1, 1]} : vector<8x32xf32> to vector<8x8xf32>
    %571 = vector.extract_strided_slice %551 {offsets = [0, 8], sizes = [8, 8], strides = [1, 1]} : vector<8x32xf32> to vector<8x8xf32>
    %cst_228 = arith.constant dense<0.000000e+00> : vector<8x8xf32>
    %572 = tpu.matmul %570, %571, %cst_228 {dimension_numbers = #tpu.dot_dimension_numbers<[1], [1], [0], [0], [0, 0, 1, 0], [], []>} : vector<8x8xf32>, vector<8x8xf32>, vector<8x8xf32> -> vector<8x8xf32>
    %cst_229 = arith.constant 2.82842708 : f32
    %573 = vector.broadcast %cst_229 : f32 to vector<8x8xf32>
    %574 = arith.mulf %572, %573 : vector<8x8xf32>
    %cst_230 = arith.constant dense<0xFF800000> : vector<8xf32>
    %575 = vector.multi_reduction <maximumf>, %574, %cst_230 [1] : vector<8x8xf32> to vector<8xf32>
    %576 = vector.shape_cast %575 : vector<8xf32> to vector<8x1xf32>
    %577 = vector.broadcast %576 : vector<8x1xf32> to vector<8x8xf32>
    %578 = arith.subf %574, %577 : vector<8x8xf32>
    %579 = math.exp %578 : vector<8x8xf32>
    %cst_231 = arith.constant dense<0.000000e+00> : vector<8xf32>
    %580 = vector.multi_reduction <add>, %579, %cst_231 [1] : vector<8x8xf32> to vector<8xf32>
    %581 = vector.shape_cast %580 : vector<8xf32> to vector<8x1xf32>
    %582 = tpu.reciprocal %581 {approx = true} : vector<8x1xf32> -> vector<8x1xf32>
    %583 = vector.broadcast %582 : vector<8x1xf32> to vector<8x8xf32>
    %584 = arith.mulf %579, %583 : vector<8x8xf32>
    %585 = vector.extract_strided_slice %552 {offsets = [0, 8], sizes = [8, 8], strides = [1, 1]} : vector<8x32xf32> to vector<8x8xf32>
    %cst_232 = arith.constant dense<0.000000e+00> : vector<8x8xf32>
    %586 = tpu.matmul %584, %585, %cst_232 {dimension_numbers = #tpu.dot_dimension_numbers<[1], [0], [0], [1], [0, 0, 1, 1], [], []>} : vector<8x8xf32>, vector<8x8xf32>, vector<8x8xf32> -> vector<8x8xf32>
    %587 = vector.extract_strided_slice %550 {offsets = [0, 16], sizes = [8, 8], strides = [1, 1]} : vector<8x32xf32> to vector<8x8xf32>
    %588 = vector.extract_strided_slice %551 {offsets = [0, 16], sizes = [8, 8], strides = [1, 1]} : vector<8x32xf32> to vector<8x8xf32>
    %cst_233 = arith.constant dense<0.000000e+00> : vector<8x8xf32>
    %589 = tpu.matmul %587, %588, %cst_233 {dimension_numbers = #tpu.dot_dimension_numbers<[1], [1], [0], [0], [0, 0, 1, 0], [], []>} : vector<8x8xf32>, vector<8x8xf32>, vector<8x8xf32> -> vector<8x8xf32>
    %cst_234 = arith.constant 2.82842708 : f32
    %590 = vector.broadcast %cst_234 : f32 to vector<8x8xf32>
    %591 = arith.mulf %589, %590 : vector<8x8xf32>
    %cst_235 = arith.constant dense<0xFF800000> : vector<8xf32>
    %592 = vector.multi_reduction <maximumf>, %591, %cst_235 [1] : vector<8x8xf32> to vector<8xf32>
    %593 = vector.shape_cast %592 : vector<8xf32> to vector<8x1xf32>
    %594 = vector.broadcast %593 : vector<8x1xf32> to vector<8x8xf32>
    %595 = arith.subf %591, %594 : vector<8x8xf32>
    %596 = math.exp %595 : vector<8x8xf32>
    %cst_236 = arith.constant dense<0.000000e+00> : vector<8xf32>
    %597 = vector.multi_reduction <add>, %596, %cst_236 [1] : vector<8x8xf32> to vector<8xf32>
    %598 = vector.shape_cast %597 : vector<8xf32> to vector<8x1xf32>
    %599 = tpu.reciprocal %598 {approx = true} : vector<8x1xf32> -> vector<8x1xf32>
    %600 = vector.broadcast %599 : vector<8x1xf32> to vector<8x8xf32>
    %601 = arith.mulf %596, %600 : vector<8x8xf32>
    %602 = vector.extract_strided_slice %552 {offsets = [0, 16], sizes = [8, 8], strides = [1, 1]} : vector<8x32xf32> to vector<8x8xf32>
    %cst_237 = arith.constant dense<0.000000e+00> : vector<8x8xf32>
    %603 = tpu.matmul %601, %602, %cst_237 {dimension_numbers = #tpu.dot_dimension_numbers<[1], [0], [0], [1], [0, 0, 1, 1], [], []>} : vector<8x8xf32>, vector<8x8xf32>, vector<8x8xf32> -> vector<8x8xf32>
    %604 = vector.extract_strided_slice %550 {offsets = [0, 24], sizes = [8, 8], strides = [1, 1]} : vector<8x32xf32> to vector<8x8xf32>
    %605 = vector.extract_strided_slice %551 {offsets = [0, 24], sizes = [8, 8], strides = [1, 1]} : vector<8x32xf32> to vector<8x8xf32>
    %cst_238 = arith.constant dense<0.000000e+00> : vector<8x8xf32>
    %606 = tpu.matmul %604, %605, %cst_238 {dimension_numbers = #tpu.dot_dimension_numbers<[1], [1], [0], [0], [0, 0, 1, 0], [], []>} : vector<8x8xf32>, vector<8x8xf32>, vector<8x8xf32> -> vector<8x8xf32>
    %cst_239 = arith.constant 2.82842708 : f32
    %607 = vector.broadcast %cst_239 : f32 to vector<8x8xf32>
    %608 = arith.mulf %606, %607 : vector<8x8xf32>
    %cst_240 = arith.constant dense<0xFF800000> : vector<8xf32>
    %609 = vector.multi_reduction <maximumf>, %608, %cst_240 [1] : vector<8x8xf32> to vector<8xf32>
    %610 = vector.shape_cast %609 : vector<8xf32> to vector<8x1xf32>
    %611 = vector.broadcast %610 : vector<8x1xf32> to vector<8x8xf32>
    %612 = arith.subf %608, %611 : vector<8x8xf32>
    %613 = math.exp %612 : vector<8x8xf32>
    %cst_241 = arith.constant dense<0.000000e+00> : vector<8xf32>
    %614 = vector.multi_reduction <add>, %613, %cst_241 [1] : vector<8x8xf32> to vector<8xf32>
    %615 = vector.shape_cast %614 : vector<8xf32> to vector<8x1xf32>
    %616 = tpu.reciprocal %615 {approx = true} : vector<8x1xf32> -> vector<8x1xf32>
    %617 = vector.broadcast %616 : vector<8x1xf32> to vector<8x8xf32>
    %618 = arith.mulf %613, %617 : vector<8x8xf32>
    %619 = vector.extract_strided_slice %552 {offsets = [0, 24], sizes = [8, 8], strides = [1, 1]} : vector<8x32xf32> to vector<8x8xf32>
    %cst_242 = arith.constant dense<0.000000e+00> : vector<8x8xf32>
    %620 = tpu.matmul %618, %619, %cst_242 {dimension_numbers = #tpu.dot_dimension_numbers<[1], [0], [0], [1], [0, 0, 1, 1], [], []>} : vector<8x8xf32>, vector<8x8xf32>, vector<8x8xf32> -> vector<8x8xf32>
    %621 = tpu.concatenate %569, %586, %603, %620 in 1 : vector<8x8xf32>, vector<8x8xf32>, vector<8x8xf32>, vector<8x8xf32> -> vector<8x32xf32>
    %c1_243 = arith.constant 1 : index
    %c0_244 = arith.constant 0 : index
    %c0_245 = arith.constant 0 : index
    %622 = vector.load %arg10[%c1_243, %c0_244, %c0_245] : memref<2x32x32xf32, #tpu.memory_space<vmem>>, vector<1x32x32xf32>
    %623 = vector.shape_cast %622 : vector<1x32x32xf32> to vector<32x32xf32>
    %cst_246 = arith.constant dense<0.000000e+00> : vector<8x32xf32>
    %624 = tpu.matmul %621, %623, %cst_246 {dimension_numbers = #tpu.dot_dimension_numbers<[1], [0], [0], [1], [0, 0, 1, 1], [], []>} : vector<8x32xf32>, vector<32x32xf32>, vector<8x32xf32> -> vector<8x32xf32>
    %c9_247 = arith.constant 9 : index
    %c0_248 = arith.constant 0 : index
    %625 = vector.load %arg14[%c9_247, %c0_248] : memref<18x32xf32, #tpu.memory_space<vmem>>, vector<1x32xf32>
    %626 = vector.broadcast %625 : vector<1x32xf32> to vector<8x32xf32>
    %627 = arith.addf %624, %626 : vector<8x32xf32>
    %628 = arith.addf %627, %546 : vector<8x32xf32>
    %c10_249 = arith.constant 10 : index
    %c0_250 = arith.constant 0 : index
    %629 = vector.load %arg14[%c10_249, %c0_250] : memref<18x32xf32, #tpu.memory_space<vmem>>, vector<1x32xf32>
    %c11_251 = arith.constant 11 : index
    %c0_252 = arith.constant 0 : index
    %630 = vector.load %arg14[%c11_251, %c0_252] : memref<18x32xf32, #tpu.memory_space<vmem>>, vector<1x32xf32>
    %cst_253 = arith.constant dense<0.000000e+00> : vector<8xf32>
    %631 = vector.multi_reduction <add>, %628, %cst_253 [1] : vector<8x32xf32> to vector<8xf32>
    %632 = vector.shape_cast %631 : vector<8xf32> to vector<8x1xf32>
    %cst_254 = arith.constant 3.200000e+01 : f32
    %633 = vector.broadcast %cst_254 : f32 to vector<8x1xf32>
    %634 = arith.divf %632, %633 : vector<8x1xf32>
    %635 = vector.broadcast %634 : vector<8x1xf32> to vector<8x32xf32>
    %636 = arith.subf %628, %635 : vector<8x32xf32>
    %637 = arith.mulf %636, %636 : vector<8x32xf32>
    %cst_255 = arith.constant dense<0.000000e+00> : vector<8xf32>
    %638 = vector.multi_reduction <add>, %637, %cst_255 [1] : vector<8x32xf32> to vector<8xf32>
    %639 = vector.shape_cast %638 : vector<8xf32> to vector<8x1xf32>
    %cst_256 = arith.constant 3.200000e+01 : f32
    %640 = vector.broadcast %cst_256 : f32 to vector<8x1xf32>
    %641 = arith.divf %639, %640 : vector<8x1xf32>
    %642 = vector.broadcast %634 : vector<8x1xf32> to vector<8x32xf32>
    %643 = arith.subf %628, %642 : vector<8x32xf32>
    %cst_257 = arith.constant 9.99999974E-6 : f32
    %644 = vector.broadcast %cst_257 : f32 to vector<8x1xf32>
    %645 = arith.addf %641, %644 : vector<8x1xf32>
    %646 = math.rsqrt %645 : vector<8x1xf32>
    %647 = vector.broadcast %646 : vector<8x1xf32> to vector<8x32xf32>
    %648 = arith.mulf %643, %647 : vector<8x32xf32>
    %649 = vector.broadcast %629 : vector<1x32xf32> to vector<8x32xf32>
    %650 = arith.mulf %648, %649 : vector<8x32xf32>
    %651 = vector.broadcast %630 : vector<1x32xf32> to vector<8x32xf32>
    %652 = arith.addf %650, %651 : vector<8x32xf32>
    %c1_258 = arith.constant 1 : index
    %c0_259 = arith.constant 0 : index
    %c0_260 = arith.constant 0 : index
    %653 = vector.load %arg11[%c1_258, %c0_259, %c0_260] : memref<2x32x32xf32, #tpu.memory_space<vmem>>, vector<1x32x32xf32>
    %654 = vector.shape_cast %653 : vector<1x32x32xf32> to vector<32x32xf32>
    %cst_261 = arith.constant dense<0.000000e+00> : vector<8x32xf32>
    %655 = tpu.matmul %652, %654, %cst_261 {dimension_numbers = #tpu.dot_dimension_numbers<[1], [0], [0], [1], [0, 0, 1, 1], [], []>} : vector<8x32xf32>, vector<32x32xf32>, vector<8x32xf32> -> vector<8x32xf32>
    %c1_262 = arith.constant 1 : index
    %c0_263 = arith.constant 0 : index
    %c0_264 = arith.constant 0 : index
    %656 = vector.load %arg12[%c1_262, %c0_263, %c0_264] : memref<2x32x64xf32, #tpu.memory_space<vmem>>, vector<1x32x64xf32>
    %657 = vector.shape_cast %656 : vector<1x32x64xf32> to vector<32x64xf32>
    %cst_265 = arith.constant dense<0.000000e+00> : vector<8x64xf32>
    %658 = tpu.matmul %291, %657, %cst_265 {dimension_numbers = #tpu.dot_dimension_numbers<[1], [0], [0], [1], [0, 0, 1, 1], [], []>} : vector<8x32xf32>, vector<32x64xf32>, vector<8x64xf32> -> vector<8x64xf32>
    %659 = vector.extract_strided_slice %658 {offsets = [0, 0], sizes = [8, 32], strides = [1, 1]} : vector<8x64xf32> to vector<8x32xf32>
    %660 = vector.extract_strided_slice %658 {offsets = [0, 32], sizes = [8, 32], strides = [1, 1]} : vector<8x64xf32> to vector<8x32xf32>
    %661 = vector.extract_strided_slice %655 {offsets = [0, 0], sizes = [8, 8], strides = [1, 1]} : vector<8x32xf32> to vector<8x8xf32>
    %662 = vector.extract_strided_slice %659 {offsets = [0, 0], sizes = [8, 8], strides = [1, 1]} : vector<8x32xf32> to vector<8x8xf32>
    %cst_266 = arith.constant dense<0.000000e+00> : vector<8x8xf32>
    %663 = tpu.matmul %661, %662, %cst_266 {dimension_numbers = #tpu.dot_dimension_numbers<[1], [1], [0], [0], [0, 0, 1, 0], [], []>} : vector<8x8xf32>, vector<8x8xf32>, vector<8x8xf32> -> vector<8x8xf32>
    %cst_267 = arith.constant 2.82842708 : f32
    %664 = vector.broadcast %cst_267 : f32 to vector<8x8xf32>
    %665 = arith.mulf %663, %664 : vector<8x8xf32>
    %cst_268 = arith.constant dense<0xFF800000> : vector<8xf32>
    %666 = vector.multi_reduction <maximumf>, %665, %cst_268 [1] : vector<8x8xf32> to vector<8xf32>
    %667 = vector.shape_cast %666 : vector<8xf32> to vector<8x1xf32>
    %668 = vector.broadcast %667 : vector<8x1xf32> to vector<8x8xf32>
    %669 = arith.subf %665, %668 : vector<8x8xf32>
    %670 = math.exp %669 : vector<8x8xf32>
    %cst_269 = arith.constant dense<0.000000e+00> : vector<8xf32>
    %671 = vector.multi_reduction <add>, %670, %cst_269 [1] : vector<8x8xf32> to vector<8xf32>
    %672 = vector.shape_cast %671 : vector<8xf32> to vector<8x1xf32>
    %673 = tpu.reciprocal %672 {approx = true} : vector<8x1xf32> -> vector<8x1xf32>
    %674 = vector.broadcast %673 : vector<8x1xf32> to vector<8x8xf32>
    %675 = arith.mulf %670, %674 : vector<8x8xf32>
    %676 = vector.extract_strided_slice %660 {offsets = [0, 0], sizes = [8, 8], strides = [1, 1]} : vector<8x32xf32> to vector<8x8xf32>
    %cst_270 = arith.constant dense<0.000000e+00> : vector<8x8xf32>
    %677 = tpu.matmul %675, %676, %cst_270 {dimension_numbers = #tpu.dot_dimension_numbers<[1], [0], [0], [1], [0, 0, 1, 1], [], []>} : vector<8x8xf32>, vector<8x8xf32>, vector<8x8xf32> -> vector<8x8xf32>
    %678 = vector.extract_strided_slice %655 {offsets = [0, 8], sizes = [8, 8], strides = [1, 1]} : vector<8x32xf32> to vector<8x8xf32>
    %679 = vector.extract_strided_slice %659 {offsets = [0, 8], sizes = [8, 8], strides = [1, 1]} : vector<8x32xf32> to vector<8x8xf32>
    %cst_271 = arith.constant dense<0.000000e+00> : vector<8x8xf32>
    %680 = tpu.matmul %678, %679, %cst_271 {dimension_numbers = #tpu.dot_dimension_numbers<[1], [1], [0], [0], [0, 0, 1, 0], [], []>} : vector<8x8xf32>, vector<8x8xf32>, vector<8x8xf32> -> vector<8x8xf32>
    %cst_272 = arith.constant 2.82842708 : f32
    %681 = vector.broadcast %cst_272 : f32 to vector<8x8xf32>
    %682 = arith.mulf %680, %681 : vector<8x8xf32>
    %cst_273 = arith.constant dense<0xFF800000> : vector<8xf32>
    %683 = vector.multi_reduction <maximumf>, %682, %cst_273 [1] : vector<8x8xf32> to vector<8xf32>
    %684 = vector.shape_cast %683 : vector<8xf32> to vector<8x1xf32>
    %685 = vector.broadcast %684 : vector<8x1xf32> to vector<8x8xf32>
    %686 = arith.subf %682, %685 : vector<8x8xf32>
    %687 = math.exp %686 : vector<8x8xf32>
    %cst_274 = arith.constant dense<0.000000e+00> : vector<8xf32>
    %688 = vector.multi_reduction <add>, %687, %cst_274 [1] : vector<8x8xf32> to vector<8xf32>
    %689 = vector.shape_cast %688 : vector<8xf32> to vector<8x1xf32>
    %690 = tpu.reciprocal %689 {approx = true} : vector<8x1xf32> -> vector<8x1xf32>
    %691 = vector.broadcast %690 : vector<8x1xf32> to vector<8x8xf32>
    %692 = arith.mulf %687, %691 : vector<8x8xf32>
    %693 = vector.extract_strided_slice %660 {offsets = [0, 8], sizes = [8, 8], strides = [1, 1]} : vector<8x32xf32> to vector<8x8xf32>
    %cst_275 = arith.constant dense<0.000000e+00> : vector<8x8xf32>
    %694 = tpu.matmul %692, %693, %cst_275 {dimension_numbers = #tpu.dot_dimension_numbers<[1], [0], [0], [1], [0, 0, 1, 1], [], []>} : vector<8x8xf32>, vector<8x8xf32>, vector<8x8xf32> -> vector<8x8xf32>
    %695 = vector.extract_strided_slice %655 {offsets = [0, 16], sizes = [8, 8], strides = [1, 1]} : vector<8x32xf32> to vector<8x8xf32>
    %696 = vector.extract_strided_slice %659 {offsets = [0, 16], sizes = [8, 8], strides = [1, 1]} : vector<8x32xf32> to vector<8x8xf32>
    %cst_276 = arith.constant dense<0.000000e+00> : vector<8x8xf32>
    %697 = tpu.matmul %695, %696, %cst_276 {dimension_numbers = #tpu.dot_dimension_numbers<[1], [1], [0], [0], [0, 0, 1, 0], [], []>} : vector<8x8xf32>, vector<8x8xf32>, vector<8x8xf32> -> vector<8x8xf32>
    %cst_277 = arith.constant 2.82842708 : f32
    %698 = vector.broadcast %cst_277 : f32 to vector<8x8xf32>
    %699 = arith.mulf %697, %698 : vector<8x8xf32>
    %cst_278 = arith.constant dense<0xFF800000> : vector<8xf32>
    %700 = vector.multi_reduction <maximumf>, %699, %cst_278 [1] : vector<8x8xf32> to vector<8xf32>
    %701 = vector.shape_cast %700 : vector<8xf32> to vector<8x1xf32>
    %702 = vector.broadcast %701 : vector<8x1xf32> to vector<8x8xf32>
    %703 = arith.subf %699, %702 : vector<8x8xf32>
    %704 = math.exp %703 : vector<8x8xf32>
    %cst_279 = arith.constant dense<0.000000e+00> : vector<8xf32>
    %705 = vector.multi_reduction <add>, %704, %cst_279 [1] : vector<8x8xf32> to vector<8xf32>
    %706 = vector.shape_cast %705 : vector<8xf32> to vector<8x1xf32>
    %707 = tpu.reciprocal %706 {approx = true} : vector<8x1xf32> -> vector<8x1xf32>
    %708 = vector.broadcast %707 : vector<8x1xf32> to vector<8x8xf32>
    %709 = arith.mulf %704, %708 : vector<8x8xf32>
    %710 = vector.extract_strided_slice %660 {offsets = [0, 16], sizes = [8, 8], strides = [1, 1]} : vector<8x32xf32> to vector<8x8xf32>
    %cst_280 = arith.constant dense<0.000000e+00> : vector<8x8xf32>
    %711 = tpu.matmul %709, %710, %cst_280 {dimension_numbers = #tpu.dot_dimension_numbers<[1], [0], [0], [1], [0, 0, 1, 1], [], []>} : vector<8x8xf32>, vector<8x8xf32>, vector<8x8xf32> -> vector<8x8xf32>
    %712 = vector.extract_strided_slice %655 {offsets = [0, 24], sizes = [8, 8], strides = [1, 1]} : vector<8x32xf32> to vector<8x8xf32>
    %713 = vector.extract_strided_slice %659 {offsets = [0, 24], sizes = [8, 8], strides = [1, 1]} : vector<8x32xf32> to vector<8x8xf32>
    %cst_281 = arith.constant dense<0.000000e+00> : vector<8x8xf32>
    %714 = tpu.matmul %712, %713, %cst_281 {dimension_numbers = #tpu.dot_dimension_numbers<[1], [1], [0], [0], [0, 0, 1, 0], [], []>} : vector<8x8xf32>, vector<8x8xf32>, vector<8x8xf32> -> vector<8x8xf32>
    %cst_282 = arith.constant 2.82842708 : f32
    %715 = vector.broadcast %cst_282 : f32 to vector<8x8xf32>
    %716 = arith.mulf %714, %715 : vector<8x8xf32>
    %cst_283 = arith.constant dense<0xFF800000> : vector<8xf32>
    %717 = vector.multi_reduction <maximumf>, %716, %cst_283 [1] : vector<8x8xf32> to vector<8xf32>
    %718 = vector.shape_cast %717 : vector<8xf32> to vector<8x1xf32>
    %719 = vector.broadcast %718 : vector<8x1xf32> to vector<8x8xf32>
    %720 = arith.subf %716, %719 : vector<8x8xf32>
    %721 = math.exp %720 : vector<8x8xf32>
    %cst_284 = arith.constant dense<0.000000e+00> : vector<8xf32>
    %722 = vector.multi_reduction <add>, %721, %cst_284 [1] : vector<8x8xf32> to vector<8xf32>
    %723 = vector.shape_cast %722 : vector<8xf32> to vector<8x1xf32>
    %724 = tpu.reciprocal %723 {approx = true} : vector<8x1xf32> -> vector<8x1xf32>
    %725 = vector.broadcast %724 : vector<8x1xf32> to vector<8x8xf32>
    %726 = arith.mulf %721, %725 : vector<8x8xf32>
    %727 = vector.extract_strided_slice %660 {offsets = [0, 24], sizes = [8, 8], strides = [1, 1]} : vector<8x32xf32> to vector<8x8xf32>
    %cst_285 = arith.constant dense<0.000000e+00> : vector<8x8xf32>
    %728 = tpu.matmul %726, %727, %cst_285 {dimension_numbers = #tpu.dot_dimension_numbers<[1], [0], [0], [1], [0, 0, 1, 1], [], []>} : vector<8x8xf32>, vector<8x8xf32>, vector<8x8xf32> -> vector<8x8xf32>
    %729 = tpu.concatenate %677, %694, %711, %728 in 1 : vector<8x8xf32>, vector<8x8xf32>, vector<8x8xf32>, vector<8x8xf32> -> vector<8x32xf32>
    %c1_286 = arith.constant 1 : index
    %c0_287 = arith.constant 0 : index
    %c0_288 = arith.constant 0 : index
    %730 = vector.load %arg13[%c1_286, %c0_287, %c0_288] : memref<2x32x32xf32, #tpu.memory_space<vmem>>, vector<1x32x32xf32>
    %731 = vector.shape_cast %730 : vector<1x32x32xf32> to vector<32x32xf32>
    %cst_289 = arith.constant dense<0.000000e+00> : vector<8x32xf32>
    %732 = tpu.matmul %729, %731, %cst_289 {dimension_numbers = #tpu.dot_dimension_numbers<[1], [0], [0], [1], [0, 0, 1, 1], [], []>} : vector<8x32xf32>, vector<32x32xf32>, vector<8x32xf32> -> vector<8x32xf32>
    %c12 = arith.constant 12 : index
    %c0_290 = arith.constant 0 : index
    %733 = vector.load %arg14[%c12, %c0_290] : memref<18x32xf32, #tpu.memory_space<vmem>>, vector<1x32xf32>
    %734 = vector.broadcast %733 : vector<1x32xf32> to vector<8x32xf32>
    %735 = arith.addf %732, %734 : vector<8x32xf32>
    %736 = arith.addf %735, %652 : vector<8x32xf32>
    %c13 = arith.constant 13 : index
    %c0_291 = arith.constant 0 : index
    %737 = vector.load %arg14[%c13, %c0_291] : memref<18x32xf32, #tpu.memory_space<vmem>>, vector<1x32xf32>
    %c14 = arith.constant 14 : index
    %c0_292 = arith.constant 0 : index
    %738 = vector.load %arg14[%c14, %c0_292] : memref<18x32xf32, #tpu.memory_space<vmem>>, vector<1x32xf32>
    %cst_293 = arith.constant dense<0.000000e+00> : vector<8xf32>
    %739 = vector.multi_reduction <add>, %736, %cst_293 [1] : vector<8x32xf32> to vector<8xf32>
    %740 = vector.shape_cast %739 : vector<8xf32> to vector<8x1xf32>
    %cst_294 = arith.constant 3.200000e+01 : f32
    %741 = vector.broadcast %cst_294 : f32 to vector<8x1xf32>
    %742 = arith.divf %740, %741 : vector<8x1xf32>
    %743 = vector.broadcast %742 : vector<8x1xf32> to vector<8x32xf32>
    %744 = arith.subf %736, %743 : vector<8x32xf32>
    %745 = arith.mulf %744, %744 : vector<8x32xf32>
    %cst_295 = arith.constant dense<0.000000e+00> : vector<8xf32>
    %746 = vector.multi_reduction <add>, %745, %cst_295 [1] : vector<8x32xf32> to vector<8xf32>
    %747 = vector.shape_cast %746 : vector<8xf32> to vector<8x1xf32>
    %cst_296 = arith.constant 3.200000e+01 : f32
    %748 = vector.broadcast %cst_296 : f32 to vector<8x1xf32>
    %749 = arith.divf %747, %748 : vector<8x1xf32>
    %750 = vector.broadcast %742 : vector<8x1xf32> to vector<8x32xf32>
    %751 = arith.subf %736, %750 : vector<8x32xf32>
    %cst_297 = arith.constant 9.99999974E-6 : f32
    %752 = vector.broadcast %cst_297 : f32 to vector<8x1xf32>
    %753 = arith.addf %749, %752 : vector<8x1xf32>
    %754 = math.rsqrt %753 : vector<8x1xf32>
    %755 = vector.broadcast %754 : vector<8x1xf32> to vector<8x32xf32>
    %756 = arith.mulf %751, %755 : vector<8x32xf32>
    %757 = vector.broadcast %737 : vector<1x32xf32> to vector<8x32xf32>
    %758 = arith.mulf %756, %757 : vector<8x32xf32>
    %759 = vector.broadcast %738 : vector<1x32xf32> to vector<8x32xf32>
    %760 = arith.addf %758, %759 : vector<8x32xf32>
    %c1_298 = arith.constant 1 : index
    %c0_299 = arith.constant 0 : index
    %c0_300 = arith.constant 0 : index
    %761 = vector.load %arg15[%c1_298, %c0_299, %c0_300] : memref<2x32x128xf32, #tpu.memory_space<vmem>>, vector<1x32x128xf32>
    %762 = vector.shape_cast %761 : vector<1x32x128xf32> to vector<32x128xf32>
    %cst_301 = arith.constant dense<0.000000e+00> : vector<8x128xf32>
    %763 = tpu.matmul %760, %762, %cst_301 {dimension_numbers = #tpu.dot_dimension_numbers<[1], [0], [0], [1], [0, 0, 1, 1], [], []>} : vector<8x32xf32>, vector<32x128xf32>, vector<8x128xf32> -> vector<8x128xf32>
    %c1_302 = arith.constant 1 : index
    %c0_303 = arith.constant 0 : index
    %764 = vector.load %arg16[%c1_302, %c0_303] : memref<2x128xf32, #tpu.memory_space<vmem>>, vector<1x128xf32>
    %765 = vector.broadcast %764 : vector<1x128xf32> to vector<8x128xf32>
    %766 = arith.addf %763, %765 : vector<8x128xf32>
    %cst_304 = arith.constant 0.000000e+00 : f32
    %767 = vector.broadcast %cst_304 : f32 to vector<8x128xf32>
    %768 = arith.maximumf %766, %767 : vector<8x128xf32>
    %c1_305 = arith.constant 1 : index
    %c0_306 = arith.constant 0 : index
    %c0_307 = arith.constant 0 : index
    %769 = vector.load %arg17[%c1_305, %c0_306, %c0_307] : memref<2x128x32xf32, #tpu.memory_space<vmem>>, vector<1x128x32xf32>
    %770 = vector.shape_cast %769 : vector<1x128x32xf32> to vector<128x32xf32>
    %cst_308 = arith.constant dense<0.000000e+00> : vector<8x32xf32>
    %771 = tpu.matmul %768, %770, %cst_308 {dimension_numbers = #tpu.dot_dimension_numbers<[1], [0], [0], [1], [0, 0, 1, 1], [], []>} : vector<8x128xf32>, vector<128x32xf32>, vector<8x32xf32> -> vector<8x32xf32>
    %c15 = arith.constant 15 : index
    %c0_309 = arith.constant 0 : index
    %772 = vector.load %arg14[%c15, %c0_309] : memref<18x32xf32, #tpu.memory_space<vmem>>, vector<1x32xf32>
    %773 = vector.broadcast %772 : vector<1x32xf32> to vector<8x32xf32>
    %774 = arith.addf %771, %773 : vector<8x32xf32>
    %775 = arith.addf %774, %760 : vector<8x32xf32>
    %c16 = arith.constant 16 : index
    %c0_310 = arith.constant 0 : index
    %776 = vector.load %arg14[%c16, %c0_310] : memref<18x32xf32, #tpu.memory_space<vmem>>, vector<1x32xf32>
    %c17 = arith.constant 17 : index
    %c0_311 = arith.constant 0 : index
    %777 = vector.load %arg14[%c17, %c0_311] : memref<18x32xf32, #tpu.memory_space<vmem>>, vector<1x32xf32>
    %cst_312 = arith.constant dense<0.000000e+00> : vector<8xf32>
    %778 = vector.multi_reduction <add>, %775, %cst_312 [1] : vector<8x32xf32> to vector<8xf32>
    %779 = vector.shape_cast %778 : vector<8xf32> to vector<8x1xf32>
    %cst_313 = arith.constant 3.200000e+01 : f32
    %780 = vector.broadcast %cst_313 : f32 to vector<8x1xf32>
    %781 = arith.divf %779, %780 : vector<8x1xf32>
    %782 = vector.broadcast %781 : vector<8x1xf32> to vector<8x32xf32>
    %783 = arith.subf %775, %782 : vector<8x32xf32>
    %784 = arith.mulf %783, %783 : vector<8x32xf32>
    %cst_314 = arith.constant dense<0.000000e+00> : vector<8xf32>
    %785 = vector.multi_reduction <add>, %784, %cst_314 [1] : vector<8x32xf32> to vector<8xf32>
    %786 = vector.shape_cast %785 : vector<8xf32> to vector<8x1xf32>
    %cst_315 = arith.constant 3.200000e+01 : f32
    %787 = vector.broadcast %cst_315 : f32 to vector<8x1xf32>
    %788 = arith.divf %786, %787 : vector<8x1xf32>
    %789 = vector.broadcast %781 : vector<8x1xf32> to vector<8x32xf32>
    %790 = arith.subf %775, %789 : vector<8x32xf32>
    %cst_316 = arith.constant 9.99999974E-6 : f32
    %791 = vector.broadcast %cst_316 : f32 to vector<8x1xf32>
    %792 = arith.addf %788, %791 : vector<8x1xf32>
    %793 = math.rsqrt %792 : vector<8x1xf32>
    %794 = vector.broadcast %793 : vector<8x1xf32> to vector<8x32xf32>
    %795 = arith.mulf %790, %794 : vector<8x32xf32>
    %796 = vector.broadcast %776 : vector<1x32xf32> to vector<8x32xf32>
    %797 = arith.mulf %795, %796 : vector<8x32xf32>
    %798 = vector.broadcast %777 : vector<1x32xf32> to vector<8x32xf32>
    %799 = arith.addf %797, %798 : vector<8x32xf32>
    %c0_317 = arith.constant 0 : index
    %c0_318 = arith.constant 0 : index
    %800 = vector.load %arg18[%c0_317, %c0_318] : memref<32x128xf32, #tpu.memory_space<vmem>>, vector<32x128xf32>
    %cst_319 = arith.constant dense<0.000000e+00> : vector<8x128xf32>
    %801 = tpu.matmul %799, %800, %cst_319 {dimension_numbers = #tpu.dot_dimension_numbers<[1], [0], [0], [1], [0, 0, 1, 1], [], []>} : vector<8x32xf32>, vector<32x128xf32>, vector<8x128xf32> -> vector<8x128xf32>
    %c0_320 = arith.constant 0 : index
    %c0_321 = arith.constant 0 : index
    %802 = vector.load %arg19[%c0_320, %c0_321] : memref<1x128xf32, #tpu.memory_space<vmem>>, vector<1x128xf32>
    %803 = vector.broadcast %802 : vector<1x128xf32> to vector<8x128xf32>
    %804 = arith.addf %801, %803 : vector<8x128xf32>
    %c0_322 = arith.constant 0 : index
    %c0_323 = arith.constant 0 : index
    %c0_324 = arith.constant 0 : index
    %805 = vector.load %arg20[%c0_322, %c0_323, %c0_324] : memref<1x8x128xf32, #tpu.memory_space<vmem>>, vector<1x8x128xf32>
    %806 = vector.shape_cast %805 : vector<1x8x128xf32> to vector<8x128xf32>
    %807 = vector.shape_cast %804 : vector<8x128xf32> to vector<1x8x128xf32>
    tpu.vector_store %arg20[%c0_322, %c0_323, %c0_324], %807 {strides = array<i32>} : memref<1x8x128xf32, #tpu.memory_space<vmem>>, vector<1x8x128xf32>,
    return
  }
  func.func @transform_0(%arg0: i32) -> (i32, i32, i32) {
    %c0_i32 = arith.constant 0 : i32
    %c0_i32_0 = arith.constant 0 : i32
    %c0_i32_1 = arith.constant 0 : i32
    return %arg0, %c0_i32, %c0_i32_0 : i32, i32, i32
  }
  func.func @transform_1(%arg0: i32) -> (i32, i32, i32) {
    %c0_i32 = arith.constant 0 : i32
    %c0_i32_0 = arith.constant 0 : i32
    %c0_i32_1 = arith.constant 0 : i32
    return %arg0, %c0_i32, %c0_i32_0 : i32, i32, i32
  }
  func.func @transform_2(%arg0: i32) -> (i32, i32, i32) {
    %c0_i32 = arith.constant 0 : i32
    %c0_i32_0 = arith.constant 0 : i32
    %c0_i32_1 = arith.constant 0 : i32
    %c0_i32_2 = arith.constant 0 : i32
    return %c0_i32, %c0_i32_0, %c0_i32_1 : i32, i32, i32
  }
  func.func @transform_3(%arg0: i32) -> (i32, i32, i32) {
    %c0_i32 = arith.constant 0 : i32
    %c0_i32_0 = arith.constant 0 : i32
    %c0_i32_1 = arith.constant 0 : i32
    %c0_i32_2 = arith.constant 0 : i32
    return %c0_i32, %c0_i32_0, %c0_i32_1 : i32, i32, i32
  }
  func.func @transform_4(%arg0: i32) -> (i32, i32) {
    %c0_i32 = arith.constant 0 : i32
    %c0_i32_0 = arith.constant 0 : i32
    %c0_i32_1 = arith.constant 0 : i32
    return %c0_i32, %c0_i32_0 : i32, i32
  }
  func.func @transform_5(%arg0: i32) -> (i32, i32, i32) {
    %c0_i32 = arith.constant 0 : i32
    %c0_i32_0 = arith.constant 0 : i32
    %c0_i32_1 = arith.constant 0 : i32
    %c0_i32_2 = arith.constant 0 : i32
    return %c0_i32, %c0_i32_0, %c0_i32_1 : i32, i32, i32
  }
  func.func @transform_6(%arg0: i32) -> (i32, i32) {
    %c0_i32 = arith.constant 0 : i32
    %c0_i32_0 = arith.constant 0 : i32
    %c0_i32_1 = arith.constant 0 : i32
    return %c0_i32, %c0_i32_0 : i32, i32
  }
  func.func @transform_7(%arg0: i32) -> (i32, i32, i32) {
    %c0_i32 = arith.constant 0 : i32
    %c0_i32_0 = arith.constant 0 : i32
    %c0_i32_1 = arith.constant 0 : i32
    %c0_i32_2 = arith.constant 0 : i32
    return %c0_i32, %c0_i32_0, %c0_i32_1 : i32, i32, i32
  }
  func.func @transform_8(%arg0: i32) -> (i32, i32, i32) {
    %c0_i32 = arith.constant 0 : i32
    %c0_i32_0 = arith.constant 0 : i32
    %c0_i32_1 = arith.constant 0 : i32
    %c0_i32_2 = arith.constant 0 : i32
    return %c0_i32, %c0_i32_0, %c0_i32_1 : i32, i32, i32
  }
  func.func @transform_9(%arg0: i32) -> (i32, i32, i32) {
    %c0_i32 = arith.constant 0 : i32
    %c0_i32_0 = arith.constant 0 : i32
    %c0_i32_1 = arith.constant 0 : i32
    %c0_i32_2 = arith.constant 0 : i32
    return %c0_i32, %c0_i32_0, %c0_i32_1 : i32, i32, i32
  }
  func.func @transform_10(%arg0: i32) -> (i32, i32, i32) {
    %c0_i32 = arith.constant 0 : i32
    %c0_i32_0 = arith.constant 0 : i32
    %c0_i32_1 = arith.constant 0 : i32
    %c0_i32_2 = arith.constant 0 : i32
    return %c0_i32, %c0_i32_0, %c0_i32_1 : i32, i32, i32
  }
  func.func @transform_11(%arg0: i32) -> (i32, i32, i32) {
    %c0_i32 = arith.constant 0 : i32
    %c0_i32_0 = arith.constant 0 : i32
    %c0_i32_1 = arith.constant 0 : i32
    %c0_i32_2 = arith.constant 0 : i32
    return %c0_i32, %c0_i32_0, %c0_i32_1 : i32, i32, i32
  }
  func.func @transform_12(%arg0: i32) -> (i32, i32, i32) {
    %c0_i32 = arith.constant 0 : i32
    %c0_i32_0 = arith.constant 0 : i32
    %c0_i32_1 = arith.constant 0 : i32
    %c0_i32_2 = arith.constant 0 : i32
    return %c0_i32, %c0_i32_0, %c0_i32_1 : i32, i32, i32
  }
  func.func @transform_13(%arg0: i32) -> (i32, i32) {
    %c0_i32 = arith.constant 0 : i32
    %c0_i32_0 = arith.constant 0 : i32
    %c0_i32_1 = arith.constant 0 : i32
    return %c0_i32, %c0_i32_0 : i32, i32
  }
  func.func @transform_14(%arg0: i32) -> (i32, i32, i32) {
    %c0_i32 = arith.constant 0 : i32
    %c0_i32_0 = arith.constant 0 : i32
    %c0_i32_1 = arith.constant 0 : i32
    %c0_i32_2 = arith.constant 0 : i32
    return %c0_i32, %c0_i32_0, %c0_i32_1 : i32, i32, i32
  }
  func.func @transform_15(%arg0: i32) -> (i32, i32) {
    %c0_i32 = arith.constant 0 : i32
    %c0_i32_0 = arith.constant 0 : i32
    %c0_i32_1 = arith.constant 0 : i32
    return %c0_i32, %c0_i32_0 : i32, i32
  }
  func.func @transform_16(%arg0: i32) -> (i32, i32, i32) {
    %c0_i32 = arith.constant 0 : i32
    %c0_i32_0 = arith.constant 0 : i32
    %c0_i32_1 = arith.constant 0 : i32
    %c0_i32_2 = arith.constant 0 : i32
    return %c0_i32, %c0_i32_0, %c0_i32_1 : i32, i32, i32
  }
  func.func @transform_17(%arg0: i32) -> (i32, i32) {
    %c0_i32 = arith.constant 0 : i32
    %c0_i32_0 = arith.constant 0 : i32
    %c0_i32_1 = arith.constant 0 : i32
    return %c0_i32, %c0_i32_0 : i32, i32
  }
  func.func @transform_18(%arg0: i32) -> (i32, i32) {
    %c0_i32 = arith.constant 0 : i32
    %c0_i32_0 = arith.constant 0 : i32
    %c0_i32_1 = arith.constant 0 : i32
    return %c0_i32, %c0_i32_0 : i32, i32
  }
  func.func @transform_19(%arg0: i32) -> (i32, i32, i32) {
    %c0_i32 = arith.constant 0 : i32
    %c0_i32_0 = arith.constant 0 : i32
    %c0_i32_1 = arith.constant 0 : i32
    return %arg0, %c0_i32, %c0_i32_0 : i32, i32, i32
  }
}

</mosaic_0001>

<llo_original>
// kernel: transformer_apply.1
$region0: #{transformer_apply.1}
  #allocation0 [shape = 'u32[]', space=smem, size = 0x4, offset = 0x4, fixed_abs, tag = 'smem constant byte address 0x4 - core index']
  #allocation1 [shape = 'u32[144,128]{1,0:T(1,128)}', space=vmem, size = 0x12000, scoped, tag = 'internal scratch']
  %s0 = inlined_call_operand.vmem [shape: f32[2,8,32], index: 0, kind: input, shape index: {}]
  %s1 = inlined_call_operand.vmem [shape: f32[2,8,32], index: 1, kind: input, shape index: {}]
  %s2 = inlined_call_operand.vmem [shape: f32[2,32,96], index: 2, kind: input, shape index: {}]
  %s3 = inlined_call_operand.vmem [shape: f32[2,32,32], index: 3, kind: input, shape index: {}]
  %s4 = inlined_call_operand.vmem [shape: f32[12,32], index: 4, kind: input, shape index: {}]
  %s5 = inlined_call_operand.vmem [shape: f32[2,32,128], index: 5, kind: input, shape index: {}]
  %s6 = inlined_call_operand.vmem [shape: f32[2,128], index: 6, kind: input, shape index: {}]
  %s7 = inlined_call_operand.vmem [shape: f32[2,128,32], index: 7, kind: input, shape index: {}]
  %s8 = inlined_call_operand.vmem [shape: f32[2,32,96], index: 8, kind: input, shape index: {}]
  %s9 = inlined_call_operand.vmem [shape: f32[2,32,32], index: 9, kind: input, shape index: {}]
  %s10 = inlined_call_operand.vmem [shape: f32[2,32,32], index: 10, kind: input, shape index: {}]
  %s11 = inlined_call_operand.vmem [shape: f32[2,32,64], index: 11, kind: input, shape index: {}]
  %s12 = inlined_call_operand.vmem [shape: f32[2,32,32], index: 12, kind: input, shape index: {}]
  %s13 = inlined_call_operand.vmem [shape: f32[18,32], index: 13, kind: input, shape index: {}]
  %s14 = inlined_call_operand.vmem [shape: f32[2,32,128], index: 14, kind: input, shape index: {}]
  %s15 = inlined_call_operand.vmem [shape: f32[2,128], index: 15, kind: input, shape index: {}]
  %s16 = inlined_call_operand.vmem [shape: f32[2,128,32], index: 16, kind: input, shape index: {}]
  %s17 = inlined_call_operand.vmem [shape: f32[32,128], index: 17, kind: input, shape index: {}]
  %s18 = inlined_call_operand.vmem [shape: f32[1,128], index: 18, kind: input, shape index: {}]
  %s19 = inlined_call_operand.hbm [shape: f32[2,8,128], index: 19, kind: output, shape index: {}]
  %s20 = sld [smem:[#allocation0]]
  $region109: #{transformer_apply.1} parent=0
    _
  %s22 = ssub.s32 1, %s20
  %s23 = scalar_select 0, %s22, %s20
  $region1: #{transformer_apply.1} parent=0
    #allocation2 [shape = 'u8[8192]{0}', space=vmem, size = 0x2000, scoped, tag = 'output window, operand 0']
    #allocation3 [shape = 's32[2]{0}', space=sflag, size = 0x8, scoped, tag = 'scoped memory for transformer_apply.1']
    %24 = vsyncpa [#allocation3], 0
    %s25 = scalar_lea.sflag [#allocation3], 1
    %26 = vsyncpa %s25, 0
    loop: start=0, step=1, limit=4
    $region2: #{transformer_apply.1} parent=1 // loop_pre_header
      _
    $region3: #{transformer_apply.1} parent=1 // loop_header
      %s28 = sphi 0, %s32
      %p29 = scmp.ge.s32.totalorder %s28, 4
      %s38 = sphi 0, %s40
      %s41 = sphi 0, %s38
      %s42 = sphi 0, %s41
      %s58 = sphi 0, %s42
      %s64 = sphi 0, %s66
      %s67 = sphi 0, %s64
      %s68 = sphi 0, %s67
      %s84 = sphi 0, %s68
      %s88 = sphi 0, %s88
      %s90 = sphi 0, %s88
      %s91 = sphi 0, %s90
      %s105 = sphi 0, %s91
      %s109 = sphi 0, %s109
      %s111 = sphi 0, %s109
      %s112 = sphi 0, %s111
      %s126 = sphi 0, %s112
      %s130 = sphi 0, %s130
      %s132 = sphi 0, %s130
      %s133 = sphi 0, %s132
      %s147 = sphi 0, %s133
      %s151 = sphi 0, %s151
      %s153 = sphi 0, %s151
      %s154 = sphi 0, %s153
      %s168 = sphi 0, %s154
      %s172 = sphi 0, %s172
      %s174 = sphi 0, %s172
      %s175 = sphi 0, %s174
      %s189 = sphi 0, %s175
      %s193 = sphi 0, %s193
      %s195 = sphi 0, %s193
      %s196 = sphi 0, %s195
      %s210 = sphi 0, %s196
      %s214 = sphi 0, %s214
      %s216 = sphi 0, %s214
      %s217 = sphi 0, %s216
      %s231 = sphi 0, %s217
      %s235 = sphi 0, %s235
      %s237 = sphi 0, %s235
      %s238 = sphi 0, %s237
      %s252 = sphi 0, %s238
      %s256 = sphi 0, %s256
      %s258 = sphi 0, %s256
      %s259 = sphi 0, %s258
      %s273 = sphi 0, %s259
      %s277 = sphi 0, %s277
      %s279 = sphi 0, %s277
      %s280 = sphi 0, %s279
      %s294 = sphi 0, %s280
      %s298 = sphi 0, %s298
      %s300 = sphi 0, %s298
      %s301 = sphi 0, %s300
      %s315 = sphi 0, %s301
      %s319 = sphi 0, %s319
      %s321 = sphi 0, %s319
      %s322 = sphi 0, %s321
      %s336 = sphi 0, %s322
      %s340 = sphi 0, %s340
      %s342 = sphi 0, %s340
      %s343 = sphi 0, %s342
      %s357 = sphi 0, %s343
      %s361 = sphi 0, %s361
      %s363 = sphi 0, %s361
      %s364 = sphi 0, %s363
      %s378 = sphi 0, %s364
      %s382 = sphi 0, %s382
      %s384 = sphi 0, %s382
      %s385 = sphi 0, %s384
      %s399 = sphi 0, %s385
      %s403 = sphi 0, %s403
      %s405 = sphi 0, %s403
      %s406 = sphi 0, %s405
      %s420 = sphi 0, %s406
      %s424 = sphi 0, %s424
      %s426 = sphi 0, %s424
      %s427 = sphi 0, %s426
      %s441 = sphi 0, %s427
      %s447 = sphi 0, %s449
      %s450 = sphi 0, %s447
      %s451 = sphi 0, %s450
      %s467 = sphi 0, %s451
    $region4: #{transformer_apply.1} parent=1 // loop_header_branch
      %31 = sbr.rel (%p29) target = $region8
    $region5: #{transformer_apply.1} parent=1 // loop_body
      %s33 = ssub.s32 %s28, 1
      %s34 = ssub.s32 %s28, 2
      %s35 = sadd.s32 %s28, 1
      %s36 = ssub.s32 %s28, %s35
      %p37 = scmp.eq.s32.totalorder %s36, 0
      %s39 = sadd.s32 %s38, 1
      %s40 = scalar_select %p37, %s38, %s39
      %p43 = pneg %p37
      %p44 = scmp.eq.s32.totalorder %s28, 1
      %p45 = por %p43, %p44
      %p46 = scmp.ne.s32.totalorder %s38, %s41
      %p47 = scmp.eq.s32.totalorder %s28, 0
      %p48 = por %p46, %p47
      %p49 = scmp.ne.s32.totalorder %s38, %s41
      %p50 = scmp.eq.s32.totalorder %s33, 1
      %p51 = por %p49, %p50
      %p52 = scmp.ne.s32.totalorder %s41, %s42
      %p53 = scmp.eq.s32.totalorder %s33, 0
      %p54 = por %p52, %p53
      %p55 = scmp.ne.s32.totalorder %s41, %s42
      %p56 = scmp.eq.s32.totalorder %s34, 1
      %p57 = por %p55, %p56
      %p59 = scmp.ne.s32.totalorder %s42, %s58
      %p60 = scmp.eq.s32.totalorder %s34, 0
      %p61 = por %p59, %p60
      %s62 = ssub.s32 %s28, %s35
      %p63 = scmp.eq.s32.totalorder %s62, 0
      %s65 = sadd.s32 %s64, 1
      %s66 = scalar_select %p63, %s64, %s65
      %p69 = pneg %p63
      %p70 = scmp.eq.s32.totalorder %s28, 1
      %p71 = por %p69, %p70
      %p72 = scmp.ne.s32.totalorder %s64, %s67
      %p73 = scmp.eq.s32.totalorder %s28, 0
      %p74 = por %p72, %p73
      %p75 = scmp.ne.s32.totalorder %s64, %s67
      %p76 = scmp.eq.s32.totalorder %s33, 1
      %p77 = por %p75, %p76
      %p78 = scmp.ne.s32.totalorder %s67, %s68
      %p79 = scmp.eq.s32.totalorder %s33, 0
      %p80 = por %p78, %p79
      %p81 = scmp.ne.s32.totalorder %s67, %s68
      %p82 = scmp.eq.s32.totalorder %s34, 1
      %p83 = por %p81, %p82
      %p85 = scmp.ne.s32.totalorder %s68, %s84
      %p86 = scmp.eq.s32.totalorder %s34, 0
      %p87 = por %p85, %p86
      %s89 = sadd.s32 %s88, 1
      %p92 = scmp.eq.s32.totalorder %s28, 1
      %p93 = scmp.ne.s32.totalorder %s88, %s90
      %p94 = scmp.eq.s32.totalorder %s28, 0
      %p95 = por %p93, %p94
      %p96 = scmp.ne.s32.totalorder %s88, %s90
      %p97 = scmp.eq.s32.totalorder %s33, 1
      %p98 = por %p96, %p97
      %p99 = scmp.ne.s32.totalorder %s90, %s91
      %p100 = scmp.eq.s32.totalorder %s33, 0
      %p101 = por %p99, %p100
      %p102 = scmp.ne.s32.totalorder %s90, %s91
      %p103 = scmp.eq.s32.totalorder %s34, 1
      %p104 = por %p102, %p103
      %p106 = scmp.ne.s32.totalorder %s91, %s105
      %p107 = scmp.eq.s32.totalorder %s34, 0
      %p108 = por %p106, %p107
      %s110 = sadd.s32 %s109, 1
      %p113 = scmp.eq.s32.totalorder %s28, 1
      %p114 = scmp.ne.s32.totalorder %s109, %s111
      %p115 = scmp.eq.s32.totalorder %s28, 0
      %p116 = por %p114, %p115
      %p117 = scmp.ne.s32.totalorder %s109, %s111
      %p118 = scmp.eq.s32.totalorder %s33, 1
      %p119 = por %p117, %p118
      %p120 = scmp.ne.s32.totalorder %s111, %s112
      %p121 = scmp.eq.s32.totalorder %s33, 0
      %p122 = por %p120, %p121
      %p123 = scmp.ne.s32.totalorder %s111, %s112
      %p124 = scmp.eq.s32.totalorder %s34, 1
      %p125 = por %p123, %p124
      %p127 = scmp.ne.s32.totalorder %s112, %s126
      %p128 = scmp.eq.s32.totalorder %s34, 0
      %p129 = por %p127, %p128
      %s131 = sadd.s32 %s130, 1
      %p134 = scmp.eq.s32.totalorder %s28, 1
      %p135 = scmp.ne.s32.totalorder %s130, %s132
      %p136 = scmp.eq.s32.totalorder %s28, 0
      %p137 = por %p135, %p136
      %p138 = scmp.ne.s32.totalorder %s130, %s132
      %p139 = scmp.eq.s32.totalorder %s33, 1
      %p140 = por %p138, %p139
      %p141 = scmp.ne.s32.totalorder %s132, %s133
      %p142 = scmp.eq.s32.totalorder %s33, 0
      %p143 = por %p141, %p142
      %p144 = scmp.ne.s32.totalorder %s132, %s133
      %p145 = scmp.eq.s32.totalorder %s34, 1
      %p146 = por %p144, %p145
      %p148 = scmp.ne.s32.totalorder %s133, %s147
      %p149 = scmp.eq.s32.totalorder %s34, 0
      %p150 = por %p148, %p149
      %s152 = sadd.s32 %s151, 1
      %p155 = scmp.eq.s32.totalorder %s28, 1
      %p156 = scmp.ne.s32.totalorder %s151, %s153
      %p157 = scmp.eq.s32.totalorder %s28, 0
      %p158 = por %p156, %p157
      %p159 = scmp.ne.s32.totalorder %s151, %s153
      %p160 = scmp.eq.s32.totalorder %s33, 1
      %p161 = por %p159, %p160
      %p162 = scmp.ne.s32.totalorder %s153, %s154
      %p163 = scmp.eq.s32.totalorder %s33, 0
      %p164 = por %p162, %p163
      %p165 = scmp.ne.s32.totalorder %s153, %s154
      %p166 = scmp.eq.s32.totalorder %s34, 1
      %p167 = por %p165, %p166
      %p169 = scmp.ne.s32.totalorder %s154, %s168
      %p170 = scmp.eq.s32.totalorder %s34, 0
      %p171 = por %p169, %p170
      %s173 = sadd.s32 %s172, 1
      %p176 = scmp.eq.s32.totalorder %s28, 1
      %p177 = scmp.ne.s32.totalorder %s172, %s174
      %p178 = scmp.eq.s32.totalorder %s28, 0
      %p179 = por %p177, %p178
      %p180 = scmp.ne.s32.totalorder %s172, %s174
      %p181 = scmp.eq.s32.totalorder %s33, 1
      %p182 = por %p180, %p181
      %p183 = scmp.ne.s32.totalorder %s174, %s175
      %p184 = scmp.eq.s32.totalorder %s33, 0
      %p185 = por %p183, %p184
      %p186 = scmp.ne.s32.totalorder %s174, %s175
      %p187 = scmp.eq.s32.totalorder %s34, 1
      %p188 = por %p186, %p187
      %p190 = scmp.ne.s32.totalorder %s175, %s189
      %p191 = scmp.eq.s32.totalorder %s34, 0
      %p192 = por %p190, %p191
      %s194 = sadd.s32 %s193, 1
      %p197 = scmp.eq.s32.totalorder %s28, 1
      %p198 = scmp.ne.s32.totalorder %s193, %s195
      %p199 = scmp.eq.s32.totalorder %s28, 0
      %p200 = por %p198, %p199
      %p201 = scmp.ne.s32.totalorder %s193, %s195
      %p202 = scmp.eq.s32.totalorder %s33, 1
      %p203 = por %p201, %p202
      %p204 = scmp.ne.s32.totalorder %s195, %s196
      %p205 = scmp.eq.s32.totalorder %s33, 0
      %p206 = por %p204, %p205
      %p207 = scmp.ne.s32.totalorder %s195, %s196
      %p208 = scmp.eq.s32.totalorder %s34, 1
      %p209 = por %p207, %p208
      %p211 = scmp.ne.s32.totalorder %s196, %s210
      %p212 = scmp.eq.s32.totalorder %s34, 0
      %p213 = por %p211, %p212
      %s215 = sadd.s32 %s214, 1
      %p218 = scmp.eq.s32.totalorder %s28, 1
      %p219 = scmp.ne.s32.totalorder %s214, %s216
      %p220 = scmp.eq.s32.totalorder %s28, 0
      %p221 = por %p219, %p220
      %p222 = scmp.ne.s32.totalorder %s214, %s216
      %p223 = scmp.eq.s32.totalorder %s33, 1
      %p224 = por %p222, %p223
      %p225 = scmp.ne.s32.totalorder %s216, %s217
      %p226 = scmp.eq.s32.totalorder %s33, 0
      %p227 = por %p225, %p226
      %p228 = scmp.ne.s32.totalorder %s216, %s217
      %p229 = scmp.eq.s32.totalorder %s34, 1
      %p230 = por %p228, %p229
      %p232 = scmp.ne.s32.totalorder %s217, %s231
      %p233 = scmp.eq.s32.totalorder %s34, 0
      %p234 = por %p232, %p233
      %s236 = sadd.s32 %s235, 1
      %p239 = scmp.eq.s32.totalorder %s28, 1
      %p240 = scmp.ne.s32.totalorder %s235, %s237
      %p241 = scmp.eq.s32.totalorder %s28, 0
      %p242 = por %p240, %p241
      %p243 = scmp.ne.s32.totalorder %s235, %s237
      %p244 = scmp.eq.s32.totalorder %s33, 1
      %p245 = por %p243, %p244
      %p246 = scmp.ne.s32.totalorder %s237, %s238
      %p247 = scmp.eq.s32.totalorder %s33, 0
      %p248 = por %p246, %p247
      %p249 = scmp.ne.s32.totalorder %s237, %s238
      %p250 = scmp.eq.s32.totalorder %s34, 1
      %p251 = por %p249, %p250
      %p253 = scmp.ne.s32.totalorder %s238, %s252
      %p254 = scmp.eq.s32.totalorder %s34, 0
      %p255 = por %p253, %p254
      %s257 = sadd.s32 %s256, 1
      %p260 = scmp.eq.s32.totalorder %s28, 1
      %p261 = scmp.ne.s32.totalorder %s256, %s258
      %p262 = scmp.eq.s32.totalorder %s28, 0
      %p263 = por %p261, %p262
      %p264 = scmp.ne.s32.totalorder %s256, %s258
      %p265 = scmp.eq.s32.totalorder %s33, 1
      %p266 = por %p264, %p265
      %p267 = scmp.ne.s32.totalorder %s258, %s259
      %p268 = scmp.eq.s32.totalorder %s33, 0
      %p269 = por %p267, %p268
      %p270 = scmp.ne.s32.totalorder %s258, %s259
      %p271 = scmp.eq.s32.totalorder %s34, 1
      %p272 = por %p270, %p271
      %p274 = scmp.ne.s32.totalorder %s259, %s273
      %p275 = scmp.eq.s32.totalorder %s34, 0
      %p276 = por %p274, %p275
      %s278 = sadd.s32 %s277, 1
      %p281 = scmp.eq.s32.totalorder %s28, 1
      %p282 = scmp.ne.s32.totalorder %s277, %s279
      %p283 = scmp.eq.s32.totalorder %s28, 0
      %p284 = por %p282, %p283
      %p285 = scmp.ne.s32.totalorder %s277, %s279
      %p286 = scmp.eq.s32.totalorder %s33, 1
      %p287 = por %p285, %p286
      %p288 = scmp.ne.s32.totalorder %s279, %s280
      %p289 = scmp.eq.s32.totalorder %s33, 0
      %p290 = por %p288, %p289
      %p291 = scmp.ne.s32.totalorder %s279, %s280
      %p292 = scmp.eq.s32.totalorder %s34, 1
      %p293 = por %p291, %p292
      %p295 = scmp.ne.s32.totalorder %s280, %s294
      %p296 = scmp.eq.s32.totalorder %s34, 0
      %p297 = por %p295, %p296
      %s299 = sadd.s32 %s298, 1
      %p302 = scmp.eq.s32.totalorder %s28, 1
      %p303 = scmp.ne.s32.totalorder %s298, %s300
      %p304 = scmp.eq.s32.totalorder %s28, 0
      %p305 = por %p303, %p304
      %p306 = scmp.ne.s32.totalorder %s298, %s300
      %p307 = scmp.eq.s32.totalorder %s33, 1
      %p308 = por %p306, %p307
      %p309 = scmp.ne.s32.totalorder %s300, %s301
      %p310 = scmp.eq.s32.totalorder %s33, 0
      %p311 = por %p309, %p310
      %p312 = scmp.ne.s32.totalorder %s300, %s301
      %p313 = scmp.eq.s32.totalorder %s34, 1
      %p314 = por %p312, %p313
      %p316 = scmp.ne.s32.totalorder %s301, %s315
      %p317 = scmp.eq.s32.totalorder %s34, 0
      %p318 = por %p316, %p317
      %s320 = sadd.s32 %s319, 1
      %p323 = scmp.eq.s32.totalorder %s28, 1
      %p324 = scmp.ne.s32.totalorder %s319, %s321
      %p325 = scmp.eq.s32.totalorder %s28, 0
      %p326 = por %p324, %p325
      %p327 = scmp.ne.s32.totalorder %s319, %s321
      %p328 = scmp.eq.s32.totalorder %s33, 1
      %p329 = por %p327, %p328
      %p330 = scmp.ne.s32.totalorder %s321, %s322
      %p331 = scmp.eq.s32.totalorder %s33, 0
      %p332 = por %p330, %p331
      %p333 = scmp.ne.s32.totalorder %s321, %s322
      %p334 = scmp.eq.s32.totalorder %s34, 1
      %p335 = por %p333, %p334
      %p337 = scmp.ne.s32.totalorder %s322, %s336
      %p338 = scmp.eq.s32.totalorder %s34, 0
      %p339 = por %p337, %p338
      %s341 = sadd.s32 %s340, 1
      %p344 = scmp.eq.s32.totalorder %s28, 1
      %p345 = scmp.ne.s32.totalorder %s340, %s342
      %p346 = scmp.eq.s32.totalorder %s28, 0
      %p347 = por %p345, %p346
      %p348 = scmp.ne.s32.totalorder %s340, %s342
      %p349 = scmp.eq.s32.totalorder %s33, 1
      %p350 = por %p348, %p349
      %p351 = scmp.ne.s32.totalorder %s342, %s343
      %p352 = scmp.eq.s32.totalorder %s33, 0
      %p353 = por %p351, %p352
      %p354 = scmp.ne.s32.totalorder %s342, %s343
      %p355 = scmp.eq.s32.totalorder %s34, 1
      %p356 = por %p354, %p355
      %p358 = scmp.ne.s32.totalorder %s343, %s357
      %p359 = scmp.eq.s32.totalorder %s34, 0
      %p360 = por %p358, %p359
      %s362 = sadd.s32 %s361, 1
      %p365 = scmp.eq.s32.totalorder %s28, 1
      %p366 = scmp.ne.s32.totalorder %s361, %s363
      %p367 = scmp.eq.s32.totalorder %s28, 0
      %p368 = por %p366, %p367
      %p369 = scmp.ne.s32.totalorder %s361, %s363
      %p370 = scmp.eq.s32.totalorder %s33, 1
      %p371 = por %p369, %p370
      %p372 = scmp.ne.s32.totalorder %s363, %s364
      %p373 = scmp.eq.s32.totalorder %s33, 0
      %p374 = por %p372, %p373
      %p375 = scmp.ne.s32.totalorder %s363, %s364
      %p376 = scmp.eq.s32.totalorder %s34, 1
      %p377 = por %p375, %p376
      %p379 = scmp.ne.s32.totalorder %s364, %s378
      %p380 = scmp.eq.s32.totalorder %s34, 0
      %p381 = por %p379, %p380
      %s383 = sadd.s32 %s382, 1
      %p386 = scmp.eq.s32.totalorder %s28, 1
      %p387 = scmp.ne.s32.totalorder %s382, %s384
      %p388 = scmp.eq.s32.totalorder %s28, 0
      %p389 = por %p387, %p388
      %p390 = scmp.ne.s32.totalorder %s382, %s384
      %p391 = scmp.eq.s32.totalorder %s33, 1
      %p392 = por %p390, %p391
      %p393 = scmp.ne.s32.totalorder %s384, %s385
      %p394 = scmp.eq.s32.totalorder %s33, 0
      %p395 = por %p393, %p394
      %p396 = scmp.ne.s32.totalorder %s384, %s385
      %p397 = scmp.eq.s32.totalorder %s34, 1
      %p398 = por %p396, %p397
      %p400 = scmp.ne.s32.totalorder %s385, %s399
      %p401 = scmp.eq.s32.totalorder %s34, 0
      %p402 = por %p400, %p401
      %s404 = sadd.s32 %s403, 1
      %p407 = scmp.eq.s32.totalorder %s28, 1
      %p408 = scmp.ne.s32.totalorder %s403, %s405
      %p409 = scmp.eq.s32.totalorder %s28, 0
      %p410 = por %p408, %p409
      %p411 = scmp.ne.s32.totalorder %s403, %s405
      %p412 = scmp.eq.s32.totalorder %s33, 1
      %p413 = por %p411, %p412
      %p414 = scmp.ne.s32.totalorder %s405, %s406
      %p415 = scmp.eq.s32.totalorder %s33, 0
      %p416 = por %p414, %p415
      %p417 = scmp.ne.s32.totalorder %s405, %s406
      %p418 = scmp.eq.s32.totalorder %s34, 1
      %p419 = por %p417, %p418
      %p421 = scmp.ne.s32.totalorder %s406, %s420
      %p422 = scmp.eq.s32.totalorder %s34, 0
      %p423 = por %p421, %p422
      %s425 = sadd.s32 %s424, 1
      %p428 = scmp.eq.s32.totalorder %s28, 1
      %p429 = scmp.ne.s32.totalorder %s424, %s426
      %p430 = scmp.eq.s32.totalorder %s28, 0
      %p431 = por %p429, %p430
      %p432 = scmp.ne.s32.totalorder %s424, %s426
      %p433 = scmp.eq.s32.totalorder %s33, 1
      %p434 = por %p432, %p433
      %p435 = scmp.ne.s32.totalorder %s426, %s427
      %p436 = scmp.eq.s32.totalorder %s33, 0
      %p437 = por %p435, %p436
      %p438 = scmp.ne.s32.totalorder %s426, %s427
      %p439 = scmp.eq.s32.totalorder %s34, 1
      %p440 = por %p438, %p439
      %p442 = scmp.ne.s32.totalorder %s427, %s441
      %p443 = scmp.eq.s32.totalorder %s34, 0
      %p444 = por %p442, %p443
      %s445 = ssub.s32 %s28, %s35
      %p446 = scmp.eq.s32.totalorder %s445, 0
      %s448 = sadd.s32 %s447, 1
      %s449 = scalar_select %p446, %s447, %s448
      %p452 = pneg %p446
      %p453 = scmp.eq.s32.totalorder %s28, 1
      %p454 = por %p452, %p453
      %p455 = scmp.ne.s32.totalorder %s447, %s450
      %p456 = scmp.eq.s32.totalorder %s28, 0
      %p457 = por %p455, %p456
      %p458 = scmp.ne.s32.totalorder %s447, %s450
      %p459 = scmp.eq.s32.totalorder %s33, 1
      %p460 = por %p458, %p459
      %p461 = scmp.ne.s32.totalorder %s450, %s451
      %p462 = scmp.eq.s32.totalorder %s33, 0
      %p463 = por %p461, %p462
      %p464 = scmp.ne.s32.totalorder %s450, %s451
      %p465 = scmp.eq.s32.totalorder %s34, 1
      %p466 = por %p464, %p465
      %p468 = scmp.ne.s32.totalorder %s451, %s467
      %p469 = scmp.eq.s32.totalorder %s34, 0
      %p470 = por %p468, %p469
      %p471 = scmp.le.s32.totalorder 1, %s28
      %p472 = scmp.lt.s32.totalorder %s28, 3
      %p473 = pnand %p471, %p472
      %p474 = pneg %p473
      // Predicated region
      $region9: #{transformer_apply.1} parent=5 // pred_check
        _
      $region10: #{transformer_apply.1} parent=5 // pred_check_branch
        %476 = sbr.rel (%p473) target = $region12
      $region11: #{transformer_apply.1} parent=5 // pred_region
        %s477 = ssub.s32 %s28, 1
        // Predicated region
        $region13: #{transformer_apply.1} parent=11 // pred_check
          %p478 = pneg %p101
        $region14: #{transformer_apply.1} parent=11 // pred_check_branch
          %480 = sbr.rel (%p478) target = $region16
        $region15: #{transformer_apply.1} parent=11 // pred_region
          _
        $region16: #{transformer_apply.1} parent=11 // pred_fallthru
          _
        // Predicated region
        $region17: #{transformer_apply.1} parent=11 // pred_check
          %p481 = pneg %p122
        $region18: #{transformer_apply.1} parent=11 // pred_check_branch
          %483 = sbr.rel (%p481) target = $region20
        $region19: #{transformer_apply.1} parent=11 // pred_region
          _
        $region20: #{transformer_apply.1} parent=11 // pred_fallthru
          _
        // Predicated region
        $region21: #{transformer_apply.1} parent=11 // pred_check
          %p484 = pneg %p143
        $region22: #{transformer_apply.1} parent=11 // pred_check_branch
          %486 = sbr.rel (%p484) target = $region24
        $region23: #{transformer_apply.1} parent=11 // pred_region
          _
        $region24: #{transformer_apply.1} parent=11 // pred_fallthru
          _
        // Predicated region
        $region25: #{transformer_apply.1} parent=11 // pred_check
          %p487 = pneg %p164
        $region26: #{transformer_apply.1} parent=11 // pred_check_branch
          %489 = sbr.rel (%p487) target = $region28
        $region27: #{transformer_apply.1} parent=11 // pred_region
          _
        $region28: #{transformer_apply.1} parent=11 // pred_fallthru
          _
        // Predicated region
        $region29: #{transformer_apply.1} parent=11 // pred_check
          %p490 = pneg %p185
        $region30: #{transformer_apply.1} parent=11 // pred_check_branch
          %492 = sbr.rel (%p490) target = $region32
        $region31: #{transformer_apply.1} parent=11 // pred_region
          _
        $region32: #{transformer_apply.1} parent=11 // pred_fallthru
          _
        // Predicated region
        $region33: #{transformer_apply.1} parent=11 // pred_check
          %p493 = pneg %p206
        $region34: #{transformer_apply.1} parent=11 // pred_check_branch
          %495 = sbr.rel (%p493) target = $region36
        $region35: #{transformer_apply.1} parent=11 // pred_region
          _
        $region36: #{transformer_apply.1} parent=11 // pred_fallthru
          _
        // Predicated region
        $region37: #{transformer_apply.1} parent=11 // pred_check
          %p496 = pneg %p227
        $region38: #{transformer_apply.1} parent=11 // pred_check_branch
          %498 = sbr.rel (%p496) target = $region40
        $region39: #{transformer_apply.1} parent=11 // pred_region
          _
        $region40: #{transformer_apply.1} parent=11 // pred_fallthru
          _
        // Predicated region
        $region41: #{transformer_apply.1} parent=11 // pred_check
          %p499 = pneg %p248
        $region42: #{transformer_apply.1} parent=11 // pred_check_branch
          %501 = sbr.rel (%p499) target = $region44
        $region43: #{transformer_apply.1} parent=11 // pred_region
          _
        $region44: #{transformer_apply.1} parent=11 // pred_fallthru
          _
        // Predicated region
        $region45: #{transformer_apply.1} parent=11 // pred_check
          %p502 = pneg %p269
        $region46: #{transformer_apply.1} parent=11 // pred_check_branch
          %504 = sbr.rel (%p502) target = $region48
        $region47: #{transformer_apply.1} parent=11 // pred_region
          _
        $region48: #{transformer_apply.1} parent=11 // pred_fallthru
          _
        // Predicated region
        $region49: #{transformer_apply.1} parent=11 // pred_check
          %p505 = pneg %p290
        $region50: #{transformer_apply.1} parent=11 // pred_check_branch
          %507 = sbr.rel (%p505) target = $region52
        $region51: #{transformer_apply.1} parent=11 // pred_region
          _
        $region52: #{transformer_apply.1} parent=11 // pred_fallthru
          _
        // Predicated region
        $region53: #{transformer_apply.1} parent=11 // pred_check
          %p508 = pneg %p311
        $region54: #{transformer_apply.1} parent=11 // pred_check_branch
          %510 = sbr.rel (%p508) target = $region56
        $region55: #{transformer_apply.1} parent=11 // pred_region
          _
        $region56: #{transformer_apply.1} parent=11 // pred_fallthru
          _
        // Predicated region
        $region57: #{transformer_apply.1} parent=11 // pred_check
          %p511 = pneg %p332
        $region58: #{transformer_apply.1} parent=11 // pred_check_branch
          %513 = sbr.rel (%p511) target = $region60
        $region59: #{transformer_apply.1} parent=11 // pred_region
          _
        $region60: #{transformer_apply.1} parent=11 // pred_fallthru
          _
        // Predicated region
        $region61: #{transformer_apply.1} parent=11 // pred_check
          %p514 = pneg %p353
        $region62: #{transformer_apply.1} parent=11 // pred_check_branch
          %516 = sbr.rel (%p514) target = $region64
        $region63: #{transformer_apply.1} parent=11 // pred_region
          _
        $region64: #{transformer_apply.1} parent=11 // pred_fallthru
          _
        // Predicated region
        $region65: #{transformer_apply.1} parent=11 // pred_check
          %p517 = pneg %p374
        $region66: #{transformer_apply.1} parent=11 // pred_check_branch
          %519 = sbr.rel (%p517) target = $region68
        $region67: #{transformer_apply.1} parent=11 // pred_region
          _
        $region68: #{transformer_apply.1} parent=11 // pred_fallthru
          _
        // Predicated region
        $region69: #{transformer_apply.1} parent=11 // pred_check
          %p520 = pneg %p395
        $region70: #{transformer_apply.1} parent=11 // pred_check_branch
          %522 = sbr.rel (%p520) target = $region72
        $region71: #{transformer_apply.1} parent=11 // pred_region
          _
        $region72: #{transformer_apply.1} parent=11 // pred_fallthru
          _
        // Predicated region
        $region73: #{transformer_apply.1} parent=11 // pred_check
          %p523 = pneg %p416
        $region74: #{transformer_apply.1} parent=11 // pred_check_branch
          %525 = sbr.rel (%p523) target = $region76
        $region75: #{transformer_apply.1} parent=11 // pred_region
          _
        $region76: #{transformer_apply.1} parent=11 // pred_fallthru
          _
        // Predicated region
        $region77: #{transformer_apply.1} parent=11 // pred_check
          %p526 = pneg %p437
        $region78: #{transformer_apply.1} parent=11 // pred_check_branch
          %528 = sbr.rel (%p526) target = $region80
        $region79: #{transformer_apply.1} parent=11 // pred_region
          _
        $region80: #{transformer_apply.1} parent=11 // pred_fallthru
          _
      $region12: #{transformer_apply.1} parent=5 // pred_fallthru
        _
      %p529 = scmp.lt.s32.totalorder %s28, 2
      // Predicated region
      $region81: #{transformer_apply.1} parent=5 // pred_check
        %p530 = pneg %p529
      $region82: #{transformer_apply.1} parent=5 // pred_check_branch
        %532 = sbr.rel (%p530) target = $region84
      $region83: #{transformer_apply.1} parent=5 // pred_region
        // Predicated region
        $region85: #{transformer_apply.1} parent=83 // pred_check
          %p533 = pneg %p48
        $region86: #{transformer_apply.1} parent=83 // pred_check_branch
          %535 = sbr.rel (%p533) target = $region88
        $region87: #{transformer_apply.1} parent=83 // pred_region
          %p536 = scmp.lt.s32.totalorder %s28, 1
          %s537 = scalar_select %p536, %s28, 1
          %s538 = smul.addr %s537, 8
          %s539 = scalar_lea.vmem %s0, %s538
        $region88: #{transformer_apply.1} parent=83 // pred_fallthru
          _
        // Predicated region
        $region89: #{transformer_apply.1} parent=83 // pred_check
          %p540 = pneg %p74
        $region90: #{transformer_apply.1} parent=83 // pred_check_branch
          %542 = sbr.rel (%p540) target = $region92
        $region91: #{transformer_apply.1} parent=83 // pred_region
          %p543 = scmp.lt.s32.totalorder %s28, 1
          %s544 = scalar_select %p543, %s28, 1
          %s545 = smul.addr %s544, 8
          %s546 = scalar_lea.vmem %s1, %s545
        $region92: #{transformer_apply.1} parent=83 // pred_fallthru
          _
      $region84: #{transformer_apply.1} parent=5 // pred_fallthru
        _
      %p547 = scmp.le.s32.totalorder 1, %s28
      %p548 = scmp.lt.s32.totalorder %s28, 3
      %p549 = pnand %p547, %p548
      %p550 = pneg %p549
      // Predicated region
      $region93: #{transformer_apply.1} parent=5 // pred_check
        _
      $region94: #{transformer_apply.1} parent=5 // pred_check_branch
        %552 = sbr.rel (%p549) target = $region96
      $region95: #{transformer_apply.1} parent=5 // pred_region
        %s553 = ssub.s32 %s28, 1
        %p554 = scmp.lt.s32.totalorder %s33, 1
        %s555 = scalar_select %p554, %s33, 1
        %s556 = smul.addr %s555, 8
        %s557 = scalar_lea.vmem %s0, %s556
        %p558 = pneg %p54
        %p559 = pneg %p51
        %p560 = scmp.lt.s32.totalorder %s33, 1
        %s561 = scalar_select %p560, %s33, 1
        %s562 = smul.addr %s561, 8
        %s563 = scalar_lea.vmem %s1, %s562
        %p564 = pneg %p80
        %p565 = pneg %p77
        %p566 = pneg %p101
        %p567 = pneg %p98
        %p568 = pneg %p122
        %p569 = pneg %p119
        %p570 = pneg %p143
        %p571 = pneg %p140
        %p572 = pneg %p164
        %p573 = pneg %p161
        %p574 = pneg %p185
        %p575 = pneg %p182
        %p576 = pneg %p206
        %p577 = pneg %p203
        %p578 = pneg %p227
        %p579 = pneg %p224
        %p580 = pneg %p248
        %p581 = pneg %p245
        %p582 = pneg %p269
        %p583 = pneg %p266
        %p584 = pneg %p290
        %p585 = pneg %p287
        %p586 = pneg %p311
        %p587 = pneg %p308
        %p588 = pneg %p332
        %p589 = pneg %p329
        %p590 = pneg %p353
        %p591 = pneg %p350
        %p592 = pneg %p374
        %p593 = pneg %p371
        %p594 = pneg %p395
        %p595 = pneg %p392
        %p596 = pneg %p416
        %p597 = pneg %p413
        %p598 = pneg %p437
        %p599 = pneg %p434
        %p600 = pneg %p463
        %p601 = pneg %p460
        %s602 = sand.u32 %s450, 1
        %s603 = scalar_lea.sflag [#allocation3], %s602
        %s604 = sand.u32 %s450, 1
        %s605 = smul.addr %s604, 8
        %s606 = scalar_lea.vmem [#allocation2], %s605
        %p607 = scmp.lt.s32.totalorder %s33, 1
        %s608 = scalar_select %p607, %s33, 1
        %s609 = smul.addr %s608, 8
        %s610 = scalar_lea.vmem %s0, %s609
        %p611 = scmp.lt.s32.totalorder %s33, 1
        %s612 = scalar_select %p611, %s33, 1
        %s613 = smul.addr %s612, 8
        %s614 = scalar_lea.vmem %s1, %s613
        %v615 = vld [vmem:[%s610] sm:$0xff]
        %v616 = vld [vmem:[%s2] sm:$0xff]
        %v617 = vld [vmem:[%s2 + $0x8] sm:$0xff]
        %v618 = vld [vmem:[%s2 + $0x10] sm:$0xff]
        %v619 = vld [vmem:[%s2 + $0x18] sm:$0xff]
        %vm620 = vcmask 261120
        %v622 = vsel %vm620, %v615, 0
        %624 = vmatprep.subr.mxu0 0.0
        %625 = vmatpush1.msra.mxu0 %v616
        %626 = vmatprep.subr.mxu0 0.0
        %627 = vmatpush1.msra.mxu0 %v617
        %628 = vmatprep.subr.mxu0 0.0
        %629 = vmatpush1.msra.mxu0 %v618
        %630 = vmatprep.subr.mxu0 0.0
        %631 = vmatpush1.msra.mxu0 %v619
        %632 = vmatprep.subr.mxu0 0.0
        %633 = vmatpush1.msra.mxu0 0.0
        %634 = vmatprep.subr.mxu0 0.0
        %635 = vmatpush1.msra.mxu0 0.0
        %636 = vmatprep.subr.mxu0 0.0
        %637 = vmatpush1.msra.mxu0 0.0
        %638 = vmatprep.subr.mxu0 0.0
        %639 = vmatpush1.msra.mxu0 0.0
        %640 = vmatprep.subr.mxu0 0.0
        %641 = vmatpush1.msra.mxu0 0.0
        %642 = vmatprep.subr.mxu0 0.0
        %643 = vmatpush1.msra.mxu0 0.0
        %644 = vmatprep.subr.mxu0 0.0
        %645 = vmatpush1.msra.mxu0 0.0
        %646 = vmatprep.subr.mxu0 0.0
        %647 = vmatpush1.msra.mxu0 0.0
        %648 = vmatprep.subr.mxu0 0.0
        %649 = vmatpush1.msra.mxu0 0.0
        %650 = vmatprep.subr.mxu0 0.0
        %651 = vmatpush1.msra.mxu0 0.0
        %652 = vmatprep.subr.mxu0 0.0
        %653 = vmatpush1.msra.mxu0 0.0
        %654 = vmatprep.subr.mxu0 0.0
        %655 = vmatpush1.msra.mxu0 0.0
        %656 = vmatprep.subr.mxu0 0.0
        %657 = vmatpush1.msra.mxu0 0.0
        %658 = vmatprep.subr.mxu0 0.0
        %659 = vmatpush1.msra.mxu0 0.0
        %660 = vmatprep.subr.mxu0 0.0
        %661 = vmatpush1.msra.mxu0 0.0
        %662 = vmatprep.subr.mxu0 0.0
        %663 = vmatpush1.msra.mxu0 0.0
        %664 = vmatprep.subr.mxu0 0.0
        %665 = vmatpush1.msra.mxu0 0.0
        %666 = vmatprep.subr.mxu0 0.0
        %667 = vmatpush1.msra.mxu0 0.0
        %668 = vmatprep.subr.mxu0 0.0
        %669 = vmatpush1.msra.mxu0 0.0
        %670 = vmatprep.subr.mxu0 0.0
        %671 = vmatpush1.msra.mxu0 0.0
        %672 = vmatprep.subr.mxu0 0.0
        %673 = vmatpush1.msra.mxu0 0.0
        %674 = vmatprep.subr.mxu0 0.0
        %675 = vmatpush1.msra.mxu0 0.0
        %676 = vmatprep.subr.mxu0 0.0
        %677 = vmatpush1.msra.mxu0 0.0
        %678 = vmatprep.subr.mxu0 0.0
        %679 = vmatpush1.msra.mxu0 0.0
        %680 = vmatprep.subr.mxu0 0.0
        %681 = vmatpush1.msra.mxu0 0.0
        %682 = vmatprep.subr.mxu0 0.0
        %683 = vmatpush1.msra.mxu0 0.0
        %684 = vmatprep.subr.mxu0 0.0
        %685 = vmatpush1.msra.mxu0 0.0
        %686 = vmatprep.subr.mxu0 0.0
        %687 = vmatpush1.msra.mxu0 0.0
        %688 = vmatprep.mubr.f32.mxu0 0.0
        %689 = vmatmul.mubr.f32.gmra.mrb[0].mxu0 %v622
        %v690 = vpop.f32.mrb[0].mxu0
        %v691 = vadd.f32 0.0, %v690
        %v692 = vpop.f32.mrb[0].mxu0
        %693 = vdwg.mxu0
        %695 = vrot.lane.b32.xlu0 %v691, 96
        %v696 = vpop.permute.xlu0 %695
        %vm697 = vcmask 64512
        %v698 = vsel %vm697, %v691, 0
        %v700 = vsel %vm697, %v696, 0
        %702 = vmatprep.subr.mxu0 0.0
        %703 = vmatpush1.xpose.msra.mxu0 %v700
        %704 = vmatprep.subr.mxu0 0.0
        %705 = vmatpush1.xpose.msra.mxu0 0.0
        %706 = vmatprep.subr.mxu0 0.0
        %707 = vmatpush1.xpose.msra.mxu0 0.0
        %708 = vmatprep.subr.mxu0 0.0
        %709 = vmatpush1.xpose.msra.mxu0 0.0
        %710 = vmatprep.subr.mxu0 0.0
        %711 = vmatpush1.xpose.msra.mxu0 0.0
        %712 = vmatprep.subr.mxu0 0.0
        %713 = vmatpush1.xpose.msra.mxu0 0.0
        %714 = vmatprep.subr.mxu0 0.0
        %715 = vmatpush1.xpose.msra.mxu0 0.0
        %716 = vmatprep.subr.mxu0 0.0
        %717 = vmatpush1.xpose.msra.mxu0 0.0
        %718 = vmatprep.subr.mxu0 0.0
        %719 = vmatpush1.xpose.msra.mxu0 0.0
        %720 = vmatprep.subr.mxu0 0.0
        %721 = vmatpush1.xpose.msra.mxu0 0.0
        %722 = vmatprep.subr.mxu0 0.0
        %723 = vmatpush1.xpose.msra.mxu0 0.0
        %724 = vmatprep.subr.mxu0 0.0
        %725 = vmatpush1.xpose.msra.mxu0 0.0
        %726 = vmatprep.subr.mxu0 0.0
        %727 = vmatpush1.xpose.msra.mxu0 0.0
        %728 = vmatprep.subr.mxu0 0.0
        %729 = vmatpush1.xpose.msra.mxu0 0.0
        %730 = vmatprep.subr.mxu0 0.0
        %731 = vmatpush1.xpose.msra.mxu0 0.0
        %732 = vmatprep.subr.mxu0 0.0
        %733 = vmatpush1.xpose.msra.mxu0 0.0
        %734 = vmatprep.subr.mxu0 0.0
        %735 = vmatpush1.xpose.msra.mxu0 0.0
        %736 = vmatprep.subr.mxu0 0.0
        %737 = vmatpush1.xpose.msra.mxu0 0.0
        %738 = vmatprep.subr.mxu0 0.0
        %739 = vmatpush1.xpose.msra.mxu0 0.0
        %740 = vmatprep.subr.mxu0 0.0
        %741 = vmatpush1.xpose.msra.mxu0 0.0
        %742 = vmatprep.subr.mxu0 0.0
        %743 = vmatpush1.xpose.msra.mxu0 0.0
        %744 = vmatprep.subr.mxu0 0.0
        %745 = vmatpush1.xpose.msra.mxu0 0.0
        %746 = vmatprep.subr.mxu0 0.0
        %747 = vmatpush1.xpose.msra.mxu0 0.0
        %748 = vmatprep.subr.mxu0 0.0
        %749 = vmatpush1.xpose.msra.mxu0 0.0
        %750 = vmatprep.subr.mxu0 0.0
        %751 = vmatpush1.xpose.msra.mxu0 0.0
        %752 = vmatprep.subr.mxu0 0.0
        %753 = vmatpush1.xpose.msra.mxu0 0.0
        %754 = vmatprep.subr.mxu0 0.0
        %755 = vmatpush1.xpose.msra.mxu0 0.0
        %756 = vmatprep.subr.mxu0 0.0
        %757 = vmatpush1.xpose.msra.mxu0 0.0
        %758 = vmatprep.subr.mxu0 0.0
        %759 = vmatpush1.xpose.msra.mxu0 0.0
        %760 = vmatprep.subr.mxu0 0.0
        %761 = vmatpush1.xpose.msra.mxu0 0.0
        %762 = vmatprep.subr.mxu0 0.0
        %763 = vmatpush1.xpose.msra.mxu0 0.0
        %764 = vmatprep.subr.mxu0 0.0
        %765 = vmatpush1.xpose.msra.mxu0 0.0
        %766 = vmatprep.mubr.f32.mxu0 0.0
        %767 = vmatmul.mubr.f32.gmra.mrb[0].mxu0 %v698
        %v768 = vpop.f32.mrb[0].mxu0
        %v769 = vadd.f32 0.0, %v768
        %v770 = vpop.f32.mrb[0].mxu0
        %771 = vdwg.mxu0
        %v772 = vmul.f32 %v769, 2.828427
        %v773 = vsel %vm697, %v772, -inf
        %774 = vmax.xlane.f32.xlu0 %v773
        %v775 = vpop.xlane.xlu0 %774
        %v776 = vsub.f32 %v772, %v775
        %v777 = vmul.f32 %v776, 1.442695
        %v778 = vpow.pop %v777
        %v779 = vsel %vm697, %v778, 0.0
        %780 = vadd.xlane.f32.xlu0 %v779
        %v781 = vpop.xlane.xlu0 %780
        %v782 = vrcp.pop %v781
        %v783 = vmul.f32 %v778, %v782
        %784 = vrot.lane.b32.xlu0 %v691, 64
        %v785 = vpop.permute.xlu0 %784
        %v788 = vsel %vm697, %v783, 0
        %790 = vmatprep.subr.mxu0 0.0
        %791 = vmatpush1.msra.mxu0 %v785
        %792 = vmatprep.subr.mxu0 0.0
        %793 = vmatpush1.msra.mxu0 0.0
        %794 = vmatprep.subr.mxu0 0.0
        %795 = vmatpush1.msra.mxu0 0.0
        %796 = vmatprep.subr.mxu0 0.0
        %797 = vmatpush1.msra.mxu0 0.0
        %798 = vmatprep.subr.mxu0 0.0
        %799 = vmatpush1.msra.mxu0 0.0
        %800 = vmatprep.subr.mxu0 0.0
        %801 = vmatpush1.msra.mxu0 0.0
        %802 = vmatprep.subr.mxu0 0.0
        %803 = vmatpush1.msra.mxu0 0.0
        %804 = vmatprep.subr.mxu0 0.0
        %805 = vmatpush1.msra.mxu0 0.0
        %806 = vmatprep.subr.mxu0 0.0
        %807 = vmatpush1.msra.mxu0 0.0
        %808 = vmatprep.subr.mxu0 0.0
        %809 = vmatpush1.msra.mxu0 0.0
        %810 = vmatprep.subr.mxu0 0.0
        %811 = vmatpush1.msra.mxu0 0.0
        %812 = vmatprep.subr.mxu0 0.0
        %813 = vmatpush1.msra.mxu0 0.0
        %814 = vmatprep.subr.mxu0 0.0
        %815 = vmatpush1.msra.mxu0 0.0
        %816 = vmatprep.subr.mxu0 0.0
        %817 = vmatpush1.msra.mxu0 0.0
        %818 = vmatprep.subr.mxu0 0.0
        %819 = vmatpush1.msra.mxu0 0.0
        %820 = vmatprep.subr.mxu0 0.0
        %821 = vmatpush1.msra.mxu0 0.0
        %822 = vmatprep.subr.mxu0 0.0
        %823 = vmatpush1.msra.mxu0 0.0
        %824 = vmatprep.subr.mxu0 0.0
        %825 = vmatpush1.msra.mxu0 0.0
        %826 = vmatprep.subr.mxu0 0.0
        %827 = vmatpush1.msra.mxu0 0.0
        %828 = vmatprep.subr.mxu0 0.0
        %829 = vmatpush1.msra.mxu0 0.0
        %830 = vmatprep.subr.mxu0 0.0
        %831 = vmatpush1.msra.mxu0 0.0
        %832 = vmatprep.subr.mxu0 0.0
        %833 = vmatpush1.msra.mxu0 0.0
        %834 = vmatprep.subr.mxu0 0.0
        %835 = vmatpush1.msra.mxu0 0.0
        %836 = vmatprep.subr.mxu0 0.0
        %837 = vmatpush1.msra.mxu0 0.0
        %838 = vmatprep.subr.mxu0 0.0
        %839 = vmatpush1.msra.mxu0 0.0
        %840 = vmatprep.subr.mxu0 0.0
        %841 = vmatpush1.msra.mxu0 0.0
        %842 = vmatprep.subr.mxu0 0.0
        %843 = vmatpush1.msra.mxu0 0.0
        %844 = vmatprep.subr.mxu0 0.0
        %845 = vmatpush1.msra.mxu0 0.0
        %846 = vmatprep.subr.mxu0 0.0
        %847 = vmatpush1.msra.mxu0 0.0
        %848 = vmatprep.subr.mxu0 0.0
        %849 = vmatpush1.msra.mxu0 0.0
        %850 = vmatprep.subr.mxu0 0.0
        %851 = vmatpush1.msra.mxu0 0.0
        %852 = vmatprep.subr.mxu0 0.0
        %853 = vmatpush1.msra.mxu0 0.0
        %854 = vmatprep.mubr.f32.mxu0 0.0
        %855 = vmatmul.mubr.f32.gmra.mrb[0].mxu0 %v788
        %v856 = vpop.f32.mrb[0].mxu0
        %v857 = vadd.f32 0.0, %v856
        %v858 = vpop.f32.mrb[0].mxu0
        %859 = vdwg.mxu0
        %860 = vrot.lane.b32.xlu0 %v691, 120
        %v861 = vpop.permute.xlu0 %860
        %862 = vrot.lane.b32.xlu0 %v691, 88
        %v863 = vpop.permute.xlu0 %862
        %v864 = vsel %vm697, %v861, 0
        %v866 = vsel %vm697, %v863, 0
        %868 = vmatprep.subr.mxu0 0.0
        %869 = vmatpush1.xpose.msra.mxu0 %v866
        %870 = vmatprep.subr.mxu0 0.0
        %871 = vmatpush1.xpose.msra.mxu0 0.0
        %872 = vmatprep.subr.mxu0 0.0
        %873 = vmatpush1.xpose.msra.mxu0 0.0
        %874 = vmatprep.subr.mxu0 0.0
        %875 = vmatpush1.xpose.msra.mxu0 0.0
        %876 = vmatprep.subr.mxu0 0.0
        %877 = vmatpush1.xpose.msra.mxu0 0.0
        %878 = vmatprep.subr.mxu0 0.0
        %879 = vmatpush1.xpose.msra.mxu0 0.0
        %880 = vmatprep.subr.mxu0 0.0
        %881 = vmatpush1.xpose.msra.mxu0 0.0
        %882 = vmatprep.subr.mxu0 0.0
        %883 = vmatpush1.xpose.msra.mxu0 0.0
        %884 = vmatprep.subr.mxu0 0.0
        %885 = vmatpush1.xpose.msra.mxu0 0.0
        %886 = vmatprep.subr.mxu0 0.0
        %887 = vmatpush1.xpose.msra.mxu0 0.0
        %888 = vmatprep.subr.mxu0 0.0
        %889 = vmatpush1.xpose.msra.mxu0 0.0
        %890 = vmatprep.subr.mxu0 0.0
        %891 = vmatpush1.xpose.msra.mxu0 0.0
        %892 = vmatprep.subr.mxu0 0.0
        %893 = vmatpush1.xpose.msra.mxu0 0.0
        %894 = vmatprep.subr.mxu0 0.0
        %895 = vmatpush1.xpose.msra.mxu0 0.0
        %896 = vmatprep.subr.mxu0 0.0
        %897 = vmatpush1.xpose.msra.mxu0 0.0
        %898 = vmatprep.subr.mxu0 0.0
        %899 = vmatpush1.xpose.msra.mxu0 0.0
        %900 = vmatprep.subr.mxu0 0.0
        %901 = vmatpush1.xpose.msra.mxu0 0.0
        %902 = vmatprep.subr.mxu0 0.0
        %903 = vmatpush1.xpose.msra.mxu0 0.0
        %904 = vmatprep.subr.mxu0 0.0
        %905 = vmatpush1.xpose.msra.mxu0 0.0
        %906 = vmatprep.subr.mxu0 0.0
        %907 = vmatpush1.xpose.msra.mxu0 0.0
        %908 = vmatprep.subr.mxu0 0.0
        %909 = vmatpush1.xpose.msra.mxu0 0.0
        %910 = vmatprep.subr.mxu0 0.0
        %911 = vmatpush1.xpose.msra.mxu0 0.0
        %912 = vmatprep.subr.mxu0 0.0
        %913 = vmatpush1.xpose.msra.mxu0 0.0
        %914 = vmatprep.subr.mxu0 0.0
        %915 = vmatpush1.xpose.msra.mxu0 0.0
        %916 = vmatprep.subr.mxu0 0.0
        %917 = vmatpush1.xpose.msra.mxu0 0.0
        %918 = vmatprep.subr.mxu0 0.0
        %919 = vmatpush1.xpose.msra.mxu0 0.0
        %920 = vmatprep.subr.mxu0 0.0
        %921 = vmatpush1.xpose.msra.mxu0 0.0
        %922 = vmatprep.subr.mxu0 0.0
        %923 = vmatpush1.xpose.msra.mxu0 0.0
        %924 = vmatprep.subr.mxu0 0.0
        %925 = vmatpush1.xpose.msra.mxu0 0.0
        %926 = vmatprep.subr.mxu0 0.0
        %927 = vmatpush1.xpose.msra.mxu0 0.0
        %928 = vmatprep.subr.mxu0 0.0
        %929 = vmatpush1.xpose.msra.mxu0 0.0
        %930 = vmatprep.subr.mxu0 0.0
        %931 = vmatpush1.xpose.msra.mxu0 0.0
        %932 = vmatprep.mubr.f32.mxu0 0.0
        %933 = vmatmul.mubr.f32.gmra.mrb[0].mxu0 %v864
        %v934 = vpop.f32.mrb[0].mxu0
        %v935 = vadd.f32 0.0, %v934
        %v936 = vpop.f32.mrb[0].mxu0
        %937 = vdwg.mxu0
        %v938 = vmul.f32 %v935, 2.828427
        %v939 = vsel %vm697, %v938, -inf
        %940 = vmax.xlane.f32.xlu0 %v939
        %v941 = vpop.xlane.xlu0 %940
        %v942 = vsub.f32 %v938, %v941
        %v943 = vmul.f32 %v942, 1.442695
        %v944 = vpow.pop %v943
        %v945 = vsel %vm697, %v944, 0.0
        %946 = vadd.xlane.f32.xlu0 %v945
        %v947 = vpop.xlane.xlu0 %946
        %v948 = vrcp.pop %v947
        %v949 = vmul.f32 %v944, %v948
        %950 = vrot.lane.b32.xlu0 %v691, 56
        %v951 = vpop.permute.xlu0 %950
        %v954 = vsel %vm697, %v949, 0
        %956 = vmatprep.subr.mxu0 0.0
        %957 = vmatpush1.msra.mxu0 %v951
        %958 = vmatprep.subr.mxu0 0.0
        %959 = vmatpush1.msra.mxu0 0.0
        %960 = vmatprep.subr.mxu0 0.0
        %961 = vmatpush1.msra.mxu0 0.0
        %962 = vmatprep.subr.mxu0 0.0
        %963 = vmatpush1.msra.mxu0 0.0
        %964 = vmatprep.subr.mxu0 0.0
        %965 = vmatpush1.msra.mxu0 0.0
        %966 = vmatprep.subr.mxu0 0.0
        %967 = vmatpush1.msra.mxu0 0.0
        %968 = vmatprep.subr.mxu0 0.0
        %969 = vmatpush1.msra.mxu0 0.0
        %970 = vmatprep.subr.mxu0 0.0
        %971 = vmatpush1.msra.mxu0 0.0
        %972 = vmatprep.subr.mxu0 0.0
        %973 = vmatpush1.msra.mxu0 0.0
        %974 = vmatprep.subr.mxu0 0.0
        %975 = vmatpush1.msra.mxu0 0.0
        %976 = vmatprep.subr.mxu0 0.0
        %977 = vmatpush1.msra.mxu0 0.0
        %978 = vmatprep.subr.mxu0 0.0
        %979 = vmatpush1.msra.mxu0 0.0
        %980 = vmatprep.subr.mxu0 0.0
        %981 = vmatpush1.msra.mxu0 0.0
        %982 = vmatprep.subr.mxu0 0.0
        %983 = vmatpush1.msra.mxu0 0.0
        %984 = vmatprep.subr.mxu0 0.0
        %985 = vmatpush1.msra.mxu0 0.0
        %986 = vmatprep.subr.mxu0 0.0
        %987 = vmatpush1.msra.mxu0 0.0
        %988 = vmatprep.subr.mxu0 0.0
        %989 = vmatpush1.msra.mxu0 0.0
        %990 = vmatprep.subr.mxu0 0.0
        %991 = vmatpush1.msra.mxu0 0.0
        %992 = vmatprep.subr.mxu0 0.0
        %993 = vmatpush1.msra.mxu0 0.0
        %994 = vmatprep.subr.mxu0 0.0
        %995 = vmatpush1.msra.mxu0 0.0
        %996 = vmatprep.subr.mxu0 0.0
        %997 = vmatpush1.msra.mxu0 0.0
        %998 = vmatprep.subr.mxu0 0.0
        %999 = vmatpush1.msra.mxu0 0.0
        %1000 = vmatprep.subr.mxu0 0.0
        %1001 = vmatpush1.msra.mxu0 0.0
        %1002 = vmatprep.subr.mxu0 0.0
        %1003 = vmatpush1.msra.mxu0 0.0
        %1004 = vmatprep.subr.mxu0 0.0
        %1005 = vmatpush1.msra.mxu0 0.0
        %1006 = vmatprep.subr.mxu0 0.0
        %1007 = vmatpush1.msra.mxu0 0.0
        %1008 = vmatprep.subr.mxu0 0.0
        %1009 = vmatpush1.msra.mxu0 0.0
        %1010 = vmatprep.subr.mxu0 0.0
        %1011 = vmatpush1.msra.mxu0 0.0
        %1012 = vmatprep.subr.mxu0 0.0
        %1013 = vmatpush1.msra.mxu0 0.0
        %1014 = vmatprep.subr.mxu0 0.0
        %1015 = vmatpush1.msra.mxu0 0.0
        %1016 = vmatprep.subr.mxu0 0.0
        %1017 = vmatpush1.msra.mxu0 0.0
        %1018 = vmatprep.subr.mxu0 0.0
        %1019 = vmatpush1.msra.mxu0 0.0
        %1020 = vmatprep.mubr.f32.mxu0 0.0
        %1021 = vmatmul.mubr.f32.gmra.mrb[0].mxu0 %v954
        %v1022 = vpop.f32.mrb[0].mxu0
        %v1023 = vadd.f32 0.0, %v1022
        %v1024 = vpop.f32.mrb[0].mxu0
        %1025 = vdwg.mxu0
        %1026 = vrot.lane.b32.xlu0 %v691, 112
        %v1027 = vpop.permute.xlu0 %1026
        %1028 = vrot.lane.b32.xlu0 %v691, 80
        %v1029 = vpop.permute.xlu0 %1028
        %v1030 = vsel %vm697, %v1027, 0
        %v1032 = vsel %vm697, %v1029, 0
        %1034 = vmatprep.subr.mxu0 0.0
        %1035 = vmatpush1.xpose.msra.mxu0 %v1032
        %1036 = vmatprep.subr.mxu0 0.0
        %1037 = vmatpush1.xpose.msra.mxu0 0.0
        %1038 = vmatprep.subr.mxu0 0.0
        %1039 = vmatpush1.xpose.msra.mxu0 0.0
        %1040 = vmatprep.subr.mxu0 0.0
        %1041 = vmatpush1.xpose.msra.mxu0 0.0
        %1042 = vmatprep.subr.mxu0 0.0
        %1043 = vmatpush1.xpose.msra.mxu0 0.0
        %1044 = vmatprep.subr.mxu0 0.0
        %1045 = vmatpush1.xpose.msra.mxu0 0.0
        %1046 = vmatprep.subr.mxu0 0.0
        %1047 = vmatpush1.xpose.msra.mxu0 0.0
        %1048 = vmatprep.subr.mxu0 0.0
        %1049 = vmatpush1.xpose.msra.mxu0 0.0
        %1050 = vmatprep.subr.mxu0 0.0
        %1051 = vmatpush1.xpose.msra.mxu0 0.0
        %1052 = vmatprep.subr.mxu0 0.0
        %1053 = vmatpush1.xpose.msra.mxu0 0.0
        %1054 = vmatprep.subr.mxu0 0.0
        %1055 = vmatpush1.xpose.msra.mxu0 0.0
        %1056 = vmatprep.subr.mxu0 0.0
        %1057 = vmatpush1.xpose.msra.mxu0 0.0
        %1058 = vmatprep.subr.mxu0 0.0
        %1059 = vmatpush1.xpose.msra.mxu0 0.0
        %1060 = vmatprep.subr.mxu0 0.0
        %1061 = vmatpush1.xpose.msra.mxu0 0.0
        %1062 = vmatprep.subr.mxu0 0.0
        %1063 = vmatpush1.xpose.msra.mxu0 0.0
        %1064 = vmatprep.subr.mxu0 0.0
        %1065 = vmatpush1.xpose.msra.mxu0 0.0
        %1066 = vmatprep.subr.mxu0 0.0
        %1067 = vmatpush1.xpose.msra.mxu0 0.0
        %1068 = vmatprep.subr.mxu0 0.0
        %1069 = vmatpush1.xpose.msra.mxu0 0.0
        %1070 = vmatprep.subr.mxu0 0.0
        %1071 = vmatpush1.xpose.msra.mxu0 0.0
        %1072 = vmatprep.subr.mxu0 0.0
        %1073 = vmatpush1.xpose.msra.mxu0 0.0
        %1074 = vmatprep.subr.mxu0 0.0
        %1075 = vmatpush1.xpose.msra.mxu0 0.0
        %1076 = vmatprep.subr.mxu0 0.0
        %1077 = vmatpush1.xpose.msra.mxu0 0.0
        %1078 = vmatprep.subr.mxu0 0.0
        %1079 = vmatpush1.xpose.msra.mxu0 0.0
        %1080 = vmatprep.subr.mxu0 0.0
        %1081 = vmatpush1.xpose.msra.mxu0 0.0
        %1082 = vmatprep.subr.mxu0 0.0
        %1083 = vmatpush1.xpose.msra.mxu0 0.0
        %1084 = vmatprep.subr.mxu0 0.0
        %1085 = vmatpush1.xpose.msra.mxu0 0.0
        %1086 = vmatprep.subr.mxu0 0.0
        %1087 = vmatpush1.xpose.msra.mxu0 0.0
        %1088 = vmatprep.subr.mxu0 0.0
        %1089 = vmatpush1.xpose.msra.mxu0 0.0
        %1090 = vmatprep.subr.mxu0 0.0
        %1091 = vmatpush1.xpose.msra.mxu0 0.0
        %1092 = vmatprep.subr.mxu0 0.0
        %1093 = vmatpush1.xpose.msra.mxu0 0.0
        %1094 = vmatprep.subr.mxu0 0.0
        %1095 = vmatpush1.xpose.msra.mxu0 0.0
        %1096 = vmatprep.subr.mxu0 0.0
        %1097 = vmatpush1.xpose.msra.mxu0 0.0
        %1098 = vmatprep.mubr.f32.mxu0 0.0
        %1099 = vmatmul.mubr.f32.gmra.mrb[0].mxu0 %v1030
        %v1100 = vpop.f32.mrb[0].mxu0
        %v1101 = vadd.f32 0.0, %v1100
        %v1102 = vpop.f32.mrb[0].mxu0
        %1103 = vdwg.mxu0
        %v1104 = vmul.f32 %v1101, 2.828427
        %v1105 = vsel %vm697, %v1104, -inf
        %1106 = vmax.xlane.f32.xlu0 %v1105
        %v1107 = vpop.xlane.xlu0 %1106
        %v1108 = vsub.f32 %v1104, %v1107
        %v1109 = vmul.f32 %v1108, 1.442695
        %v1110 = vpow.pop %v1109
        %v1111 = vsel %vm697, %v1110, 0.0
        %1112 = vadd.xlane.f32.xlu0 %v1111
        %v1113 = vpop.xlane.xlu0 %1112
        %v1114 = vrcp.pop %v1113
        %v1115 = vmul.f32 %v1110, %v1114
        %1116 = vrot.lane.b32.xlu0 %v691, 48
        %v1117 = vpop.permute.xlu0 %1116
        %v1120 = vsel %vm697, %v1115, 0
        %1122 = vmatprep.subr.mxu0 0.0
        %1123 = vmatpush1.msra.mxu0 %v1117
        %1124 = vmatprep.subr.mxu0 0.0
        %1125 = vmatpush1.msra.mxu0 0.0
        %1126 = vmatprep.subr.mxu0 0.0
        %1127 = vmatpush1.msra.mxu0 0.0
        %1128 = vmatprep.subr.mxu0 0.0
        %1129 = vmatpush1.msra.mxu0 0.0
        %1130 = vmatprep.subr.mxu0 0.0
        %1131 = vmatpush1.msra.mxu0 0.0
        %1132 = vmatprep.subr.mxu0 0.0
        %1133 = vmatpush1.msra.mxu0 0.0
        %1134 = vmatprep.subr.mxu0 0.0
        %1135 = vmatpush1.msra.mxu0 0.0
        %1136 = vmatprep.subr.mxu0 0.0
        %1137 = vmatpush1.msra.mxu0 0.0
        %1138 = vmatprep.subr.mxu0 0.0
        %1139 = vmatpush1.msra.mxu0 0.0
        %1140 = vmatprep.subr.mxu0 0.0
        %1141 = vmatpush1.msra.mxu0 0.0
        %1142 = vmatprep.subr.mxu0 0.0
        %1143 = vmatpush1.msra.mxu0 0.0
        %1144 = vmatprep.subr.mxu0 0.0
        %1145 = vmatpush1.msra.mxu0 0.0
        %1146 = vmatprep.subr.mxu0 0.0
        %1147 = vmatpush1.msra.mxu0 0.0
        %1148 = vmatprep.subr.mxu0 0.0
        %1149 = vmatpush1.msra.mxu0 0.0
        %1150 = vmatprep.subr.mxu0 0.0
        %1151 = vmatpush1.msra.mxu0 0.0
        %1152 = vmatprep.subr.mxu0 0.0
        %1153 = vmatpush1.msra.mxu0 0.0
        %1154 = vmatprep.subr.mxu0 0.0
        %1155 = vmatpush1.msra.mxu0 0.0
        %1156 = vmatprep.subr.mxu0 0.0
        %1157 = vmatpush1.msra.mxu0 0.0
        %1158 = vmatprep.subr.mxu0 0.0
        %1159 = vmatpush1.msra.mxu0 0.0
        %1160 = vmatprep.subr.mxu0 0.0
        %1161 = vmatpush1.msra.mxu0 0.0
        %1162 = vmatprep.subr.mxu0 0.0
        %1163 = vmatpush1.msra.mxu0 0.0
        %1164 = vmatprep.subr.mxu0 0.0
        %1165 = vmatpush1.msra.mxu0 0.0
        %1166 = vmatprep.subr.mxu0 0.0
        %1167 = vmatpush1.msra.mxu0 0.0
        %1168 = vmatprep.subr.mxu0 0.0
        %1169 = vmatpush1.msra.mxu0 0.0
        %1170 = vmatprep.subr.mxu0 0.0
        %1171 = vmatpush1.msra.mxu0 0.0
        %1172 = vmatprep.subr.mxu0 0.0
        %1173 = vmatpush1.msra.mxu0 0.0
        %1174 = vmatprep.subr.mxu0 0.0
        %1175 = vmatpush1.msra.mxu0 0.0
        %1176 = vmatprep.subr.mxu0 0.0
        %1177 = vmatpush1.msra.mxu0 0.0
        %1178 = vmatprep.subr.mxu0 0.0
        %1179 = vmatpush1.msra.mxu0 0.0
        %1180 = vmatprep.subr.mxu0 0.0
        %1181 = vmatpush1.msra.mxu0 0.0
        %1182 = vmatprep.subr.mxu0 0.0
        %1183 = vmatpush1.msra.mxu0 0.0
        %1184 = vmatprep.subr.mxu0 0.0
        %1185 = vmatpush1.msra.mxu0 0.0
        %1186 = vmatprep.mubr.f32.mxu0 0.0
        %1187 = vmatmul.mubr.f32.gmra.mrb[0].mxu0 %v1120
        %v1188 = vpop.f32.mrb[0].mxu0
        %v1189 = vadd.f32 0.0, %v1188
        %v1190 = vpop.f32.mrb[0].mxu0
        %1191 = vdwg.mxu0
        %1192 = vrot.lane.b32.xlu0 %v691, 104
        %v1193 = vpop.permute.xlu0 %1192
        %1194 = vrot.lane.b32.xlu0 %v691, 72
        %v1195 = vpop.permute.xlu0 %1194
        %v1196 = vsel %vm697, %v1193, 0
        %v1198 = vsel %vm697, %v1195, 0
        %1200 = vmatprep.subr.mxu0 0.0
        %1201 = vmatpush1.xpose.msra.mxu0 %v1198
        %1202 = vmatprep.subr.mxu0 0.0
        %1203 = vmatpush1.xpose.msra.mxu0 0.0
        %1204 = vmatprep.subr.mxu0 0.0
        %1205 = vmatpush1.xpose.msra.mxu0 0.0
        %1206 = vmatprep.subr.mxu0 0.0
        %1207 = vmatpush1.xpose.msra.mxu0 0.0
        %1208 = vmatprep.subr.mxu0 0.0
        %1209 = vmatpush1.xpose.msra.mxu0 0.0
        %1210 = vmatprep.subr.mxu0 0.0
        %1211 = vmatpush1.xpose.msra.mxu0 0.0
        %1212 = vmatprep.subr.mxu0 0.0
        %1213 = vmatpush1.xpose.msra.mxu0 0.0
        %1214 = vmatprep.subr.mxu0 0.0
        %1215 = vmatpush1.xpose.msra.mxu0 0.0
        %1216 = vmatprep.subr.mxu0 0.0
        %1217 = vmatpush1.xpose.msra.mxu0 0.0
        %1218 = vmatprep.subr.mxu0 0.0
        %1219 = vmatpush1.xpose.msra.mxu0 0.0
        %1220 = vmatprep.subr.mxu0 0.0
        %1221 = vmatpush1.xpose.msra.mxu0 0.0
        %1222 = vmatprep.subr.mxu0 0.0
        %1223 = vmatpush1.xpose.msra.mxu0 0.0
        %1224 = vmatprep.subr.mxu0 0.0
        %1225 = vmatpush1.xpose.msra.mxu0 0.0
        %1226 = vmatprep.subr.mxu0 0.0
        %1227 = vmatpush1.xpose.msra.mxu0 0.0
        %1228 = vmatprep.subr.mxu0 0.0
        %1229 = vmatpush1.xpose.msra.mxu0 0.0
        %1230 = vmatprep.subr.mxu0 0.0
        %1231 = vmatpush1.xpose.msra.mxu0 0.0
        %1232 = vmatprep.subr.mxu0 0.0
        %1233 = vmatpush1.xpose.msra.mxu0 0.0
        %1234 = vmatprep.subr.mxu0 0.0
        %1235 = vmatpush1.xpose.msra.mxu0 0.0
        %1236 = vmatprep.subr.mxu0 0.0
        %1237 = vmatpush1.xpose.msra.mxu0 0.0
        %1238 = vmatprep.subr.mxu0 0.0
        %1239 = vmatpush1.xpose.msra.mxu0 0.0
        %1240 = vmatprep.subr.mxu0 0.0
        %1241 = vmatpush1.xpose.msra.mxu0 0.0
        %1242 = vmatprep.subr.mxu0 0.0
        %1243 = vmatpush1.xpose.msra.mxu0 0.0
        %1244 = vmatprep.subr.mxu0 0.0
        %1245 = vmatpush1.xpose.msra.mxu0 0.0
        %1246 = vmatprep.subr.mxu0 0.0
        %1247 = vmatpush1.xpose.msra.mxu0 0.0
        %1248 = vmatprep.subr.mxu0 0.0
        %1249 = vmatpush1.xpose.msra.mxu0 0.0
        %1250 = vmatprep.subr.mxu0 0.0
        %1251 = vmatpush1.xpose.msra.mxu0 0.0
        %1252 = vmatprep.subr.mxu0 0.0
        %1253 = vmatpush1.xpose.msra.mxu0 0.0
        %1254 = vmatprep.subr.mxu0 0.0
        %1255 = vmatpush1.xpose.msra.mxu0 0.0
        %1256 = vmatprep.subr.mxu0 0.0
        %1257 = vmatpush1.xpose.msra.mxu0 0.0
        %1258 = vmatprep.subr.mxu0 0.0
        %1259 = vmatpush1.xpose.msra.mxu0 0.0
        %1260 = vmatprep.subr.mxu0 0.0
        %1261 = vmatpush1.xpose.msra.mxu0 0.0
        %1262 = vmatprep.subr.mxu0 0.0
        %1263 = vmatpush1.xpose.msra.mxu0 0.0
        %1264 = vmatprep.mubr.f32.mxu0 0.0
        %1265 = vmatmul.mubr.f32.gmra.mrb[0].mxu0 %v1196
        %v1266 = vpop.f32.mrb[0].mxu0
        %v1267 = vadd.f32 0.0, %v1266
        %v1268 = vpop.f32.mrb[0].mxu0
        %1269 = vdwg.mxu0
        %v1270 = vmul.f32 %v1267, 2.828427
        %v1271 = vsel %vm697, %v1270, -inf
        %1272 = vmax.xlane.f32.xlu0 %v1271
        %v1273 = vpop.xlane.xlu0 %1272
        %v1274 = vsub.f32 %v1270, %v1273
        %v1275 = vmul.f32 %v1274, 1.442695
        %v1276 = vpow.pop %v1275
        %v1277 = vsel %vm697, %v1276, 0.0
        %1278 = vadd.xlane.f32.xlu0 %v1277
        %v1279 = vpop.xlane.xlu0 %1278
        %v1280 = vrcp.pop %v1279
        %v1281 = vmul.f32 %v1276, %v1280
        %1282 = vrot.lane.b32.xlu0 %v691, 40
        %v1283 = vpop.permute.xlu0 %1282
        %v1286 = vsel %vm697, %v1281, 0
        %1288 = vmatprep.subr.mxu0 0.0
        %1289 = vmatpush1.msra.mxu0 %v1283
        %1290 = vmatprep.subr.mxu0 0.0
        %1291 = vmatpush1.msra.mxu0 0.0
        %1292 = vmatprep.subr.mxu0 0.0
        %1293 = vmatpush1.msra.mxu0 0.0
        %1294 = vmatprep.subr.mxu0 0.0
        %1295 = vmatpush1.msra.mxu0 0.0
        %1296 = vmatprep.subr.mxu0 0.0
        %1297 = vmatpush1.msra.mxu0 0.0
        %1298 = vmatprep.subr.mxu0 0.0
        %1299 = vmatpush1.msra.mxu0 0.0
        %1300 = vmatprep.subr.mxu0 0.0
        %1301 = vmatpush1.msra.mxu0 0.0
        %1302 = vmatprep.subr.mxu0 0.0
        %1303 = vmatpush1.msra.mxu0 0.0
        %1304 = vmatprep.subr.mxu0 0.0
        %1305 = vmatpush1.msra.mxu0 0.0
        %1306 = vmatprep.subr.mxu0 0.0
        %1307 = vmatpush1.msra.mxu0 0.0
        %1308 = vmatprep.subr.mxu0 0.0
        %1309 = vmatpush1.msra.mxu0 0.0
        %1310 = vmatprep.subr.mxu0 0.0
        %1311 = vmatpush1.msra.mxu0 0.0
        %1312 = vmatprep.subr.mxu0 0.0
        %1313 = vmatpush1.msra.mxu0 0.0
        %1314 = vmatprep.subr.mxu0 0.0
        %1315 = vmatpush1.msra.mxu0 0.0
        %1316 = vmatprep.subr.mxu0 0.0
        %1317 = vmatpush1.msra.mxu0 0.0
        %1318 = vmatprep.subr.mxu0 0.0
        %1319 = vmatpush1.msra.mxu0 0.0
        %1320 = vmatprep.subr.mxu0 0.0
        %1321 = vmatpush1.msra.mxu0 0.0
        %1322 = vmatprep.subr.mxu0 0.0
        %1323 = vmatpush1.msra.mxu0 0.0
        %1324 = vmatprep.subr.mxu0 0.0
        %1325 = vmatpush1.msra.mxu0 0.0
        %1326 = vmatprep.subr.mxu0 0.0
        %1327 = vmatpush1.msra.mxu0 0.0
        %1328 = vmatprep.subr.mxu0 0.0
        %1329 = vmatpush1.msra.mxu0 0.0
        %1330 = vmatprep.subr.mxu0 0.0
        %1331 = vmatpush1.msra.mxu0 0.0
        %1332 = vmatprep.subr.mxu0 0.0
        %1333 = vmatpush1.msra.mxu0 0.0
        %1334 = vmatprep.subr.mxu0 0.0
        %1335 = vmatpush1.msra.mxu0 0.0
        %1336 = vmatprep.subr.mxu0 0.0
        %1337 = vmatpush1.msra.mxu0 0.0
        %1338 = vmatprep.subr.mxu0 0.0
        %1339 = vmatpush1.msra.mxu0 0.0
        %1340 = vmatprep.subr.mxu0 0.0
        %1341 = vmatpush1.msra.mxu0 0.0
        %1342 = vmatprep.subr.mxu0 0.0
        %1343 = vmatpush1.msra.mxu0 0.0
        %1344 = vmatprep.subr.mxu0 0.0
        %1345 = vmatpush1.msra.mxu0 0.0
        %1346 = vmatprep.subr.mxu0 0.0
        %1347 = vmatpush1.msra.mxu0 0.0
        %1348 = vmatprep.subr.mxu0 0.0
        %1349 = vmatpush1.msra.mxu0 0.0
        %1350 = vmatprep.subr.mxu0 0.0
        %1351 = vmatpush1.msra.mxu0 0.0
        %1352 = vmatprep.mubr.f32.mxu0 0.0
        %1353 = vmatmul.mubr.f32.gmra.mrb[0].mxu0 %v1286
        %v1354 = vpop.f32.mrb[0].mxu0
        %v1355 = vadd.f32 0.0, %v1354
        %v1356 = vpop.f32.mrb[0].mxu0
        %1357 = vdwg.mxu0
        %1359 = vrot.lane.b32.xlu0 %v1023, 8
        %v1360 = vpop.permute.xlu0 %1359
        %1363 = vrot.lane.b32.xlu0 %v1189, 16
        %v1364 = vpop.permute.xlu0 %1363
        %1367 = vrot.lane.b32.xlu0 %v1355, 24
        %v1368 = vpop.permute.xlu0 %1367
        %v1370 = vsel %vm697, %v857, %v1360
        %vm1371 = vcmask 130048
        %v1372 = vsel %vm1371, %v1370, %v1364
        %vm1373 = vcmask 195584
        %v1374 = vsel %vm1373, %v1372, %v1368
        %v1375 = vld [vmem:[%s3] sm:$0xff]
        %v1376 = vld [vmem:[%s3 + $0x8] sm:$0xff]
        %v1377 = vld [vmem:[%s3 + $0x10] sm:$0xff]
        %v1378 = vld [vmem:[%s3 + $0x18] sm:$0xff]
        %v1379 = vld [vmem:[%s4] sm:$0x1]
        %v1380 = vlaneseq
        %v1381 = vshrl.u32 %v1380, 7
        %v1382 = vsub.s32 0, %v1381
        %v1383 = vrot.slane %v1379, %v1382
        %v1385 = vsel %vm620, %v1374, 0
        %1387 = vmatprep.subr.mxu0 0.0
        %1388 = vmatpush1.msra.mxu0 %v1375
        %1389 = vmatprep.subr.mxu0 0.0
        %1390 = vmatpush1.msra.mxu0 %v1376
        %1391 = vmatprep.subr.mxu0 0.0
        %1392 = vmatpush1.msra.mxu0 %v1377
        %1393 = vmatprep.subr.mxu0 0.0
        %1394 = vmatpush1.msra.mxu0 %v1378
        %1395 = vmatprep.subr.mxu0 0.0
        %1396 = vmatpush1.msra.mxu0 0.0
        %1397 = vmatprep.subr.mxu0 0.0
        %1398 = vmatpush1.msra.mxu0 0.0
        %1399 = vmatprep.subr.mxu0 0.0
        %1400 = vmatpush1.msra.mxu0 0.0
        %1401 = vmatprep.subr.mxu0 0.0
        %1402 = vmatpush1.msra.mxu0 0.0
        %1403 = vmatprep.subr.mxu0 0.0
        %1404 = vmatpush1.msra.mxu0 0.0
        %1405 = vmatprep.subr.mxu0 0.0
        %1406 = vmatpush1.msra.mxu0 0.0
        %1407 = vmatprep.subr.mxu0 0.0
        %1408 = vmatpush1.msra.mxu0 0.0
        %1409 = vmatprep.subr.mxu0 0.0
        %1410 = vmatpush1.msra.mxu0 0.0
        %1411 = vmatprep.subr.mxu0 0.0
        %1412 = vmatpush1.msra.mxu0 0.0
        %1413 = vmatprep.subr.mxu0 0.0
        %1414 = vmatpush1.msra.mxu0 0.0
        %1415 = vmatprep.subr.mxu0 0.0
        %1416 = vmatpush1.msra.mxu0 0.0
        %1417 = vmatprep.subr.mxu0 0.0
        %1418 = vmatpush1.msra.mxu0 0.0
        %1419 = vmatprep.subr.mxu0 0.0
        %1420 = vmatpush1.msra.mxu0 0.0
        %1421 = vmatprep.subr.mxu0 0.0
        %1422 = vmatpush1.msra.mxu0 0.0
        %1423 = vmatprep.subr.mxu0 0.0
        %1424 = vmatpush1.msra.mxu0 0.0
        %1425 = vmatprep.subr.mxu0 0.0
        %1426 = vmatpush1.msra.mxu0 0.0
        %1427 = vmatprep.subr.mxu0 0.0
        %1428 = vmatpush1.msra.mxu0 0.0
        %1429 = vmatprep.subr.mxu0 0.0
        %1430 = vmatpush1.msra.mxu0 0.0
        %1431 = vmatprep.subr.mxu0 0.0
        %1432 = vmatpush1.msra.mxu0 0.0
        %1433 = vmatprep.subr.mxu0 0.0
        %1434 = vmatpush1.msra.mxu0 0.0
        %1435 = vmatprep.subr.mxu0 0.0
        %1436 = vmatpush1.msra.mxu0 0.0
        %1437 = vmatprep.subr.mxu0 0.0
        %1438 = vmatpush1.msra.mxu0 0.0
        %1439 = vmatprep.subr.mxu0 0.0
        %1440 = vmatpush1.msra.mxu0 0.0
        %1441 = vmatprep.subr.mxu0 0.0
        %1442 = vmatpush1.msra.mxu0 0.0
        %1443 = vmatprep.subr.mxu0 0.0
        %1444 = vmatpush1.msra.mxu0 0.0
        %1445 = vmatprep.subr.mxu0 0.0
        %1446 = vmatpush1.msra.mxu0 0.0
        %1447 = vmatprep.subr.mxu0 0.0
        %1448 = vmatpush1.msra.mxu0 0.0
        %1449 = vmatprep.subr.mxu0 0.0
        %1450 = vmatpush1.msra.mxu0 0.0
        %1451 = vmatprep.mubr.f32.mxu0 0.0
        %1452 = vmatmul.mubr.f32.gmra.mrb[0].mxu0 %v1385
        %v1453 = vpop.f32.mrb[0].mxu0
        %v1454 = vadd.f32 %v1383, %v1453
        %v1455 = vpop.f32.mrb[0].mxu0
        %1456 = vdwg.mxu0
        %v1457 = vadd.f32 %v1454, %v615
        %v1458 = vld [vmem:[%s4 + $0x1] sm:$0x1]
        %v1459 = vld [vmem:[%s4 + $0x2] sm:$0x1]
        %v1460 = vsel %vm620, %v1457, 0.0
        %1461 = vadd.xlane.f32.xlu0 %v1460
        %v1462 = vpop.xlane.xlu0 %1461
        %v1463 = vrcp.pop 32.0
        %v1464 = vmul.f32 %v1462, %v1463
        %v1465 = vsub.f32 %v1457, %v1464
        %v1466 = vmul.f32 %v1465, %v1465
        %v1467 = vsel %vm620, %v1466, 0.0
        %1468 = vadd.xlane.f32.xlu0 %v1467
        %v1469 = vpop.xlane.xlu0 %1468
        %v1470 = vmul.f32 %v1469, %v1463
        %v1471 = vadd.f32 %v1470, 1e-05
        %v1472 = vrsqrt.pop %v1471
        %v1473 = vmul.f32 %v1465, %v1472
        %v1474 = vlaneseq
        %v1475 = vshrl.u32 %v1474, 7
        %v1476 = vsub.s32 0, %v1475
        %v1477 = vrot.slane %v1458, %v1476
        %v1478 = vmul.f32 %v1473, %v1477
        %v1479 = vlaneseq
        %v1480 = vshrl.u32 %v1479, 7
        %v1481 = vsub.s32 0, %v1480
        %v1482 = vrot.slane %v1459, %v1481
        %v1483 = vadd.f32 %v1478, %v1482
        %v1484 = vld [vmem:[%s5] sm:$0xff]
        %v1485 = vld [vmem:[%s5 + $0x8] sm:$0xff]
        %v1486 = vld [vmem:[%s5 + $0x10] sm:$0xff]
        %v1487 = vld [vmem:[%s5 + $0x18] sm:$0xff]
        %v1488 = vld [vmem:[%s6] sm:$0x1]
        %v1489 = vlaneseq
        %v1490 = vshrl.u32 %v1489, 7
        %v1491 = vsub.s32 0, %v1490
        %v1492 = vrot.slane %v1488, %v1491
        %v1494 = vsel %vm620, %v1483, 0
        %1496 = vmatprep.subr.mxu0 0.0
        %1497 = vmatpush1.msra.mxu0 %v1484
        %1498 = vmatprep.subr.mxu0 0.0
        %1499 = vmatpush1.msra.mxu0 %v1485
        %1500 = vmatprep.subr.mxu0 0.0
        %1501 = vmatpush1.msra.mxu0 %v1486
        %1502 = vmatprep.subr.mxu0 0.0
        %1503 = vmatpush1.msra.mxu0 %v1487
        %1504 = vmatprep.subr.mxu0 0.0
        %1505 = vmatpush1.msra.mxu0 0.0
        %1506 = vmatprep.subr.mxu0 0.0
        %1507 = vmatpush1.msra.mxu0 0.0
        %1508 = vmatprep.subr.mxu0 0.0
        %1509 = vmatpush1.msra.mxu0 0.0
        %1510 = vmatprep.subr.mxu0 0.0
        %1511 = vmatpush1.msra.mxu0 0.0
        %1512 = vmatprep.subr.mxu0 0.0
        %1513 = vmatpush1.msra.mxu0 0.0
        %1514 = vmatprep.subr.mxu0 0.0
        %1515 = vmatpush1.msra.mxu0 0.0
        %1516 = vmatprep.subr.mxu0 0.0
        %1517 = vmatpush1.msra.mxu0 0.0
        %1518 = vmatprep.subr.mxu0 0.0
        %1519 = vmatpush1.msra.mxu0 0.0
        %1520 = vmatprep.subr.mxu0 0.0
        %1521 = vmatpush1.msra.mxu0 0.0
        %1522 = vmatprep.subr.mxu0 0.0
        %1523 = vmatpush1.msra.mxu0 0.0
        %1524 = vmatprep.subr.mxu0 0.0
        %1525 = vmatpush1.msra.mxu0 0.0
        %1526 = vmatprep.subr.mxu0 0.0
        %1527 = vmatpush1.msra.mxu0 0.0
        %1528 = vmatprep.subr.mxu0 0.0
        %1529 = vmatpush1.msra.mxu0 0.0
        %1530 = vmatprep.subr.mxu0 0.0
        %1531 = vmatpush1.msra.mxu0 0.0
        %1532 = vmatprep.subr.mxu0 0.0
        %1533 = vmatpush1.msra.mxu0 0.0
        %1534 = vmatprep.subr.mxu0 0.0
        %1535 = vmatpush1.msra.mxu0 0.0
        %1536 = vmatprep.subr.mxu0 0.0
        %1537 = vmatpush1.msra.mxu0 0.0
        %1538 = vmatprep.subr.mxu0 0.0
        %1539 = vmatpush1.msra.mxu0 0.0
        %1540 = vmatprep.subr.mxu0 0.0
        %1541 = vmatpush1.msra.mxu0 0.0
        %1542 = vmatprep.subr.mxu0 0.0
        %1543 = vmatpush1.msra.mxu0 0.0
        %1544 = vmatprep.subr.mxu0 0.0
        %1545 = vmatpush1.msra.mxu0 0.0
        %1546 = vmatprep.subr.mxu0 0.0
        %1547 = vmatpush1.msra.mxu0 0.0
        %1548 = vmatprep.subr.mxu0 0.0
        %1549 = vmatpush1.msra.mxu0 0.0
        %1550 = vmatprep.subr.mxu0 0.0
        %1551 = vmatpush1.msra.mxu0 0.0
        %1552 = vmatprep.subr.mxu0 0.0
        %1553 = vmatpush1.msra.mxu0 0.0
        %1554 = vmatprep.subr.mxu0 0.0
        %1555 = vmatpush1.msra.mxu0 0.0
        %1556 = vmatprep.subr.mxu0 0.0
        %1557 = vmatpush1.msra.mxu0 0.0
        %1558 = vmatprep.subr.mxu0 0.0
        %1559 = vmatpush1.msra.mxu0 0.0
        %1560 = vmatprep.mubr.f32.mxu0 0.0
        %1561 = vmatmul.mubr.f32.gmra.mrb[0].mxu0 %v1494
        %v1562 = vpop.f32.mrb[0].mxu0
        %v1563 = vadd.f32 %v1492, %v1562
        %v1564 = vpop.f32.mrb[0].mxu0
        %1565 = vdwg.mxu0
        %v1566 = vmax.f32 %v1563, 0.0
        %v1567 = vld [vmem:[%s7] sm:$0xff]
        %v1568 = vld [vmem:[%s7 + $0x8] sm:$0xff]
        %v1569 = vld [vmem:[%s7 + $0x10] sm:$0xff]
        %v1570 = vld [vmem:[%s7 + $0x18] sm:$0xff]
        %v1571 = vld [vmem:[%s7 + $0x20] sm:$0xff]
        %v1572 = vld [vmem:[%s7 + $0x28] sm:$0xff]
        %v1573 = vld [vmem:[%s7 + $0x30] sm:$0xff]
        %v1574 = vld [vmem:[%s7 + $0x38] sm:$0xff]
        %v1575 = vld [vmem:[%s7 + $0x40] sm:$0xff]
        %v1576 = vld [vmem:[%s7 + $0x48] sm:$0xff]
        %v1577 = vld [vmem:[%s7 + $0x50] sm:$0xff]
        %v1578 = vld [vmem:[%s7 + $0x58] sm:$0xff]
        %v1579 = vld [vmem:[%s7 + $0x60] sm:$0xff]
        %v1580 = vld [vmem:[%s7 + $0x68] sm:$0xff]
        %v1581 = vld [vmem:[%s7 + $0x70] sm:$0xff]
        %v1582 = vld [vmem:[%s7 + $0x78] sm:$0xff]
        %v1583 = vld [vmem:[%s4 + $0x3] sm:$0x1]
        %v1584 = vlaneseq
        %v1585 = vshrl.u32 %v1584, 7
        %v1586 = vsub.s32 0, %v1585
        %v1587 = vrot.slane %v1583, %v1586
        %1588 = vmatprep.subr.mxu0 0.0
        %1589 = vmatpush1.msra.mxu0 %v1567
        %1590 = vmatprep.subr.mxu0 0.0
        %1591 = vmatpush1.msra.mxu0 %v1568
        %1592 = vmatprep.subr.mxu0 0.0
        %1593 = vmatpush1.msra.mxu0 %v1569
        %1594 = vmatprep.subr.mxu0 0.0
        %1595 = vmatpush1.msra.mxu0 %v1570
        %1596 = vmatprep.subr.mxu0 0.0
        %1597 = vmatpush1.msra.mxu0 %v1571
        %1598 = vmatprep.subr.mxu0 0.0
        %1599 = vmatpush1.msra.mxu0 %v1572
        %1600 = vmatprep.subr.mxu0 0.0
        %1601 = vmatpush1.msra.mxu0 %v1573
        %1602 = vmatprep.subr.mxu0 0.0
        %1603 = vmatpush1.msra.mxu0 %v1574
        %1604 = vmatprep.subr.mxu0 0.0
        %1605 = vmatpush1.msra.mxu0 %v1575
        %1606 = vmatprep.subr.mxu0 0.0
        %1607 = vmatpush1.msra.mxu0 %v1576
        %1608 = vmatprep.subr.mxu0 0.0
        %1609 = vmatpush1.msra.mxu0 %v1577
        %1610 = vmatprep.subr.mxu0 0.0
        %1611 = vmatpush1.msra.mxu0 %v1578
        %1612 = vmatprep.subr.mxu0 0.0
        %1613 = vmatpush1.msra.mxu0 %v1579
        %1614 = vmatprep.subr.mxu0 0.0
        %1615 = vmatpush1.msra.mxu0 %v1580
        %1616 = vmatprep.subr.mxu0 0.0
        %1617 = vmatpush1.msra.mxu0 %v1581
        %1618 = vmatprep.subr.mxu0 0.0
        %1619 = vmatpush1.msra.mxu0 %v1582
        %1620 = vmatprep.subr.mxu0 0.0
        %1621 = vmatpush1.msra.mxu0 0.0
        %1622 = vmatprep.subr.mxu0 0.0
        %1623 = vmatpush1.msra.mxu0 0.0
        %1624 = vmatprep.subr.mxu0 0.0
        %1625 = vmatpush1.msra.mxu0 0.0
        %1626 = vmatprep.subr.mxu0 0.0
        %1627 = vmatpush1.msra.mxu0 0.0
        %1628 = vmatprep.subr.mxu0 0.0
        %1629 = vmatpush1.msra.mxu0 0.0
        %1630 = vmatprep.subr.mxu0 0.0
        %1631 = vmatpush1.msra.mxu0 0.0
        %1632 = vmatprep.subr.mxu0 0.0
        %1633 = vmatpush1.msra.mxu0 0.0
        %1634 = vmatprep.subr.mxu0 0.0
        %1635 = vmatpush1.msra.mxu0 0.0
        %1636 = vmatprep.subr.mxu0 0.0
        %1637 = vmatpush1.msra.mxu0 0.0
        %1638 = vmatprep.subr.mxu0 0.0
        %1639 = vmatpush1.msra.mxu0 0.0
        %1640 = vmatprep.subr.mxu0 0.0
        %1641 = vmatpush1.msra.mxu0 0.0
        %1642 = vmatprep.subr.mxu0 0.0
        %1643 = vmatpush1.msra.mxu0 0.0
        %1644 = vmatprep.subr.mxu0 0.0
        %1645 = vmatpush1.msra.mxu0 0.0
        %1646 = vmatprep.subr.mxu0 0.0
        %1647 = vmatpush1.msra.mxu0 0.0
        %1648 = vmatprep.subr.mxu0 0.0
        %1649 = vmatpush1.msra.mxu0 0.0
        %1650 = vmatprep.subr.mxu0 0.0
        %1651 = vmatpush1.msra.mxu0 0.0
        %1652 = vmatprep.mubr.f32.mxu0 0.0
        %1653 = vmatmul.mubr.f32.gmra.mrb[0].mxu0 %v1566
        %v1654 = vpop.f32.mrb[0].mxu0
        %v1655 = vadd.f32 %v1587, %v1654
        %v1656 = vpop.f32.mrb[0].mxu0
        %1657 = vdwg.mxu0
        %v1658 = vadd.f32 %v1655, %v1483
        %v1659 = vld [vmem:[%s4 + $0x4] sm:$0x1]
        %v1660 = vld [vmem:[%s4 + $0x5] sm:$0x1]
        %v1661 = vsel %vm620, %v1658, 0.0
        %1662 = vadd.xlane.f32.xlu0 %v1661
        %v1663 = vpop.xlane.xlu0 %1662
        %v1664 = vmul.f32 %v1663, %v1463
        %v1665 = vsub.f32 %v1658, %v1664
        %v1666 = vmul.f32 %v1665, %v1665
        %v1667 = vsel %vm620, %v1666, 0.0
        %1668 = vadd.xlane.f32.xlu0 %v1667
        %v1669 = vpop.xlane.xlu0 %1668
        %v1670 = vmul.f32 %v1669, %v1463
        %v1671 = vadd.f32 %v1670, 1e-05
        %v1672 = vrsqrt.pop %v1671
        %v1673 = vmul.f32 %v1665, %v1672
        %v1674 = vlaneseq
        %v1675 = vshrl.u32 %v1674, 7
        %v1676 = vsub.s32 0, %v1675
        %v1677 = vrot.slane %v1659, %v1676
        %v1678 = vmul.f32 %v1673, %v1677
        %v1679 = vlaneseq
        %v1680 = vshrl.u32 %v1679, 7
        %v1681 = vsub.s32 0, %v1680
        %v1682 = vrot.slane %v1660, %v1681
        %v1683 = vadd.f32 %v1678, %v1682
        %s1684 = scalar_lea.vmem %s2, 32
        %v1685 = vld [vmem:[%s1684] sm:$0xff]
        %v1686 = vld [vmem:[%s1684 + $0x8] sm:$0xff]
        %v1687 = vld [vmem:[%s1684 + $0x10] sm:$0xff]
        %v1688 = vld [vmem:[%s1684 + $0x18] sm:$0xff]
        %v1690 = vsel %vm620, %v1683, 0
        %1692 = vmatprep.subr.mxu0 0.0
        %1693 = vmatpush1.msra.mxu0 %v1685
        %1694 = vmatprep.subr.mxu0 0.0
        %1695 = vmatpush1.msra.mxu0 %v1686
        %1696 = vmatprep.subr.mxu0 0.0
        %1697 = vmatpush1.msra.mxu0 %v1687
        %1698 = vmatprep.subr.mxu0 0.0
        %1699 = vmatpush1.msra.mxu0 %v1688
        %1700 = vmatprep.subr.mxu0 0.0
        %1701 = vmatpush1.msra.mxu0 0.0
        %1702 = vmatprep.subr.mxu0 0.0
        %1703 = vmatpush1.msra.mxu0 0.0
        %1704 = vmatprep.subr.mxu0 0.0
        %1705 = vmatpush1.msra.mxu0 0.0
        %1706 = vmatprep.subr.mxu0 0.0
        %1707 = vmatpush1.msra.mxu0 0.0
        %1708 = vmatprep.subr.mxu0 0.0
        %1709 = vmatpush1.msra.mxu0 0.0
        %1710 = vmatprep.subr.mxu0 0.0
        %1711 = vmatpush1.msra.mxu0 0.0
        %1712 = vmatprep.subr.mxu0 0.0
        %1713 = vmatpush1.msra.mxu0 0.0
        %1714 = vmatprep.subr.mxu0 0.0
        %1715 = vmatpush1.msra.mxu0 0.0
        %1716 = vmatprep.subr.mxu0 0.0
        %1717 = vmatpush1.msra.mxu0 0.0
        %1718 = vmatprep.subr.mxu0 0.0
        %1719 = vmatpush1.msra.mxu0 0.0
        %1720 = vmatprep.subr.mxu0 0.0
        %1721 = vmatpush1.msra.mxu0 0.0
        %1722 = vmatprep.subr.mxu0 0.0
        %1723 = vmatpush1.msra.mxu0 0.0
        %1724 = vmatprep.subr.mxu0 0.0
        %1725 = vmatpush1.msra.mxu0 0.0
        %1726 = vmatprep.subr.mxu0 0.0
        %1727 = vmatpush1.msra.mxu0 0.0
        %1728 = vmatprep.subr.mxu0 0.0
        %1729 = vmatpush1.msra.mxu0 0.0
        %1730 = vmatprep.subr.mxu0 0.0
        %1731 = vmatpush1.msra.mxu0 0.0
        %1732 = vmatprep.subr.mxu0 0.0
        %1733 = vmatpush1.msra.mxu0 0.0
        %1734 = vmatprep.subr.mxu0 0.0
        %1735 = vmatpush1.msra.mxu0 0.0
        %1736 = vmatprep.subr.mxu0 0.0
        %1737 = vmatpush1.msra.mxu0 0.0
        %1738 = vmatprep.subr.mxu0 0.0
        %1739 = vmatpush1.msra.mxu0 0.0
        %1740 = vmatprep.subr.mxu0 0.0
        %1741 = vmatpush1.msra.mxu0 0.0
        %1742 = vmatprep.subr.mxu0 0.0
        %1743 = vmatpush1.msra.mxu0 0.0
        %1744 = vmatprep.subr.mxu0 0.0
        %1745 = vmatpush1.msra.mxu0 0.0
        %1746 = vmatprep.subr.mxu0 0.0
        %1747 = vmatpush1.msra.mxu0 0.0
        %1748 = vmatprep.subr.mxu0 0.0
        %1749 = vmatpush1.msra.mxu0 0.0
        %1750 = vmatprep.subr.mxu0 0.0
        %1751 = vmatpush1.msra.mxu0 0.0
        %1752 = vmatprep.subr.mxu0 0.0
        %1753 = vmatpush1.msra.mxu0 0.0
        %1754 = vmatprep.subr.mxu0 0.0
        %1755 = vmatpush1.msra.mxu0 0.0
        %1756 = vmatprep.mubr.f32.mxu0 0.0
        %1757 = vmatmul.mubr.f32.gmra.mrb[0].mxu0 %v1690
        %v1758 = vpop.f32.mrb[0].mxu0
        %v1759 = vadd.f32 0.0, %v1758
        %v1760 = vpop.f32.mrb[0].mxu0
        %1761 = vdwg.mxu0
        %1763 = vrot.lane.b32.xlu0 %v1759, 96
        %v1764 = vpop.permute.xlu0 %1763
        %v1765 = vsel %vm697, %v1759, 0
        %v1767 = vsel %vm697, %v1764, 0
        %1769 = vmatprep.subr.mxu0 0.0
        %1770 = vmatpush1.xpose.msra.mxu0 %v1767
        %1771 = vmatprep.subr.mxu0 0.0
        %1772 = vmatpush1.xpose.msra.mxu0 0.0
        %1773 = vmatprep.subr.mxu0 0.0
        %1774 = vmatpush1.xpose.msra.mxu0 0.0
        %1775 = vmatprep.subr.mxu0 0.0
        %1776 = vmatpush1.xpose.msra.mxu0 0.0
        %1777 = vmatprep.subr.mxu0 0.0
        %1778 = vmatpush1.xpose.msra.mxu0 0.0
        %1779 = vmatprep.subr.mxu0 0.0
        %1780 = vmatpush1.xpose.msra.mxu0 0.0
        %1781 = vmatprep.subr.mxu0 0.0
        %1782 = vmatpush1.xpose.msra.mxu0 0.0
        %1783 = vmatprep.subr.mxu0 0.0
        %1784 = vmatpush1.xpose.msra.mxu0 0.0
        %1785 = vmatprep.subr.mxu0 0.0
        %1786 = vmatpush1.xpose.msra.mxu0 0.0
        %1787 = vmatprep.subr.mxu0 0.0
        %1788 = vmatpush1.xpose.msra.mxu0 0.0
        %1789 = vmatprep.subr.mxu0 0.0
        %1790 = vmatpush1.xpose.msra.mxu0 0.0
        %1791 = vmatprep.subr.mxu0 0.0
        %1792 = vmatpush1.xpose.msra.mxu0 0.0
        %1793 = vmatprep.subr.mxu0 0.0
        %1794 = vmatpush1.xpose.msra.mxu0 0.0
        %1795 = vmatprep.subr.mxu0 0.0
        %1796 = vmatpush1.xpose.msra.mxu0 0.0
        %1797 = vmatprep.subr.mxu0 0.0
        %1798 = vmatpush1.xpose.msra.mxu0 0.0
        %1799 = vmatprep.subr.mxu0 0.0
        %1800 = vmatpush1.xpose.msra.mxu0 0.0
        %1801 = vmatprep.subr.mxu0 0.0
        %1802 = vmatpush1.xpose.msra.mxu0 0.0
        %1803 = vmatprep.subr.mxu0 0.0
        %1804 = vmatpush1.xpose.msra.mxu0 0.0
        %1805 = vmatprep.subr.mxu0 0.0
        %1806 = vmatpush1.xpose.msra.mxu0 0.0
        %1807 = vmatprep.subr.mxu0 0.0
        %1808 = vmatpush1.xpose.msra.mxu0 0.0
        %1809 = vmatprep.subr.mxu0 0.0
        %1810 = vmatpush1.xpose.msra.mxu0 0.0
        %1811 = vmatprep.subr.mxu0 0.0
        %1812 = vmatpush1.xpose.msra.mxu0 0.0
        %1813 = vmatprep.subr.mxu0 0.0
        %1814 = vmatpush1.xpose.msra.mxu0 0.0
        %1815 = vmatprep.subr.mxu0 0.0
        %1816 = vmatpush1.xpose.msra.mxu0 0.0
        %1817 = vmatprep.subr.mxu0 0.0
        %1818 = vmatpush1.xpose.msra.mxu0 0.0
        %1819 = vmatprep.subr.mxu0 0.0
        %1820 = vmatpush1.xpose.msra.mxu0 0.0
        %1821 = vmatprep.subr.mxu0 0.0
        %1822 = vmatpush1.xpose.msra.mxu0 0.0
        %1823 = vmatprep.subr.mxu0 0.0
        %1824 = vmatpush1.xpose.msra.mxu0 0.0
        %1825 = vmatprep.subr.mxu0 0.0
        %1826 = vmatpush1.xpose.msra.mxu0 0.0
        %1827 = vmatprep.subr.mxu0 0.0
        %1828 = vmatpush1.xpose.msra.mxu0 0.0
        %1829 = vmatprep.subr.mxu0 0.0
        %1830 = vmatpush1.xpose.msra.mxu0 0.0
        %1831 = vmatprep.subr.mxu0 0.0
        %1832 = vmatpush1.xpose.msra.mxu0 0.0
        %1833 = vmatprep.mubr.f32.mxu0 0.0
        %1834 = vmatmul.mubr.f32.gmra.mrb[0].mxu0 %v1765
        %v1835 = vpop.f32.mrb[0].mxu0
        %v1836 = vadd.f32 0.0, %v1835
        %v1837 = vpop.f32.mrb[0].mxu0
        %1838 = vdwg.mxu0
        %v1839 = vmul.f32 %v1836, 2.828427
        %v1840 = vsel %vm697, %v1839, -inf
        %1841 = vmax.xlane.f32.xlu0 %v1840
        %v1842 = vpop.xlane.xlu0 %1841
        %v1843 = vsub.f32 %v1839, %v1842
        %v1844 = vmul.f32 %v1843, 1.442695
        %v1845 = vpow.pop %v1844
        %v1846 = vsel %vm697, %v1845, 0.0
        %1847 = vadd.xlane.f32.xlu0 %v1846
        %v1848 = vpop.xlane.xlu0 %1847
        %v1849 = vrcp.pop %v1848
        %v1850 = vmul.f32 %v1845, %v1849
        %1851 = vrot.lane.b32.xlu0 %v1759, 64
        %v1852 = vpop.permute.xlu0 %1851
        %v1855 = vsel %vm697, %v1850, 0
        %1857 = vmatprep.subr.mxu0 0.0
        %1858 = vmatpush1.msra.mxu0 %v1852
        %1859 = vmatprep.subr.mxu0 0.0
        %1860 = vmatpush1.msra.mxu0 0.0
        %1861 = vmatprep.subr.mxu0 0.0
        %1862 = vmatpush1.msra.mxu0 0.0
        %1863 = vmatprep.subr.mxu0 0.0
        %1864 = vmatpush1.msra.mxu0 0.0
        %1865 = vmatprep.subr.mxu0 0.0
        %1866 = vmatpush1.msra.mxu0 0.0
        %1867 = vmatprep.subr.mxu0 0.0
        %1868 = vmatpush1.msra.mxu0 0.0
        %1869 = vmatprep.subr.mxu0 0.0
        %1870 = vmatpush1.msra.mxu0 0.0
        %1871 = vmatprep.subr.mxu0 0.0
        %1872 = vmatpush1.msra.mxu0 0.0
        %1873 = vmatprep.subr.mxu0 0.0
        %1874 = vmatpush1.msra.mxu0 0.0
        %1875 = vmatprep.subr.mxu0 0.0
        %1876 = vmatpush1.msra.mxu0 0.0
        %1877 = vmatprep.subr.mxu0 0.0
        %1878 = vmatpush1.msra.mxu0 0.0
        %1879 = vmatprep.subr.mxu0 0.0
        %1880 = vmatpush1.msra.mxu0 0.0
        %1881 = vmatprep.subr.mxu0 0.0
        %1882 = vmatpush1.msra.mxu0 0.0
        %1883 = vmatprep.subr.mxu0 0.0
        %1884 = vmatpush1.msra.mxu0 0.0
        %1885 = vmatprep.subr.mxu0 0.0
        %1886 = vmatpush1.msra.mxu0 0.0
        %1887 = vmatprep.subr.mxu0 0.0
        %1888 = vmatpush1.msra.mxu0 0.0
        %1889 = vmatprep.subr.mxu0 0.0
        %1890 = vmatpush1.msra.mxu0 0.0
        %1891 = vmatprep.subr.mxu0 0.0
        %1892 = vmatpush1.msra.mxu0 0.0
        %1893 = vmatprep.subr.mxu0 0.0
        %1894 = vmatpush1.msra.mxu0 0.0
        %1895 = vmatprep.subr.mxu0 0.0
        %1896 = vmatpush1.msra.mxu0 0.0
        %1897 = vmatprep.subr.mxu0 0.0
        %1898 = vmatpush1.msra.mxu0 0.0
        %1899 = vmatprep.subr.mxu0 0.0
        %1900 = vmatpush1.msra.mxu0 0.0
        %1901 = vmatprep.subr.mxu0 0.0
        %1902 = vmatpush1.msra.mxu0 0.0
        %1903 = vmatprep.subr.mxu0 0.0
        %1904 = vmatpush1.msra.mxu0 0.0
        %1905 = vmatprep.subr.mxu0 0.0
        %1906 = vmatpush1.msra.mxu0 0.0
        %1907 = vmatprep.subr.mxu0 0.0
        %1908 = vmatpush1.msra.mxu0 0.0
        %1909 = vmatprep.subr.mxu0 0.0
        %1910 = vmatpush1.msra.mxu0 0.0
        %1911 = vmatprep.subr.mxu0 0.0
        %1912 = vmatpush1.msra.mxu0 0.0
        %1913 = vmatprep.subr.mxu0 0.0
        %1914 = vmatpush1.msra.mxu0 0.0
        %1915 = vmatprep.subr.mxu0 0.0
        %1916 = vmatpush1.msra.mxu0 0.0
        %1917 = vmatprep.subr.mxu0 0.0
        %1918 = vmatpush1.msra.mxu0 0.0
        %1919 = vmatprep.subr.mxu0 0.0
        %1920 = vmatpush1.msra.mxu0 0.0
        %1921 = vmatprep.mubr.f32.mxu0 0.0
        %1922 = vmatmul.mubr.f32.gmra.mrb[0].mxu0 %v1855
        %v1923 = vpop.f32.mrb[0].mxu0
        %v1924 = vadd.f32 0.0, %v1923
        %v1925 = vpop.f32.mrb[0].mxu0
        %1926 = vdwg.mxu0
        %1927 = vrot.lane.b32.xlu0 %v1759, 120
        %v1928 = vpop.permute.xlu0 %1927
        %1929 = vrot.lane.b32.xlu0 %v1759, 88
        %v1930 = vpop.permute.xlu0 %1929
        %v1931 = vsel %vm697, %v1928, 0
        %v1933 = vsel %vm697, %v1930, 0
        %1935 = vmatprep.subr.mxu0 0.0
        %1936 = vmatpush1.xpose.msra.mxu0 %v1933
        %1937 = vmatprep.subr.mxu0 0.0
        %1938 = vmatpush1.xpose.msra.mxu0 0.0
        %1939 = vmatprep.subr.mxu0 0.0
        %1940 = vmatpush1.xpose.msra.mxu0 0.0
        %1941 = vmatprep.subr.mxu0 0.0
        %1942 = vmatpush1.xpose.msra.mxu0 0.0
        %1943 = vmatprep.subr.mxu0 0.0
        %1944 = vmatpush1.xpose.msra.mxu0 0.0
        %1945 = vmatprep.subr.mxu0 0.0
        %1946 = vmatpush1.xpose.msra.mxu0 0.0
        %1947 = vmatprep.subr.mxu0 0.0
        %1948 = vmatpush1.xpose.msra.mxu0 0.0
        %1949 = vmatprep.subr.mxu0 0.0
        %1950 = vmatpush1.xpose.msra.mxu0 0.0
        %1951 = vmatprep.subr.mxu0 0.0
        %1952 = vmatpush1.xpose.msra.mxu0 0.0
        %1953 = vmatprep.subr.mxu0 0.0
        %1954 = vmatpush1.xpose.msra.mxu0 0.0
        %1955 = vmatprep.subr.mxu0 0.0
        %1956 = vmatpush1.xpose.msra.mxu0 0.0
        %1957 = vmatprep.subr.mxu0 0.0
        %1958 = vmatpush1.xpose.msra.mxu0 0.0
        %1959 = vmatprep.subr.mxu0 0.0
        %1960 = vmatpush1.xpose.msra.mxu0 0.0
        %1961 = vmatprep.subr.mxu0 0.0
        %1962 = vmatpush1.xpose.msra.mxu0 0.0
        %1963 = vmatprep.subr.mxu0 0.0
        %1964 = vmatpush1.xpose.msra.mxu0 0.0
        %1965 = vmatprep.subr.mxu0 0.0
        %1966 = vmatpush1.xpose.msra.mxu0 0.0
        %1967 = vmatprep.subr.mxu0 0.0
        %1968 = vmatpush1.xpose.msra.mxu0 0.0
        %1969 = vmatprep.subr.mxu0 0.0
        %1970 = vmatpush1.xpose.msra.mxu0 0.0
        %1971 = vmatprep.subr.mxu0 0.0
        %1972 = vmatpush1.xpose.msra.mxu0 0.0
        %1973 = vmatprep.subr.mxu0 0.0
        %1974 = vmatpush1.xpose.msra.mxu0 0.0
        %1975 = vmatprep.subr.mxu0 0.0
        %1976 = vmatpush1.xpose.msra.mxu0 0.0
        %1977 = vmatprep.subr.mxu0 0.0
        %1978 = vmatpush1.xpose.msra.mxu0 0.0
        %1979 = vmatprep.subr.mxu0 0.0
        %1980 = vmatpush1.xpose.msra.mxu0 0.0
        %1981 = vmatprep.subr.mxu0 0.0
        %1982 = vmatpush1.xpose.msra.mxu0 0.0
        %1983 = vmatprep.subr.mxu0 0.0
        %1984 = vmatpush1.xpose.msra.mxu0 0.0
        %1985 = vmatprep.subr.mxu0 0.0
        %1986 = vmatpush1.xpose.msra.mxu0 0.0
        %1987 = vmatprep.subr.mxu0 0.0
        %1988 = vmatpush1.xpose.msra.mxu0 0.0
        %1989 = vmatprep.subr.mxu0 0.0
        %1990 = vmatpush1.xpose.msra.mxu0 0.0
        %1991 = vmatprep.subr.mxu0 0.0
        %1992 = vmatpush1.xpose.msra.mxu0 0.0
        %1993 = vmatprep.subr.mxu0 0.0
        %1994 = vmatpush1.xpose.msra.mxu0 0.0
        %1995 = vmatprep.subr.mxu0 0.0
        %1996 = vmatpush1.xpose.msra.mxu0 0.0
        %1997 = vmatprep.subr.mxu0 0.0
        %1998 = vmatpush1.xpose.msra.mxu0 0.0
        %1999 = vmatprep.mubr.f32.mxu0 0.0
        %2000 = vmatmul.mubr.f32.gmra.mrb[0].mxu0 %v1931
        %v2001 = vpop.f32.mrb[0].mxu0
        %v2002 = vadd.f32 0.0, %v2001
        %v2003 = vpop.f32.mrb[0].mxu0
        %2004 = vdwg.mxu0
        %v2005 = vmul.f32 %v2002, 2.828427
        %v2006 = vsel %vm697, %v2005, -inf
        %2007 = vmax.xlane.f32.xlu0 %v2006
        %v2008 = vpop.xlane.xlu0 %2007
        %v2009 = vsub.f32 %v2005, %v2008
        %v2010 = vmul.f32 %v2009, 1.442695
        %v2011 = vpow.pop %v2010
        %v2012 = vsel %vm697, %v2011, 0.0
        %2013 = vadd.xlane.f32.xlu0 %v2012
        %v2014 = vpop.xlane.xlu0 %2013
        %v2015 = vrcp.pop %v2014
        %v2016 = vmul.f32 %v2011, %v2015
        %2017 = vrot.lane.b32.xlu0 %v1759, 56
        %v2018 = vpop.permute.xlu0 %2017
        %v2021 = vsel %vm697, %v2016, 0
        %2023 = vmatprep.subr.mxu0 0.0
        %2024 = vmatpush1.msra.mxu0 %v2018
        %2025 = vmatprep.subr.mxu0 0.0
        %2026 = vmatpush1.msra.mxu0 0.0
        %2027 = vmatprep.subr.mxu0 0.0
        %2028 = vmatpush1.msra.mxu0 0.0
        %2029 = vmatprep.subr.mxu0 0.0
        %2030 = vmatpush1.msra.mxu0 0.0
        %2031 = vmatprep.subr.mxu0 0.0
        %2032 = vmatpush1.msra.mxu0 0.0
        %2033 = vmatprep.subr.mxu0 0.0
        %2034 = vmatpush1.msra.mxu0 0.0
        %2035 = vmatprep.subr.mxu0 0.0
        %2036 = vmatpush1.msra.mxu0 0.0
        %2037 = vmatprep.subr.mxu0 0.0
        %2038 = vmatpush1.msra.mxu0 0.0
        %2039 = vmatprep.subr.mxu0 0.0
        %2040 = vmatpush1.msra.mxu0 0.0
        %2041 = vmatprep.subr.mxu0 0.0
        %2042 = vmatpush1.msra.mxu0 0.0
        %2043 = vmatprep.subr.mxu0 0.0
        %2044 = vmatpush1.msra.mxu0 0.0
        %2045 = vmatprep.subr.mxu0 0.0
        %2046 = vmatpush1.msra.mxu0 0.0
        %2047 = vmatprep.subr.mxu0 0.0
        %2048 = vmatpush1.msra.mxu0 0.0
        %2049 = vmatprep.subr.mxu0 0.0
        %2050 = vmatpush1.msra.mxu0 0.0
        %2051 = vmatprep.subr.mxu0 0.0
        %2052 = vmatpush1.msra.mxu0 0.0
        %2053 = vmatprep.subr.mxu0 0.0
        %2054 = vmatpush1.msra.mxu0 0.0
        %2055 = vmatprep.subr.mxu0 0.0
        %2056 = vmatpush1.msra.mxu0 0.0
        %2057 = vmatprep.subr.mxu0 0.0
        %2058 = vmatpush1.msra.mxu0 0.0
        %2059 = vmatprep.subr.mxu0 0.0
        %2060 = vmatpush1.msra.mxu0 0.0
        %2061 = vmatprep.subr.mxu0 0.0
        %2062 = vmatpush1.msra.mxu0 0.0
        %2063 = vmatprep.subr.mxu0 0.0
        %2064 = vmatpush1.msra.mxu0 0.0
        %2065 = vmatprep.subr.mxu0 0.0
        %2066 = vmatpush1.msra.mxu0 0.0
        %2067 = vmatprep.subr.mxu0 0.0
        %2068 = vmatpush1.msra.mxu0 0.0
        %2069 = vmatprep.subr.mxu0 0.0
        %2070 = vmatpush1.msra.mxu0 0.0
        %2071 = vmatprep.subr.mxu0 0.0
        %2072 = vmatpush1.msra.mxu0 0.0
        %2073 = vmatprep.subr.mxu0 0.0
        %2074 = vmatpush1.msra.mxu0 0.0
        %2075 = vmatprep.subr.mxu0 0.0
        %2076 = vmatpush1.msra.mxu0 0.0
        %2077 = vmatprep.subr.mxu0 0.0
        %2078 = vmatpush1.msra.mxu0 0.0
        %2079 = vmatprep.subr.mxu0 0.0
        %2080 = vmatpush1.msra.mxu0 0.0
        %2081 = vmatprep.subr.mxu0 0.0
        %2082 = vmatpush1.msra.mxu0 0.0
        %2083 = vmatprep.subr.mxu0 0.0
        %2084 = vmatpush1.msra.mxu0 0.0
        %2085 = vmatprep.subr.mxu0 0.0
        %2086 = vmatpush1.msra.mxu0 0.0
        %2087 = vmatprep.mubr.f32.mxu0 0.0
        %2088 = vmatmul.mubr.f32.gmra.mrb[0].mxu0 %v2021
        %v2089 = vpop.f32.mrb[0].mxu0
        %v2090 = vadd.f32 0.0, %v2089
        %v2091 = vpop.f32.mrb[0].mxu0
        %2092 = vdwg.mxu0
        %2093 = vrot.lane.b32.xlu0 %v1759, 112
        %v2094 = vpop.permute.xlu0 %2093
        %2095 = vrot.lane.b32.xlu0 %v1759, 80
        %v2096 = vpop.permute.xlu0 %2095
        %v2097 = vsel %vm697, %v2094, 0
        %v2099 = vsel %vm697, %v2096, 0
        %2101 = vmatprep.subr.mxu0 0.0
        %2102 = vmatpush1.xpose.msra.mxu0 %v2099
        %2103 = vmatprep.subr.mxu0 0.0
        %2104 = vmatpush1.xpose.msra.mxu0 0.0
        %2105 = vmatprep.subr.mxu0 0.0
        %2106 = vmatpush1.xpose.msra.mxu0 0.0
        %2107 = vmatprep.subr.mxu0 0.0
        %2108 = vmatpush1.xpose.msra.mxu0 0.0
        %2109 = vmatprep.subr.mxu0 0.0
        %2110 = vmatpush1.xpose.msra.mxu0 0.0
        %2111 = vmatprep.subr.mxu0 0.0
        %2112 = vmatpush1.xpose.msra.mxu0 0.0
        %2113 = vmatprep.subr.mxu0 0.0
        %2114 = vmatpush1.xpose.msra.mxu0 0.0
        %2115 = vmatprep.subr.mxu0 0.0
        %2116 = vmatpush1.xpose.msra.mxu0 0.0
        %2117 = vmatprep.subr.mxu0 0.0
        %2118 = vmatpush1.xpose.msra.mxu0 0.0
        %2119 = vmatprep.subr.mxu0 0.0
        %2120 = vmatpush1.xpose.msra.mxu0 0.0
        %2121 = vmatprep.subr.mxu0 0.0
        %2122 = vmatpush1.xpose.msra.mxu0 0.0
        %2123 = vmatprep.subr.mxu0 0.0
        %2124 = vmatpush1.xpose.msra.mxu0 0.0
        %2125 = vmatprep.subr.mxu0 0.0
        %2126 = vmatpush1.xpose.msra.mxu0 0.0
        %2127 = vmatprep.subr.mxu0 0.0
        %2128 = vmatpush1.xpose.msra.mxu0 0.0
        %2129 = vmatprep.subr.mxu0 0.0
        %2130 = vmatpush1.xpose.msra.mxu0 0.0
        %2131 = vmatprep.subr.mxu0 0.0
        %2132 = vmatpush1.xpose.msra.mxu0 0.0
        %2133 = vmatprep.subr.mxu0 0.0
        %2134 = vmatpush1.xpose.msra.mxu0 0.0
        %2135 = vmatprep.subr.mxu0 0.0
        %2136 = vmatpush1.xpose.msra.mxu0 0.0
        %2137 = vmatprep.subr.mxu0 0.0
        %2138 = vmatpush1.xpose.msra.mxu0 0.0
        %2139 = vmatprep.subr.mxu0 0.0
        %2140 = vmatpush1.xpose.msra.mxu0 0.0
        %2141 = vmatprep.subr.mxu0 0.0
        %2142 = vmatpush1.xpose.msra.mxu0 0.0
        %2143 = vmatprep.subr.mxu0 0.0
        %2144 = vmatpush1.xpose.msra.mxu0 0.0
        %2145 = vmatprep.subr.mxu0 0.0
        %2146 = vmatpush1.xpose.msra.mxu0 0.0
        %2147 = vmatprep.subr.mxu0 0.0
        %2148 = vmatpush1.xpose.msra.mxu0 0.0
        %2149 = vmatprep.subr.mxu0 0.0
        %2150 = vmatpush1.xpose.msra.mxu0 0.0
        %2151 = vmatprep.subr.mxu0 0.0
        %2152 = vmatpush1.xpose.msra.mxu0 0.0
        %2153 = vmatprep.subr.mxu0 0.0
        %2154 = vmatpush1.xpose.msra.mxu0 0.0
        %2155 = vmatprep.subr.mxu0 0.0
        %2156 = vmatpush1.xpose.msra.mxu0 0.0
        %2157 = vmatprep.subr.mxu0 0.0
        %2158 = vmatpush1.xpose.msra.mxu0 0.0
        %2159 = vmatprep.subr.mxu0 0.0
        %2160 = vmatpush1.xpose.msra.mxu0 0.0
        %2161 = vmatprep.subr.mxu0 0.0
        %2162 = vmatpush1.xpose.msra.mxu0 0.0
        %2163 = vmatprep.subr.mxu0 0.0
        %2164 = vmatpush1.xpose.msra.mxu0 0.0
        %2165 = vmatprep.mubr.f32.mxu0 0.0
        %2166 = vmatmul.mubr.f32.gmra.mrb[0].mxu0 %v2097
        %v2167 = vpop.f32.mrb[0].mxu0
        %v2168 = vadd.f32 0.0, %v2167
        %v2169 = vpop.f32.mrb[0].mxu0
        %2170 = vdwg.mxu0
        %v2171 = vmul.f32 %v2168, 2.828427
        %v2172 = vsel %vm697, %v2171, -inf
        %2173 = vmax.xlane.f32.xlu0 %v2172
        %v2174 = vpop.xlane.xlu0 %2173
        %v2175 = vsub.f32 %v2171, %v2174
        %v2176 = vmul.f32 %v2175, 1.442695
        %v2177 = vpow.pop %v2176
        %v2178 = vsel %vm697, %v2177, 0.0
        %2179 = vadd.xlane.f32.xlu0 %v2178
        %v2180 = vpop.xlane.xlu0 %2179
        %v2181 = vrcp.pop %v2180
        %v2182 = vmul.f32 %v2177, %v2181
        %2183 = vrot.lane.b32.xlu0 %v1759, 48
        %v2184 = vpop.permute.xlu0 %2183
        %v2187 = vsel %vm697, %v2182, 0
        %2189 = vmatprep.subr.mxu0 0.0
        %2190 = vmatpush1.msra.mxu0 %v2184
        %2191 = vmatprep.subr.mxu0 0.0
        %2192 = vmatpush1.msra.mxu0 0.0
        %2193 = vmatprep.subr.mxu0 0.0
        %2194 = vmatpush1.msra.mxu0 0.0
        %2195 = vmatprep.subr.mxu0 0.0
        %2196 = vmatpush1.msra.mxu0 0.0
        %2197 = vmatprep.subr.mxu0 0.0
        %2198 = vmatpush1.msra.mxu0 0.0
        %2199 = vmatprep.subr.mxu0 0.0
        %2200 = vmatpush1.msra.mxu0 0.0
        %2201 = vmatprep.subr.mxu0 0.0
        %2202 = vmatpush1.msra.mxu0 0.0
        %2203 = vmatprep.subr.mxu0 0.0
        %2204 = vmatpush1.msra.mxu0 0.0
        %2205 = vmatprep.subr.mxu0 0.0
        %2206 = vmatpush1.msra.mxu0 0.0
        %2207 = vmatprep.subr.mxu0 0.0
        %2208 = vmatpush1.msra.mxu0 0.0
        %2209 = vmatprep.subr.mxu0 0.0
        %2210 = vmatpush1.msra.mxu0 0.0
        %2211 = vmatprep.subr.mxu0 0.0
        %2212 = vmatpush1.msra.mxu0 0.0
        %2213 = vmatprep.subr.mxu0 0.0
        %2214 = vmatpush1.msra.mxu0 0.0
        %2215 = vmatprep.subr.mxu0 0.0
        %2216 = vmatpush1.msra.mxu0 0.0
        %2217 = vmatprep.subr.mxu0 0.0
        %2218 = vmatpush1.msra.mxu0 0.0
        %2219 = vmatprep.subr.mxu0 0.0
        %2220 = vmatpush1.msra.mxu0 0.0
        %2221 = vmatprep.subr.mxu0 0.0
        %2222 = vmatpush1.msra.mxu0 0.0
        %2223 = vmatprep.subr.mxu0 0.0
        %2224 = vmatpush1.msra.mxu0 0.0
        %2225 = vmatprep.subr.mxu0 0.0
        %2226 = vmatpush1.msra.mxu0 0.0
        %2227 = vmatprep.subr.mxu0 0.0
        %2228 = vmatpush1.msra.mxu0 0.0
        %2229 = vmatprep.subr.mxu0 0.0
        %2230 = vmatpush1.msra.mxu0 0.0
        %2231 = vmatprep.subr.mxu0 0.0
        %2232 = vmatpush1.msra.mxu0 0.0
        %2233 = vmatprep.subr.mxu0 0.0
        %2234 = vmatpush1.msra.mxu0 0.0
        %2235 = vmatprep.subr.mxu0 0.0
        %2236 = vmatpush1.msra.mxu0 0.0
        %2237 = vmatprep.subr.mxu0 0.0
        %2238 = vmatpush1.msra.mxu0 0.0
        %2239 = vmatprep.subr.mxu0 0.0
        %2240 = vmatpush1.msra.mxu0 0.0
        %2241 = vmatprep.subr.mxu0 0.0
        %2242 = vmatpush1.msra.mxu0 0.0
        %2243 = vmatprep.subr.mxu0 0.0
        %2244 = vmatpush1.msra.mxu0 0.0
        %2245 = vmatprep.subr.mxu0 0.0
        %2246 = vmatpush1.msra.mxu0 0.0
        %2247 = vmatprep.subr.mxu0 0.0
        %2248 = vmatpush1.msra.mxu0 0.0
        %2249 = vmatprep.subr.mxu0 0.0
        %2250 = vmatpush1.msra.mxu0 0.0
        %2251 = vmatprep.subr.mxu0 0.0
        %2252 = vmatpush1.msra.mxu0 0.0
        %2253 = vmatprep.mubr.f32.mxu0 0.0
        %2254 = vmatmul.mubr.f32.gmra.mrb[0].mxu0 %v2187
        %v2255 = vpop.f32.mrb[0].mxu0
        %v2256 = vadd.f32 0.0, %v2255
        %v2257 = vpop.f32.mrb[0].mxu0
        %2258 = vdwg.mxu0
        %2259 = vrot.lane.b32.xlu0 %v1759, 104
        %v2260 = vpop.permute.xlu0 %2259
        %2261 = vrot.lane.b32.xlu0 %v1759, 72
        %v2262 = vpop.permute.xlu0 %2261
        %v2263 = vsel %vm697, %v2260, 0
        %v2265 = vsel %vm697, %v2262, 0
        %2267 = vmatprep.subr.mxu0 0.0
        %2268 = vmatpush1.xpose.msra.mxu0 %v2265
        %2269 = vmatprep.subr.mxu0 0.0
        %2270 = vmatpush1.xpose.msra.mxu0 0.0
        %2271 = vmatprep.subr.mxu0 0.0
        %2272 = vmatpush1.xpose.msra.mxu0 0.0
        %2273 = vmatprep.subr.mxu0 0.0
        %2274 = vmatpush1.xpose.msra.mxu0 0.0
        %2275 = vmatprep.subr.mxu0 0.0
        %2276 = vmatpush1.xpose.msra.mxu0 0.0
        %2277 = vmatprep.subr.mxu0 0.0
        %2278 = vmatpush1.xpose.msra.mxu0 0.0
        %2279 = vmatprep.subr.mxu0 0.0
        %2280 = vmatpush1.xpose.msra.mxu0 0.0
        %2281 = vmatprep.subr.mxu0 0.0
        %2282 = vmatpush1.xpose.msra.mxu0 0.0
        %2283 = vmatprep.subr.mxu0 0.0
        %2284 = vmatpush1.xpose.msra.mxu0 0.0
        %2285 = vmatprep.subr.mxu0 0.0
        %2286 = vmatpush1.xpose.msra.mxu0 0.0
        %2287 = vmatprep.subr.mxu0 0.0
        %2288 = vmatpush1.xpose.msra.mxu0 0.0
        %2289 = vmatprep.subr.mxu0 0.0
        %2290 = vmatpush1.xpose.msra.mxu0 0.0
        %2291 = vmatprep.subr.mxu0 0.0
        %2292 = vmatpush1.xpose.msra.mxu0 0.0
        %2293 = vmatprep.subr.mxu0 0.0
        %2294 = vmatpush1.xpose.msra.mxu0 0.0
        %2295 = vmatprep.subr.mxu0 0.0
        %2296 = vmatpush1.xpose.msra.mxu0 0.0
        %2297 = vmatprep.subr.mxu0 0.0
        %2298 = vmatpush1.xpose.msra.mxu0 0.0
        %2299 = vmatprep.subr.mxu0 0.0
        %2300 = vmatpush1.xpose.msra.mxu0 0.0
        %2301 = vmatprep.subr.mxu0 0.0
        %2302 = vmatpush1.xpose.msra.mxu0 0.0
        %2303 = vmatprep.subr.mxu0 0.0
        %2304 = vmatpush1.xpose.msra.mxu0 0.0
        %2305 = vmatprep.subr.mxu0 0.0
        %2306 = vmatpush1.xpose.msra.mxu0 0.0
        %2307 = vmatprep.subr.mxu0 0.0
        %2308 = vmatpush1.xpose.msra.mxu0 0.0
        %2309 = vmatprep.subr.mxu0 0.0
        %2310 = vmatpush1.xpose.msra.mxu0 0.0
        %2311 = vmatprep.subr.mxu0 0.0
        %2312 = vmatpush1.xpose.msra.mxu0 0.0
        %2313 = vmatprep.subr.mxu0 0.0
        %2314 = vmatpush1.xpose.msra.mxu0 0.0
        %2315 = vmatprep.subr.mxu0 0.0
        %2316 = vmatpush1.xpose.msra.mxu0 0.0
        %2317 = vmatprep.subr.mxu0 0.0
        %2318 = vmatpush1.xpose.msra.mxu0 0.0
        %2319 = vmatprep.subr.mxu0 0.0
        %2320 = vmatpush1.xpose.msra.mxu0 0.0
        %2321 = vmatprep.subr.mxu0 0.0
        %2322 = vmatpush1.xpose.msra.mxu0 0.0
        %2323 = vmatprep.subr.mxu0 0.0
        %2324 = vmatpush1.xpose.msra.mxu0 0.0
        %2325 = vmatprep.subr.mxu0 0.0
        %2326 = vmatpush1.xpose.msra.mxu0 0.0
        %2327 = vmatprep.subr.mxu0 0.0
        %2328 = vmatpush1.xpose.msra.mxu0 0.0
        %2329 = vmatprep.subr.mxu0 0.0
        %2330 = vmatpush1.xpose.msra.mxu0 0.0
        %2331 = vmatprep.mubr.f32.mxu0 0.0
        %2332 = vmatmul.mubr.f32.gmra.mrb[0].mxu0 %v2263
        %v2333 = vpop.f32.mrb[0].mxu0
        %v2334 = vadd.f32 0.0, %v2333
        %v2335 = vpop.f32.mrb[0].mxu0
        %2336 = vdwg.mxu0
        %v2337 = vmul.f32 %v2334, 2.828427
        %v2338 = vsel %vm697, %v2337, -inf
        %2339 = vmax.xlane.f32.xlu0 %v2338
        %v2340 = vpop.xlane.xlu0 %2339
        %v2341 = vsub.f32 %v2337, %v2340
        %v2342 = vmul.f32 %v2341, 1.442695
        %v2343 = vpow.pop %v2342
        %v2344 = vsel %vm697, %v2343, 0.0
        %2345 = vadd.xlane.f32.xlu0 %v2344
        %v2346 = vpop.xlane.xlu0 %2345
        %v2347 = vrcp.pop %v2346
        %v2348 = vmul.f32 %v2343, %v2347
        %2349 = vrot.lane.b32.xlu0 %v1759, 40
        %v2350 = vpop.permute.xlu0 %2349
        %v2353 = vsel %vm697, %v2348, 0
        %2355 = vmatprep.subr.mxu0 0.0
        %2356 = vmatpush1.msra.mxu0 %v2350
        %2357 = vmatprep.subr.mxu0 0.0
        %2358 = vmatpush1.msra.mxu0 0.0
        %2359 = vmatprep.subr.mxu0 0.0
        %2360 = vmatpush1.msra.mxu0 0.0
        %2361 = vmatprep.subr.mxu0 0.0
        %2362 = vmatpush1.msra.mxu0 0.0
        %2363 = vmatprep.subr.mxu0 0.0
        %2364 = vmatpush1.msra.mxu0 0.0
        %2365 = vmatprep.subr.mxu0 0.0
        %2366 = vmatpush1.msra.mxu0 0.0
        %2367 = vmatprep.subr.mxu0 0.0
        %2368 = vmatpush1.msra.mxu0 0.0
        %2369 = vmatprep.subr.mxu0 0.0
        %2370 = vmatpush1.msra.mxu0 0.0
        %2371 = vmatprep.subr.mxu0 0.0
        %2372 = vmatpush1.msra.mxu0 0.0
        %2373 = vmatprep.subr.mxu0 0.0
        %2374 = vmatpush1.msra.mxu0 0.0
        %2375 = vmatprep.subr.mxu0 0.0
        %2376 = vmatpush1.msra.mxu0 0.0
        %2377 = vmatprep.subr.mxu0 0.0
        %2378 = vmatpush1.msra.mxu0 0.0
        %2379 = vmatprep.subr.mxu0 0.0
        %2380 = vmatpush1.msra.mxu0 0.0
        %2381 = vmatprep.subr.mxu0 0.0
        %2382 = vmatpush1.msra.mxu0 0.0
        %2383 = vmatprep.subr.mxu0 0.0
        %2384 = vmatpush1.msra.mxu0 0.0
        %2385 = vmatprep.subr.mxu0 0.0
        %2386 = vmatpush1.msra.mxu0 0.0
        %2387 = vmatprep.subr.mxu0 0.0
        %2388 = vmatpush1.msra.mxu0 0.0
        %2389 = vmatprep.subr.mxu0 0.0
        %2390 = vmatpush1.msra.mxu0 0.0
        %2391 = vmatprep.subr.mxu0 0.0
        %2392 = vmatpush1.msra.mxu0 0.0
        %2393 = vmatprep.subr.mxu0 0.0
        %2394 = vmatpush1.msra.mxu0 0.0
        %2395 = vmatprep.subr.mxu0 0.0
        %2396 = vmatpush1.msra.mxu0 0.0
        %2397 = vmatprep.subr.mxu0 0.0
        %2398 = vmatpush1.msra.mxu0 0.0
        %2399 = vmatprep.subr.mxu0 0.0
        %2400 = vmatpush1.msra.mxu0 0.0
        %2401 = vmatprep.subr.mxu0 0.0
        %2402 = vmatpush1.msra.mxu0 0.0
        %2403 = vmatprep.subr.mxu0 0.0
        %2404 = vmatpush1.msra.mxu0 0.0
        %2405 = vmatprep.subr.mxu0 0.0
        %2406 = vmatpush1.msra.mxu0 0.0
        %2407 = vmatprep.subr.mxu0 0.0
        %2408 = vmatpush1.msra.mxu0 0.0
        %2409 = vmatprep.subr.mxu0 0.0
        %2410 = vmatpush1.msra.mxu0 0.0
        %2411 = vmatprep.subr.mxu0 0.0
        %2412 = vmatpush1.msra.mxu0 0.0
        %2413 = vmatprep.subr.mxu0 0.0
        %2414 = vmatpush1.msra.mxu0 0.0
        %2415 = vmatprep.subr.mxu0 0.0
        %2416 = vmatpush1.msra.mxu0 0.0
        %2417 = vmatprep.subr.mxu0 0.0
        %2418 = vmatpush1.msra.mxu0 0.0
        %2419 = vmatprep.mubr.f32.mxu0 0.0
        %2420 = vmatmul.mubr.f32.gmra.mrb[0].mxu0 %v2353
        %v2421 = vpop.f32.mrb[0].mxu0
        %v2422 = vadd.f32 0.0, %v2421
        %v2423 = vpop.f32.mrb[0].mxu0
        %2424 = vdwg.mxu0
        %2426 = vrot.lane.b32.xlu0 %v2090, 8
        %v2427 = vpop.permute.xlu0 %2426
        %2430 = vrot.lane.b32.xlu0 %v2256, 16
        %v2431 = vpop.permute.xlu0 %2430
        %2434 = vrot.lane.b32.xlu0 %v2422, 24
        %v2435 = vpop.permute.xlu0 %2434
        %v2437 = vsel %vm697, %v1924, %v2427
        %v2438 = vsel %vm1371, %v2437, %v2431
        %v2439 = vsel %vm1373, %v2438, %v2435
        %s2440 = scalar_lea.vmem %s3, 32
        %v2441 = vld [vmem:[%s2440] sm:$0xff]
        %v2442 = vld [vmem:[%s2440 + $0x8] sm:$0xff]
        %v2443 = vld [vmem:[%s2440 + $0x10] sm:$0xff]
        %v2444 = vld [vmem:[%s2440 + $0x18] sm:$0xff]
        %v2445 = vld [vmem:[%s4 + $0x6] sm:$0x1]
        %v2446 = vlaneseq
        %v2447 = vshrl.u32 %v2446, 7
        %v2448 = vsub.s32 0, %v2447
        %v2449 = vrot.slane %v2445, %v2448
        %v2451 = vsel %vm620, %v2439, 0
        %2453 = vmatprep.subr.mxu0 0.0
        %2454 = vmatpush1.msra.mxu0 %v2441
        %2455 = vmatprep.subr.mxu0 0.0
        %2456 = vmatpush1.msra.mxu0 %v2442
        %2457 = vmatprep.subr.mxu0 0.0
        %2458 = vmatpush1.msra.mxu0 %v2443
        %2459 = vmatprep.subr.mxu0 0.0
        %2460 = vmatpush1.msra.mxu0 %v2444
        %2461 = vmatprep.subr.mxu0 0.0
        %2462 = vmatpush1.msra.mxu0 0.0
        %2463 = vmatprep.subr.mxu0 0.0
        %2464 = vmatpush1.msra.mxu0 0.0
        %2465 = vmatprep.subr.mxu0 0.0
        %2466 = vmatpush1.msra.mxu0 0.0
        %2467 = vmatprep.subr.mxu0 0.0
        %2468 = vmatpush1.msra.mxu0 0.0
        %2469 = vmatprep.subr.mxu0 0.0
        %2470 = vmatpush1.msra.mxu0 0.0
        %2471 = vmatprep.subr.mxu0 0.0
        %2472 = vmatpush1.msra.mxu0 0.0
        %2473 = vmatprep.subr.mxu0 0.0
        %2474 = vmatpush1.msra.mxu0 0.0
        %2475 = vmatprep.subr.mxu0 0.0
        %2476 = vmatpush1.msra.mxu0 0.0
        %2477 = vmatprep.subr.mxu0 0.0
        %2478 = vmatpush1.msra.mxu0 0.0
        %2479 = vmatprep.subr.mxu0 0.0
        %2480 = vmatpush1.msra.mxu0 0.0
        %2481 = vmatprep.subr.mxu0 0.0
        %2482 = vmatpush1.msra.mxu0 0.0
        %2483 = vmatprep.subr.mxu0 0.0
        %2484 = vmatpush1.msra.mxu0 0.0
        %2485 = vmatprep.subr.mxu0 0.0
        %2486 = vmatpush1.msra.mxu0 0.0
        %2487 = vmatprep.subr.mxu0 0.0
        %2488 = vmatpush1.msra.mxu0 0.0
        %2489 = vmatprep.subr.mxu0 0.0
        %2490 = vmatpush1.msra.mxu0 0.0
        %2491 = vmatprep.subr.mxu0 0.0
        %2492 = vmatpush1.msra.mxu0 0.0
        %2493 = vmatprep.subr.mxu0 0.0
        %2494 = vmatpush1.msra.mxu0 0.0
        %2495 = vmatprep.subr.mxu0 0.0
        %2496 = vmatpush1.msra.mxu0 0.0
        %2497 = vmatprep.subr.mxu0 0.0
        %2498 = vmatpush1.msra.mxu0 0.0
        %2499 = vmatprep.subr.mxu0 0.0
        %2500 = vmatpush1.msra.mxu0 0.0
        %2501 = vmatprep.subr.mxu0 0.0
        %2502 = vmatpush1.msra.mxu0 0.0
        %2503 = vmatprep.subr.mxu0 0.0
        %2504 = vmatpush1.msra.mxu0 0.0
        %2505 = vmatprep.subr.mxu0 0.0
        %2506 = vmatpush1.msra.mxu0 0.0
        %2507 = vmatprep.subr.mxu0 0.0
        %2508 = vmatpush1.msra.mxu0 0.0
        %2509 = vmatprep.subr.mxu0 0.0
        %2510 = vmatpush1.msra.mxu0 0.0
        %2511 = vmatprep.subr.mxu0 0.0
        %2512 = vmatpush1.msra.mxu0 0.0
        %2513 = vmatprep.subr.mxu0 0.0
        %2514 = vmatpush1.msra.mxu0 0.0
        %2515 = vmatprep.subr.mxu0 0.0
        %2516 = vmatpush1.msra.mxu0 0.0
        %2517 = vmatprep.mubr.f32.mxu0 0.0
        %2518 = vmatmul.mubr.f32.gmra.mrb[0].mxu0 %v2451
        %v2519 = vpop.f32.mrb[0].mxu0
        %v2520 = vadd.f32 %v2449, %v2519
        %v2521 = vpop.f32.mrb[0].mxu0
        %2522 = vdwg.mxu0
        %v2523 = vadd.f32 %v2520, %v1683
        %v2524 = vld [vmem:[%s4 + $0x7] sm:$0x1]
        %v2525 = vld [vmem:[%s4 + $0x8] sm:$0x1]
        %v2526 = vsel %vm620, %v2523, 0.0
        %2527 = vadd.xlane.f32.xlu0 %v2526
        %v2528 = vpop.xlane.xlu0 %2527
        %v2529 = vmul.f32 %v2528, %v1463
        %v2530 = vsub.f32 %v2523, %v2529
        %v2531 = vmul.f32 %v2530, %v2530
        %v2532 = vsel %vm620, %v2531, 0.0
        %2533 = vadd.xlane.f32.xlu0 %v2532
        %v2534 = vpop.xlane.xlu0 %2533
        %v2535 = vmul.f32 %v2534, %v1463
        %v2536 = vadd.f32 %v2535, 1e-05
        %v2537 = vrsqrt.pop %v2536
        %v2538 = vmul.f32 %v2530, %v2537
        %v2539 = vlaneseq
        %v2540 = vshrl.u32 %v2539, 7
        %v2541 = vsub.s32 0, %v2540
        %v2542 = vrot.slane %v2524, %v2541
        %v2543 = vmul.f32 %v2538, %v2542
        %v2544 = vlaneseq
        %v2545 = vshrl.u32 %v2544, 7
        %v2546 = vsub.s32 0, %v2545
        %v2547 = vrot.slane %v2525, %v2546
        %v2548 = vadd.f32 %v2543, %v2547
        %s2549 = scalar_lea.vmem %s5, 32
        %v2550 = vld [vmem:[%s2549] sm:$0xff]
        %v2551 = vld [vmem:[%s2549 + $0x8] sm:$0xff]
        %v2552 = vld [vmem:[%s2549 + $0x10] sm:$0xff]
        %v2553 = vld [vmem:[%s2549 + $0x18] sm:$0xff]
        %v2554 = vld [vmem:[%s6 + $0x1] sm:$0x1]
        %v2555 = vlaneseq
        %v2556 = vshrl.u32 %v2555, 7
        %v2557 = vsub.s32 0, %v2556
        %v2558 = vrot.slane %v2554, %v2557
        %v2560 = vsel %vm620, %v2548, 0
        %2562 = vmatprep.subr.mxu0 0.0
        %2563 = vmatpush1.msra.mxu0 %v2550
        %2564 = vmatprep.subr.mxu0 0.0
        %2565 = vmatpush1.msra.mxu0 %v2551
        %2566 = vmatprep.subr.mxu0 0.0
        %2567 = vmatpush1.msra.mxu0 %v2552
        %2568 = vmatprep.subr.mxu0 0.0
        %2569 = vmatpush1.msra.mxu0 %v2553
        %2570 = vmatprep.subr.mxu0 0.0
        %2571 = vmatpush1.msra.mxu0 0.0
        %2572 = vmatprep.subr.mxu0 0.0
        %2573 = vmatpush1.msra.mxu0 0.0
        %2574 = vmatprep.subr.mxu0 0.0
        %2575 = vmatpush1.msra.mxu0 0.0
        %2576 = vmatprep.subr.mxu0 0.0
        %2577 = vmatpush1.msra.mxu0 0.0
        %2578 = vmatprep.subr.mxu0 0.0
        %2579 = vmatpush1.msra.mxu0 0.0
        %2580 = vmatprep.subr.mxu0 0.0
        %2581 = vmatpush1.msra.mxu0 0.0
        %2582 = vmatprep.subr.mxu0 0.0
        %2583 = vmatpush1.msra.mxu0 0.0
        %2584 = vmatprep.subr.mxu0 0.0
        %2585 = vmatpush1.msra.mxu0 0.0
        %2586 = vmatprep.subr.mxu0 0.0
        %2587 = vmatpush1.msra.mxu0 0.0
        %2588 = vmatprep.subr.mxu0 0.0
        %2589 = vmatpush1.msra.mxu0 0.0
        %2590 = vmatprep.subr.mxu0 0.0
        %2591 = vmatpush1.msra.mxu0 0.0
        %2592 = vmatprep.subr.mxu0 0.0
        %2593 = vmatpush1.msra.mxu0 0.0
        %2594 = vmatprep.subr.mxu0 0.0
        %2595 = vmatpush1.msra.mxu0 0.0
        %2596 = vmatprep.subr.mxu0 0.0
        %2597 = vmatpush1.msra.mxu0 0.0
        %2598 = vmatprep.subr.mxu0 0.0
        %2599 = vmatpush1.msra.mxu0 0.0
        %2600 = vmatprep.subr.mxu0 0.0
        %2601 = vmatpush1.msra.mxu0 0.0
        %2602 = vmatprep.subr.mxu0 0.0
        %2603 = vmatpush1.msra.mxu0 0.0
        %2604 = vmatprep.subr.mxu0 0.0
        %2605 = vmatpush1.msra.mxu0 0.0
        %2606 = vmatprep.subr.mxu0 0.0
        %2607 = vmatpush1.msra.mxu0 0.0
        %2608 = vmatprep.subr.mxu0 0.0
        %2609 = vmatpush1.msra.mxu0 0.0
        %2610 = vmatprep.subr.mxu0 0.0
        %2611 = vmatpush1.msra.mxu0 0.0
        %2612 = vmatprep.subr.mxu0 0.0
        %2613 = vmatpush1.msra.mxu0 0.0
        %2614 = vmatprep.subr.mxu0 0.0
        %2615 = vmatpush1.msra.mxu0 0.0
        %2616 = vmatprep.subr.mxu0 0.0
        %2617 = vmatpush1.msra.mxu0 0.0
        %2618 = vmatprep.subr.mxu0 0.0
        %2619 = vmatpush1.msra.mxu0 0.0
        %2620 = vmatprep.subr.mxu0 0.0
        %2621 = vmatpush1.msra.mxu0 0.0
        %2622 = vmatprep.subr.mxu0 0.0
        %2623 = vmatpush1.msra.mxu0 0.0
        %2624 = vmatprep.subr.mxu0 0.0
        %2625 = vmatpush1.msra.mxu0 0.0
        %2626 = vmatprep.mubr.f32.mxu0 0.0
        %2627 = vmatmul.mubr.f32.gmra.mrb[0].mxu0 %v2560
        %v2628 = vpop.f32.mrb[0].mxu0
        %v2629 = vadd.f32 %v2558, %v2628
        %v2630 = vpop.f32.mrb[0].mxu0
        %2631 = vdwg.mxu0
        %v2632 = vmax.f32 %v2629, 0.0
        %s2633 = scalar_lea.vmem %s7, 128
        %v2634 = vld [vmem:[%s2633] sm:$0xff]
        %v2635 = vld [vmem:[%s2633 + $0x8] sm:$0xff]
        %v2636 = vld [vmem:[%s2633 + $0x10] sm:$0xff]
        %v2637 = vld [vmem:[%s2633 + $0x18] sm:$0xff]
        %v2638 = vld [vmem:[%s2633 + $0x20] sm:$0xff]
        %v2639 = vld [vmem:[%s2633 + $0x28] sm:$0xff]
        %v2640 = vld [vmem:[%s2633 + $0x30] sm:$0xff]
        %v2641 = vld [vmem:[%s2633 + $0x38] sm:$0xff]
        %v2642 = vld [vmem:[%s2633 + $0x40] sm:$0xff]
        %v2643 = vld [vmem:[%s2633 + $0x48] sm:$0xff]
        %v2644 = vld [vmem:[%s2633 + $0x50] sm:$0xff]
        %v2645 = vld [vmem:[%s2633 + $0x58] sm:$0xff]
        %v2646 = vld [vmem:[%s2633 + $0x60] sm:$0xff]
        %v2647 = vld [vmem:[%s2633 + $0x68] sm:$0xff]
        %v2648 = vld [vmem:[%s2633 + $0x70] sm:$0xff]
        %v2649 = vld [vmem:[%s2633 + $0x78] sm:$0xff]
        %v2650 = vld [vmem:[%s4 + $0x9] sm:$0x1]
        %v2651 = vlaneseq
        %v2652 = vshrl.u32 %v2651, 7
        %v2653 = vsub.s32 0, %v2652
        %v2654 = vrot.slane %v2650, %v2653
        %2655 = vmatprep.subr.mxu0 0.0
        %2656 = vmatpush1.msra.mxu0 %v2634
        %2657 = vmatprep.subr.mxu0 0.0
        %2658 = vmatpush1.msra.mxu0 %v2635
        %2659 = vmatprep.subr.mxu0 0.0
        %2660 = vmatpush1.msra.mxu0 %v2636
        %2661 = vmatprep.subr.mxu0 0.0
        %2662 = vmatpush1.msra.mxu0 %v2637
        %2663 = vmatprep.subr.mxu0 0.0
        %2664 = vmatpush1.msra.mxu0 %v2638
        %2665 = vmatprep.subr.mxu0 0.0
        %2666 = vmatpush1.msra.mxu0 %v2639
        %2667 = vmatprep.subr.mxu0 0.0
        %2668 = vmatpush1.msra.mxu0 %v2640
        %2669 = vmatprep.subr.mxu0 0.0
        %2670 = vmatpush1.msra.mxu0 %v2641
        %2671 = vmatprep.subr.mxu0 0.0
        %2672 = vmatpush1.msra.mxu0 %v2642
        %2673 = vmatprep.subr.mxu0 0.0
        %2674 = vmatpush1.msra.mxu0 %v2643
        %2675 = vmatprep.subr.mxu0 0.0
        %2676 = vmatpush1.msra.mxu0 %v2644
        %2677 = vmatprep.subr.mxu0 0.0
        %2678 = vmatpush1.msra.mxu0 %v2645
        %2679 = vmatprep.subr.mxu0 0.0
        %2680 = vmatpush1.msra.mxu0 %v2646
        %2681 = vmatprep.subr.mxu0 0.0
        %2682 = vmatpush1.msra.mxu0 %v2647
        %2683 = vmatprep.subr.mxu0 0.0
        %2684 = vmatpush1.msra.mxu0 %v2648
        %2685 = vmatprep.subr.mxu0 0.0
        %2686 = vmatpush1.msra.mxu0 %v2649
        %2687 = vmatprep.subr.mxu0 0.0
        %2688 = vmatpush1.msra.mxu0 0.0
        %2689 = vmatprep.subr.mxu0 0.0
        %2690 = vmatpush1.msra.mxu0 0.0
        %2691 = vmatprep.subr.mxu0 0.0
        %2692 = vmatpush1.msra.mxu0 0.0
        %2693 = vmatprep.subr.mxu0 0.0
        %2694 = vmatpush1.msra.mxu0 0.0
        %2695 = vmatprep.subr.mxu0 0.0
        %2696 = vmatpush1.msra.mxu0 0.0
        %2697 = vmatprep.subr.mxu0 0.0
        %2698 = vmatpush1.msra.mxu0 0.0
        %2699 = vmatprep.subr.mxu0 0.0
        %2700 = vmatpush1.msra.mxu0 0.0
        %2701 = vmatprep.subr.mxu0 0.0
        %2702 = vmatpush1.msra.mxu0 0.0
        %2703 = vmatprep.subr.mxu0 0.0
        %2704 = vmatpush1.msra.mxu0 0.0
        %2705 = vmatprep.subr.mxu0 0.0
        %2706 = vmatpush1.msra.mxu0 0.0
        %2707 = vmatprep.subr.mxu0 0.0
        %2708 = vmatpush1.msra.mxu0 0.0
        %2709 = vmatprep.subr.mxu0 0.0
        %2710 = vmatpush1.msra.mxu0 0.0
        %2711 = vmatprep.subr.mxu0 0.0
        %2712 = vmatpush1.msra.mxu0 0.0
        %2713 = vmatprep.subr.mxu0 0.0
        %2714 = vmatpush1.msra.mxu0 0.0
        %2715 = vmatprep.subr.mxu0 0.0
        %2716 = vmatpush1.msra.mxu0 0.0
        %2717 = vmatprep.subr.mxu0 0.0
        %2718 = vmatpush1.msra.mxu0 0.0
        %2719 = vmatprep.mubr.f32.mxu0 0.0
        %2720 = vmatmul.mubr.f32.gmra.mrb[0].mxu0 %v2632
        %v2721 = vpop.f32.mrb[0].mxu0
        %v2722 = vadd.f32 %v2654, %v2721
        %v2723 = vpop.f32.mrb[0].mxu0
        %2724 = vdwg.mxu0
        %v2725 = vadd.f32 %v2722, %v2548
        %v2726 = vld [vmem:[%s4 + $0xa] sm:$0x1]
        %v2727 = vld [vmem:[%s4 + $0xb] sm:$0x1]
        %v2728 = vsel %vm620, %v2725, 0.0
        %2729 = vadd.xlane.f32.xlu0 %v2728
        %v2730 = vpop.xlane.xlu0 %2729
        %v2731 = vmul.f32 %v2730, %v1463
        %v2732 = vsub.f32 %v2725, %v2731
        %v2733 = vmul.f32 %v2732, %v2732
        %v2734 = vsel %vm620, %v2733, 0.0
        %2735 = vadd.xlane.f32.xlu0 %v2734
        %v2736 = vpop.xlane.xlu0 %2735
        %v2737 = vmul.f32 %v2736, %v1463
        %v2738 = vadd.f32 %v2737, 1e-05
        %v2739 = vrsqrt.pop %v2738
        %v2740 = vmul.f32 %v2732, %v2739
        %v2741 = vlaneseq
        %v2742 = vshrl.u32 %v2741, 7
        %v2743 = vsub.s32 0, %v2742
        %v2744 = vrot.slane %v2726, %v2743
        %v2745 = vmul.f32 %v2740, %v2744
        %v2746 = vlaneseq
        %v2747 = vshrl.u32 %v2746, 7
        %v2748 = vsub.s32 0, %v2747
        %v2749 = vrot.slane %v2727, %v2748
        %v2750 = vadd.f32 %v2745, %v2749
        %v2751 = vld [vmem:[%s614] sm:$0xff]
        %v2752 = vld [vmem:[%s8] sm:$0xff]
        %v2753 = vld [vmem:[%s8 + $0x8] sm:$0xff]
        %v2754 = vld [vmem:[%s8 + $0x10] sm:$0xff]
        %v2755 = vld [vmem:[%s8 + $0x18] sm:$0xff]
        %v2757 = vsel %vm620, %v2751, 0
        %2759 = vmatprep.subr.mxu0 0.0
        %2760 = vmatpush1.msra.mxu0 %v2752
        %2761 = vmatprep.subr.mxu0 0.0
        %2762 = vmatpush1.msra.mxu0 %v2753
        %2763 = vmatprep.subr.mxu0 0.0
        %2764 = vmatpush1.msra.mxu0 %v2754
        %2765 = vmatprep.subr.mxu0 0.0
        %2766 = vmatpush1.msra.mxu0 %v2755
        %2767 = vmatprep.subr.mxu0 0.0
        %2768 = vmatpush1.msra.mxu0 0.0
        %2769 = vmatprep.subr.mxu0 0.0
        %2770 = vmatpush1.msra.mxu0 0.0
        %2771 = vmatprep.subr.mxu0 0.0
        %2772 = vmatpush1.msra.mxu0 0.0
        %2773 = vmatprep.subr.mxu0 0.0
        %2774 = vmatpush1.msra.mxu0 0.0
        %2775 = vmatprep.subr.mxu0 0.0
        %2776 = vmatpush1.msra.mxu0 0.0
        %2777 = vmatprep.subr.mxu0 0.0
        %2778 = vmatpush1.msra.mxu0 0.0
        %2779 = vmatprep.subr.mxu0 0.0
        %2780 = vmatpush1.msra.mxu0 0.0
        %2781 = vmatprep.subr.mxu0 0.0
        %2782 = vmatpush1.msra.mxu0 0.0
        %2783 = vmatprep.subr.mxu0 0.0
        %2784 = vmatpush1.msra.mxu0 0.0
        %2785 = vmatprep.subr.mxu0 0.0
        %2786 = vmatpush1.msra.mxu0 0.0
        %2787 = vmatprep.subr.mxu0 0.0
        %2788 = vmatpush1.msra.mxu0 0.0
        %2789 = vmatprep.subr.mxu0 0.0
        %2790 = vmatpush1.msra.mxu0 0.0
        %2791 = vmatprep.subr.mxu0 0.0
        %2792 = vmatpush1.msra.mxu0 0.0
        %2793 = vmatprep.subr.mxu0 0.0
        %2794 = vmatpush1.msra.mxu0 0.0
        %2795 = vmatprep.subr.mxu0 0.0
        %2796 = vmatpush1.msra.mxu0 0.0
        %2797 = vmatprep.subr.mxu0 0.0
        %2798 = vmatpush1.msra.mxu0 0.0
        %2799 = vmatprep.subr.mxu0 0.0
        %2800 = vmatpush1.msra.mxu0 0.0
        %2801 = vmatprep.subr.mxu0 0.0
        %2802 = vmatpush1.msra.mxu0 0.0
        %2803 = vmatprep.subr.mxu0 0.0
        %2804 = vmatpush1.msra.mxu0 0.0
        %2805 = vmatprep.subr.mxu0 0.0
        %2806 = vmatpush1.msra.mxu0 0.0
        %2807 = vmatprep.subr.mxu0 0.0
        %2808 = vmatpush1.msra.mxu0 0.0
        %2809 = vmatprep.subr.mxu0 0.0
        %2810 = vmatpush1.msra.mxu0 0.0
        %2811 = vmatprep.subr.mxu0 0.0
        %2812 = vmatpush1.msra.mxu0 0.0
        %2813 = vmatprep.subr.mxu0 0.0
        %2814 = vmatpush1.msra.mxu0 0.0
        %2815 = vmatprep.subr.mxu0 0.0
        %2816 = vmatpush1.msra.mxu0 0.0
        %2817 = vmatprep.subr.mxu0 0.0
        %2818 = vmatpush1.msra.mxu0 0.0
        %2819 = vmatprep.subr.mxu0 0.0
        %2820 = vmatpush1.msra.mxu0 0.0
        %2821 = vmatprep.subr.mxu0 0.0
        %2822 = vmatpush1.msra.mxu0 0.0
        %2823 = vmatprep.mubr.f32.mxu0 0.0
        %2824 = vmatmul.mubr.f32.gmra.mrb[0].mxu0 %v2757
        %v2825 = vpop.f32.mrb[0].mxu0
        %v2826 = vadd.f32 0.0, %v2825
        %v2827 = vpop.f32.mrb[0].mxu0
        %2828 = vdwg.mxu0
        %2830 = vrot.lane.b32.xlu0 %v2826, 96
        %v2831 = vpop.permute.xlu0 %2830
        %v2832 = vsel %vm697, %v2826, 0
        %v2834 = vsel %vm697, %v2831, 0
        %2836 = vmatprep.subr.mxu0 0.0
        %2837 = vmatpush1.xpose.msra.mxu0 %v2834
        %2838 = vmatprep.subr.mxu0 0.0
        %2839 = vmatpush1.xpose.msra.mxu0 0.0
        %2840 = vmatprep.subr.mxu0 0.0
        %2841 = vmatpush1.xpose.msra.mxu0 0.0
        %2842 = vmatprep.subr.mxu0 0.0
        %2843 = vmatpush1.xpose.msra.mxu0 0.0
        %2844 = vmatprep.subr.mxu0 0.0
        %2845 = vmatpush1.xpose.msra.mxu0 0.0
        %2846 = vmatprep.subr.mxu0 0.0
        %2847 = vmatpush1.xpose.msra.mxu0 0.0
        %2848 = vmatprep.subr.mxu0 0.0
        %2849 = vmatpush1.xpose.msra.mxu0 0.0
        %2850 = vmatprep.subr.mxu0 0.0
        %2851 = vmatpush1.xpose.msra.mxu0 0.0
        %2852 = vmatprep.subr.mxu0 0.0
        %2853 = vmatpush1.xpose.msra.mxu0 0.0
        %2854 = vmatprep.subr.mxu0 0.0
        %2855 = vmatpush1.xpose.msra.mxu0 0.0
        %2856 = vmatprep.subr.mxu0 0.0
        %2857 = vmatpush1.xpose.msra.mxu0 0.0
        %2858 = vmatprep.subr.mxu0 0.0
        %2859 = vmatpush1.xpose.msra.mxu0 0.0
        %2860 = vmatprep.subr.mxu0 0.0
        %2861 = vmatpush1.xpose.msra.mxu0 0.0
        %2862 = vmatprep.subr.mxu0 0.0
        %2863 = vmatpush1.xpose.msra.mxu0 0.0
        %2864 = vmatprep.subr.mxu0 0.0
        %2865 = vmatpush1.xpose.msra.mxu0 0.0
        %2866 = vmatprep.subr.mxu0 0.0
        %2867 = vmatpush1.xpose.msra.mxu0 0.0
        %2868 = vmatprep.subr.mxu0 0.0
        %2869 = vmatpush1.xpose.msra.mxu0 0.0
        %2870 = vmatprep.subr.mxu0 0.0
        %2871 = vmatpush1.xpose.msra.mxu0 0.0
        %2872 = vmatprep.subr.mxu0 0.0
        %2873 = vmatpush1.xpose.msra.mxu0 0.0
        %2874 = vmatprep.subr.mxu0 0.0
        %2875 = vmatpush1.xpose.msra.mxu0 0.0
        %2876 = vmatprep.subr.mxu0 0.0
        %2877 = vmatpush1.xpose.msra.mxu0 0.0
        %2878 = vmatprep.subr.mxu0 0.0
        %2879 = vmatpush1.xpose.msra.mxu0 0.0
        %2880 = vmatprep.subr.mxu0 0.0
        %2881 = vmatpush1.xpose.msra.mxu0 0.0
        %2882 = vmatprep.subr.mxu0 0.0
        %2883 = vmatpush1.xpose.msra.mxu0 0.0
        %2884 = vmatprep.subr.mxu0 0.0
        %2885 = vmatpush1.xpose.msra.mxu0 0.0
        %2886 = vmatprep.subr.mxu0 0.0
        %2887 = vmatpush1.xpose.msra.mxu0 0.0
        %2888 = vmatprep.subr.mxu0 0.0
        %2889 = vmatpush1.xpose.msra.mxu0 0.0
        %2890 = vmatprep.subr.mxu0 0.0
        %2891 = vmatpush1.xpose.msra.mxu0 0.0
        %2892 = vmatprep.subr.mxu0 0.0
        %2893 = vmatpush1.xpose.msra.mxu0 0.0
        %2894 = vmatprep.subr.mxu0 0.0
        %2895 = vmatpush1.xpose.msra.mxu0 0.0
        %2896 = vmatprep.subr.mxu0 0.0
        %2897 = vmatpush1.xpose.msra.mxu0 0.0
        %2898 = vmatprep.subr.mxu0 0.0
        %2899 = vmatpush1.xpose.msra.mxu0 0.0
        %2900 = vmatprep.mubr.f32.mxu0 0.0
        %2901 = vmatmul.mubr.f32.gmra.mrb[0].mxu0 %v2832
        %v2902 = vpop.f32.mrb[0].mxu0
        %v2903 = vadd.f32 0.0, %v2902
        %v2904 = vpop.f32.mrb[0].mxu0
        %2905 = vdwg.mxu0
        %v2906 = vmul.f32 %v2903, 2.828427
        %v2907 = vsel %vm697, %v2906, -inf
        %2908 = vmax.xlane.f32.xlu0 %v2907
        %v2909 = vpop.xlane.xlu0 %2908
        %v2910 = vsub.f32 %v2906, %v2909
        %v2911 = vmul.f32 %v2910, 1.442695
        %v2912 = vpow.pop %v2911
        %v2913 = vsel %vm697, %v2912, 0.0
        %2914 = vadd.xlane.f32.xlu0 %v2913
        %v2915 = vpop.xlane.xlu0 %2914
        %v2916 = vrcp.pop %v2915
        %v2917 = vmul.f32 %v2912, %v2916
        %2918 = vrot.lane.b32.xlu0 %v2826, 64
        %v2919 = vpop.permute.xlu0 %2918
        %v2922 = vsel %vm697, %v2917, 0
        %2924 = vmatprep.subr.mxu0 0.0
        %2925 = vmatpush1.msra.mxu0 %v2919
        %2926 = vmatprep.subr.mxu0 0.0
        %2927 = vmatpush1.msra.mxu0 0.0
        %2928 = vmatprep.subr.mxu0 0.0
        %2929 = vmatpush1.msra.mxu0 0.0
        %2930 = vmatprep.subr.mxu0 0.0
        %2931 = vmatpush1.msra.mxu0 0.0
        %2932 = vmatprep.subr.mxu0 0.0
        %2933 = vmatpush1.msra.mxu0 0.0
        %2934 = vmatprep.subr.mxu0 0.0
        %2935 = vmatpush1.msra.mxu0 0.0
        %2936 = vmatprep.subr.mxu0 0.0
        %2937 = vmatpush1.msra.mxu0 0.0
        %2938 = vmatprep.subr.mxu0 0.0
        %2939 = vmatpush1.msra.mxu0 0.0
        %2940 = vmatprep.subr.mxu0 0.0
        %2941 = vmatpush1.msra.mxu0 0.0
        %2942 = vmatprep.subr.mxu0 0.0
        %2943 = vmatpush1.msra.mxu0 0.0
        %2944 = vmatprep.subr.mxu0 0.0
        %2945 = vmatpush1.msra.mxu0 0.0
        %2946 = vmatprep.subr.mxu0 0.0
        %2947 = vmatpush1.msra.mxu0 0.0
        %2948 = vmatprep.subr.mxu0 0.0
        %2949 = vmatpush1.msra.mxu0 0.0
        %2950 = vmatprep.subr.mxu0 0.0
        %2951 = vmatpush1.msra.mxu0 0.0
        %2952 = vmatprep.subr.mxu0 0.0
        %2953 = vmatpush1.msra.mxu0 0.0
        %2954 = vmatprep.subr.mxu0 0.0
        %2955 = vmatpush1.msra.mxu0 0.0
        %2956 = vmatprep.subr.mxu0 0.0
        %2957 = vmatpush1.msra.mxu0 0.0
        %2958 = vmatprep.subr.mxu0 0.0
        %2959 = vmatpush1.msra.mxu0 0.0
        %2960 = vmatprep.subr.mxu0 0.0
        %2961 = vmatpush1.msra.mxu0 0.0
        %2962 = vmatprep.subr.mxu0 0.0
        %2963 = vmatpush1.msra.mxu0 0.0
        %2964 = vmatprep.subr.mxu0 0.0
        %2965 = vmatpush1.msra.mxu0 0.0
        %2966 = vmatprep.subr.mxu0 0.0
        %2967 = vmatpush1.msra.mxu0 0.0
        %2968 = vmatprep.subr.mxu0 0.0
        %2969 = vmatpush1.msra.mxu0 0.0
        %2970 = vmatprep.subr.mxu0 0.0
        %2971 = vmatpush1.msra.mxu0 0.0
        %2972 = vmatprep.subr.mxu0 0.0
        %2973 = vmatpush1.msra.mxu0 0.0
        %2974 = vmatprep.subr.mxu0 0.0
        %2975 = vmatpush1.msra.mxu0 0.0
        %2976 = vmatprep.subr.mxu0 0.0
        %2977 = vmatpush1.msra.mxu0 0.0
        %2978 = vmatprep.subr.mxu0 0.0
        %2979 = vmatpush1.msra.mxu0 0.0
        %2980 = vmatprep.subr.mxu0 0.0
        %2981 = vmatpush1.msra.mxu0 0.0
        %2982 = vmatprep.subr.mxu0 0.0
        %2983 = vmatpush1.msra.mxu0 0.0
        %2984 = vmatprep.subr.mxu0 0.0
        %2985 = vmatpush1.msra.mxu0 0.0
        %2986 = vmatprep.subr.mxu0 0.0
        %2987 = vmatpush1.msra.mxu0 0.0
        %2988 = vmatprep.mubr.f32.mxu0 0.0
        %2989 = vmatmul.mubr.f32.gmra.mrb[0].mxu0 %v2922
        %v2990 = vpop.f32.mrb[0].mxu0
        %v2991 = vadd.f32 0.0, %v2990
        %v2992 = vpop.f32.mrb[0].mxu0
        %2993 = vdwg.mxu0
        %2994 = vrot.lane.b32.xlu0 %v2826, 120
        %v2995 = vpop.permute.xlu0 %2994
        %2996 = vrot.lane.b32.xlu0 %v2826, 88
        %v2997 = vpop.permute.xlu0 %2996
        %v2998 = vsel %vm697, %v2995, 0
        %v3000 = vsel %vm697, %v2997, 0
        %3002 = vmatprep.subr.mxu0 0.0
        %3003 = vmatpush1.xpose.msra.mxu0 %v3000
        %3004 = vmatprep.subr.mxu0 0.0
        %3005 = vmatpush1.xpose.msra.mxu0 0.0
        %3006 = vmatprep.subr.mxu0 0.0
        %3007 = vmatpush1.xpose.msra.mxu0 0.0
        %3008 = vmatprep.subr.mxu0 0.0
        %3009 = vmatpush1.xpose.msra.mxu0 0.0
        %3010 = vmatprep.subr.mxu0 0.0
        %3011 = vmatpush1.xpose.msra.mxu0 0.0
        %3012 = vmatprep.subr.mxu0 0.0
        %3013 = vmatpush1.xpose.msra.mxu0 0.0
        %3014 = vmatprep.subr.mxu0 0.0
        %3015 = vmatpush1.xpose.msra.mxu0 0.0
        %3016 = vmatprep.subr.mxu0 0.0
        %3017 = vmatpush1.xpose.msra.mxu0 0.0
        %3018 = vmatprep.subr.mxu0 0.0
        %3019 = vmatpush1.xpose.msra.mxu0 0.0
        %3020 = vmatprep.subr.mxu0 0.0
        %3021 = vmatpush1.xpose.msra.mxu0 0.0
        %3022 = vmatprep.subr.mxu0 0.0
        %3023 = vmatpush1.xpose.msra.mxu0 0.0
        %3024 = vmatprep.subr.mxu0 0.0
        %3025 = vmatpush1.xpose.msra.mxu0 0.0
        %3026 = vmatprep.subr.mxu0 0.0
        %3027 = vmatpush1.xpose.msra.mxu0 0.0
        %3028 = vmatprep.subr.mxu0 0.0
        %3029 = vmatpush1.xpose.msra.mxu0 0.0
        %3030 = vmatprep.subr.mxu0 0.0
        %3031 = vmatpush1.xpose.msra.mxu0 0.0
        %3032 = vmatprep.subr.mxu0 0.0
        %3033 = vmatpush1.xpose.msra.mxu0 0.0
        %3034 = vmatprep.subr.mxu0 0.0
        %3035 = vmatpush1.xpose.msra.mxu0 0.0
        %3036 = vmatprep.subr.mxu0 0.0
        %3037 = vmatpush1.xpose.msra.mxu0 0.0
        %3038 = vmatprep.subr.mxu0 0.0
        %3039 = vmatpush1.xpose.msra.mxu0 0.0
        %3040 = vmatprep.subr.mxu0 0.0
        %3041 = vmatpush1.xpose.msra.mxu0 0.0
        %3042 = vmatprep.subr.mxu0 0.0
        %3043 = vmatpush1.xpose.msra.mxu0 0.0
        %3044 = vmatprep.subr.mxu0 0.0
        %3045 = vmatpush1.xpose.msra.mxu0 0.0
        %3046 = vmatprep.subr.mxu0 0.0
        %3047 = vmatpush1.xpose.msra.mxu0 0.0
        %3048 = vmatprep.subr.mxu0 0.0
        %3049 = vmatpush1.xpose.msra.mxu0 0.0
        %3050 = vmatprep.subr.mxu0 0.0
        %3051 = vmatpush1.xpose.msra.mxu0 0.0
        %3052 = vmatprep.subr.mxu0 0.0
        %3053 = vmatpush1.xpose.msra.mxu0 0.0
        %3054 = vmatprep.subr.mxu0 0.0
        %3055 = vmatpush1.xpose.msra.mxu0 0.0
        %3056 = vmatprep.subr.mxu0 0.0
        %3057 = vmatpush1.xpose.msra.mxu0 0.0
        %3058 = vmatprep.subr.mxu0 0.0
        %3059 = vmatpush1.xpose.msra.mxu0 0.0
        %3060 = vmatprep.subr.mxu0 0.0
        %3061 = vmatpush1.xpose.msra.mxu0 0.0
        %3062 = vmatprep.subr.mxu0 0.0
        %3063 = vmatpush1.xpose.msra.mxu0 0.0
        %3064 = vmatprep.subr.mxu0 0.0
        %3065 = vmatpush1.xpose.msra.mxu0 0.0
        %3066 = vmatprep.mubr.f32.mxu0 0.0
        %3067 = vmatmul.mubr.f32.gmra.mrb[0].mxu0 %v2998
        %v3068 = vpop.f32.mrb[0].mxu0
        %v3069 = vadd.f32 0.0, %v3068
        %v3070 = vpop.f32.mrb[0].mxu0
        %3071 = vdwg.mxu0
        %v3072 = vmul.f32 %v3069, 2.828427
        %v3073 = vsel %vm697, %v3072, -inf
        %3074 = vmax.xlane.f32.xlu0 %v3073
        %v3075 = vpop.xlane.xlu0 %3074
        %v3076 = vsub.f32 %v3072, %v3075
        %v3077 = vmul.f32 %v3076, 1.442695
        %v3078 = vpow.pop %v3077
        %v3079 = vsel %vm697, %v3078, 0.0
        %3080 = vadd.xlane.f32.xlu0 %v3079
        %v3081 = vpop.xlane.xlu0 %3080
        %v3082 = vrcp.pop %v3081
        %v3083 = vmul.f32 %v3078, %v3082
        %3084 = vrot.lane.b32.xlu0 %v2826, 56
        %v3085 = vpop.permute.xlu0 %3084
        %v3088 = vsel %vm697, %v3083, 0
        %3090 = vmatprep.subr.mxu0 0.0
        %3091 = vmatpush1.msra.mxu0 %v3085
        %3092 = vmatprep.subr.mxu0 0.0
        %3093 = vmatpush1.msra.mxu0 0.0
        %3094 = vmatprep.subr.mxu0 0.0
        %3095 = vmatpush1.msra.mxu0 0.0
        %3096 = vmatprep.subr.mxu0 0.0
        %3097 = vmatpush1.msra.mxu0 0.0
        %3098 = vmatprep.subr.mxu0 0.0
        %3099 = vmatpush1.msra.mxu0 0.0
        %3100 = vmatprep.subr.mxu0 0.0
        %3101 = vmatpush1.msra.mxu0 0.0
        %3102 = vmatprep.subr.mxu0 0.0
        %3103 = vmatpush1.msra.mxu0 0.0
        %3104 = vmatprep.subr.mxu0 0.0
        %3105 = vmatpush1.msra.mxu0 0.0
        %3106 = vmatprep.subr.mxu0 0.0
        %3107 = vmatpush1.msra.mxu0 0.0
        %3108 = vmatprep.subr.mxu0 0.0
        %3109 = vmatpush1.msra.mxu0 0.0
        %3110 = vmatprep.subr.mxu0 0.0
        %3111 = vmatpush1.msra.mxu0 0.0
        %3112 = vmatprep.subr.mxu0 0.0
        %3113 = vmatpush1.msra.mxu0 0.0
        %3114 = vmatprep.subr.mxu0 0.0
        %3115 = vmatpush1.msra.mxu0 0.0
        %3116 = vmatprep.subr.mxu0 0.0
        %3117 = vmatpush1.msra.mxu0 0.0
        %3118 = vmatprep.subr.mxu0 0.0
        %3119 = vmatpush1.msra.mxu0 0.0
        %3120 = vmatprep.subr.mxu0 0.0
        %3121 = vmatpush1.msra.mxu0 0.0
        %3122 = vmatprep.subr.mxu0 0.0
        %3123 = vmatpush1.msra.mxu0 0.0
        %3124 = vmatprep.subr.mxu0 0.0
        %3125 = vmatpush1.msra.mxu0 0.0
        %3126 = vmatprep.subr.mxu0 0.0
        %3127 = vmatpush1.msra.mxu0 0.0
        %3128 = vmatprep.subr.mxu0 0.0
        %3129 = vmatpush1.msra.mxu0 0.0
        %3130 = vmatprep.subr.mxu0 0.0
        %3131 = vmatpush1.msra.mxu0 0.0
        %3132 = vmatprep.subr.mxu0 0.0
        %3133 = vmatpush1.msra.mxu0 0.0
        %3134 = vmatprep.subr.mxu0 0.0
        %3135 = vmatpush1.msra.mxu0 0.0
        %3136 = vmatprep.subr.mxu0 0.0
        %3137 = vmatpush1.msra.mxu0 0.0
        %3138 = vmatprep.subr.mxu0 0.0
        %3139 = vmatpush1.msra.mxu0 0.0
        %3140 = vmatprep.subr.mxu0 0.0
        %3141 = vmatpush1.msra.mxu0 0.0
        %3142 = vmatprep.subr.mxu0 0.0
        %3143 = vmatpush1.msra.mxu0 0.0
        %3144 = vmatprep.subr.mxu0 0.0
        %3145 = vmatpush1.msra.mxu0 0.0
        %3146 = vmatprep.subr.mxu0 0.0
        %3147 = vmatpush1.msra.mxu0 0.0
        %3148 = vmatprep.subr.mxu0 0.0
        %3149 = vmatpush1.msra.mxu0 0.0
        %3150 = vmatprep.subr.mxu0 0.0
        %3151 = vmatpush1.msra.mxu0 0.0
        %3152 = vmatprep.subr.mxu0 0.0
        %3153 = vmatpush1.msra.mxu0 0.0
        %3154 = vmatprep.mubr.f32.mxu0 0.0
        %3155 = vmatmul.mubr.f32.gmra.mrb[0].mxu0 %v3088
        %v3156 = vpop.f32.mrb[0].mxu0
        %v3157 = vadd.f32 0.0, %v3156
        %v3158 = vpop.f32.mrb[0].mxu0
        %3159 = vdwg.mxu0
        %3160 = vrot.lane.b32.xlu0 %v2826, 112
        %v3161 = vpop.permute.xlu0 %3160
        %3162 = vrot.lane.b32.xlu0 %v2826, 80
        %v3163 = vpop.permute.xlu0 %3162
        %v3164 = vsel %vm697, %v3161, 0
        %v3166 = vsel %vm697, %v3163, 0
        %3168 = vmatprep.subr.mxu0 0.0
        %3169 = vmatpush1.xpose.msra.mxu0 %v3166
        %3170 = vmatprep.subr.mxu0 0.0
        %3171 = vmatpush1.xpose.msra.mxu0 0.0
        %3172 = vmatprep.subr.mxu0 0.0
        %3173 = vmatpush1.xpose.msra.mxu0 0.0
        %3174 = vmatprep.subr.mxu0 0.0
        %3175 = vmatpush1.xpose.msra.mxu0 0.0
        %3176 = vmatprep.subr.mxu0 0.0
        %3177 = vmatpush1.xpose.msra.mxu0 0.0
        %3178 = vmatprep.subr.mxu0 0.0
        %3179 = vmatpush1.xpose.msra.mxu0 0.0
        %3180 = vmatprep.subr.mxu0 0.0
        %3181 = vmatpush1.xpose.msra.mxu0 0.0
        %3182 = vmatprep.subr.mxu0 0.0
        %3183 = vmatpush1.xpose.msra.mxu0 0.0
        %3184 = vmatprep.subr.mxu0 0.0
        %3185 = vmatpush1.xpose.msra.mxu0 0.0
        %3186 = vmatprep.subr.mxu0 0.0
        %3187 = vmatpush1.xpose.msra.mxu0 0.0
        %3188 = vmatprep.subr.mxu0 0.0
        %3189 = vmatpush1.xpose.msra.mxu0 0.0
        %3190 = vmatprep.subr.mxu0 0.0
        %3191 = vmatpush1.xpose.msra.mxu0 0.0
        %3192 = vmatprep.subr.mxu0 0.0
        %3193 = vmatpush1.xpose.msra.mxu0 0.0
        %3194 = vmatprep.subr.mxu0 0.0
        %3195 = vmatpush1.xpose.msra.mxu0 0.0
        %3196 = vmatprep.subr.mxu0 0.0
        %3197 = vmatpush1.xpose.msra.mxu0 0.0
        %3198 = vmatprep.subr.mxu0 0.0
        %3199 = vmatpush1.xpose.msra.mxu0 0.0
        %3200 = vmatprep.subr.mxu0 0.0
        %3201 = vmatpush1.xpose.msra.mxu0 0.0
        %3202 = vmatprep.subr.mxu0 0.0
        %3203 = vmatpush1.xpose.msra.mxu0 0.0
        %3204 = vmatprep.subr.mxu0 0.0
        %3205 = vmatpush1.xpose.msra.mxu0 0.0
        %3206 = vmatprep.subr.mxu0 0.0
        %3207 = vmatpush1.xpose.msra.mxu0 0.0
        %3208 = vmatprep.subr.mxu0 0.0
        %3209 = vmatpush1.xpose.msra.mxu0 0.0
        %3210 = vmatprep.subr.mxu0 0.0
        %3211 = vmatpush1.xpose.msra.mxu0 0.0
        %3212 = vmatprep.subr.mxu0 0.0
        %3213 = vmatpush1.xpose.msra.mxu0 0.0
        %3214 = vmatprep.subr.mxu0 0.0
        %3215 = vmatpush1.xpose.msra.mxu0 0.0
        %3216 = vmatprep.subr.mxu0 0.0
        %3217 = vmatpush1.xpose.msra.mxu0 0.0
        %3218 = vmatprep.subr.mxu0 0.0
        %3219 = vmatpush1.xpose.msra.mxu0 0.0
        %3220 = vmatprep.subr.mxu0 0.0
        %3221 = vmatpush1.xpose.msra.mxu0 0.0
        %3222 = vmatprep.subr.mxu0 0.0
        %3223 = vmatpush1.xpose.msra.mxu0 0.0
        %3224 = vmatprep.subr.mxu0 0.0
        %3225 = vmatpush1.xpose.msra.mxu0 0.0
        %3226 = vmatprep.subr.mxu0 0.0
        %3227 = vmatpush1.xpose.msra.mxu0 0.0
        %3228 = vmatprep.subr.mxu0 0.0
        %3229 = vmatpush1.xpose.msra.mxu0 0.0
        %3230 = vmatprep.subr.mxu0 0.0
        %3231 = vmatpush1.xpose.msra.mxu0 0.0
        %3232 = vmatprep.mubr.f32.mxu0 0.0
        %3233 = vmatmul.mubr.f32.gmra.mrb[0].mxu0 %v3164
        %v3234 = vpop.f32.mrb[0].mxu0
        %v3235 = vadd.f32 0.0, %v3234
        %v3236 = vpop.f32.mrb[0].mxu0
        %3237 = vdwg.mxu0
        %v3238 = vmul.f32 %v3235, 2.828427
        %v3239 = vsel %vm697, %v3238, -inf
        %3240 = vmax.xlane.f32.xlu0 %v3239
        %v3241 = vpop.xlane.xlu0 %3240
        %v3242 = vsub.f32 %v3238, %v3241
        %v3243 = vmul.f32 %v3242, 1.442695
        %v3244 = vpow.pop %v3243
        %v3245 = vsel %vm697, %v3244, 0.0
        %3246 = vadd.xlane.f32.xlu0 %v3245
        %v3247 = vpop.xlane.xlu0 %3246
        %v3248 = vrcp.pop %v3247
        %v3249 = vmul.f32 %v3244, %v3248
        %3250 = vrot.lane.b32.xlu0 %v2826, 48
        %v3251 = vpop.permute.xlu0 %3250
        %v3254 = vsel %vm697, %v3249, 0
        %3256 = vmatprep.subr.mxu0 0.0
        %3257 = vmatpush1.msra.mxu0 %v3251
        %3258 = vmatprep.subr.mxu0 0.0
        %3259 = vmatpush1.msra.mxu0 0.0
        %3260 = vmatprep.subr.mxu0 0.0
        %3261 = vmatpush1.msra.mxu0 0.0
        %3262 = vmatprep.subr.mxu0 0.0
        %3263 = vmatpush1.msra.mxu0 0.0
        %3264 = vmatprep.subr.mxu0 0.0
        %3265 = vmatpush1.msra.mxu0 0.0
        %3266 = vmatprep.subr.mxu0 0.0
        %3267 = vmatpush1.msra.mxu0 0.0
        %3268 = vmatprep.subr.mxu0 0.0
        %3269 = vmatpush1.msra.mxu0 0.0
        %3270 = vmatprep.subr.mxu0 0.0
        %3271 = vmatpush1.msra.mxu0 0.0
        %3272 = vmatprep.subr.mxu0 0.0
        %3273 = vmatpush1.msra.mxu0 0.0
        %3274 = vmatprep.subr.mxu0 0.0
        %3275 = vmatpush1.msra.mxu0 0.0
        %3276 = vmatprep.subr.mxu0 0.0
        %3277 = vmatpush1.msra.mxu0 0.0
        %3278 = vmatprep.subr.mxu0 0.0
        %3279 = vmatpush1.msra.mxu0 0.0
        %3280 = vmatprep.subr.mxu0 0.0
        %3281 = vmatpush1.msra.mxu0 0.0
        %3282 = vmatprep.subr.mxu0 0.0
        %3283 = vmatpush1.msra.mxu0 0.0
        %3284 = vmatprep.subr.mxu0 0.0
        %3285 = vmatpush1.msra.mxu0 0.0
        %3286 = vmatprep.subr.mxu0 0.0
        %3287 = vmatpush1.msra.mxu0 0.0
        %3288 = vmatprep.subr.mxu0 0.0
        %3289 = vmatpush1.msra.mxu0 0.0
        %3290 = vmatprep.subr.mxu0 0.0
        %3291 = vmatpush1.msra.mxu0 0.0
        %3292 = vmatprep.subr.mxu0 0.0
        %3293 = vmatpush1.msra.mxu0 0.0
        %3294 = vmatprep.subr.mxu0 0.0
        %3295 = vmatpush1.msra.mxu0 0.0
        %3296 = vmatprep.subr.mxu0 0.0
        %3297 = vmatpush1.msra.mxu0 0.0
        %3298 = vmatprep.subr.mxu0 0.0
        %3299 = vmatpush1.msra.mxu0 0.0
        %3300 = vmatprep.subr.mxu0 0.0
        %3301 = vmatpush1.msra.mxu0 0.0
        %3302 = vmatprep.subr.mxu0 0.0
        %3303 = vmatpush1.msra.mxu0 0.0
        %3304 = vmatprep.subr.mxu0 0.0
        %3305 = vmatpush1.msra.mxu0 0.0
        %3306 = vmatprep.subr.mxu0 0.0
        %3307 = vmatpush1.msra.mxu0 0.0
        %3308 = vmatprep.subr.mxu0 0.0
        %3309 = vmatpush1.msra.mxu0 0.0
        %3310 = vmatprep.subr.mxu0 0.0
        %3311 = vmatpush1.msra.mxu0 0.0
        %3312 = vmatprep.subr.mxu0 0.0
        %3313 = vmatpush1.msra.mxu0 0.0
        %3314 = vmatprep.subr.mxu0 0.0
        %3315 = vmatpush1.msra.mxu0 0.0
        %3316 = vmatprep.subr.mxu0 0.0
        %3317 = vmatpush1.msra.mxu0 0.0
        %3318 = vmatprep.subr.mxu0 0.0
        %3319 = vmatpush1.msra.mxu0 0.0
        %3320 = vmatprep.mubr.f32.mxu0 0.0
        %3321 = vmatmul.mubr.f32.gmra.mrb[0].mxu0 %v3254
        %v3322 = vpop.f32.mrb[0].mxu0
        %v3323 = vadd.f32 0.0, %v3322
        %v3324 = vpop.f32.mrb[0].mxu0
        %3325 = vdwg.mxu0
        %3326 = vrot.lane.b32.xlu0 %v2826, 104
        %v3327 = vpop.permute.xlu0 %3326
        %3328 = vrot.lane.b32.xlu0 %v2826, 72
        %v3329 = vpop.permute.xlu0 %3328
        %v3330 = vsel %vm697, %v3327, 0
        %v3332 = vsel %vm697, %v3329, 0
        %3334 = vmatprep.subr.mxu0 0.0
        %3335 = vmatpush1.xpose.msra.mxu0 %v3332
        %3336 = vmatprep.subr.mxu0 0.0
        %3337 = vmatpush1.xpose.msra.mxu0 0.0
        %3338 = vmatprep.subr.mxu0 0.0
        %3339 = vmatpush1.xpose.msra.mxu0 0.0
        %3340 = vmatprep.subr.mxu0 0.0
        %3341 = vmatpush1.xpose.msra.mxu0 0.0
        %3342 = vmatprep.subr.mxu0 0.0
        %3343 = vmatpush1.xpose.msra.mxu0 0.0
        %3344 = vmatprep.subr.mxu0 0.0
        %3345 = vmatpush1.xpose.msra.mxu0 0.0
        %3346 = vmatprep.subr.mxu0 0.0
        %3347 = vmatpush1.xpose.msra.mxu0 0.0
        %3348 = vmatprep.subr.mxu0 0.0
        %3349 = vmatpush1.xpose.msra.mxu0 0.0
        %3350 = vmatprep.subr.mxu0 0.0
        %3351 = vmatpush1.xpose.msra.mxu0 0.0
        %3352 = vmatprep.subr.mxu0 0.0
        %3353 = vmatpush1.xpose.msra.mxu0 0.0
        %3354 = vmatprep.subr.mxu0 0.0
        %3355 = vmatpush1.xpose.msra.mxu0 0.0
        %3356 = vmatprep.subr.mxu0 0.0
        %3357 = vmatpush1.xpose.msra.mxu0 0.0
        %3358 = vmatprep.subr.mxu0 0.0
        %3359 = vmatpush1.xpose.msra.mxu0 0.0
        %3360 = vmatprep.subr.mxu0 0.0
        %3361 = vmatpush1.xpose.msra.mxu0 0.0
        %3362 = vmatprep.subr.mxu0 0.0
        %3363 = vmatpush1.xpose.msra.mxu0 0.0
        %3364 = vmatprep.subr.mxu0 0.0
        %3365 = vmatpush1.xpose.msra.mxu0 0.0
        %3366 = vmatprep.subr.mxu0 0.0
        %3367 = vmatpush1.xpose.msra.mxu0 0.0
        %3368 = vmatprep.subr.mxu0 0.0
        %3369 = vmatpush1.xpose.msra.mxu0 0.0
        %3370 = vmatprep.subr.mxu0 0.0
        %3371 = vmatpush1.xpose.msra.mxu0 0.0
        %3372 = vmatprep.subr.mxu0 0.0
        %3373 = vmatpush1.xpose.msra.mxu0 0.0
        %3374 = vmatprep.subr.mxu0 0.0
        %3375 = vmatpush1.xpose.msra.mxu0 0.0
        %3376 = vmatprep.subr.mxu0 0.0
        %3377 = vmatpush1.xpose.msra.mxu0 0.0
        %3378 = vmatprep.subr.mxu0 0.0
        %3379 = vmatpush1.xpose.msra.mxu0 0.0
        %3380 = vmatprep.subr.mxu0 0.0
        %3381 = vmatpush1.xpose.msra.mxu0 0.0
        %3382 = vmatprep.subr.mxu0 0.0
        %3383 = vmatpush1.xpose.msra.mxu0 0.0
        %3384 = vmatprep.subr.mxu0 0.0
        %3385 = vmatpush1.xpose.msra.mxu0 0.0
        %3386 = vmatprep.subr.mxu0 0.0
        %3387 = vmatpush1.xpose.msra.mxu0 0.0
        %3388 = vmatprep.subr.mxu0 0.0
        %3389 = vmatpush1.xpose.msra.mxu0 0.0
        %3390 = vmatprep.subr.mxu0 0.0
        %3391 = vmatpush1.xpose.msra.mxu0 0.0
        %3392 = vmatprep.subr.mxu0 0.0
        %3393 = vmatpush1.xpose.msra.mxu0 0.0
        %3394 = vmatprep.subr.mxu0 0.0
        %3395 = vmatpush1.xpose.msra.mxu0 0.0
        %3396 = vmatprep.subr.mxu0 0.0
        %3397 = vmatpush1.xpose.msra.mxu0 0.0
        %3398 = vmatprep.mubr.f32.mxu0 0.0
        %3399 = vmatmul.mubr.f32.gmra.mrb[0].mxu0 %v3330
        %v3400 = vpop.f32.mrb[0].mxu0
        %v3401 = vadd.f32 0.0, %v3400
        %v3402 = vpop.f32.mrb[0].mxu0
        %3403 = vdwg.mxu0
        %v3404 = vmul.f32 %v3401, 2.828427
        %v3405 = vsel %vm697, %v3404, -inf
        %3406 = vmax.xlane.f32.xlu0 %v3405
        %v3407 = vpop.xlane.xlu0 %3406
        %v3408 = vsub.f32 %v3404, %v3407
        %v3409 = vmul.f32 %v3408, 1.442695
        %v3410 = vpow.pop %v3409
        %v3411 = vsel %vm697, %v3410, 0.0
        %3412 = vadd.xlane.f32.xlu0 %v3411
        %v3413 = vpop.xlane.xlu0 %3412
        %v3414 = vrcp.pop %v3413
        %v3415 = vmul.f32 %v3410, %v3414
        %3416 = vrot.lane.b32.xlu0 %v2826, 40
        %v3417 = vpop.permute.xlu0 %3416
        %v3420 = vsel %vm697, %v3415, 0
        %3422 = vmatprep.subr.mxu0 0.0
        %3423 = vmatpush1.msra.mxu0 %v3417
        %3424 = vmatprep.subr.mxu0 0.0
        %3425 = vmatpush1.msra.mxu0 0.0
        %3426 = vmatprep.subr.mxu0 0.0
        %3427 = vmatpush1.msra.mxu0 0.0
        %3428 = vmatprep.subr.mxu0 0.0
        %3429 = vmatpush1.msra.mxu0 0.0
        %3430 = vmatprep.subr.mxu0 0.0
        %3431 = vmatpush1.msra.mxu0 0.0
        %3432 = vmatprep.subr.mxu0 0.0
        %3433 = vmatpush1.msra.mxu0 0.0
        %3434 = vmatprep.subr.mxu0 0.0
        %3435 = vmatpush1.msra.mxu0 0.0
        %3436 = vmatprep.subr.mxu0 0.0
        %3437 = vmatpush1.msra.mxu0 0.0
        %3438 = vmatprep.subr.mxu0 0.0
        %3439 = vmatpush1.msra.mxu0 0.0
        %3440 = vmatprep.subr.mxu0 0.0
        %3441 = vmatpush1.msra.mxu0 0.0
        %3442 = vmatprep.subr.mxu0 0.0
        %3443 = vmatpush1.msra.mxu0 0.0
        %3444 = vmatprep.subr.mxu0 0.0
        %3445 = vmatpush1.msra.mxu0 0.0
        %3446 = vmatprep.subr.mxu0 0.0
        %3447 = vmatpush1.msra.mxu0 0.0
        %3448 = vmatprep.subr.mxu0 0.0
        %3449 = vmatpush1.msra.mxu0 0.0
        %3450 = vmatprep.subr.mxu0 0.0
        %3451 = vmatpush1.msra.mxu0 0.0
        %3452 = vmatprep.subr.mxu0 0.0
        %3453 = vmatpush1.msra.mxu0 0.0
        %3454 = vmatprep.subr.mxu0 0.0
        %3455 = vmatpush1.msra.mxu0 0.0
        %3456 = vmatprep.subr.mxu0 0.0
        %3457 = vmatpush1.msra.mxu0 0.0
        %3458 = vmatprep.subr.mxu0 0.0
        %3459 = vmatpush1.msra.mxu0 0.0
        %3460 = vmatprep.subr.mxu0 0.0
        %3461 = vmatpush1.msra.mxu0 0.0
        %3462 = vmatprep.subr.mxu0 0.0
        %3463 = vmatpush1.msra.mxu0 0.0
        %3464 = vmatprep.subr.mxu0 0.0
        %3465 = vmatpush1.msra.mxu0 0.0
        %3466 = vmatprep.subr.mxu0 0.0
        %3467 = vmatpush1.msra.mxu0 0.0
        %3468 = vmatprep.subr.mxu0 0.0
        %3469 = vmatpush1.msra.mxu0 0.0
        %3470 = vmatprep.subr.mxu0 0.0
        %3471 = vmatpush1.msra.mxu0 0.0
        %3472 = vmatprep.subr.mxu0 0.0
        %3473 = vmatpush1.msra.mxu0 0.0
        %3474 = vmatprep.subr.mxu0 0.0
        %3475 = vmatpush1.msra.mxu0 0.0
        %3476 = vmatprep.subr.mxu0 0.0
        %3477 = vmatpush1.msra.mxu0 0.0
        %3478 = vmatprep.subr.mxu0 0.0
        %3479 = vmatpush1.msra.mxu0 0.0
        %3480 = vmatprep.subr.mxu0 0.0
        %3481 = vmatpush1.msra.mxu0 0.0
        %3482 = vmatprep.subr.mxu0 0.0
        %3483 = vmatpush1.msra.mxu0 0.0
        %3484 = vmatprep.subr.mxu0 0.0
        %3485 = vmatpush1.msra.mxu0 0.0
        %3486 = vmatprep.mubr.f32.mxu0 0.0
        %3487 = vmatmul.mubr.f32.gmra.mrb[0].mxu0 %v3420
        %v3488 = vpop.f32.mrb[0].mxu0
        %v3489 = vadd.f32 0.0, %v3488
        %v3490 = vpop.f32.mrb[0].mxu0
        %3491 = vdwg.mxu0
        %3493 = vrot.lane.b32.xlu0 %v3157, 8
        %v3494 = vpop.permute.xlu0 %3493
        %3497 = vrot.lane.b32.xlu0 %v3323, 16
        %v3498 = vpop.permute.xlu0 %3497
        %3501 = vrot.lane.b32.xlu0 %v3489, 24
        %v3502 = vpop.permute.xlu0 %3501
        %v3504 = vsel %vm697, %v2991, %v3494
        %v3505 = vsel %vm1371, %v3504, %v3498
        %v3506 = vsel %vm1373, %v3505, %v3502
        %v3507 = vld [vmem:[%s9] sm:$0xff]
        %v3508 = vld [vmem:[%s9 + $0x8] sm:$0xff]
        %v3509 = vld [vmem:[%s9 + $0x10] sm:$0xff]
        %v3510 = vld [vmem:[%s9 + $0x18] sm:$0xff]
        %v3511 = vld [vmem:[%s13] sm:$0x1]
        %v3512 = vlaneseq
        %v3513 = vshrl.u32 %v3512, 7
        %v3514 = vsub.s32 0, %v3513
        %v3515 = vrot.slane %v3511, %v3514
        %v3517 = vsel %vm620, %v3506, 0
        %3519 = vmatprep.subr.mxu0 0.0
        %3520 = vmatpush1.msra.mxu0 %v3507
        %3521 = vmatprep.subr.mxu0 0.0
        %3522 = vmatpush1.msra.mxu0 %v3508
        %3523 = vmatprep.subr.mxu0 0.0
        %3524 = vmatpush1.msra.mxu0 %v3509
        %3525 = vmatprep.subr.mxu0 0.0
        %3526 = vmatpush1.msra.mxu0 %v3510
        %3527 = vmatprep.subr.mxu0 0.0
        %3528 = vmatpush1.msra.mxu0 0.0
        %3529 = vmatprep.subr.mxu0 0.0
        %3530 = vmatpush1.msra.mxu0 0.0
        %3531 = vmatprep.subr.mxu0 0.0
        %3532 = vmatpush1.msra.mxu0 0.0
        %3533 = vmatprep.subr.mxu0 0.0
        %3534 = vmatpush1.msra.mxu0 0.0
        %3535 = vmatprep.subr.mxu0 0.0
        %3536 = vmatpush1.msra.mxu0 0.0
        %3537 = vmatprep.subr.mxu0 0.0
        %3538 = vmatpush1.msra.mxu0 0.0
        %3539 = vmatprep.subr.mxu0 0.0
        %3540 = vmatpush1.msra.mxu0 0.0
        %3541 = vmatprep.subr.mxu0 0.0
        %3542 = vmatpush1.msra.mxu0 0.0
        %3543 = vmatprep.subr.mxu0 0.0
        %3544 = vmatpush1.msra.mxu0 0.0
        %3545 = vmatprep.subr.mxu0 0.0
        %3546 = vmatpush1.msra.mxu0 0.0
        %3547 = vmatprep.subr.mxu0 0.0
        %3548 = vmatpush1.msra.mxu0 0.0
        %3549 = vmatprep.subr.mxu0 0.0
        %3550 = vmatpush1.msra.mxu0 0.0
        %3551 = vmatprep.subr.mxu0 0.0
        %3552 = vmatpush1.msra.mxu0 0.0
        %3553 = vmatprep.subr.mxu0 0.0
        %3554 = vmatpush1.msra.mxu0 0.0
        %3555 = vmatprep.subr.mxu0 0.0
        %3556 = vmatpush1.msra.mxu0 0.0
        %3557 = vmatprep.subr.mxu0 0.0
        %3558 = vmatpush1.msra.mxu0 0.0
        %3559 = vmatprep.subr.mxu0 0.0
        %3560 = vmatpush1.msra.mxu0 0.0
        %3561 = vmatprep.subr.mxu0 0.0
        %3562 = vmatpush1.msra.mxu0 0.0
        %3563 = vmatprep.subr.mxu0 0.0
        %3564 = vmatpush1.msra.mxu0 0.0
        %3565 = vmatprep.subr.mxu0 0.0
        %3566 = vmatpush1.msra.mxu0 0.0
        %3567 = vmatprep.subr.mxu0 0.0
        %3568 = vmatpush1.msra.mxu0 0.0
        %3569 = vmatprep.subr.mxu0 0.0
        %3570 = vmatpush1.msra.mxu0 0.0
        %3571 = vmatprep.subr.mxu0 0.0
        %3572 = vmatpush1.msra.mxu0 0.0
        %3573 = vmatprep.subr.mxu0 0.0
        %3574 = vmatpush1.msra.mxu0 0.0
        %3575 = vmatprep.subr.mxu0 0.0
        %3576 = vmatpush1.msra.mxu0 0.0
        %3577 = vmatprep.subr.mxu0 0.0
        %3578 = vmatpush1.msra.mxu0 0.0
        %3579 = vmatprep.subr.mxu0 0.0
        %3580 = vmatpush1.msra.mxu0 0.0
        %3581 = vmatprep.subr.mxu0 0.0
        %3582 = vmatpush1.msra.mxu0 0.0
        %3583 = vmatprep.mubr.f32.mxu0 0.0
        %3584 = vmatmul.mubr.f32.gmra.mrb[0].mxu0 %v3517
        %v3585 = vpop.f32.mrb[0].mxu0
        %v3586 = vadd.f32 %v3515, %v3585
        %v3587 = vpop.f32.mrb[0].mxu0
        %3588 = vdwg.mxu0
        %v3589 = vadd.f32 %v3586, %v2751
        %v3590 = vld [vmem:[%s13 + $0x1] sm:$0x1]
        %v3591 = vld [vmem:[%s13 + $0x2] sm:$0x1]
        %v3592 = vsel %vm620, %v3589, 0.0
        %3593 = vadd.xlane.f32.xlu0 %v3592
        %v3594 = vpop.xlane.xlu0 %3593
        %v3595 = vmul.f32 %v3594, %v1463
        %v3596 = vsub.f32 %v3589, %v3595
        %v3597 = vmul.f32 %v3596, %v3596
        %v3598 = vsel %vm620, %v3597, 0.0
        %3599 = vadd.xlane.f32.xlu0 %v3598
        %v3600 = vpop.xlane.xlu0 %3599
        %v3601 = vmul.f32 %v3600, %v1463
        %v3602 = vadd.f32 %v3601, 1e-05
        %v3603 = vrsqrt.pop %v3602
        %v3604 = vmul.f32 %v3596, %v3603
        %v3605 = vlaneseq
        %v3606 = vshrl.u32 %v3605, 7
        %v3607 = vsub.s32 0, %v3606
        %v3608 = vrot.slane %v3590, %v3607
        %v3609 = vmul.f32 %v3604, %v3608
        %v3610 = vlaneseq
        %v3611 = vshrl.u32 %v3610, 7
        %v3612 = vsub.s32 0, %v3611
        %v3613 = vrot.slane %v3591, %v3612
        %v3614 = vadd.f32 %v3609, %v3613
        %v3615 = vld [vmem:[%s10] sm:$0xff]
        %v3616 = vld [vmem:[%s10 + $0x8] sm:$0xff]
        %v3617 = vld [vmem:[%s10 + $0x10] sm:$0xff]
        %v3618 = vld [vmem:[%s10 + $0x18] sm:$0xff]
        %v3620 = vsel %vm620, %v3614, 0
        %3622 = vmatprep.subr.mxu0 0.0
        %3623 = vmatpush1.msra.mxu0 %v3615
        %3624 = vmatprep.subr.mxu0 0.0
        %3625 = vmatpush1.msra.mxu0 %v3616
        %3626 = vmatprep.subr.mxu0 0.0
        %3627 = vmatpush1.msra.mxu0 %v3617
        %3628 = vmatprep.subr.mxu0 0.0
        %3629 = vmatpush1.msra.mxu0 %v3618
        %3630 = vmatprep.subr.mxu0 0.0
        %3631 = vmatpush1.msra.mxu0 0.0
        %3632 = vmatprep.subr.mxu0 0.0
        %3633 = vmatpush1.msra.mxu0 0.0
        %3634 = vmatprep.subr.mxu0 0.0
        %3635 = vmatpush1.msra.mxu0 0.0
        %3636 = vmatprep.subr.mxu0 0.0
        %3637 = vmatpush1.msra.mxu0 0.0
        %3638 = vmatprep.subr.mxu0 0.0
        %3639 = vmatpush1.msra.mxu0 0.0
        %3640 = vmatprep.subr.mxu0 0.0
        %3641 = vmatpush1.msra.mxu0 0.0
        %3642 = vmatprep.subr.mxu0 0.0
        %3643 = vmatpush1.msra.mxu0 0.0
        %3644 = vmatprep.subr.mxu0 0.0
        %3645 = vmatpush1.msra.mxu0 0.0
        %3646 = vmatprep.subr.mxu0 0.0
        %3647 = vmatpush1.msra.mxu0 0.0
        %3648 = vmatprep.subr.mxu0 0.0
        %3649 = vmatpush1.msra.mxu0 0.0
        %3650 = vmatprep.subr.mxu0 0.0
        %3651 = vmatpush1.msra.mxu0 0.0
        %3652 = vmatprep.subr.mxu0 0.0
        %3653 = vmatpush1.msra.mxu0 0.0
        %3654 = vmatprep.subr.mxu0 0.0
        %3655 = vmatpush1.msra.mxu0 0.0
        %3656 = vmatprep.subr.mxu0 0.0
        %3657 = vmatpush1.msra.mxu0 0.0
        %3658 = vmatprep.subr.mxu0 0.0
        %3659 = vmatpush1.msra.mxu0 0.0
        %3660 = vmatprep.subr.mxu0 0.0
        %3661 = vmatpush1.msra.mxu0 0.0
        %3662 = vmatprep.subr.mxu0 0.0
        %3663 = vmatpush1.msra.mxu0 0.0
        %3664 = vmatprep.subr.mxu0 0.0
        %3665 = vmatpush1.msra.mxu0 0.0
        %3666 = vmatprep.subr.mxu0 0.0
        %3667 = vmatpush1.msra.mxu0 0.0
        %3668 = vmatprep.subr.mxu0 0.0
        %3669 = vmatpush1.msra.mxu0 0.0
        %3670 = vmatprep.subr.mxu0 0.0
        %3671 = vmatpush1.msra.mxu0 0.0
        %3672 = vmatprep.subr.mxu0 0.0
        %3673 = vmatpush1.msra.mxu0 0.0
        %3674 = vmatprep.subr.mxu0 0.0
        %3675 = vmatpush1.msra.mxu0 0.0
        %3676 = vmatprep.subr.mxu0 0.0
        %3677 = vmatpush1.msra.mxu0 0.0
        %3678 = vmatprep.subr.mxu0 0.0
        %3679 = vmatpush1.msra.mxu0 0.0
        %3680 = vmatprep.subr.mxu0 0.0
        %3681 = vmatpush1.msra.mxu0 0.0
        %3682 = vmatprep.subr.mxu0 0.0
        %3683 = vmatpush1.msra.mxu0 0.0
        %3684 = vmatprep.subr.mxu0 0.0
        %3685 = vmatpush1.msra.mxu0 0.0
        %3686 = vmatprep.mubr.f32.mxu0 0.0
        %3687 = vmatmul.mubr.f32.gmra.mrb[0].mxu0 %v3620
        %v3688 = vpop.f32.mrb[0].mxu0
        %v3689 = vadd.f32 0.0, %v3688
        %v3690 = vpop.f32.mrb[0].mxu0
        %3691 = vdwg.mxu0
        %v3692 = vld [vmem:[%s11] sm:$0xff]
        %v3693 = vld [vmem:[%s11 + $0x8] sm:$0xff]
        %v3694 = vld [vmem:[%s11 + $0x10] sm:$0xff]
        %v3695 = vld [vmem:[%s11 + $0x18] sm:$0xff]
        %v3697 = vsel %vm620, %v2750, 0
        %3699 = vmatprep.subr.mxu0 0.0
        %3700 = vmatpush1.msra.mxu0 %v3692
        %3701 = vmatprep.subr.mxu0 0.0
        %3702 = vmatpush1.msra.mxu0 %v3693
        %3703 = vmatprep.subr.mxu0 0.0
        %3704 = vmatpush1.msra.mxu0 %v3694
        %3705 = vmatprep.subr.mxu0 0.0
        %3706 = vmatpush1.msra.mxu0 %v3695
        %3707 = vmatprep.subr.mxu0 0.0
        %3708 = vmatpush1.msra.mxu0 0.0
        %3709 = vmatprep.subr.mxu0 0.0
        %3710 = vmatpush1.msra.mxu0 0.0
        %3711 = vmatprep.subr.mxu0 0.0
        %3712 = vmatpush1.msra.mxu0 0.0
        %3713 = vmatprep.subr.mxu0 0.0
        %3714 = vmatpush1.msra.mxu0 0.0
        %3715 = vmatprep.subr.mxu0 0.0
        %3716 = vmatpush1.msra.mxu0 0.0
        %3717 = vmatprep.subr.mxu0 0.0
        %3718 = vmatpush1.msra.mxu0 0.0
        %3719 = vmatprep.subr.mxu0 0.0
        %3720 = vmatpush1.msra.mxu0 0.0
        %3721 = vmatprep.subr.mxu0 0.0
        %3722 = vmatpush1.msra.mxu0 0.0
        %3723 = vmatprep.subr.mxu0 0.0
        %3724 = vmatpush1.msra.mxu0 0.0
        %3725 = vmatprep.subr.mxu0 0.0
        %3726 = vmatpush1.msra.mxu0 0.0
        %3727 = vmatprep.subr.mxu0 0.0
        %3728 = vmatpush1.msra.mxu0 0.0
        %3729 = vmatprep.subr.mxu0 0.0
        %3730 = vmatpush1.msra.mxu0 0.0
        %3731 = vmatprep.subr.mxu0 0.0
        %3732 = vmatpush1.msra.mxu0 0.0
        %3733 = vmatprep.subr.mxu0 0.0
        %3734 = vmatpush1.msra.mxu0 0.0
        %3735 = vmatprep.subr.mxu0 0.0
        %3736 = vmatpush1.msra.mxu0 0.0
        %3737 = vmatprep.subr.mxu0 0.0
        %3738 = vmatpush1.msra.mxu0 0.0
        %3739 = vmatprep.subr.mxu0 0.0
        %3740 = vmatpush1.msra.mxu0 0.0
        %3741 = vmatprep.subr.mxu0 0.0
        %3742 = vmatpush1.msra.mxu0 0.0
        %3743 = vmatprep.subr.mxu0 0.0
        %3744 = vmatpush1.msra.mxu0 0.0
        %3745 = vmatprep.subr.mxu0 0.0
        %3746 = vmatpush1.msra.mxu0 0.0
        %3747 = vmatprep.subr.mxu0 0.0
        %3748 = vmatpush1.msra.mxu0 0.0
        %3749 = vmatprep.subr.mxu0 0.0
        %3750 = vmatpush1.msra.mxu0 0.0
        %3751 = vmatprep.subr.mxu0 0.0
        %3752 = vmatpush1.msra.mxu0 0.0
        %3753 = vmatprep.subr.mxu0 0.0
        %3754 = vmatpush1.msra.mxu0 0.0
        %3755 = vmatprep.subr.mxu0 0.0
        %3756 = vmatpush1.msra.mxu0 0.0
        %3757 = vmatprep.subr.mxu0 0.0
        %3758 = vmatpush1.msra.mxu0 0.0
        %3759 = vmatprep.subr.mxu0 0.0
        %3760 = vmatpush1.msra.mxu0 0.0
        %3761 = vmatprep.subr.mxu0 0.0
        %3762 = vmatpush1.msra.mxu0 0.0
        %3763 = vmatprep.mubr.f32.mxu0 0.0
        %3764 = vmatmul.mubr.f32.gmra.mrb[0].mxu0 %v3697
        %v3765 = vpop.f32.mrb[0].mxu0
        %v3766 = vadd.f32 0.0, %v3765
        %v3767 = vpop.f32.mrb[0].mxu0
        %3768 = vdwg.mxu0
        %v3770 = vsel %vm697, %v3689, 0
        %v3773 = vsel %vm697, %v3766, 0
        %3775 = vmatprep.subr.mxu0 0.0
        %3776 = vmatpush1.xpose.msra.mxu0 %v3773
        %3777 = vmatprep.subr.mxu0 0.0
        %3778 = vmatpush1.xpose.msra.mxu0 0.0
        %3779 = vmatprep.subr.mxu0 0.0
        %3780 = vmatpush1.xpose.msra.mxu0 0.0
        %3781 = vmatprep.subr.mxu0 0.0
        %3782 = vmatpush1.xpose.msra.mxu0 0.0
        %3783 = vmatprep.subr.mxu0 0.0
        %3784 = vmatpush1.xpose.msra.mxu0 0.0
        %3785 = vmatprep.subr.mxu0 0.0
        %3786 = vmatpush1.xpose.msra.mxu0 0.0
        %3787 = vmatprep.subr.mxu0 0.0
        %3788 = vmatpush1.xpose.msra.mxu0 0.0
        %3789 = vmatprep.subr.mxu0 0.0
        %3790 = vmatpush1.xpose.msra.mxu0 0.0
        %3791 = vmatprep.subr.mxu0 0.0
        %3792 = vmatpush1.xpose.msra.mxu0 0.0
        %3793 = vmatprep.subr.mxu0 0.0
        %3794 = vmatpush1.xpose.msra.mxu0 0.0
        %3795 = vmatprep.subr.mxu0 0.0
        %3796 = vmatpush1.xpose.msra.mxu0 0.0
        %3797 = vmatprep.subr.mxu0 0.0
        %3798 = vmatpush1.xpose.msra.mxu0 0.0
        %3799 = vmatprep.subr.mxu0 0.0
        %3800 = vmatpush1.xpose.msra.mxu0 0.0
        %3801 = vmatprep.subr.mxu0 0.0
        %3802 = vmatpush1.xpose.msra.mxu0 0.0
        %3803 = vmatprep.subr.mxu0 0.0
        %3804 = vmatpush1.xpose.msra.mxu0 0.0
        %3805 = vmatprep.subr.mxu0 0.0
        %3806 = vmatpush1.xpose.msra.mxu0 0.0
        %3807 = vmatprep.subr.mxu0 0.0
        %3808 = vmatpush1.xpose.msra.mxu0 0.0
        %3809 = vmatprep.subr.mxu0 0.0
        %3810 = vmatpush1.xpose.msra.mxu0 0.0
        %3811 = vmatprep.subr.mxu0 0.0
        %3812 = vmatpush1.xpose.msra.mxu0 0.0
        %3813 = vmatprep.subr.mxu0 0.0
        %3814 = vmatpush1.xpose.msra.mxu0 0.0
        %3815 = vmatprep.subr.mxu0 0.0
        %3816 = vmatpush1.xpose.msra.mxu0 0.0
        %3817 = vmatprep.subr.mxu0 0.0
        %3818 = vmatpush1.xpose.msra.mxu0 0.0
        %3819 = vmatprep.subr.mxu0 0.0
        %3820 = vmatpush1.xpose.msra.mxu0 0.0
        %3821 = vmatprep.subr.mxu0 0.0
        %3822 = vmatpush1.xpose.msra.mxu0 0.0
        %3823 = vmatprep.subr.mxu0 0.0
        %3824 = vmatpush1.xpose.msra.mxu0 0.0
        %3825 = vmatprep.subr.mxu0 0.0
        %3826 = vmatpush1.xpose.msra.mxu0 0.0
        %3827 = vmatprep.subr.mxu0 0.0
        %3828 = vmatpush1.xpose.msra.mxu0 0.0
        %3829 = vmatprep.subr.mxu0 0.0
        %3830 = vmatpush1.xpose.msra.mxu0 0.0
        %3831 = vmatprep.subr.mxu0 0.0
        %3832 = vmatpush1.xpose.msra.mxu0 0.0
        %3833 = vmatprep.subr.mxu0 0.0
        %3834 = vmatpush1.xpose.msra.mxu0 0.0
        %3835 = vmatprep.subr.mxu0 0.0
        %3836 = vmatpush1.xpose.msra.mxu0 0.0
        %3837 = vmatprep.subr.mxu0 0.0
        %3838 = vmatpush1.xpose.msra.mxu0 0.0
        %3839 = vmatprep.mubr.f32.mxu0 0.0
        %3840 = vmatmul.mubr.f32.gmra.mrb[0].mxu0 %v3770
        %v3841 = vpop.f32.mrb[0].mxu0
        %v3842 = vadd.f32 0.0, %v3841
        %v3843 = vpop.f32.mrb[0].mxu0
        %3844 = vdwg.mxu0
        %v3845 = vmul.f32 %v3842, 2.828427
        %v3846 = vsel %vm697, %v3845, -inf
        %3847 = vmax.xlane.f32.xlu0 %v3846
        %v3848 = vpop.xlane.xlu0 %3847
        %v3849 = vsub.f32 %v3845, %v3848
        %v3850 = vmul.f32 %v3849, 1.442695
        %v3851 = vpow.pop %v3850
        %v3852 = vsel %vm697, %v3851, 0.0
        %3853 = vadd.xlane.f32.xlu0 %v3852
        %v3854 = vpop.xlane.xlu0 %3853
        %v3855 = vrcp.pop %v3854
        %v3856 = vmul.f32 %v3851, %v3855
        %3857 = vrot.lane.b32.xlu0 %v3766, 96
        %v3858 = vpop.permute.xlu0 %3857
        %v3861 = vsel %vm697, %v3856, 0
        %3863 = vmatprep.subr.mxu0 0.0
        %3864 = vmatpush1.msra.mxu0 %v3858
        %3865 = vmatprep.subr.mxu0 0.0
        %3866 = vmatpush1.msra.mxu0 0.0
        %3867 = vmatprep.subr.mxu0 0.0
        %3868 = vmatpush1.msra.mxu0 0.0
        %3869 = vmatprep.subr.mxu0 0.0
        %3870 = vmatpush1.msra.mxu0 0.0
        %3871 = vmatprep.subr.mxu0 0.0
        %3872 = vmatpush1.msra.mxu0 0.0
        %3873 = vmatprep.subr.mxu0 0.0
        %3874 = vmatpush1.msra.mxu0 0.0
        %3875 = vmatprep.subr.mxu0 0.0
        %3876 = vmatpush1.msra.mxu0 0.0
        %3877 = vmatprep.subr.mxu0 0.0
        %3878 = vmatpush1.msra.mxu0 0.0
        %3879 = vmatprep.subr.mxu0 0.0
        %3880 = vmatpush1.msra.mxu0 0.0
        %3881 = vmatprep.subr.mxu0 0.0
        %3882 = vmatpush1.msra.mxu0 0.0
        %3883 = vmatprep.subr.mxu0 0.0
        %3884 = vmatpush1.msra.mxu0 0.0
        %3885 = vmatprep.subr.mxu0 0.0
        %3886 = vmatpush1.msra.mxu0 0.0
        %3887 = vmatprep.subr.mxu0 0.0
        %3888 = vmatpush1.msra.mxu0 0.0
        %3889 = vmatprep.subr.mxu0 0.0
        %3890 = vmatpush1.msra.mxu0 0.0
        %3891 = vmatprep.subr.mxu0 0.0
        %3892 = vmatpush1.msra.mxu0 0.0
        %3893 = vmatprep.subr.mxu0 0.0
        %3894 = vmatpush1.msra.mxu0 0.0
        %3895 = vmatprep.subr.mxu0 0.0
        %3896 = vmatpush1.msra.mxu0 0.0
        %3897 = vmatprep.subr.mxu0 0.0
        %3898 = vmatpush1.msra.mxu0 0.0
        %3899 = vmatprep.subr.mxu0 0.0
        %3900 = vmatpush1.msra.mxu0 0.0
        %3901 = vmatprep.subr.mxu0 0.0
        %3902 = vmatpush1.msra.mxu0 0.0
        %3903 = vmatprep.subr.mxu0 0.0
        %3904 = vmatpush1.msra.mxu0 0.0
        %3905 = vmatprep.subr.mxu0 0.0
        %3906 = vmatpush1.msra.mxu0 0.0
        %3907 = vmatprep.subr.mxu0 0.0
        %3908 = vmatpush1.msra.mxu0 0.0
        %3909 = vmatprep.subr.mxu0 0.0
        %3910 = vmatpush1.msra.mxu0 0.0
        %3911 = vmatprep.subr.mxu0 0.0
        %3912 = vmatpush1.msra.mxu0 0.0
        %3913 = vmatprep.subr.mxu0 0.0
        %3914 = vmatpush1.msra.mxu0 0.0
        %3915 = vmatprep.subr.mxu0 0.0
        %3916 = vmatpush1.msra.mxu0 0.0
        %3917 = vmatprep.subr.mxu0 0.0
        %3918 = vmatpush1.msra.mxu0 0.0
        %3919 = vmatprep.subr.mxu0 0.0
        %3920 = vmatpush1.msra.mxu0 0.0
        %3921 = vmatprep.subr.mxu0 0.0
        %3922 = vmatpush1.msra.mxu0 0.0
        %3923 = vmatprep.subr.mxu0 0.0
        %3924 = vmatpush1.msra.mxu0 0.0
        %3925 = vmatprep.subr.mxu0 0.0
        %3926 = vmatpush1.msra.mxu0 0.0
        %3927 = vmatprep.mubr.f32.mxu0 0.0
        %3928 = vmatmul.mubr.f32.gmra.mrb[0].mxu0 %v3861
        %v3929 = vpop.f32.mrb[0].mxu0
        %v3930 = vadd.f32 0.0, %v3929
        %v3931 = vpop.f32.mrb[0].mxu0
        %3932 = vdwg.mxu0
        %3933 = vrot.lane.b32.xlu0 %v3689, 120
        %v3934 = vpop.permute.xlu0 %3933
        %3935 = vrot.lane.b32.xlu0 %v3766, 120
        %v3936 = vpop.permute.xlu0 %3935
        %v3937 = vsel %vm697, %v3934, 0
        %v3939 = vsel %vm697, %v3936, 0
        %3941 = vmatprep.subr.mxu0 0.0
        %3942 = vmatpush1.xpose.msra.mxu0 %v3939
        %3943 = vmatprep.subr.mxu0 0.0
        %3944 = vmatpush1.xpose.msra.mxu0 0.0
        %3945 = vmatprep.subr.mxu0 0.0
        %3946 = vmatpush1.xpose.msra.mxu0 0.0
        %3947 = vmatprep.subr.mxu0 0.0
        %3948 = vmatpush1.xpose.msra.mxu0 0.0
        %3949 = vmatprep.subr.mxu0 0.0
        %3950 = vmatpush1.xpose.msra.mxu0 0.0
        %3951 = vmatprep.subr.mxu0 0.0
        %3952 = vmatpush1.xpose.msra.mxu0 0.0
        %3953 = vmatprep.subr.mxu0 0.0
        %3954 = vmatpush1.xpose.msra.mxu0 0.0
        %3955 = vmatprep.subr.mxu0 0.0
        %3956 = vmatpush1.xpose.msra.mxu0 0.0
        %3957 = vmatprep.subr.mxu0 0.0
        %3958 = vmatpush1.xpose.msra.mxu0 0.0
        %3959 = vmatprep.subr.mxu0 0.0
        %3960 = vmatpush1.xpose.msra.mxu0 0.0
        %3961 = vmatprep.subr.mxu0 0.0
        %3962 = vmatpush1.xpose.msra.mxu0 0.0
        %3963 = vmatprep.subr.mxu0 0.0
        %3964 = vmatpush1.xpose.msra.mxu0 0.0
        %3965 = vmatprep.subr.mxu0 0.0
        %3966 = vmatpush1.xpose.msra.mxu0 0.0
        %3967 = vmatprep.subr.mxu0 0.0
        %3968 = vmatpush1.xpose.msra.mxu0 0.0
        %3969 = vmatprep.subr.mxu0 0.0
        %3970 = vmatpush1.xpose.msra.mxu0 0.0
        %3971 = vmatprep.subr.mxu0 0.0
        %3972 = vmatpush1.xpose.msra.mxu0 0.0
        %3973 = vmatprep.subr.mxu0 0.0
        %3974 = vmatpush1.xpose.msra.mxu0 0.0
        %3975 = vmatprep.subr.mxu0 0.0
        %3976 = vmatpush1.xpose.msra.mxu0 0.0
        %3977 = vmatprep.subr.mxu0 0.0
        %3978 = vmatpush1.xpose.msra.mxu0 0.0
        %3979 = vmatprep.subr.mxu0 0.0
        %3980 = vmatpush1.xpose.msra.mxu0 0.0
        %3981 = vmatprep.subr.mxu0 0.0
        %3982 = vmatpush1.xpose.msra.mxu0 0.0
        %3983 = vmatprep.subr.mxu0 0.0
        %3984 = vmatpush1.xpose.msra.mxu0 0.0
        %3985 = vmatprep.subr.mxu0 0.0
        %3986 = vmatpush1.xpose.msra.mxu0 0.0
        %3987 = vmatprep.subr.mxu0 0.0
        %3988 = vmatpush1.xpose.msra.mxu0 0.0
        %3989 = vmatprep.subr.mxu0 0.0
        %3990 = vmatpush1.xpose.msra.mxu0 0.0
        %3991 = vmatprep.subr.mxu0 0.0
        %3992 = vmatpush1.xpose.msra.mxu0 0.0
        %3993 = vmatprep.subr.mxu0 0.0
        %3994 = vmatpush1.xpose.msra.mxu0 0.0
        %3995 = vmatprep.subr.mxu0 0.0
        %3996 = vmatpush1.xpose.msra.mxu0 0.0
        %3997 = vmatprep.subr.mxu0 0.0
        %3998 = vmatpush1.xpose.msra.mxu0 0.0
        %3999 = vmatprep.subr.mxu0 0.0
        %4000 = vmatpush1.xpose.msra.mxu0 0.0
        %4001 = vmatprep.subr.mxu0 0.0
        %4002 = vmatpush1.xpose.msra.mxu0 0.0
        %4003 = vmatprep.subr.mxu0 0.0
        %4004 = vmatpush1.xpose.msra.mxu0 0.0
        %4005 = vmatprep.mubr.f32.mxu0 0.0
        %4006 = vmatmul.mubr.f32.gmra.mrb[0].mxu0 %v3937
        %v4007 = vpop.f32.mrb[0].mxu0
        %v4008 = vadd.f32 0.0, %v4007
        %v4009 = vpop.f32.mrb[0].mxu0
        %4010 = vdwg.mxu0
        %v4011 = vmul.f32 %v4008, 2.828427
        %v4012 = vsel %vm697, %v4011, -inf
        %4013 = vmax.xlane.f32.xlu0 %v4012
        %v4014 = vpop.xlane.xlu0 %4013
        %v4015 = vsub.f32 %v4011, %v4014
        %v4016 = vmul.f32 %v4015, 1.442695
        %v4017 = vpow.pop %v4016
        %v4018 = vsel %vm697, %v4017, 0.0
        %4019 = vadd.xlane.f32.xlu0 %v4018
        %v4020 = vpop.xlane.xlu0 %4019
        %v4021 = vrcp.pop %v4020
        %v4022 = vmul.f32 %v4017, %v4021
        %4023 = vrot.lane.b32.xlu0 %v3766, 88
        %v4024 = vpop.permute.xlu0 %4023
        %v4027 = vsel %vm697, %v4022, 0
        %4029 = vmatprep.subr.mxu0 0.0
        %4030 = vmatpush1.msra.mxu0 %v4024
        %4031 = vmatprep.subr.mxu0 0.0
        %4032 = vmatpush1.msra.mxu0 0.0
        %4033 = vmatprep.subr.mxu0 0.0
        %4034 = vmatpush1.msra.mxu0 0.0
        %4035 = vmatprep.subr.mxu0 0.0
        %4036 = vmatpush1.msra.mxu0 0.0
        %4037 = vmatprep.subr.mxu0 0.0
        %4038 = vmatpush1.msra.mxu0 0.0
        %4039 = vmatprep.subr.mxu0 0.0
        %4040 = vmatpush1.msra.mxu0 0.0
        %4041 = vmatprep.subr.mxu0 0.0
        %4042 = vmatpush1.msra.mxu0 0.0
        %4043 = vmatprep.subr.mxu0 0.0
        %4044 = vmatpush1.msra.mxu0 0.0
        %4045 = vmatprep.subr.mxu0 0.0
        %4046 = vmatpush1.msra.mxu0 0.0
        %4047 = vmatprep.subr.mxu0 0.0
        %4048 = vmatpush1.msra.mxu0 0.0
        %4049 = vmatprep.subr.mxu0 0.0
        %4050 = vmatpush1.msra.mxu0 0.0
        %4051 = vmatprep.subr.mxu0 0.0
        %4052 = vmatpush1.msra.mxu0 0.0
        %4053 = vmatprep.subr.mxu0 0.0
        %4054 = vmatpush1.msra.mxu0 0.0
        %4055 = vmatprep.subr.mxu0 0.0
        %4056 = vmatpush1.msra.mxu0 0.0
        %4057 = vmatprep.subr.mxu0 0.0
        %4058 = vmatpush1.msra.mxu0 0.0
        %4059 = vmatprep.subr.mxu0 0.0
        %4060 = vmatpush1.msra.mxu0 0.0
        %4061 = vmatprep.subr.mxu0 0.0
        %4062 = vmatpush1.msra.mxu0 0.0
        %4063 = vmatprep.subr.mxu0 0.0
        %4064 = vmatpush1.msra.mxu0 0.0
        %4065 = vmatprep.subr.mxu0 0.0
        %4066 = vmatpush1.msra.mxu0 0.0
        %4067 = vmatprep.subr.mxu0 0.0
        %4068 = vmatpush1.msra.mxu0 0.0
        %4069 = vmatprep.subr.mxu0 0.0
        %4070 = vmatpush1.msra.mxu0 0.0
        %4071 = vmatprep.subr.mxu0 0.0
        %4072 = vmatpush1.msra.mxu0 0.0
        %4073 = vmatprep.subr.mxu0 0.0
        %4074 = vmatpush1.msra.mxu0 0.0
        %4075 = vmatprep.subr.mxu0 0.0
        %4076 = vmatpush1.msra.mxu0 0.0
        %4077 = vmatprep.subr.mxu0 0.0
        %4078 = vmatpush1.msra.mxu0 0.0
        %4079 = vmatprep.subr.mxu0 0.0
        %4080 = vmatpush1.msra.mxu0 0.0
        %4081 = vmatprep.subr.mxu0 0.0
        %4082 = vmatpush1.msra.mxu0 0.0
        %4083 = vmatprep.subr.mxu0 0.0
        %4084 = vmatpush1.msra.mxu0 0.0
        %4085 = vmatprep.subr.mxu0 0.0
        %4086 = vmatpush1.msra.mxu0 0.0
        %4087 = vmatprep.subr.mxu0 0.0
        %4088 = vmatpush1.msra.mxu0 0.0
        %4089 = vmatprep.subr.mxu0 0.0
        %4090 = vmatpush1.msra.mxu0 0.0
        %4091 = vmatprep.subr.mxu0 0.0
        %4092 = vmatpush1.msra.mxu0 0.0
        %4093 = vmatprep.mubr.f32.mxu0 0.0
        %4094 = vmatmul.mubr.f32.gmra.mrb[0].mxu0 %v4027
        %v4095 = vpop.f32.mrb[0].mxu0
        %v4096 = vadd.f32 0.0, %v4095
        %v4097 = vpop.f32.mrb[0].mxu0
        %4098 = vdwg.mxu0
        %4099 = vrot.lane.b32.xlu0 %v3689, 112
        %v4100 = vpop.permute.xlu0 %4099
        %4101 = vrot.lane.b32.xlu0 %v3766, 112
        %v4102 = vpop.permute.xlu0 %4101
        %v4103 = vsel %vm697, %v4100, 0
        %v4105 = vsel %vm697, %v4102, 0
        %4107 = vmatprep.subr.mxu0 0.0
        %4108 = vmatpush1.xpose.msra.mxu0 %v4105
        %4109 = vmatprep.subr.mxu0 0.0
        %4110 = vmatpush1.xpose.msra.mxu0 0.0
        %4111 = vmatprep.subr.mxu0 0.0
        %4112 = vmatpush1.xpose.msra.mxu0 0.0
        %4113 = vmatprep.subr.mxu0 0.0
        %4114 = vmatpush1.xpose.msra.mxu0 0.0
        %4115 = vmatprep.subr.mxu0 0.0
        %4116 = vmatpush1.xpose.msra.mxu0 0.0
        %4117 = vmatprep.subr.mxu0 0.0
        %4118 = vmatpush1.xpose.msra.mxu0 0.0
        %4119 = vmatprep.subr.mxu0 0.0
        %4120 = vmatpush1.xpose.msra.mxu0 0.0
        %4121 = vmatprep.subr.mxu0 0.0
        %4122 = vmatpush1.xpose.msra.mxu0 0.0
        %4123 = vmatprep.subr.mxu0 0.0
        %4124 = vmatpush1.xpose.msra.mxu0 0.0
        %4125 = vmatprep.subr.mxu0 0.0
        %4126 = vmatpush1.xpose.msra.mxu0 0.0
        %4127 = vmatprep.subr.mxu0 0.0
        %4128 = vmatpush1.xpose.msra.mxu0 0.0
        %4129 = vmatprep.subr.mxu0 0.0
        %4130 = vmatpush1.xpose.msra.mxu0 0.0
        %4131 = vmatprep.subr.mxu0 0.0
        %4132 = vmatpush1.xpose.msra.mxu0 0.0
        %4133 = vmatprep.subr.mxu0 0.0
        %4134 = vmatpush1.xpose.msra.mxu0 0.0
        %4135 = vmatprep.subr.mxu0 0.0
        %4136 = vmatpush1.xpose.msra.mxu0 0.0
        %4137 = vmatprep.subr.mxu0 0.0
        %4138 = vmatpush1.xpose.msra.mxu0 0.0
        %4139 = vmatprep.subr.mxu0 0.0
        %4140 = vmatpush1.xpose.msra.mxu0 0.0
        %4141 = vmatprep.subr.mxu0 0.0
        %4142 = vmatpush1.xpose.msra.mxu0 0.0
        %4143 = vmatprep.subr.mxu0 0.0
        %4144 = vmatpush1.xpose.msra.mxu0 0.0
        %4145 = vmatprep.subr.mxu0 0.0
        %4146 = vmatpush1.xpose.msra.mxu0 0.0
        %4147 = vmatprep.subr.mxu0 0.0
        %4148 = vmatpush1.xpose.msra.mxu0 0.0
        %4149 = vmatprep.subr.mxu0 0.0
        %4150 = vmatpush1.xpose.msra.mxu0 0.0
        %4151 = vmatprep.subr.mxu0 0.0
        %4152 = vmatpush1.xpose.msra.mxu0 0.0
        %4153 = vmatprep.subr.mxu0 0.0
        %4154 = vmatpush1.xpose.msra.mxu0 0.0
        %4155 = vmatprep.subr.mxu0 0.0
        %4156 = vmatpush1.xpose.msra.mxu0 0.0
        %4157 = vmatprep.subr.mxu0 0.0
        %4158 = vmatpush1.xpose.msra.mxu0 0.0
        %4159 = vmatprep.subr.mxu0 0.0
        %4160 = vmatpush1.xpose.msra.mxu0 0.0
        %4161 = vmatprep.subr.mxu0 0.0
        %4162 = vmatpush1.xpose.msra.mxu0 0.0
        %4163 = vmatprep.subr.mxu0 0.0
        %4164 = vmatpush1.xpose.msra.mxu0 0.0
        %4165 = vmatprep.subr.mxu0 0.0
        %4166 = vmatpush1.xpose.msra.mxu0 0.0
        %4167 = vmatprep.subr.mxu0 0.0
        %4168 = vmatpush1.xpose.msra.mxu0 0.0
        %4169 = vmatprep.subr.mxu0 0.0
        %4170 = vmatpush1.xpose.msra.mxu0 0.0
        %4171 = vmatprep.mubr.f32.mxu0 0.0
        %4172 = vmatmul.mubr.f32.gmra.mrb[0].mxu0 %v4103
        %v4173 = vpop.f32.mrb[0].mxu0
        %v4174 = vadd.f32 0.0, %v4173
        %v4175 = vpop.f32.mrb[0].mxu0
        %4176 = vdwg.mxu0
        %v4177 = vmul.f32 %v4174, 2.828427
        %v4178 = vsel %vm697, %v4177, -inf
        %4179 = vmax.xlane.f32.xlu0 %v4178
        %v4180 = vpop.xlane.xlu0 %4179
        %v4181 = vsub.f32 %v4177, %v4180
        %v4182 = vmul.f32 %v4181, 1.442695
        %v4183 = vpow.pop %v4182
        %v4184 = vsel %vm697, %v4183, 0.0
        %4185 = vadd.xlane.f32.xlu0 %v4184
        %v4186 = vpop.xlane.xlu0 %4185
        %v4187 = vrcp.pop %v4186
        %v4188 = vmul.f32 %v4183, %v4187
        %4189 = vrot.lane.b32.xlu0 %v3766, 80
        %v4190 = vpop.permute.xlu0 %4189
        %v4193 = vsel %vm697, %v4188, 0
        %4195 = vmatprep.subr.mxu0 0.0
        %4196 = vmatpush1.msra.mxu0 %v4190
        %4197 = vmatprep.subr.mxu0 0.0
        %4198 = vmatpush1.msra.mxu0 0.0
        %4199 = vmatprep.subr.mxu0 0.0
        %4200 = vmatpush1.msra.mxu0 0.0
        %4201 = vmatprep.subr.mxu0 0.0
        %4202 = vmatpush1.msra.mxu0 0.0
        %4203 = vmatprep.subr.mxu0 0.0
        %4204 = vmatpush1.msra.mxu0 0.0
        %4205 = vmatprep.subr.mxu0 0.0
        %4206 = vmatpush1.msra.mxu0 0.0
        %4207 = vmatprep.subr.mxu0 0.0
        %4208 = vmatpush1.msra.mxu0 0.0
        %4209 = vmatprep.subr.mxu0 0.0
        %4210 = vmatpush1.msra.mxu0 0.0
        %4211 = vmatprep.subr.mxu0 0.0
        %4212 = vmatpush1.msra.mxu0 0.0
        %4213 = vmatprep.subr.mxu0 0.0
        %4214 = vmatpush1.msra.mxu0 0.0
        %4215 = vmatprep.subr.mxu0 0.0
        %4216 = vmatpush1.msra.mxu0 0.0
        %4217 = vmatprep.subr.mxu0 0.0
        %4218 = vmatpush1.msra.mxu0 0.0
        %4219 = vmatprep.subr.mxu0 0.0
        %4220 = vmatpush1.msra.mxu0 0.0
        %4221 = vmatprep.subr.mxu0 0.0
        %4222 = vmatpush1.msra.mxu0 0.0
        %4223 = vmatprep.subr.mxu0 0.0
        %4224 = vmatpush1.msra.mxu0 0.0
        %4225 = vmatprep.subr.mxu0 0.0
        %4226 = vmatpush1.msra.mxu0 0.0
        %4227 = vmatprep.subr.mxu0 0.0
        %4228 = vmatpush1.msra.mxu0 0.0
        %4229 = vmatprep.subr.mxu0 0.0
        %4230 = vmatpush1.msra.mxu0 0.0
        %4231 = vmatprep.subr.mxu0 0.0
        %4232 = vmatpush1.msra.mxu0 0.0
        %4233 = vmatprep.subr.mxu0 0.0
        %4234 = vmatpush1.msra.mxu0 0.0
        %4235 = vmatprep.subr.mxu0 0.0
        %4236 = vmatpush1.msra.mxu0 0.0
        %4237 = vmatprep.subr.mxu0 0.0
        %4238 = vmatpush1.msra.mxu0 0.0
        %4239 = vmatprep.subr.mxu0 0.0
        %4240 = vmatpush1.msra.mxu0 0.0
        %4241 = vmatprep.subr.mxu0 0.0
        %4242 = vmatpush1.msra.mxu0 0.0
        %4243 = vmatprep.subr.mxu0 0.0
        %4244 = vmatpush1.msra.mxu0 0.0
        %4245 = vmatprep.subr.mxu0 0.0
        %4246 = vmatpush1.msra.mxu0 0.0
        %4247 = vmatprep.subr.mxu0 0.0
        %4248 = vmatpush1.msra.mxu0 0.0
        %4249 = vmatprep.subr.mxu0 0.0
        %4250 = vmatpush1.msra.mxu0 0.0
        %4251 = vmatprep.subr.mxu0 0.0
        %4252 = vmatpush1.msra.mxu0 0.0
        %4253 = vmatprep.subr.mxu0 0.0
        %4254 = vmatpush1.msra.mxu0 0.0
        %4255 = vmatprep.subr.mxu0 0.0
        %4256 = vmatpush1.msra.mxu0 0.0
        %4257 = vmatprep.subr.mxu0 0.0
        %4258 = vmatpush1.msra.mxu0 0.0
        %4259 = vmatprep.mubr.f32.mxu0 0.0
        %4260 = vmatmul.mubr.f32.gmra.mrb[0].mxu0 %v4193
        %v4261 = vpop.f32.mrb[0].mxu0
        %v4262 = vadd.f32 0.0, %v4261
        %v4263 = vpop.f32.mrb[0].mxu0
        %4264 = vdwg.mxu0
        %4265 = vrot.lane.b32.xlu0 %v3689, 104
        %v4266 = vpop.permute.xlu0 %4265
        %4267 = vrot.lane.b32.xlu0 %v3766, 104
        %v4268 = vpop.permute.xlu0 %4267
        %v4269 = vsel %vm697, %v4266, 0
        %v4271 = vsel %vm697, %v4268, 0
        %4273 = vmatprep.subr.mxu0 0.0
        %4274 = vmatpush1.xpose.msra.mxu0 %v4271
        %4275 = vmatprep.subr.mxu0 0.0
        %4276 = vmatpush1.xpose.msra.mxu0 0.0
        %4277 = vmatprep.subr.mxu0 0.0
        %4278 = vmatpush1.xpose.msra.mxu0 0.0
        %4279 = vmatprep.subr.mxu0 0.0
        %4280 = vmatpush1.xpose.msra.mxu0 0.0
        %4281 = vmatprep.subr.mxu0 0.0
        %4282 = vmatpush1.xpose.msra.mxu0 0.0
        %4283 = vmatprep.subr.mxu0 0.0
        %4284 = vmatpush1.xpose.msra.mxu0 0.0
        %4285 = vmatprep.subr.mxu0 0.0
        %4286 = vmatpush1.xpose.msra.mxu0 0.0
        %4287 = vmatprep.subr.mxu0 0.0
        %4288 = vmatpush1.xpose.msra.mxu0 0.0
        %4289 = vmatprep.subr.mxu0 0.0
        %4290 = vmatpush1.xpose.msra.mxu0 0.0
        %4291 = vmatprep.subr.mxu0 0.0
        %4292 = vmatpush1.xpose.msra.mxu0 0.0
        %4293 = vmatprep.subr.mxu0 0.0
        %4294 = vmatpush1.xpose.msra.mxu0 0.0
        %4295 = vmatprep.subr.mxu0 0.0
        %4296 = vmatpush1.xpose.msra.mxu0 0.0
        %4297 = vmatprep.subr.mxu0 0.0
        %4298 = vmatpush1.xpose.msra.mxu0 0.0
        %4299 = vmatprep.subr.mxu0 0.0
        %4300 = vmatpush1.xpose.msra.mxu0 0.0
        %4301 = vmatprep.subr.mxu0 0.0
        %4302 = vmatpush1.xpose.msra.mxu0 0.0
        %4303 = vmatprep.subr.mxu0 0.0
        %4304 = vmatpush1.xpose.msra.mxu0 0.0
        %4305 = vmatprep.subr.mxu0 0.0
        %4306 = vmatpush1.xpose.msra.mxu0 0.0
        %4307 = vmatprep.subr.mxu0 0.0
        %4308 = vmatpush1.xpose.msra.mxu0 0.0
        %4309 = vmatprep.subr.mxu0 0.0
        %4310 = vmatpush1.xpose.msra.mxu0 0.0
        %4311 = vmatprep.subr.mxu0 0.0
        %4312 = vmatpush1.xpose.msra.mxu0 0.0
        %4313 = vmatprep.subr.mxu0 0.0
        %4314 = vmatpush1.xpose.msra.mxu0 0.0
        %4315 = vmatprep.subr.mxu0 0.0
        %4316 = vmatpush1.xpose.msra.mxu0 0.0
        %4317 = vmatprep.subr.mxu0 0.0
        %4318 = vmatpush1.xpose.msra.mxu0 0.0
        %4319 = vmatprep.subr.mxu0 0.0
        %4320 = vmatpush1.xpose.msra.mxu0 0.0
        %4321 = vmatprep.subr.mxu0 0.0
        %4322 = vmatpush1.xpose.msra.mxu0 0.0
        %4323 = vmatprep.subr.mxu0 0.0
        %4324 = vmatpush1.xpose.msra.mxu0 0.0
        %4325 = vmatprep.subr.mxu0 0.0
        %4326 = vmatpush1.xpose.msra.mxu0 0.0
        %4327 = vmatprep.subr.mxu0 0.0
        %4328 = vmatpush1.xpose.msra.mxu0 0.0
        %4329 = vmatprep.subr.mxu0 0.0
        %4330 = vmatpush1.xpose.msra.mxu0 0.0
        %4331 = vmatprep.subr.mxu0 0.0
        %4332 = vmatpush1.xpose.msra.mxu0 0.0
        %4333 = vmatprep.subr.mxu0 0.0
        %4334 = vmatpush1.xpose.msra.mxu0 0.0
        %4335 = vmatprep.subr.mxu0 0.0
        %4336 = vmatpush1.xpose.msra.mxu0 0.0
        %4337 = vmatprep.mubr.f32.mxu0 0.0
        %4338 = vmatmul.mubr.f32.gmra.mrb[0].mxu0 %v4269
        %v4339 = vpop.f32.mrb[0].mxu0
        %v4340 = vadd.f32 0.0, %v4339
        %v4341 = vpop.f32.mrb[0].mxu0
        %4342 = vdwg.mxu0
        %v4343 = vmul.f32 %v4340, 2.828427
        %v4344 = vsel %vm697, %v4343, -inf
        %4345 = vmax.xlane.f32.xlu0 %v4344
        %v4346 = vpop.xlane.xlu0 %4345
        %v4347 = vsub.f32 %v4343, %v4346
        %v4348 = vmul.f32 %v4347, 1.442695
        %v4349 = vpow.pop %v4348
        %v4350 = vsel %vm697, %v4349, 0.0
        %4351 = vadd.xlane.f32.xlu0 %v4350
        %v4352 = vpop.xlane.xlu0 %4351
        %v4353 = vrcp.pop %v4352
        %v4354 = vmul.f32 %v4349, %v4353
        %4355 = vrot.lane.b32.xlu0 %v3766, 72
        %v4356 = vpop.permute.xlu0 %4355
        %v4359 = vsel %vm697, %v4354, 0
        %4361 = vmatprep.subr.mxu0 0.0
        %4362 = vmatpush1.msra.mxu0 %v4356
        %4363 = vmatprep.subr.mxu0 0.0
        %4364 = vmatpush1.msra.mxu0 0.0
        %4365 = vmatprep.subr.mxu0 0.0
        %4366 = vmatpush1.msra.mxu0 0.0
        %4367 = vmatprep.subr.mxu0 0.0
        %4368 = vmatpush1.msra.mxu0 0.0
        %4369 = vmatprep.subr.mxu0 0.0
        %4370 = vmatpush1.msra.mxu0 0.0
        %4371 = vmatprep.subr.mxu0 0.0
        %4372 = vmatpush1.msra.mxu0 0.0
        %4373 = vmatprep.subr.mxu0 0.0
        %4374 = vmatpush1.msra.mxu0 0.0
        %4375 = vmatprep.subr.mxu0 0.0
        %4376 = vmatpush1.msra.mxu0 0.0
        %4377 = vmatprep.subr.mxu0 0.0
        %4378 = vmatpush1.msra.mxu0 0.0
        %4379 = vmatprep.subr.mxu0 0.0
        %4380 = vmatpush1.msra.mxu0 0.0
        %4381 = vmatprep.subr.mxu0 0.0
        %4382 = vmatpush1.msra.mxu0 0.0
        %4383 = vmatprep.subr.mxu0 0.0
        %4384 = vmatpush1.msra.mxu0 0.0
        %4385 = vmatprep.subr.mxu0 0.0
        %4386 = vmatpush1.msra.mxu0 0.0
        %4387 = vmatprep.subr.mxu0 0.0
        %4388 = vmatpush1.msra.mxu0 0.0
        %4389 = vmatprep.subr.mxu0 0.0
        %4390 = vmatpush1.msra.mxu0 0.0
        %4391 = vmatprep.subr.mxu0 0.0
        %4392 = vmatpush1.msra.mxu0 0.0
        %4393 = vmatprep.subr.mxu0 0.0
        %4394 = vmatpush1.msra.mxu0 0.0
        %4395 = vmatprep.subr.mxu0 0.0
        %4396 = vmatpush1.msra.mxu0 0.0
        %4397 = vmatprep.subr.mxu0 0.0
        %4398 = vmatpush1.msra.mxu0 0.0
        %4399 = vmatprep.subr.mxu0 0.0
        %4400 = vmatpush1.msra.mxu0 0.0
        %4401 = vmatprep.subr.mxu0 0.0
        %4402 = vmatpush1.msra.mxu0 0.0
        %4403 = vmatprep.subr.mxu0 0.0
        %4404 = vmatpush1.msra.mxu0 0.0
        %4405 = vmatprep.subr.mxu0 0.0
        %4406 = vmatpush1.msra.mxu0 0.0
        %4407 = vmatprep.subr.mxu0 0.0
        %4408 = vmatpush1.msra.mxu0 0.0
        %4409 = vmatprep.subr.mxu0 0.0
        %4410 = vmatpush1.msra.mxu0 0.0
        %4411 = vmatprep.subr.mxu0 0.0
        %4412 = vmatpush1.msra.mxu0 0.0
        %4413 = vmatprep.subr.mxu0 0.0
        %4414 = vmatpush1.msra.mxu0 0.0
        %4415 = vmatprep.subr.mxu0 0.0
        %4416 = vmatpush1.msra.mxu0 0.0
        %4417 = vmatprep.subr.mxu0 0.0
        %4418 = vmatpush1.msra.mxu0 0.0
        %4419 = vmatprep.subr.mxu0 0.0
        %4420 = vmatpush1.msra.mxu0 0.0
        %4421 = vmatprep.subr.mxu0 0.0
        %4422 = vmatpush1.msra.mxu0 0.0
        %4423 = vmatprep.subr.mxu0 0.0
        %4424 = vmatpush1.msra.mxu0 0.0
        %4425 = vmatprep.mubr.f32.mxu0 0.0
        %4426 = vmatmul.mubr.f32.gmra.mrb[0].mxu0 %v4359
        %v4427 = vpop.f32.mrb[0].mxu0
        %v4428 = vadd.f32 0.0, %v4427
        %v4429 = vpop.f32.mrb[0].mxu0
        %4430 = vdwg.mxu0
        %4432 = vrot.lane.b32.xlu0 %v4096, 8
        %v4433 = vpop.permute.xlu0 %4432
        %4436 = vrot.lane.b32.xlu0 %v4262, 16
        %v4437 = vpop.permute.xlu0 %4436
        %4440 = vrot.lane.b32.xlu0 %v4428, 24
        %v4441 = vpop.permute.xlu0 %4440
        %v4443 = vsel %vm697, %v3930, %v4433
        %v4444 = vsel %vm1371, %v4443, %v4437
        %v4445 = vsel %vm1373, %v4444, %v4441
        %v4446 = vld [vmem:[%s12] sm:$0xff]
        %v4447 = vld [vmem:[%s12 + $0x8] sm:$0xff]
        %v4448 = vld [vmem:[%s12 + $0x10] sm:$0xff]
        %v4449 = vld [vmem:[%s12 + $0x18] sm:$0xff]
        %v4450 = vld [vmem:[%s13 + $0x3] sm:$0x1]
        %v4451 = vlaneseq
        %v4452 = vshrl.u32 %v4451, 7
        %v4453 = vsub.s32 0, %v4452
        %v4454 = vrot.slane %v4450, %v4453
        %v4456 = vsel %vm620, %v4445, 0
        %4458 = vmatprep.subr.mxu0 0.0
        %4459 = vmatpush1.msra.mxu0 %v4446
        %4460 = vmatprep.subr.mxu0 0.0
        %4461 = vmatpush1.msra.mxu0 %v4447
        %4462 = vmatprep.subr.mxu0 0.0
        %4463 = vmatpush1.msra.mxu0 %v4448
        %4464 = vmatprep.subr.mxu0 0.0
        %4465 = vmatpush1.msra.mxu0 %v4449
        %4466 = vmatprep.subr.mxu0 0.0
        %4467 = vmatpush1.msra.mxu0 0.0
        %4468 = vmatprep.subr.mxu0 0.0
        %4469 = vmatpush1.msra.mxu0 0.0
        %4470 = vmatprep.subr.mxu0 0.0
        %4471 = vmatpush1.msra.mxu0 0.0
        %4472 = vmatprep.subr.mxu0 0.0
        %4473 = vmatpush1.msra.mxu0 0.0
        %4474 = vmatprep.subr.mxu0 0.0
        %4475 = vmatpush1.msra.mxu0 0.0
        %4476 = vmatprep.subr.mxu0 0.0
        %4477 = vmatpush1.msra.mxu0 0.0
        %4478 = vmatprep.subr.mxu0 0.0
        %4479 = vmatpush1.msra.mxu0 0.0
        %4480 = vmatprep.subr.mxu0 0.0
        %4481 = vmatpush1.msra.mxu0 0.0
        %4482 = vmatprep.subr.mxu0 0.0
        %4483 = vmatpush1.msra.mxu0 0.0
        %4484 = vmatprep.subr.mxu0 0.0
        %4485 = vmatpush1.msra.mxu0 0.0
        %4486 = vmatprep.subr.mxu0 0.0
        %4487 = vmatpush1.msra.mxu0 0.0
        %4488 = vmatprep.subr.mxu0 0.0
        %4489 = vmatpush1.msra.mxu0 0.0
        %4490 = vmatprep.subr.mxu0 0.0
        %4491 = vmatpush1.msra.mxu0 0.0
        %4492 = vmatprep.subr.mxu0 0.0
        %4493 = vmatpush1.msra.mxu0 0.0
        %4494 = vmatprep.subr.mxu0 0.0
        %4495 = vmatpush1.msra.mxu0 0.0
        %4496 = vmatprep.subr.mxu0 0.0
        %4497 = vmatpush1.msra.mxu0 0.0
        %4498 = vmatprep.subr.mxu0 0.0
        %4499 = vmatpush1.msra.mxu0 0.0
        %4500 = vmatprep.subr.mxu0 0.0
        %4501 = vmatpush1.msra.mxu0 0.0
        %4502 = vmatprep.subr.mxu0 0.0
        %4503 = vmatpush1.msra.mxu0 0.0
        %4504 = vmatprep.subr.mxu0 0.0
        %4505 = vmatpush1.msra.mxu0 0.0
        %4506 = vmatprep.subr.mxu0 0.0
        %4507 = vmatpush1.msra.mxu0 0.0
        %4508 = vmatprep.subr.mxu0 0.0
        %4509 = vmatpush1.msra.mxu0 0.0
        %4510 = vmatprep.subr.mxu0 0.0
        %4511 = vmatpush1.msra.mxu0 0.0
        %4512 = vmatprep.subr.mxu0 0.0
        %4513 = vmatpush1.msra.mxu0 0.0
        %4514 = vmatprep.subr.mxu0 0.0
        %4515 = vmatpush1.msra.mxu0 0.0
        %4516 = vmatprep.subr.mxu0 0.0
        %4517 = vmatpush1.msra.mxu0 0.0
        %4518 = vmatprep.subr.mxu0 0.0
        %4519 = vmatpush1.msra.mxu0 0.0
        %4520 = vmatprep.subr.mxu0 0.0
        %4521 = vmatpush1.msra.mxu0 0.0
        %4522 = vmatprep.mubr.f32.mxu0 0.0
        %4523 = vmatmul.mubr.f32.gmra.mrb[0].mxu0 %v4456
        %v4524 = vpop.f32.mrb[0].mxu0
        %v4525 = vadd.f32 %v4454, %v4524
        %v4526 = vpop.f32.mrb[0].mxu0
        %4527 = vdwg.mxu0
        %v4528 = vadd.f32 %v4525, %v3614
        %v4529 = vld [vmem:[%s13 + $0x4] sm:$0x1]
        %v4530 = vld [vmem:[%s13 + $0x5] sm:$0x1]
        %v4531 = vsel %vm620, %v4528, 0.0
        %4532 = vadd.xlane.f32.xlu0 %v4531
        %v4533 = vpop.xlane.xlu0 %4532
        %v4534 = vmul.f32 %v4533, %v1463
        %v4535 = vsub.f32 %v4528, %v4534
        %v4536 = vmul.f32 %v4535, %v4535
        %v4537 = vsel %vm620, %v4536, 0.0
        %4538 = vadd.xlane.f32.xlu0 %v4537
        %v4539 = vpop.xlane.xlu0 %4538
        %v4540 = vmul.f32 %v4539, %v1463
        %v4541 = vadd.f32 %v4540, 1e-05
        %v4542 = vrsqrt.pop %v4541
        %v4543 = vmul.f32 %v4535, %v4542
        %v4544 = vlaneseq
        %v4545 = vshrl.u32 %v4544, 7
        %v4546 = vsub.s32 0, %v4545
        %v4547 = vrot.slane %v4529, %v4546
        %v4548 = vmul.f32 %v4543, %v4547
        %v4549 = vlaneseq
        %v4550 = vshrl.u32 %v4549, 7
        %v4551 = vsub.s32 0, %v4550
        %v4552 = vrot.slane %v4530, %v4551
        %v4553 = vadd.f32 %v4548, %v4552
        %v4554 = vld [vmem:[%s14] sm:$0xff]
        %v4555 = vld [vmem:[%s14 + $0x8] sm:$0xff]
        %v4556 = vld [vmem:[%s14 + $0x10] sm:$0xff]
        %v4557 = vld [vmem:[%s14 + $0x18] sm:$0xff]
        %v4558 = vld [vmem:[%s15] sm:$0x1]
        %v4559 = vlaneseq
        %v4560 = vshrl.u32 %v4559, 7
        %v4561 = vsub.s32 0, %v4560
        %v4562 = vrot.slane %v4558, %v4561
        %v4564 = vsel %vm620, %v4553, 0
        %4566 = vmatprep.subr.mxu0 0.0
        %4567 = vmatpush1.msra.mxu0 %v4554
        %4568 = vmatprep.subr.mxu0 0.0
        %4569 = vmatpush1.msra.mxu0 %v4555
        %4570 = vmatprep.subr.mxu0 0.0
        %4571 = vmatpush1.msra.mxu0 %v4556
        %4572 = vmatprep.subr.mxu0 0.0
        %4573 = vmatpush1.msra.mxu0 %v4557
        %4574 = vmatprep.subr.mxu0 0.0
        %4575 = vmatpush1.msra.mxu0 0.0
        %4576 = vmatprep.subr.mxu0 0.0
        %4577 = vmatpush1.msra.mxu0 0.0
        %4578 = vmatprep.subr.mxu0 0.0
        %4579 = vmatpush1.msra.mxu0 0.0
        %4580 = vmatprep.subr.mxu0 0.0
        %4581 = vmatpush1.msra.mxu0 0.0
        %4582 = vmatprep.subr.mxu0 0.0
        %4583 = vmatpush1.msra.mxu0 0.0
        %4584 = vmatprep.subr.mxu0 0.0
        %4585 = vmatpush1.msra.mxu0 0.0
        %4586 = vmatprep.subr.mxu0 0.0
        %4587 = vmatpush1.msra.mxu0 0.0
        %4588 = vmatprep.subr.mxu0 0.0
        %4589 = vmatpush1.msra.mxu0 0.0
        %4590 = vmatprep.subr.mxu0 0.0
        %4591 = vmatpush1.msra.mxu0 0.0
        %4592 = vmatprep.subr.mxu0 0.0
        %4593 = vmatpush1.msra.mxu0 0.0
        %4594 = vmatprep.subr.mxu0 0.0
        %4595 = vmatpush1.msra.mxu0 0.0
        %4596 = vmatprep.subr.mxu0 0.0
        %4597 = vmatpush1.msra.mxu0 0.0
        %4598 = vmatprep.subr.mxu0 0.0
        %4599 = vmatpush1.msra.mxu0 0.0
        %4600 = vmatprep.subr.mxu0 0.0
        %4601 = vmatpush1.msra.mxu0 0.0
        %4602 = vmatprep.subr.mxu0 0.0
        %4603 = vmatpush1.msra.mxu0 0.0
        %4604 = vmatprep.subr.mxu0 0.0
        %4605 = vmatpush1.msra.mxu0 0.0
        %4606 = vmatprep.subr.mxu0 0.0
        %4607 = vmatpush1.msra.mxu0 0.0
        %4608 = vmatprep.subr.mxu0 0.0
        %4609 = vmatpush1.msra.mxu0 0.0
        %4610 = vmatprep.subr.mxu0 0.0
        %4611 = vmatpush1.msra.mxu0 0.0
        %4612 = vmatprep.subr.mxu0 0.0
        %4613 = vmatpush1.msra.mxu0 0.0
        %4614 = vmatprep.subr.mxu0 0.0
        %4615 = vmatpush1.msra.mxu0 0.0
        %4616 = vmatprep.subr.mxu0 0.0
        %4617 = vmatpush1.msra.mxu0 0.0
        %4618 = vmatprep.subr.mxu0 0.0
        %4619 = vmatpush1.msra.mxu0 0.0
        %4620 = vmatprep.subr.mxu0 0.0
        %4621 = vmatpush1.msra.mxu0 0.0
        %4622 = vmatprep.subr.mxu0 0.0
        %4623 = vmatpush1.msra.mxu0 0.0
        %4624 = vmatprep.subr.mxu0 0.0
        %4625 = vmatpush1.msra.mxu0 0.0
        %4626 = vmatprep.subr.mxu0 0.0
        %4627 = vmatpush1.msra.mxu0 0.0
        %4628 = vmatprep.subr.mxu0 0.0
        %4629 = vmatpush1.msra.mxu0 0.0
        %4630 = vmatprep.mubr.f32.mxu0 0.0
        %4631 = vmatmul.mubr.f32.gmra.mrb[0].mxu0 %v4564
        %v4632 = vpop.f32.mrb[0].mxu0
        %v4633 = vadd.f32 %v4562, %v4632
        %v4634 = vpop.f32.mrb[0].mxu0
        %4635 = vdwg.mxu0
        %v4636 = vmax.f32 %v4633, 0.0
        %v4637 = vld [vmem:[%s16] sm:$0xff]
        %v4638 = vld [vmem:[%s16 + $0x8] sm:$0xff]
        %v4639 = vld [vmem:[%s16 + $0x10] sm:$0xff]
        %v4640 = vld [vmem:[%s16 + $0x18] sm:$0xff]
        %v4641 = vld [vmem:[%s16 + $0x20] sm:$0xff]
        %v4642 = vld [vmem:[%s16 + $0x28] sm:$0xff]
        %v4643 = vld [vmem:[%s16 + $0x30] sm:$0xff]
        %v4644 = vld [vmem:[%s16 + $0x38] sm:$0xff]
        %v4645 = vld [vmem:[%s16 + $0x40] sm:$0xff]
        %v4646 = vld [vmem:[%s16 + $0x48] sm:$0xff]
        %v4647 = vld [vmem:[%s16 + $0x50] sm:$0xff]
        %v4648 = vld [vmem:[%s16 + $0x58] sm:$0xff]
        %v4649 = vld [vmem:[%s16 + $0x60] sm:$0xff]
        %v4650 = vld [vmem:[%s16 + $0x68] sm:$0xff]
        %v4651 = vld [vmem:[%s16 + $0x70] sm:$0xff]
        %v4652 = vld [vmem:[%s16 + $0x78] sm:$0xff]
        %v4653 = vld [vmem:[%s13 + $0x6] sm:$0x1]
        %v4654 = vlaneseq
        %v4655 = vshrl.u32 %v4654, 7
        %v4656 = vsub.s32 0, %v4655
        %v4657 = vrot.slane %v4653, %v4656
        %4658 = vmatprep.subr.mxu0 0.0
        %4659 = vmatpush1.msra.mxu0 %v4637
        %4660 = vmatprep.subr.mxu0 0.0
        %4661 = vmatpush1.msra.mxu0 %v4638
        %4662 = vmatprep.subr.mxu0 0.0
        %4663 = vmatpush1.msra.mxu0 %v4639
        %4664 = vmatprep.subr.mxu0 0.0
        %4665 = vmatpush1.msra.mxu0 %v4640
        %4666 = vmatprep.subr.mxu0 0.0
        %4667 = vmatpush1.msra.mxu0 %v4641
        %4668 = vmatprep.subr.mxu0 0.0
        %4669 = vmatpush1.msra.mxu0 %v4642
        %4670 = vmatprep.subr.mxu0 0.0
        %4671 = vmatpush1.msra.mxu0 %v4643
        %4672 = vmatprep.subr.mxu0 0.0
        %4673 = vmatpush1.msra.mxu0 %v4644
        %4674 = vmatprep.subr.mxu0 0.0
        %4675 = vmatpush1.msra.mxu0 %v4645
        %4676 = vmatprep.subr.mxu0 0.0
        %4677 = vmatpush1.msra.mxu0 %v4646
        %4678 = vmatprep.subr.mxu0 0.0
        %4679 = vmatpush1.msra.mxu0 %v4647
        %4680 = vmatprep.subr.mxu0 0.0
        %4681 = vmatpush1.msra.mxu0 %v4648
        %4682 = vmatprep.subr.mxu0 0.0
        %4683 = vmatpush1.msra.mxu0 %v4649
        %4684 = vmatprep.subr.mxu0 0.0
        %4685 = vmatpush1.msra.mxu0 %v4650
        %4686 = vmatprep.subr.mxu0 0.0
        %4687 = vmatpush1.msra.mxu0 %v4651
        %4688 = vmatprep.subr.mxu0 0.0
        %4689 = vmatpush1.msra.mxu0 %v4652
        %4690 = vmatprep.subr.mxu0 0.0
        %4691 = vmatpush1.msra.mxu0 0.0
        %4692 = vmatprep.subr.mxu0 0.0
        %4693 = vmatpush1.msra.mxu0 0.0
        %4694 = vmatprep.subr.mxu0 0.0
        %4695 = vmatpush1.msra.mxu0 0.0
        %4696 = vmatprep.subr.mxu0 0.0
        %4697 = vmatpush1.msra.mxu0 0.0
        %4698 = vmatprep.subr.mxu0 0.0
        %4699 = vmatpush1.msra.mxu0 0.0
        %4700 = vmatprep.subr.mxu0 0.0
        %4701 = vmatpush1.msra.mxu0 0.0
        %4702 = vmatprep.subr.mxu0 0.0
        %4703 = vmatpush1.msra.mxu0 0.0
        %4704 = vmatprep.subr.mxu0 0.0
        %4705 = vmatpush1.msra.mxu0 0.0
        %4706 = vmatprep.subr.mxu0 0.0
        %4707 = vmatpush1.msra.mxu0 0.0
        %4708 = vmatprep.subr.mxu0 0.0
        %4709 = vmatpush1.msra.mxu0 0.0
        %4710 = vmatprep.subr.mxu0 0.0
        %4711 = vmatpush1.msra.mxu0 0.0
        %4712 = vmatprep.subr.mxu0 0.0
        %4713 = vmatpush1.msra.mxu0 0.0
        %4714 = vmatprep.subr.mxu0 0.0
        %4715 = vmatpush1.msra.mxu0 0.0
        %4716 = vmatprep.subr.mxu0 0.0
        %4717 = vmatpush1.msra.mxu0 0.0
        %4718 = vmatprep.subr.mxu0 0.0
        %4719 = vmatpush1.msra.mxu0 0.0
        %4720 = vmatprep.subr.mxu0 0.0
        %4721 = vmatpush1.msra.mxu0 0.0
        %4722 = vmatprep.mubr.f32.mxu0 0.0
        %4723 = vmatmul.mubr.f32.gmra.mrb[0].mxu0 %v4636
        %v4724 = vpop.f32.mrb[0].mxu0
        %v4725 = vadd.f32 %v4657, %v4724
        %v4726 = vpop.f32.mrb[0].mxu0
        %4727 = vdwg.mxu0
        %v4728 = vadd.f32 %v4725, %v4553
        %v4729 = vld [vmem:[%s13 + $0x7] sm:$0x1]
        %v4730 = vld [vmem:[%s13 + $0x8] sm:$0x1]
        %v4731 = vsel %vm620, %v4728, 0.0
        %4732 = vadd.xlane.f32.xlu0 %v4731
        %v4733 = vpop.xlane.xlu0 %4732
        %v4734 = vmul.f32 %v4733, %v1463
        %v4735 = vsub.f32 %v4728, %v4734
        %v4736 = vmul.f32 %v4735, %v4735
        %v4737 = vsel %vm620, %v4736, 0.0
        %4738 = vadd.xlane.f32.xlu0 %v4737
        %v4739 = vpop.xlane.xlu0 %4738
        %v4740 = vmul.f32 %v4739, %v1463
        %v4741 = vadd.f32 %v4740, 1e-05
        %v4742 = vrsqrt.pop %v4741
        %v4743 = vmul.f32 %v4735, %v4742
        %v4744 = vlaneseq
        %v4745 = vshrl.u32 %v4744, 7
        %v4746 = vsub.s32 0, %v4745
        %v4747 = vrot.slane %v4729, %v4746
        %v4748 = vmul.f32 %v4743, %v4747
        %v4749 = vlaneseq
        %v4750 = vshrl.u32 %v4749, 7
        %v4751 = vsub.s32 0, %v4750
        %v4752 = vrot.slane %v4730, %v4751
        %v4753 = vadd.f32 %v4748, %v4752
        %s4754 = scalar_lea.vmem %s8, 32
        %v4755 = vld [vmem:[%s4754] sm:$0xff]
        %v4756 = vld [vmem:[%s4754 + $0x8] sm:$0xff]
        %v4757 = vld [vmem:[%s4754 + $0x10] sm:$0xff]
        %v4758 = vld [vmem:[%s4754 + $0x18] sm:$0xff]
        %v4760 = vsel %vm620, %v4753, 0
        %4762 = vmatprep.subr.mxu0 0.0
        %4763 = vmatpush1.msra.mxu0 %v4755
        %4764 = vmatprep.subr.mxu0 0.0
        %4765 = vmatpush1.msra.mxu0 %v4756
        %4766 = vmatprep.subr.mxu0 0.0
        %4767 = vmatpush1.msra.mxu0 %v4757
        %4768 = vmatprep.subr.mxu0 0.0
        %4769 = vmatpush1.msra.mxu0 %v4758
        %4770 = vmatprep.subr.mxu0 0.0
        %4771 = vmatpush1.msra.mxu0 0.0
        %4772 = vmatprep.subr.mxu0 0.0
        %4773 = vmatpush1.msra.mxu0 0.0
        %4774 = vmatprep.subr.mxu0 0.0
        %4775 = vmatpush1.msra.mxu0 0.0
        %4776 = vmatprep.subr.mxu0 0.0
        %4777 = vmatpush1.msra.mxu0 0.0
        %4778 = vmatprep.subr.mxu0 0.0
        %4779 = vmatpush1.msra.mxu0 0.0
        %4780 = vmatprep.subr.mxu0 0.0
        %4781 = vmatpush1.msra.mxu0 0.0
        %4782 = vmatprep.subr.mxu0 0.0
        %4783 = vmatpush1.msra.mxu0 0.0
        %4784 = vmatprep.subr.mxu0 0.0
        %4785 = vmatpush1.msra.mxu0 0.0
        %4786 = vmatprep.subr.mxu0 0.0
        %4787 = vmatpush1.msra.mxu0 0.0
        %4788 = vmatprep.subr.mxu0 0.0
        %4789 = vmatpush1.msra.mxu0 0.0
        %4790 = vmatprep.subr.mxu0 0.0
        %4791 = vmatpush1.msra.mxu0 0.0
        %4792 = vmatprep.subr.mxu0 0.0
        %4793 = vmatpush1.msra.mxu0 0.0
        %4794 = vmatprep.subr.mxu0 0.0
        %4795 = vmatpush1.msra.mxu0 0.0
        %4796 = vmatprep.subr.mxu0 0.0
        %4797 = vmatpush1.msra.mxu0 0.0
        %4798 = vmatprep.subr.mxu0 0.0
        %4799 = vmatpush1.msra.mxu0 0.0
        %4800 = vmatprep.subr.mxu0 0.0
        %4801 = vmatpush1.msra.mxu0 0.0
        %4802 = vmatprep.subr.mxu0 0.0
        %4803 = vmatpush1.msra.mxu0 0.0
        %4804 = vmatprep.subr.mxu0 0.0
        %4805 = vmatpush1.msra.mxu0 0.0
        %4806 = vmatprep.subr.mxu0 0.0
        %4807 = vmatpush1.msra.mxu0 0.0
        %4808 = vmatprep.subr.mxu0 0.0
        %4809 = vmatpush1.msra.mxu0 0.0
        %4810 = vmatprep.subr.mxu0 0.0
        %4811 = vmatpush1.msra.mxu0 0.0
        %4812 = vmatprep.subr.mxu0 0.0
        %4813 = vmatpush1.msra.mxu0 0.0
        %4814 = vmatprep.subr.mxu0 0.0
        %4815 = vmatpush1.msra.mxu0 0.0
        %4816 = vmatprep.subr.mxu0 0.0
        %4817 = vmatpush1.msra.mxu0 0.0
        %4818 = vmatprep.subr.mxu0 0.0
        %4819 = vmatpush1.msra.mxu0 0.0
        %4820 = vmatprep.subr.mxu0 0.0
        %4821 = vmatpush1.msra.mxu0 0.0
        %4822 = vmatprep.subr.mxu0 0.0
        %4823 = vmatpush1.msra.mxu0 0.0
        %4824 = vmatprep.subr.mxu0 0.0
        %4825 = vmatpush1.msra.mxu0 0.0
        %4826 = vmatprep.mubr.f32.mxu0 0.0
        %4827 = vmatmul.mubr.f32.gmra.mrb[0].mxu0 %v4760
        %v4828 = vpop.f32.mrb[0].mxu0
        %v4829 = vadd.f32 0.0, %v4828
        %v4830 = vpop.f32.mrb[0].mxu0
        %4831 = vdwg.mxu0
        %4833 = vrot.lane.b32.xlu0 %v4829, 96
        %v4834 = vpop.permute.xlu0 %4833
        %v4835 = vsel %vm697, %v4829, 0
        %v4837 = vsel %vm697, %v4834, 0
        %4839 = vmatprep.subr.mxu0 0.0
        %4840 = vmatpush1.xpose.msra.mxu0 %v4837
        %4841 = vmatprep.subr.mxu0 0.0
        %4842 = vmatpush1.xpose.msra.mxu0 0.0
        %4843 = vmatprep.subr.mxu0 0.0
        %4844 = vmatpush1.xpose.msra.mxu0 0.0
        %4845 = vmatprep.subr.mxu0 0.0
        %4846 = vmatpush1.xpose.msra.mxu0 0.0
        %4847 = vmatprep.subr.mxu0 0.0
        %4848 = vmatpush1.xpose.msra.mxu0 0.0
        %4849 = vmatprep.subr.mxu0 0.0
        %4850 = vmatpush1.xpose.msra.mxu0 0.0
        %4851 = vmatprep.subr.mxu0 0.0
        %4852 = vmatpush1.xpose.msra.mxu0 0.0
        %4853 = vmatprep.subr.mxu0 0.0
        %4854 = vmatpush1.xpose.msra.mxu0 0.0
        %4855 = vmatprep.subr.mxu0 0.0
        %4856 = vmatpush1.xpose.msra.mxu0 0.0
        %4857 = vmatprep.subr.mxu0 0.0
        %4858 = vmatpush1.xpose.msra.mxu0 0.0
        %4859 = vmatprep.subr.mxu0 0.0
        %4860 = vmatpush1.xpose.msra.mxu0 0.0
        %4861 = vmatprep.subr.mxu0 0.0
        %4862 = vmatpush1.xpose.msra.mxu0 0.0
        %4863 = vmatprep.subr.mxu0 0.0
        %4864 = vmatpush1.xpose.msra.mxu0 0.0
        %4865 = vmatprep.subr.mxu0 0.0
        %4866 = vmatpush1.xpose.msra.mxu0 0.0
        %4867 = vmatprep.subr.mxu0 0.0
        %4868 = vmatpush1.xpose.msra.mxu0 0.0
        %4869 = vmatprep.subr.mxu0 0.0
        %4870 = vmatpush1.xpose.msra.mxu0 0.0
        %4871 = vmatprep.subr.mxu0 0.0
        %4872 = vmatpush1.xpose.msra.mxu0 0.0
        %4873 = vmatprep.subr.mxu0 0.0
        %4874 = vmatpush1.xpose.msra.mxu0 0.0
        %4875 = vmatprep.subr.mxu0 0.0
        %4876 = vmatpush1.xpose.msra.mxu0 0.0
        %4877 = vmatprep.subr.mxu0 0.0
        %4878 = vmatpush1.xpose.msra.mxu0 0.0
        %4879 = vmatprep.subr.mxu0 0.0
        %4880 = vmatpush1.xpose.msra.mxu0 0.0
        %4881 = vmatprep.subr.mxu0 0.0
        %4882 = vmatpush1.xpose.msra.mxu0 0.0
        %4883 = vmatprep.subr.mxu0 0.0
        %4884 = vmatpush1.xpose.msra.mxu0 0.0
        %4885 = vmatprep.subr.mxu0 0.0
        %4886 = vmatpush1.xpose.msra.mxu0 0.0
        %4887 = vmatprep.subr.mxu0 0.0
        %4888 = vmatpush1.xpose.msra.mxu0 0.0
        %4889 = vmatprep.subr.mxu0 0.0
        %4890 = vmatpush1.xpose.msra.mxu0 0.0
        %4891 = vmatprep.subr.mxu0 0.0
        %4892 = vmatpush1.xpose.msra.mxu0 0.0
        %4893 = vmatprep.subr.mxu0 0.0
        %4894 = vmatpush1.xpose.msra.mxu0 0.0
        %4895 = vmatprep.subr.mxu0 0.0
        %4896 = vmatpush1.xpose.msra.mxu0 0.0
        %4897 = vmatprep.subr.mxu0 0.0
        %4898 = vmatpush1.xpose.msra.mxu0 0.0
        %4899 = vmatprep.subr.mxu0 0.0
        %4900 = vmatpush1.xpose.msra.mxu0 0.0
        %4901 = vmatprep.subr.mxu0 0.0
        %4902 = vmatpush1.xpose.msra.mxu0 0.0
        %4903 = vmatprep.mubr.f32.mxu0 0.0
        %4904 = vmatmul.mubr.f32.gmra.mrb[0].mxu0 %v4835
        %v4905 = vpop.f32.mrb[0].mxu0
        %v4906 = vadd.f32 0.0, %v4905
        %v4907 = vpop.f32.mrb[0].mxu0
        %4908 = vdwg.mxu0
        %v4909 = vmul.f32 %v4906, 2.828427
        %v4910 = vsel %vm697, %v4909, -inf
        %4911 = vmax.xlane.f32.xlu0 %v4910
        %v4912 = vpop.xlane.xlu0 %4911
        %v4913 = vsub.f32 %v4909, %v4912
        %v4914 = vmul.f32 %v4913, 1.442695
        %v4915 = vpow.pop %v4914
        %v4916 = vsel %vm697, %v4915, 0.0
        %4917 = vadd.xlane.f32.xlu0 %v4916
        %v4918 = vpop.xlane.xlu0 %4917
        %v4919 = vrcp.pop %v4918
        %v4920 = vmul.f32 %v4915, %v4919
        %4921 = vrot.lane.b32.xlu0 %v4829, 64
        %v4922 = vpop.permute.xlu0 %4921
        %v4925 = vsel %vm697, %v4920, 0
        %4927 = vmatprep.subr.mxu0 0.0
        %4928 = vmatpush1.msra.mxu0 %v4922
        %4929 = vmatprep.subr.mxu0 0.0
        %4930 = vmatpush1.msra.mxu0 0.0
        %4931 = vmatprep.subr.mxu0 0.0
        %4932 = vmatpush1.msra.mxu0 0.0
        %4933 = vmatprep.subr.mxu0 0.0
        %4934 = vmatpush1.msra.mxu0 0.0
        %4935 = vmatprep.subr.mxu0 0.0
        %4936 = vmatpush1.msra.mxu0 0.0
        %4937 = vmatprep.subr.mxu0 0.0
        %4938 = vmatpush1.msra.mxu0 0.0
        %4939 = vmatprep.subr.mxu0 0.0
        %4940 = vmatpush1.msra.mxu0 0.0
        %4941 = vmatprep.subr.mxu0 0.0
        %4942 = vmatpush1.msra.mxu0 0.0
        %4943 = vmatprep.subr.mxu0 0.0
        %4944 = vmatpush1.msra.mxu0 0.0
        %4945 = vmatprep.subr.mxu0 0.0
        %4946 = vmatpush1.msra.mxu0 0.0
        %4947 = vmatprep.subr.mxu0 0.0
        %4948 = vmatpush1.msra.mxu0 0.0
        %4949 = vmatprep.subr.mxu0 0.0
        %4950 = vmatpush1.msra.mxu0 0.0
        %4951 = vmatprep.subr.mxu0 0.0
        %4952 = vmatpush1.msra.mxu0 0.0
        %4953 = vmatprep.subr.mxu0 0.0
        %4954 = vmatpush1.msra.mxu0 0.0
        %4955 = vmatprep.subr.mxu0 0.0
        %4956 = vmatpush1.msra.mxu0 0.0
        %4957 = vmatprep.subr.mxu0 0.0
        %4958 = vmatpush1.msra.mxu0 0.0
        %4959 = vmatprep.subr.mxu0 0.0
        %4960 = vmatpush1.msra.mxu0 0.0
        %4961 = vmatprep.subr.mxu0 0.0
        %4962 = vmatpush1.msra.mxu0 0.0
        %4963 = vmatprep.subr.mxu0 0.0
        %4964 = vmatpush1.msra.mxu0 0.0
        %4965 = vmatprep.subr.mxu0 0.0
        %4966 = vmatpush1.msra.mxu0 0.0
        %4967 = vmatprep.subr.mxu0 0.0
        %4968 = vmatpush1.msra.mxu0 0.0
        %4969 = vmatprep.subr.mxu0 0.0
        %4970 = vmatpush1.msra.mxu0 0.0
        %4971 = vmatprep.subr.mxu0 0.0
        %4972 = vmatpush1.msra.mxu0 0.0
        %4973 = vmatprep.subr.mxu0 0.0
        %4974 = vmatpush1.msra.mxu0 0.0
        %4975 = vmatprep.subr.mxu0 0.0
        %4976 = vmatpush1.msra.mxu0 0.0
        %4977 = vmatprep.subr.mxu0 0.0
        %4978 = vmatpush1.msra.mxu0 0.0
        %4979 = vmatprep.subr.mxu0 0.0
        %4980 = vmatpush1.msra.mxu0 0.0
        %4981 = vmatprep.subr.mxu0 0.0
        %4982 = vmatpush1.msra.mxu0 0.0
        %4983 = vmatprep.subr.mxu0 0.0
        %4984 = vmatpush1.msra.mxu0 0.0
        %4985 = vmatprep.subr.mxu0 0.0
        %4986 = vmatpush1.msra.mxu0 0.0
        %4987 = vmatprep.subr.mxu0 0.0
        %4988 = vmatpush1.msra.mxu0 0.0
        %4989 = vmatprep.subr.mxu0 0.0
        %4990 = vmatpush1.msra.mxu0 0.0
        %4991 = vmatprep.mubr.f32.mxu0 0.0
        %4992 = vmatmul.mubr.f32.gmra.mrb[0].mxu0 %v4925
        %v4993 = vpop.f32.mrb[0].mxu0
        %v4994 = vadd.f32 0.0, %v4993
        %v4995 = vpop.f32.mrb[0].mxu0
        %4996 = vdwg.mxu0
        %4997 = vrot.lane.b32.xlu0 %v4829, 120
        %v4998 = vpop.permute.xlu0 %4997
        %4999 = vrot.lane.b32.xlu0 %v4829, 88
        %v5000 = vpop.permute.xlu0 %4999
        %v5001 = vsel %vm697, %v4998, 0
        %v5003 = vsel %vm697, %v5000, 0
        %5005 = vmatprep.subr.mxu0 0.0
        %5006 = vmatpush1.xpose.msra.mxu0 %v5003
        %5007 = vmatprep.subr.mxu0 0.0
        %5008 = vmatpush1.xpose.msra.mxu0 0.0
        %5009 = vmatprep.subr.mxu0 0.0
        %5010 = vmatpush1.xpose.msra.mxu0 0.0
        %5011 = vmatprep.subr.mxu0 0.0
        %5012 = vmatpush1.xpose.msra.mxu0 0.0
        %5013 = vmatprep.subr.mxu0 0.0
        %5014 = vmatpush1.xpose.msra.mxu0 0.0
        %5015 = vmatprep.subr.mxu0 0.0
        %5016 = vmatpush1.xpose.msra.mxu0 0.0
        %5017 = vmatprep.subr.mxu0 0.0
        %5018 = vmatpush1.xpose.msra.mxu0 0.0
        %5019 = vmatprep.subr.mxu0 0.0
        %5020 = vmatpush1.xpose.msra.mxu0 0.0
        %5021 = vmatprep.subr.mxu0 0.0
        %5022 = vmatpush1.xpose.msra.mxu0 0.0
        %5023 = vmatprep.subr.mxu0 0.0
        %5024 = vmatpush1.xpose.msra.mxu0 0.0
        %5025 = vmatprep.subr.mxu0 0.0
        %5026 = vmatpush1.xpose.msra.mxu0 0.0
        %5027 = vmatprep.subr.mxu0 0.0
        %5028 = vmatpush1.xpose.msra.mxu0 0.0
        %5029 = vmatprep.subr.mxu0 0.0
        %5030 = vmatpush1.xpose.msra.mxu0 0.0
        %5031 = vmatprep.subr.mxu0 0.0
        %5032 = vmatpush1.xpose.msra.mxu0 0.0
        %5033 = vmatprep.subr.mxu0 0.0
        %5034 = vmatpush1.xpose.msra.mxu0 0.0
        %5035 = vmatprep.subr.mxu0 0.0
        %5036 = vmatpush1.xpose.msra.mxu0 0.0
        %5037 = vmatprep.subr.mxu0 0.0
        %5038 = vmatpush1.xpose.msra.mxu0 0.0
        %5039 = vmatprep.subr.mxu0 0.0
        %5040 = vmatpush1.xpose.msra.mxu0 0.0
        %5041 = vmatprep.subr.mxu0 0.0
        %5042 = vmatpush1.xpose.msra.mxu0 0.0
        %5043 = vmatprep.subr.mxu0 0.0
        %5044 = vmatpush1.xpose.msra.mxu0 0.0
        %5045 = vmatprep.subr.mxu0 0.0
        %5046 = vmatpush1.xpose.msra.mxu0 0.0
        %5047 = vmatprep.subr.mxu0 0.0
        %5048 = vmatpush1.xpose.msra.mxu0 0.0
        %5049 = vmatprep.subr.mxu0 0.0
        %5050 = vmatpush1.xpose.msra.mxu0 0.0
        %5051 = vmatprep.subr.mxu0 0.0
        %5052 = vmatpush1.xpose.msra.mxu0 0.0
        %5053 = vmatprep.subr.mxu0 0.0
        %5054 = vmatpush1.xpose.msra.mxu0 0.0
        %5055 = vmatprep.subr.mxu0 0.0
        %5056 = vmatpush1.xpose.msra.mxu0 0.0
        %5057 = vmatprep.subr.mxu0 0.0
        %5058 = vmatpush1.xpose.msra.mxu0 0.0
        %5059 = vmatprep.subr.mxu0 0.0
        %5060 = vmatpush1.xpose.msra.mxu0 0.0
        %5061 = vmatprep.subr.mxu0 0.0
        %5062 = vmatpush1.xpose.msra.mxu0 0.0
        %5063 = vmatprep.subr.mxu0 0.0
        %5064 = vmatpush1.xpose.msra.mxu0 0.0
        %5065 = vmatprep.subr.mxu0 0.0
        %5066 = vmatpush1.xpose.msra.mxu0 0.0
        %5067 = vmatprep.subr.mxu0 0.0
        %5068 = vmatpush1.xpose.msra.mxu0 0.0
        %5069 = vmatprep.mubr.f32.mxu0 0.0
        %5070 = vmatmul.mubr.f32.gmra.mrb[0].mxu0 %v5001
        %v5071 = vpop.f32.mrb[0].mxu0
        %v5072 = vadd.f32 0.0, %v5071
        %v5073 = vpop.f32.mrb[0].mxu0
        %5074 = vdwg.mxu0
        %v5075 = vmul.f32 %v5072, 2.828427
        %v5076 = vsel %vm697, %v5075, -inf
        %5077 = vmax.xlane.f32.xlu0 %v5076
        %v5078 = vpop.xlane.xlu0 %5077
        %v5079 = vsub.f32 %v5075, %v5078
        %v5080 = vmul.f32 %v5079, 1.442695
        %v5081 = vpow.pop %v5080
        %v5082 = vsel %vm697, %v5081, 0.0
        %5083 = vadd.xlane.f32.xlu0 %v5082
        %v5084 = vpop.xlane.xlu0 %5083
        %v5085 = vrcp.pop %v5084
        %v5086 = vmul.f32 %v5081, %v5085
        %5087 = vrot.lane.b32.xlu0 %v4829, 56
        %v5088 = vpop.permute.xlu0 %5087
        %v5091 = vsel %vm697, %v5086, 0
        %5093 = vmatprep.subr.mxu0 0.0
        %5094 = vmatpush1.msra.mxu0 %v5088
        %5095 = vmatprep.subr.mxu0 0.0
        %5096 = vmatpush1.msra.mxu0 0.0
        %5097 = vmatprep.subr.mxu0 0.0
        %5098 = vmatpush1.msra.mxu0 0.0
        %5099 = vmatprep.subr.mxu0 0.0
        %5100 = vmatpush1.msra.mxu0 0.0
        %5101 = vmatprep.subr.mxu0 0.0
        %5102 = vmatpush1.msra.mxu0 0.0
        %5103 = vmatprep.subr.mxu0 0.0
        %5104 = vmatpush1.msra.mxu0 0.0
        %5105 = vmatprep.subr.mxu0 0.0
        %5106 = vmatpush1.msra.mxu0 0.0
        %5107 = vmatprep.subr.mxu0 0.0
        %5108 = vmatpush1.msra.mxu0 0.0
        %5109 = vmatprep.subr.mxu0 0.0
        %5110 = vmatpush1.msra.mxu0 0.0
        %5111 = vmatprep.subr.mxu0 0.0
        %5112 = vmatpush1.msra.mxu0 0.0
        %5113 = vmatprep.subr.mxu0 0.0
        %5114 = vmatpush1.msra.mxu0 0.0
        %5115 = vmatprep.subr.mxu0 0.0
        %5116 = vmatpush1.msra.mxu0 0.0
        %5117 = vmatprep.subr.mxu0 0.0
        %5118 = vmatpush1.msra.mxu0 0.0
        %5119 = vmatprep.subr.mxu0 0.0
        %5120 = vmatpush1.msra.mxu0 0.0
        %5121 = vmatprep.subr.mxu0 0.0
        %5122 = vmatpush1.msra.mxu0 0.0
        %5123 = vmatprep.subr.mxu0 0.0
        %5124 = vmatpush1.msra.mxu0 0.0
        %5125 = vmatprep.subr.mxu0 0.0
        %5126 = vmatpush1.msra.mxu0 0.0
        %5127 = vmatprep.subr.mxu0 0.0
        %5128 = vmatpush1.msra.mxu0 0.0
        %5129 = vmatprep.subr.mxu0 0.0
        %5130 = vmatpush1.msra.mxu0 0.0
        %5131 = vmatprep.subr.mxu0 0.0
        %5132 = vmatpush1.msra.mxu0 0.0
        %5133 = vmatprep.subr.mxu0 0.0
        %5134 = vmatpush1.msra.mxu0 0.0
        %5135 = vmatprep.subr.mxu0 0.0
        %5136 = vmatpush1.msra.mxu0 0.0
        %5137 = vmatprep.subr.mxu0 0.0
        %5138 = vmatpush1.msra.mxu0 0.0
        %5139 = vmatprep.subr.mxu0 0.0
        %5140 = vmatpush1.msra.mxu0 0.0
        %5141 = vmatprep.subr.mxu0 0.0
        %5142 = vmatpush1.msra.mxu0 0.0
        %5143 = vmatprep.subr.mxu0 0.0
        %5144 = vmatpush1.msra.mxu0 0.0
        %5145 = vmatprep.subr.mxu0 0.0
        %5146 = vmatpush1.msra.mxu0 0.0
        %5147 = vmatprep.subr.mxu0 0.0
        %5148 = vmatpush1.msra.mxu0 0.0
        %5149 = vmatprep.subr.mxu0 0.0
        %5150 = vmatpush1.msra.mxu0 0.0
        %5151 = vmatprep.subr.mxu0 0.0
        %5152 = vmatpush1.msra.mxu0 0.0
        %5153 = vmatprep.subr.mxu0 0.0
        %5154 = vmatpush1.msra.mxu0 0.0
        %5155 = vmatprep.subr.mxu0 0.0
        %5156 = vmatpush1.msra.mxu0 0.0
        %5157 = vmatprep.mubr.f32.mxu0 0.0
        %5158 = vmatmul.mubr.f32.gmra.mrb[0].mxu0 %v5091
        %v5159 = vpop.f32.mrb[0].mxu0
        %v5160 = vadd.f32 0.0, %v5159
        %v5161 = vpop.f32.mrb[0].mxu0
        %5162 = vdwg.mxu0
        %5163 = vrot.lane.b32.xlu0 %v4829, 112
        %v5164 = vpop.permute.xlu0 %5163
        %5165 = vrot.lane.b32.xlu0 %v4829, 80
        %v5166 = vpop.permute.xlu0 %5165
        %v5167 = vsel %vm697, %v5164, 0
        %v5169 = vsel %vm697, %v5166, 0
        %5171 = vmatprep.subr.mxu0 0.0
        %5172 = vmatpush1.xpose.msra.mxu0 %v5169
        %5173 = vmatprep.subr.mxu0 0.0
        %5174 = vmatpush1.xpose.msra.mxu0 0.0
        %5175 = vmatprep.subr.mxu0 0.0
        %5176 = vmatpush1.xpose.msra.mxu0 0.0
        %5177 = vmatprep.subr.mxu0 0.0
        %5178 = vmatpush1.xpose.msra.mxu0 0.0
        %5179 = vmatprep.subr.mxu0 0.0
        %5180 = vmatpush1.xpose.msra.mxu0 0.0
        %5181 = vmatprep.subr.mxu0 0.0
        %5182 = vmatpush1.xpose.msra.mxu0 0.0
        %5183 = vmatprep.subr.mxu0 0.0
        %5184 = vmatpush1.xpose.msra.mxu0 0.0
        %5185 = vmatprep.subr.mxu0 0.0
        %5186 = vmatpush1.xpose.msra.mxu0 0.0
        %5187 = vmatprep.subr.mxu0 0.0
        %5188 = vmatpush1.xpose.msra.mxu0 0.0
        %5189 = vmatprep.subr.mxu0 0.0
        %5190 = vmatpush1.xpose.msra.mxu0 0.0
        %5191 = vmatprep.subr.mxu0 0.0
        %5192 = vmatpush1.xpose.msra.mxu0 0.0
        %5193 = vmatprep.subr.mxu0 0.0
        %5194 = vmatpush1.xpose.msra.mxu0 0.0
        %5195 = vmatprep.subr.mxu0 0.0
        %5196 = vmatpush1.xpose.msra.mxu0 0.0
        %5197 = vmatprep.subr.mxu0 0.0
        %5198 = vmatpush1.xpose.msra.mxu0 0.0
        %5199 = vmatprep.subr.mxu0 0.0
        %5200 = vmatpush1.xpose.msra.mxu0 0.0
        %5201 = vmatprep.subr.mxu0 0.0
        %5202 = vmatpush1.xpose.msra.mxu0 0.0
        %5203 = vmatprep.subr.mxu0 0.0
        %5204 = vmatpush1.xpose.msra.mxu0 0.0
        %5205 = vmatprep.subr.mxu0 0.0
        %5206 = vmatpush1.xpose.msra.mxu0 0.0
        %5207 = vmatprep.subr.mxu0 0.0
        %5208 = vmatpush1.xpose.msra.mxu0 0.0
        %5209 = vmatprep.subr.mxu0 0.0
        %5210 = vmatpush1.xpose.msra.mxu0 0.0
        %5211 = vmatprep.subr.mxu0 0.0
        %5212 = vmatpush1.xpose.msra.mxu0 0.0
        %5213 = vmatprep.subr.mxu0 0.0
        %5214 = vmatpush1.xpose.msra.mxu0 0.0
        %5215 = vmatprep.subr.mxu0 0.0
        %5216 = vmatpush1.xpose.msra.mxu0 0.0
        %5217 = vmatprep.subr.mxu0 0.0
        %5218 = vmatpush1.xpose.msra.mxu0 0.0
        %5219 = vmatprep.subr.mxu0 0.0
        %5220 = vmatpush1.xpose.msra.mxu0 0.0
        %5221 = vmatprep.subr.mxu0 0.0
        %5222 = vmatpush1.xpose.msra.mxu0 0.0
        %5223 = vmatprep.subr.mxu0 0.0
        %5224 = vmatpush1.xpose.msra.mxu0 0.0
        %5225 = vmatprep.subr.mxu0 0.0
        %5226 = vmatpush1.xpose.msra.mxu0 0.0
        %5227 = vmatprep.subr.mxu0 0.0
        %5228 = vmatpush1.xpose.msra.mxu0 0.0
        %5229 = vmatprep.subr.mxu0 0.0
        %5230 = vmatpush1.xpose.msra.mxu0 0.0
        %5231 = vmatprep.subr.mxu0 0.0
        %5232 = vmatpush1.xpose.msra.mxu0 0.0
        %5233 = vmatprep.subr.mxu0 0.0
        %5234 = vmatpush1.xpose.msra.mxu0 0.0
        %5235 = vmatprep.mubr.f32.mxu0 0.0
        %5236 = vmatmul.mubr.f32.gmra.mrb[0].mxu0 %v5167
        %v5237 = vpop.f32.mrb[0].mxu0
        %v5238 = vadd.f32 0.0, %v5237
        %v5239 = vpop.f32.mrb[0].mxu0
        %5240 = vdwg.mxu0
        %v5241 = vmul.f32 %v5238, 2.828427
        %v5242 = vsel %vm697, %v5241, -inf
        %5243 = vmax.xlane.f32.xlu0 %v5242
        %v5244 = vpop.xlane.xlu0 %5243
        %v5245 = vsub.f32 %v5241, %v5244
        %v5246 = vmul.f32 %v5245, 1.442695
        %v5247 = vpow.pop %v5246
        %v5248 = vsel %vm697, %v5247, 0.0
        %5249 = vadd.xlane.f32.xlu0 %v5248
        %v5250 = vpop.xlane.xlu0 %5249
        %v5251 = vrcp.pop %v5250
        %v5252 = vmul.f32 %v5247, %v5251
        %5253 = vrot.lane.b32.xlu0 %v4829, 48
        %v5254 = vpop.permute.xlu0 %5253
        %v5257 = vsel %vm697, %v5252, 0
        %5259 = vmatprep.subr.mxu0 0.0
        %5260 = vmatpush1.msra.mxu0 %v5254
        %5261 = vmatprep.subr.mxu0 0.0
        %5262 = vmatpush1.msra.mxu0 0.0
        %5263 = vmatprep.subr.mxu0 0.0
        %5264 = vmatpush1.msra.mxu0 0.0
        %5265 = vmatprep.subr.mxu0 0.0
        %5266 = vmatpush1.msra.mxu0 0.0
        %5267 = vmatprep.subr.mxu0 0.0
        %5268 = vmatpush1.msra.mxu0 0.0
        %5269 = vmatprep.subr.mxu0 0.0
        %5270 = vmatpush1.msra.mxu0 0.0
        %5271 = vmatprep.subr.mxu0 0.0
        %5272 = vmatpush1.msra.mxu0 0.0
        %5273 = vmatprep.subr.mxu0 0.0
        %5274 = vmatpush1.msra.mxu0 0.0
        %5275 = vmatprep.subr.mxu0 0.0
        %5276 = vmatpush1.msra.mxu0 0.0
        %5277 = vmatprep.subr.mxu0 0.0
        %5278 = vmatpush1.msra.mxu0 0.0
        %5279 = vmatprep.subr.mxu0 0.0
        %5280 = vmatpush1.msra.mxu0 0.0
        %5281 = vmatprep.subr.mxu0 0.0
        %5282 = vmatpush1.msra.mxu0 0.0
        %5283 = vmatprep.subr.mxu0 0.0
        %5284 = vmatpush1.msra.mxu0 0.0
        %5285 = vmatprep.subr.mxu0 0.0
        %5286 = vmatpush1.msra.mxu0 0.0
        %5287 = vmatprep.subr.mxu0 0.0
        %5288 = vmatpush1.msra.mxu0 0.0
        %5289 = vmatprep.subr.mxu0 0.0
        %5290 = vmatpush1.msra.mxu0 0.0
        %5291 = vmatprep.subr.mxu0 0.0
        %5292 = vmatpush1.msra.mxu0 0.0
        %5293 = vmatprep.subr.mxu0 0.0
        %5294 = vmatpush1.msra.mxu0 0.0
        %5295 = vmatprep.subr.mxu0 0.0
        %5296 = vmatpush1.msra.mxu0 0.0
        %5297 = vmatprep.subr.mxu0 0.0
        %5298 = vmatpush1.msra.mxu0 0.0
        %5299 = vmatprep.subr.mxu0 0.0
        %5300 = vmatpush1.msra.mxu0 0.0
        %5301 = vmatprep.subr.mxu0 0.0
        %5302 = vmatpush1.msra.mxu0 0.0
        %5303 = vmatprep.subr.mxu0 0.0
        %5304 = vmatpush1.msra.mxu0 0.0
        %5305 = vmatprep.subr.mxu0 0.0
        %5306 = vmatpush1.msra.mxu0 0.0
        %5307 = vmatprep.subr.mxu0 0.0
        %5308 = vmatpush1.msra.mxu0 0.0
        %5309 = vmatprep.subr.mxu0 0.0
        %5310 = vmatpush1.msra.mxu0 0.0
        %5311 = vmatprep.subr.mxu0 0.0
        %5312 = vmatpush1.msra.mxu0 0.0
        %5313 = vmatprep.subr.mxu0 0.0
        %5314 = vmatpush1.msra.mxu0 0.0
        %5315 = vmatprep.subr.mxu0 0.0
        %5316 = vmatpush1.msra.mxu0 0.0
        %5317 = vmatprep.subr.mxu0 0.0
        %5318 = vmatpush1.msra.mxu0 0.0
        %5319 = vmatprep.subr.mxu0 0.0
        %5320 = vmatpush1.msra.mxu0 0.0
        %5321 = vmatprep.subr.mxu0 0.0
        %5322 = vmatpush1.msra.mxu0 0.0
        %5323 = vmatprep.mubr.f32.mxu0 0.0
        %5324 = vmatmul.mubr.f32.gmra.mrb[0].mxu0 %v5257
        %v5325 = vpop.f32.mrb[0].mxu0
        %v5326 = vadd.f32 0.0, %v5325
        %v5327 = vpop.f32.mrb[0].mxu0
        %5328 = vdwg.mxu0
        %5329 = vrot.lane.b32.xlu0 %v4829, 104
        %v5330 = vpop.permute.xlu0 %5329
        %5331 = vrot.lane.b32.xlu0 %v4829, 72
        %v5332 = vpop.permute.xlu0 %5331
        %v5333 = vsel %vm697, %v5330, 0
        %v5335 = vsel %vm697, %v5332, 0
        %5337 = vmatprep.subr.mxu0 0.0
        %5338 = vmatpush1.xpose.msra.mxu0 %v5335
        %5339 = vmatprep.subr.mxu0 0.0
        %5340 = vmatpush1.xpose.msra.mxu0 0.0
        %5341 = vmatprep.subr.mxu0 0.0
        %5342 = vmatpush1.xpose.msra.mxu0 0.0
        %5343 = vmatprep.subr.mxu0 0.0
        %5344 = vmatpush1.xpose.msra.mxu0 0.0
        %5345 = vmatprep.subr.mxu0 0.0
        %5346 = vmatpush1.xpose.msra.mxu0 0.0
        %5347 = vmatprep.subr.mxu0 0.0
        %5348 = vmatpush1.xpose.msra.mxu0 0.0
        %5349 = vmatprep.subr.mxu0 0.0
        %5350 = vmatpush1.xpose.msra.mxu0 0.0
        %5351 = vmatprep.subr.mxu0 0.0
        %5352 = vmatpush1.xpose.msra.mxu0 0.0
        %5353 = vmatprep.subr.mxu0 0.0
        %5354 = vmatpush1.xpose.msra.mxu0 0.0
        %5355 = vmatprep.subr.mxu0 0.0
        %5356 = vmatpush1.xpose.msra.mxu0 0.0
        %5357 = vmatprep.subr.mxu0 0.0
        %5358 = vmatpush1.xpose.msra.mxu0 0.0
        %5359 = vmatprep.subr.mxu0 0.0
        %5360 = vmatpush1.xpose.msra.mxu0 0.0
        %5361 = vmatprep.subr.mxu0 0.0
        %5362 = vmatpush1.xpose.msra.mxu0 0.0
        %5363 = vmatprep.subr.mxu0 0.0
        %5364 = vmatpush1.xpose.msra.mxu0 0.0
        %5365 = vmatprep.subr.mxu0 0.0
        %5366 = vmatpush1.xpose.msra.mxu0 0.0
        %5367 = vmatprep.subr.mxu0 0.0
        %5368 = vmatpush1.xpose.msra.mxu0 0.0
        %5369 = vmatprep.subr.mxu0 0.0
        %5370 = vmatpush1.xpose.msra.mxu0 0.0
        %5371 = vmatprep.subr.mxu0 0.0
        %5372 = vmatpush1.xpose.msra.mxu0 0.0
        %5373 = vmatprep.subr.mxu0 0.0
        %5374 = vmatpush1.xpose.msra.mxu0 0.0
        %5375 = vmatprep.subr.mxu0 0.0
        %5376 = vmatpush1.xpose.msra.mxu0 0.0
        %5377 = vmatprep.subr.mxu0 0.0
        %5378 = vmatpush1.xpose.msra.mxu0 0.0
        %5379 = vmatprep.subr.mxu0 0.0
        %5380 = vmatpush1.xpose.msra.mxu0 0.0
        %5381 = vmatprep.subr.mxu0 0.0
        %5382 = vmatpush1.xpose.msra.mxu0 0.0
        %5383 = vmatprep.subr.mxu0 0.0
        %5384 = vmatpush1.xpose.msra.mxu0 0.0
        %5385 = vmatprep.subr.mxu0 0.0
        %5386 = vmatpush1.xpose.msra.mxu0 0.0
        %5387 = vmatprep.subr.mxu0 0.0
        %5388 = vmatpush1.xpose.msra.mxu0 0.0
        %5389 = vmatprep.subr.mxu0 0.0
        %5390 = vmatpush1.xpose.msra.mxu0 0.0
        %5391 = vmatprep.subr.mxu0 0.0
        %5392 = vmatpush1.xpose.msra.mxu0 0.0
        %5393 = vmatprep.subr.mxu0 0.0
        %5394 = vmatpush1.xpose.msra.mxu0 0.0
        %5395 = vmatprep.subr.mxu0 0.0
        %5396 = vmatpush1.xpose.msra.mxu0 0.0
        %5397 = vmatprep.subr.mxu0 0.0
        %5398 = vmatpush1.xpose.msra.mxu0 0.0
        %5399 = vmatprep.subr.mxu0 0.0
        %5400 = vmatpush1.xpose.msra.mxu0 0.0
        %5401 = vmatprep.mubr.f32.mxu0 0.0
        %5402 = vmatmul.mubr.f32.gmra.mrb[0].mxu0 %v5333
        %v5403 = vpop.f32.mrb[0].mxu0
        %v5404 = vadd.f32 0.0, %v5403
        %v5405 = vpop.f32.mrb[0].mxu0
        %5406 = vdwg.mxu0
        %v5407 = vmul.f32 %v5404, 2.828427
        %v5408 = vsel %vm697, %v5407, -inf
        %5409 = vmax.xlane.f32.xlu0 %v5408
        %v5410 = vpop.xlane.xlu0 %5409
        %v5411 = vsub.f32 %v5407, %v5410
        %v5412 = vmul.f32 %v5411, 1.442695
        %v5413 = vpow.pop %v5412
        %v5414 = vsel %vm697, %v5413, 0.0
        %5415 = vadd.xlane.f32.xlu0 %v5414
        %v5416 = vpop.xlane.xlu0 %5415
        %v5417 = vrcp.pop %v5416
        %v5418 = vmul.f32 %v5413, %v5417
        %5419 = vrot.lane.b32.xlu0 %v4829, 40
        %v5420 = vpop.permute.xlu0 %5419
        %v5423 = vsel %vm697, %v5418, 0
        %5425 = vmatprep.subr.mxu0 0.0
        %5426 = vmatpush1.msra.mxu0 %v5420
        %5427 = vmatprep.subr.mxu0 0.0
        %5428 = vmatpush1.msra.mxu0 0.0
        %5429 = vmatprep.subr.mxu0 0.0
        %5430 = vmatpush1.msra.mxu0 0.0
        %5431 = vmatprep.subr.mxu0 0.0
        %5432 = vmatpush1.msra.mxu0 0.0
        %5433 = vmatprep.subr.mxu0 0.0
        %5434 = vmatpush1.msra.mxu0 0.0
        %5435 = vmatprep.subr.mxu0 0.0
        %5436 = vmatpush1.msra.mxu0 0.0
        %5437 = vmatprep.subr.mxu0 0.0
        %5438 = vmatpush1.msra.mxu0 0.0
        %5439 = vmatprep.subr.mxu0 0.0
        %5440 = vmatpush1.msra.mxu0 0.0
        %5441 = vmatprep.subr.mxu0 0.0
        %5442 = vmatpush1.msra.mxu0 0.0
        %5443 = vmatprep.subr.mxu0 0.0
        %5444 = vmatpush1.msra.mxu0 0.0
        %5445 = vmatprep.subr.mxu0 0.0
        %5446 = vmatpush1.msra.mxu0 0.0
        %5447 = vmatprep.subr.mxu0 0.0
        %5448 = vmatpush1.msra.mxu0 0.0
        %5449 = vmatprep.subr.mxu0 0.0
        %5450 = vmatpush1.msra.mxu0 0.0
        %5451 = vmatprep.subr.mxu0 0.0
        %5452 = vmatpush1.msra.mxu0 0.0
        %5453 = vmatprep.subr.mxu0 0.0
        %5454 = vmatpush1.msra.mxu0 0.0
        %5455 = vmatprep.subr.mxu0 0.0
        %5456 = vmatpush1.msra.mxu0 0.0
        %5457 = vmatprep.subr.mxu0 0.0
        %5458 = vmatpush1.msra.mxu0 0.0
        %5459 = vmatprep.subr.mxu0 0.0
        %5460 = vmatpush1.msra.mxu0 0.0
        %5461 = vmatprep.subr.mxu0 0.0
        %5462 = vmatpush1.msra.mxu0 0.0
        %5463 = vmatprep.subr.mxu0 0.0
        %5464 = vmatpush1.msra.mxu0 0.0
        %5465 = vmatprep.subr.mxu0 0.0
        %5466 = vmatpush1.msra.mxu0 0.0
        %5467 = vmatprep.subr.mxu0 0.0
        %5468 = vmatpush1.msra.mxu0 0.0
        %5469 = vmatprep.subr.mxu0 0.0
        %5470 = vmatpush1.msra.mxu0 0.0
        %5471 = vmatprep.subr.mxu0 0.0
        %5472 = vmatpush1.msra.mxu0 0.0
        %5473 = vmatprep.subr.mxu0 0.0
        %5474 = vmatpush1.msra.mxu0 0.0
        %5475 = vmatprep.subr.mxu0 0.0
        %5476 = vmatpush1.msra.mxu0 0.0
        %5477 = vmatprep.subr.mxu0 0.0
        %5478 = vmatpush1.msra.mxu0 0.0
        %5479 = vmatprep.subr.mxu0 0.0
        %5480 = vmatpush1.msra.mxu0 0.0
        %5481 = vmatprep.subr.mxu0 0.0
        %5482 = vmatpush1.msra.mxu0 0.0
        %5483 = vmatprep.subr.mxu0 0.0
        %5484 = vmatpush1.msra.mxu0 0.0
        %5485 = vmatprep.subr.mxu0 0.0
        %5486 = vmatpush1.msra.mxu0 0.0
        %5487 = vmatprep.subr.mxu0 0.0
        %5488 = vmatpush1.msra.mxu0 0.0
        %5489 = vmatprep.mubr.f32.mxu0 0.0
        %5490 = vmatmul.mubr.f32.gmra.mrb[0].mxu0 %v5423
        %v5491 = vpop.f32.mrb[0].mxu0
        %v5492 = vadd.f32 0.0, %v5491
        %v5493 = vpop.f32.mrb[0].mxu0
        %5494 = vdwg.mxu0
        %5496 = vrot.lane.b32.xlu0 %v5160, 8
        %v5497 = vpop.permute.xlu0 %5496
        %5500 = vrot.lane.b32.xlu0 %v5326, 16
        %v5501 = vpop.permute.xlu0 %5500
        %5504 = vrot.lane.b32.xlu0 %v5492, 24
        %v5505 = vpop.permute.xlu0 %5504
        %v5507 = vsel %vm697, %v4994, %v5497
        %v5508 = vsel %vm1371, %v5507, %v5501
        %v5509 = vsel %vm1373, %v5508, %v5505
        %s5510 = scalar_lea.vmem %s9, 32
        %v5511 = vld [vmem:[%s5510] sm:$0xff]
        %v5512 = vld [vmem:[%s5510 + $0x8] sm:$0xff]
        %v5513 = vld [vmem:[%s5510 + $0x10] sm:$0xff]
        %v5514 = vld [vmem:[%s5510 + $0x18] sm:$0xff]
        %v5515 = vld [vmem:[%s13 + $0x9] sm:$0x1]
        %v5516 = vlaneseq
        %v5517 = vshrl.u32 %v5516, 7
        %v5518 = vsub.s32 0, %v5517
        %v5519 = vrot.slane %v5515, %v5518
        %v5521 = vsel %vm620, %v5509, 0
        %5523 = vmatprep.subr.mxu0 0.0
        %5524 = vmatpush1.msra.mxu0 %v5511
        %5525 = vmatprep.subr.mxu0 0.0
        %5526 = vmatpush1.msra.mxu0 %v5512
        %5527 = vmatprep.subr.mxu0 0.0
        %5528 = vmatpush1.msra.mxu0 %v5513
        %5529 = vmatprep.subr.mxu0 0.0
        %5530 = vmatpush1.msra.mxu0 %v5514
        %5531 = vmatprep.subr.mxu0 0.0
        %5532 = vmatpush1.msra.mxu0 0.0
        %5533 = vmatprep.subr.mxu0 0.0
        %5534 = vmatpush1.msra.mxu0 0.0
        %5535 = vmatprep.subr.mxu0 0.0
        %5536 = vmatpush1.msra.mxu0 0.0
        %5537 = vmatprep.subr.mxu0 0.0
        %5538 = vmatpush1.msra.mxu0 0.0
        %5539 = vmatprep.subr.mxu0 0.0
        %5540 = vmatpush1.msra.mxu0 0.0
        %5541 = vmatprep.subr.mxu0 0.0
        %5542 = vmatpush1.msra.mxu0 0.0
        %5543 = vmatprep.subr.mxu0 0.0
        %5544 = vmatpush1.msra.mxu0 0.0
        %5545 = vmatprep.subr.mxu0 0.0
        %5546 = vmatpush1.msra.mxu0 0.0
        %5547 = vmatprep.subr.mxu0 0.0
        %5548 = vmatpush1.msra.mxu0 0.0
        %5549 = vmatprep.subr.mxu0 0.0
        %5550 = vmatpush1.msra.mxu0 0.0
        %5551 = vmatprep.subr.mxu0 0.0
        %5552 = vmatpush1.msra.mxu0 0.0
        %5553 = vmatprep.subr.mxu0 0.0
        %5554 = vmatpush1.msra.mxu0 0.0
        %5555 = vmatprep.subr.mxu0 0.0
        %5556 = vmatpush1.msra.mxu0 0.0
        %5557 = vmatprep.subr.mxu0 0.0
        %5558 = vmatpush1.msra.mxu0 0.0
        %5559 = vmatprep.subr.mxu0 0.0
        %5560 = vmatpush1.msra.mxu0 0.0
        %5561 = vmatprep.subr.mxu0 0.0
        %5562 = vmatpush1.msra.mxu0 0.0
        %5563 = vmatprep.subr.mxu0 0.0
        %5564 = vmatpush1.msra.mxu0 0.0
        %5565 = vmatprep.subr.mxu0 0.0
        %5566 = vmatpush1.msra.mxu0 0.0
        %5567 = vmatprep.subr.mxu0 0.0
        %5568 = vmatpush1.msra.mxu0 0.0
        %5569 = vmatprep.subr.mxu0 0.0
        %5570 = vmatpush1.msra.mxu0 0.0
        %5571 = vmatprep.subr.mxu0 0.0
        %5572 = vmatpush1.msra.mxu0 0.0
        %5573 = vmatprep.subr.mxu0 0.0
        %5574 = vmatpush1.msra.mxu0 0.0
        %5575 = vmatprep.subr.mxu0 0.0
        %5576 = vmatpush1.msra.mxu0 0.0
        %5577 = vmatprep.subr.mxu0 0.0
        %5578 = vmatpush1.msra.mxu0 0.0
        %5579 = vmatprep.subr.mxu0 0.0
        %5580 = vmatpush1.msra.mxu0 0.0
        %5581 = vmatprep.subr.mxu0 0.0
        %5582 = vmatpush1.msra.mxu0 0.0
        %5583 = vmatprep.subr.mxu0 0.0
        %5584 = vmatpush1.msra.mxu0 0.0
        %5585 = vmatprep.subr.mxu0 0.0
        %5586 = vmatpush1.msra.mxu0 0.0
        %5587 = vmatprep.mubr.f32.mxu0 0.0
        %5588 = vmatmul.mubr.f32.gmra.mrb[0].mxu0 %v5521
        %v5589 = vpop.f32.mrb[0].mxu0
        %v5590 = vadd.f32 %v5519, %v5589
        %v5591 = vpop.f32.mrb[0].mxu0
        %5592 = vdwg.mxu0
        %v5593 = vadd.f32 %v5590, %v4753
        %v5594 = vld [vmem:[%s13 + $0xa] sm:$0x1]
        %v5595 = vld [vmem:[%s13 + $0xb] sm:$0x1]
        %v5596 = vsel %vm620, %v5593, 0.0
        %5597 = vadd.xlane.f32.xlu0 %v5596
        %v5598 = vpop.xlane.xlu0 %5597
        %v5599 = vmul.f32 %v5598, %v1463
        %v5600 = vsub.f32 %v5593, %v5599
        %v5601 = vmul.f32 %v5600, %v5600
        %v5602 = vsel %vm620, %v5601, 0.0
        %5603 = vadd.xlane.f32.xlu0 %v5602
        %v5604 = vpop.xlane.xlu0 %5603
        %v5605 = vmul.f32 %v5604, %v1463
        %v5606 = vadd.f32 %v5605, 1e-05
        %v5607 = vrsqrt.pop %v5606
        %v5608 = vmul.f32 %v5600, %v5607
        %v5609 = vlaneseq
        %v5610 = vshrl.u32 %v5609, 7
        %v5611 = vsub.s32 0, %v5610
        %v5612 = vrot.slane %v5594, %v5611
        %v5613 = vmul.f32 %v5608, %v5612
        %v5614 = vlaneseq
        %v5615 = vshrl.u32 %v5614, 7
        %v5616 = vsub.s32 0, %v5615
        %v5617 = vrot.slane %v5595, %v5616
        %v5618 = vadd.f32 %v5613, %v5617
        %s5619 = scalar_lea.vmem %s10, 32
        %v5620 = vld [vmem:[%s5619] sm:$0xff]
        %v5621 = vld [vmem:[%s5619 + $0x8] sm:$0xff]
        %v5622 = vld [vmem:[%s5619 + $0x10] sm:$0xff]
        %v5623 = vld [vmem:[%s5619 + $0x18] sm:$0xff]
        %v5625 = vsel %vm620, %v5618, 0
        %5627 = vmatprep.subr.mxu0 0.0
        %5628 = vmatpush1.msra.mxu0 %v5620
        %5629 = vmatprep.subr.mxu0 0.0
        %5630 = vmatpush1.msra.mxu0 %v5621
        %5631 = vmatprep.subr.mxu0 0.0
        %5632 = vmatpush1.msra.mxu0 %v5622
        %5633 = vmatprep.subr.mxu0 0.0
        %5634 = vmatpush1.msra.mxu0 %v5623
        %5635 = vmatprep.subr.mxu0 0.0
        %5636 = vmatpush1.msra.mxu0 0.0
        %5637 = vmatprep.subr.mxu0 0.0
        %5638 = vmatpush1.msra.mxu0 0.0
        %5639 = vmatprep.subr.mxu0 0.0
        %5640 = vmatpush1.msra.mxu0 0.0
        %5641 = vmatprep.subr.mxu0 0.0
        %5642 = vmatpush1.msra.mxu0 0.0
        %5643 = vmatprep.subr.mxu0 0.0
        %5644 = vmatpush1.msra.mxu0 0.0
        %5645 = vmatprep.subr.mxu0 0.0
        %5646 = vmatpush1.msra.mxu0 0.0
        %5647 = vmatprep.subr.mxu0 0.0
        %5648 = vmatpush1.msra.mxu0 0.0
        %5649 = vmatprep.subr.mxu0 0.0
        %5650 = vmatpush1.msra.mxu0 0.0
        %5651 = vmatprep.subr.mxu0 0.0
        %5652 = vmatpush1.msra.mxu0 0.0
        %5653 = vmatprep.subr.mxu0 0.0
        %5654 = vmatpush1.msra.mxu0 0.0
        %5655 = vmatprep.subr.mxu0 0.0
        %5656 = vmatpush1.msra.mxu0 0.0
        %5657 = vmatprep.subr.mxu0 0.0
        %5658 = vmatpush1.msra.mxu0 0.0
        %5659 = vmatprep.subr.mxu0 0.0
        %5660 = vmatpush1.msra.mxu0 0.0
        %5661 = vmatprep.subr.mxu0 0.0
        %5662 = vmatpush1.msra.mxu0 0.0
        %5663 = vmatprep.subr.mxu0 0.0
        %5664 = vmatpush1.msra.mxu0 0.0
        %5665 = vmatprep.subr.mxu0 0.0
        %5666 = vmatpush1.msra.mxu0 0.0
        %5667 = vmatprep.subr.mxu0 0.0
        %5668 = vmatpush1.msra.mxu0 0.0
        %5669 = vmatprep.subr.mxu0 0.0
        %5670 = vmatpush1.msra.mxu0 0.0
        %5671 = vmatprep.subr.mxu0 0.0
        %5672 = vmatpush1.msra.mxu0 0.0
        %5673 = vmatprep.subr.mxu0 0.0
        %5674 = vmatpush1.msra.mxu0 0.0
        %5675 = vmatprep.subr.mxu0 0.0
        %5676 = vmatpush1.msra.mxu0 0.0
        %5677 = vmatprep.subr.mxu0 0.0
        %5678 = vmatpush1.msra.mxu0 0.0
        %5679 = vmatprep.subr.mxu0 0.0
        %5680 = vmatpush1.msra.mxu0 0.0
        %5681 = vmatprep.subr.mxu0 0.0
        %5682 = vmatpush1.msra.mxu0 0.0
        %5683 = vmatprep.subr.mxu0 0.0
        %5684 = vmatpush1.msra.mxu0 0.0
        %5685 = vmatprep.subr.mxu0 0.0
        %5686 = vmatpush1.msra.mxu0 0.0
        %5687 = vmatprep.subr.mxu0 0.0
        %5688 = vmatpush1.msra.mxu0 0.0
        %5689 = vmatprep.subr.mxu0 0.0
        %5690 = vmatpush1.msra.mxu0 0.0
        %5691 = vmatprep.mubr.f32.mxu0 0.0
        %5692 = vmatmul.mubr.f32.gmra.mrb[0].mxu0 %v5625
        %v5693 = vpop.f32.mrb[0].mxu0
        %v5694 = vadd.f32 0.0, %v5693
        %v5695 = vpop.f32.mrb[0].mxu0
        %5696 = vdwg.mxu0
        %s5697 = scalar_lea.vmem %s11, 32
        %v5698 = vld [vmem:[%s5697] sm:$0xff]
        %v5699 = vld [vmem:[%s5697 + $0x8] sm:$0xff]
        %v5700 = vld [vmem:[%s5697 + $0x10] sm:$0xff]
        %v5701 = vld [vmem:[%s5697 + $0x18] sm:$0xff]
        %5702 = vmatprep.subr.mxu0 0.0
        %5703 = vmatpush1.msra.mxu0 %v5698
        %5704 = vmatprep.subr.mxu0 0.0
        %5705 = vmatpush1.msra.mxu0 %v5699
        %5706 = vmatprep.subr.mxu0 0.0
        %5707 = vmatpush1.msra.mxu0 %v5700
        %5708 = vmatprep.subr.mxu0 0.0
        %5709 = vmatpush1.msra.mxu0 %v5701
        %5710 = vmatprep.subr.mxu0 0.0
        %5711 = vmatpush1.msra.mxu0 0.0
        %5712 = vmatprep.subr.mxu0 0.0
        %5713 = vmatpush1.msra.mxu0 0.0
        %5714 = vmatprep.subr.mxu0 0.0
        %5715 = vmatpush1.msra.mxu0 0.0
        %5716 = vmatprep.subr.mxu0 0.0
        %5717 = vmatpush1.msra.mxu0 0.0
        %5718 = vmatprep.subr.mxu0 0.0
        %5719 = vmatpush1.msra.mxu0 0.0
        %5720 = vmatprep.subr.mxu0 0.0
        %5721 = vmatpush1.msra.mxu0 0.0
        %5722 = vmatprep.subr.mxu0 0.0
        %5723 = vmatpush1.msra.mxu0 0.0
        %5724 = vmatprep.subr.mxu0 0.0
        %5725 = vmatpush1.msra.mxu0 0.0
        %5726 = vmatprep.subr.mxu0 0.0
        %5727 = vmatpush1.msra.mxu0 0.0
        %5728 = vmatprep.subr.mxu0 0.0
        %5729 = vmatpush1.msra.mxu0 0.0
        %5730 = vmatprep.subr.mxu0 0.0
        %5731 = vmatpush1.msra.mxu0 0.0
        %5732 = vmatprep.subr.mxu0 0.0
        %5733 = vmatpush1.msra.mxu0 0.0
        %5734 = vmatprep.subr.mxu0 0.0
        %5735 = vmatpush1.msra.mxu0 0.0
        %5736 = vmatprep.subr.mxu0 0.0
        %5737 = vmatpush1.msra.mxu0 0.0
        %5738 = vmatprep.subr.mxu0 0.0
        %5739 = vmatpush1.msra.mxu0 0.0
        %5740 = vmatprep.subr.mxu0 0.0
        %5741 = vmatpush1.msra.mxu0 0.0
        %5742 = vmatprep.subr.mxu0 0.0
        %5743 = vmatpush1.msra.mxu0 0.0
        %5744 = vmatprep.subr.mxu0 0.0
        %5745 = vmatpush1.msra.mxu0 0.0
        %5746 = vmatprep.subr.mxu0 0.0
        %5747 = vmatpush1.msra.mxu0 0.0
        %5748 = vmatprep.subr.mxu0 0.0
        %5749 = vmatpush1.msra.mxu0 0.0
        %5750 = vmatprep.subr.mxu0 0.0
        %5751 = vmatpush1.msra.mxu0 0.0
        %5752 = vmatprep.subr.mxu0 0.0
        %5753 = vmatpush1.msra.mxu0 0.0
        %5754 = vmatprep.subr.mxu0 0.0
        %5755 = vmatpush1.msra.mxu0 0.0
        %5756 = vmatprep.subr.mxu0 0.0
        %5757 = vmatpush1.msra.mxu0 0.0
        %5758 = vmatprep.subr.mxu0 0.0
        %5759 = vmatpush1.msra.mxu0 0.0
        %5760 = vmatprep.subr.mxu0 0.0
        %5761 = vmatpush1.msra.mxu0 0.0
        %5762 = vmatprep.subr.mxu0 0.0
        %5763 = vmatpush1.msra.mxu0 0.0
        %5764 = vmatprep.subr.mxu0 0.0
        %5765 = vmatpush1.msra.mxu0 0.0
        %5766 = vmatprep.mubr.f32.mxu0 0.0
        %5767 = vmatmul.mubr.f32.gmra.mrb[0].mxu0 %v3697
        %v5768 = vpop.f32.mrb[0].mxu0
        %v5769 = vadd.f32 0.0, %v5768
        %v5770 = vpop.f32.mrb[0].mxu0
        %5771 = vdwg.mxu0
        %v5773 = vsel %vm697, %v5694, 0
        %v5776 = vsel %vm697, %v5769, 0
        %5778 = vmatprep.subr.mxu0 0.0
        %5779 = vmatpush1.xpose.msra.mxu0 %v5776
        %5780 = vmatprep.subr.mxu0 0.0
        %5781 = vmatpush1.xpose.msra.mxu0 0.0
        %5782 = vmatprep.subr.mxu0 0.0
        %5783 = vmatpush1.xpose.msra.mxu0 0.0
        %5784 = vmatprep.subr.mxu0 0.0
        %5785 = vmatpush1.xpose.msra.mxu0 0.0
        %5786 = vmatprep.subr.mxu0 0.0
        %5787 = vmatpush1.xpose.msra.mxu0 0.0
        %5788 = vmatprep.subr.mxu0 0.0
        %5789 = vmatpush1.xpose.msra.mxu0 0.0
        %5790 = vmatprep.subr.mxu0 0.0
        %5791 = vmatpush1.xpose.msra.mxu0 0.0
        %5792 = vmatprep.subr.mxu0 0.0
        %5793 = vmatpush1.xpose.msra.mxu0 0.0
        %5794 = vmatprep.subr.mxu0 0.0
        %5795 = vmatpush1.xpose.msra.mxu0 0.0
        %5796 = vmatprep.subr.mxu0 0.0
        %5797 = vmatpush1.xpose.msra.mxu0 0.0
        %5798 = vmatprep.subr.mxu0 0.0
        %5799 = vmatpush1.xpose.msra.mxu0 0.0
        %5800 = vmatprep.subr.mxu0 0.0
        %5801 = vmatpush1.xpose.msra.mxu0 0.0
        %5802 = vmatprep.subr.mxu0 0.0
        %5803 = vmatpush1.xpose.msra.mxu0 0.0
        %5804 = vmatprep.subr.mxu0 0.0
        %5805 = vmatpush1.xpose.msra.mxu0 0.0
        %5806 = vmatprep.subr.mxu0 0.0
        %5807 = vmatpush1.xpose.msra.mxu0 0.0
        %5808 = vmatprep.subr.mxu0 0.0
        %5809 = vmatpush1.xpose.msra.mxu0 0.0
        %5810 = vmatprep.subr.mxu0 0.0
        %5811 = vmatpush1.xpose.msra.mxu0 0.0
        %5812 = vmatprep.subr.mxu0 0.0
        %5813 = vmatpush1.xpose.msra.mxu0 0.0
        %5814 = vmatprep.subr.mxu0 0.0
        %5815 = vmatpush1.xpose.msra.mxu0 0.0
        %5816 = vmatprep.subr.mxu0 0.0
        %5817 = vmatpush1.xpose.msra.mxu0 0.0
        %5818 = vmatprep.subr.mxu0 0.0
        %5819 = vmatpush1.xpose.msra.mxu0 0.0
        %5820 = vmatprep.subr.mxu0 0.0
        %5821 = vmatpush1.xpose.msra.mxu0 0.0
        %5822 = vmatprep.subr.mxu0 0.0
        %5823 = vmatpush1.xpose.msra.mxu0 0.0
        %5824 = vmatprep.subr.mxu0 0.0
        %5825 = vmatpush1.xpose.msra.mxu0 0.0
        %5826 = vmatprep.subr.mxu0 0.0
        %5827 = vmatpush1.xpose.msra.mxu0 0.0
        %5828 = vmatprep.subr.mxu0 0.0
        %5829 = vmatpush1.xpose.msra.mxu0 0.0
        %5830 = vmatprep.subr.mxu0 0.0
        %5831 = vmatpush1.xpose.msra.mxu0 0.0
        %5832 = vmatprep.subr.mxu0 0.0
        %5833 = vmatpush1.xpose.msra.mxu0 0.0
        %5834 = vmatprep.subr.mxu0 0.0
        %5835 = vmatpush1.xpose.msra.mxu0 0.0
        %5836 = vmatprep.subr.mxu0 0.0
        %5837 = vmatpush1.xpose.msra.mxu0 0.0
        %5838 = vmatprep.subr.mxu0 0.0
        %5839 = vmatpush1.xpose.msra.mxu0 0.0
        %5840 = vmatprep.subr.mxu0 0.0
        %5841 = vmatpush1.xpose.msra.mxu0 0.0
        %5842 = vmatprep.mubr.f32.mxu0 0.0
        %5843 = vmatmul.mubr.f32.gmra.mrb[0].mxu0 %v5773
        %v5844 = vpop.f32.mrb[0].mxu0
        %v5845 = vadd.f32 0.0, %v5844
        %v5846 = vpop.f32.mrb[0].mxu0
        %5847 = vdwg.mxu0
        %v5848 = vmul.f32 %v5845, 2.828427
        %v5849 = vsel %vm697, %v5848, -inf
        %5850 = vmax.xlane.f32.xlu0 %v5849
        %v5851 = vpop.xlane.xlu0 %5850
        %v5852 = vsub.f32 %v5848, %v5851
        %v5853 = vmul.f32 %v5852, 1.442695
        %v5854 = vpow.pop %v5853
        %v5855 = vsel %vm697, %v5854, 0.0
        %5856 = vadd.xlane.f32.xlu0 %v5855
        %v5857 = vpop.xlane.xlu0 %5856
        %v5858 = vrcp.pop %v5857
        %v5859 = vmul.f32 %v5854, %v5858
        %5860 = vrot.lane.b32.xlu0 %v5769, 96
        %v5861 = vpop.permute.xlu0 %5860
        %v5864 = vsel %vm697, %v5859, 0
        %5866 = vmatprep.subr.mxu0 0.0
        %5867 = vmatpush1.msra.mxu0 %v5861
        %5868 = vmatprep.subr.mxu0 0.0
        %5869 = vmatpush1.msra.mxu0 0.0
        %5870 = vmatprep.subr.mxu0 0.0
        %5871 = vmatpush1.msra.mxu0 0.0
        %5872 = vmatprep.subr.mxu0 0.0
        %5873 = vmatpush1.msra.mxu0 0.0
        %5874 = vmatprep.subr.mxu0 0.0
        %5875 = vmatpush1.msra.mxu0 0.0
        %5876 = vmatprep.subr.mxu0 0.0
        %5877 = vmatpush1.msra.mxu0 0.0
        %5878 = vmatprep.subr.mxu0 0.0
        %5879 = vmatpush1.msra.mxu0 0.0
        %5880 = vmatprep.subr.mxu0 0.0
        %5881 = vmatpush1.msra.mxu0 0.0
        %5882 = vmatprep.subr.mxu0 0.0
        %5883 = vmatpush1.msra.mxu0 0.0
        %5884 = vmatprep.subr.mxu0 0.0
        %5885 = vmatpush1.msra.mxu0 0.0
        %5886 = vmatprep.subr.mxu0 0.0
        %5887 = vmatpush1.msra.mxu0 0.0
        %5888 = vmatprep.subr.mxu0 0.0
        %5889 = vmatpush1.msra.mxu0 0.0
        %5890 = vmatprep.subr.mxu0 0.0
        %5891 = vmatpush1.msra.mxu0 0.0
        %5892 = vmatprep.subr.mxu0 0.0
        %5893 = vmatpush1.msra.mxu0 0.0
        %5894 = vmatprep.subr.mxu0 0.0
        %5895 = vmatpush1.msra.mxu0 0.0
        %5896 = vmatprep.subr.mxu0 0.0
        %5897 = vmatpush1.msra.mxu0 0.0
        %5898 = vmatprep.subr.mxu0 0.0
        %5899 = vmatpush1.msra.mxu0 0.0
        %5900 = vmatprep.subr.mxu0 0.0
        %5901 = vmatpush1.msra.mxu0 0.0
        %5902 = vmatprep.subr.mxu0 0.0
        %5903 = vmatpush1.msra.mxu0 0.0
        %5904 = vmatprep.subr.mxu0 0.0
        %5905 = vmatpush1.msra.mxu0 0.0
        %5906 = vmatprep.subr.mxu0 0.0
        %5907 = vmatpush1.msra.mxu0 0.0
        %5908 = vmatprep.subr.mxu0 0.0
        %5909 = vmatpush1.msra.mxu0 0.0
        %5910 = vmatprep.subr.mxu0 0.0
        %5911 = vmatpush1.msra.mxu0 0.0
        %5912 = vmatprep.subr.mxu0 0.0
        %5913 = vmatpush1.msra.mxu0 0.0
        %5914 = vmatprep.subr.mxu0 0.0
        %5915 = vmatpush1.msra.mxu0 0.0
        %5916 = vmatprep.subr.mxu0 0.0
        %5917 = vmatpush1.msra.mxu0 0.0
        %5918 = vmatprep.subr.mxu0 0.0
        %5919 = vmatpush1.msra.mxu0 0.0
        %5920 = vmatprep.subr.mxu0 0.0
        %5921 = vmatpush1.msra.mxu0 0.0
        %5922 = vmatprep.subr.mxu0 0.0
        %5923 = vmatpush1.msra.mxu0 0.0
        %5924 = vmatprep.subr.mxu0 0.0
        %5925 = vmatpush1.msra.mxu0 0.0
        %5926 = vmatprep.subr.mxu0 0.0
        %5927 = vmatpush1.msra.mxu0 0.0
        %5928 = vmatprep.subr.mxu0 0.0
        %5929 = vmatpush1.msra.mxu0 0.0
        %5930 = vmatprep.mubr.f32.mxu0 0.0
        %5931 = vmatmul.mubr.f32.gmra.mrb[0].mxu0 %v5864
        %v5932 = vpop.f32.mrb[0].mxu0
        %v5933 = vadd.f32 0.0, %v5932
        %v5934 = vpop.f32.mrb[0].mxu0
        %5935 = vdwg.mxu0
        %5936 = vrot.lane.b32.xlu0 %v5694, 120
        %v5937 = vpop.permute.xlu0 %5936
        %5938 = vrot.lane.b32.xlu0 %v5769, 120
        %v5939 = vpop.permute.xlu0 %5938
        %v5940 = vsel %vm697, %v5937, 0
        %v5942 = vsel %vm697, %v5939, 0
        %5944 = vmatprep.subr.mxu0 0.0
        %5945 = vmatpush1.xpose.msra.mxu0 %v5942
        %5946 = vmatprep.subr.mxu0 0.0
        %5947 = vmatpush1.xpose.msra.mxu0 0.0
        %5948 = vmatprep.subr.mxu0 0.0
        %5949 = vmatpush1.xpose.msra.mxu0 0.0
        %5950 = vmatprep.subr.mxu0 0.0
        %5951 = vmatpush1.xpose.msra.mxu0 0.0
        %5952 = vmatprep.subr.mxu0 0.0
        %5953 = vmatpush1.xpose.msra.mxu0 0.0
        %5954 = vmatprep.subr.mxu0 0.0
        %5955 = vmatpush1.xpose.msra.mxu0 0.0
        %5956 = vmatprep.subr.mxu0 0.0
        %5957 = vmatpush1.xpose.msra.mxu0 0.0
        %5958 = vmatprep.subr.mxu0 0.0
        %5959 = vmatpush1.xpose.msra.mxu0 0.0
        %5960 = vmatprep.subr.mxu0 0.0
        %5961 = vmatpush1.xpose.msra.mxu0 0.0
        %5962 = vmatprep.subr.mxu0 0.0
        %5963 = vmatpush1.xpose.msra.mxu0 0.0
        %5964 = vmatprep.subr.mxu0 0.0
        %5965 = vmatpush1.xpose.msra.mxu0 0.0
        %5966 = vmatprep.subr.mxu0 0.0
        %5967 = vmatpush1.xpose.msra.mxu0 0.0
        %5968 = vmatprep.subr.mxu0 0.0
        %5969 = vmatpush1.xpose.msra.mxu0 0.0
        %5970 = vmatprep.subr.mxu0 0.0
        %5971 = vmatpush1.xpose.msra.mxu0 0.0
        %5972 = vmatprep.subr.mxu0 0.0
        %5973 = vmatpush1.xpose.msra.mxu0 0.0
        %5974 = vmatprep.subr.mxu0 0.0
        %5975 = vmatpush1.xpose.msra.mxu0 0.0
        %5976 = vmatprep.subr.mxu0 0.0
        %5977 = vmatpush1.xpose.msra.mxu0 0.0
        %5978 = vmatprep.subr.mxu0 0.0
        %5979 = vmatpush1.xpose.msra.mxu0 0.0
        %5980 = vmatprep.subr.mxu0 0.0
        %5981 = vmatpush1.xpose.msra.mxu0 0.0
        %5982 = vmatprep.subr.mxu0 0.0
        %5983 = vmatpush1.xpose.msra.mxu0 0.0
        %5984 = vmatprep.subr.mxu0 0.0
        %5985 = vmatpush1.xpose.msra.mxu0 0.0
        %5986 = vmatprep.subr.mxu0 0.0
        %5987 = vmatpush1.xpose.msra.mxu0 0.0
        %5988 = vmatprep.subr.mxu0 0.0
        %5989 = vmatpush1.xpose.msra.mxu0 0.0
        %5990 = vmatprep.subr.mxu0 0.0
        %5991 = vmatpush1.xpose.msra.mxu0 0.0
        %5992 = vmatprep.subr.mxu0 0.0
        %5993 = vmatpush1.xpose.msra.mxu0 0.0
        %5994 = vmatprep.subr.mxu0 0.0
        %5995 = vmatpush1.xpose.msra.mxu0 0.0
        %5996 = vmatprep.subr.mxu0 0.0
        %5997 = vmatpush1.xpose.msra.mxu0 0.0
        %5998 = vmatprep.subr.mxu0 0.0
        %5999 = vmatpush1.xpose.msra.mxu0 0.0
        %6000 = vmatprep.subr.mxu0 0.0
        %6001 = vmatpush1.xpose.msra.mxu0 0.0
        %6002 = vmatprep.subr.mxu0 0.0
        %6003 = vmatpush1.xpose.msra.mxu0 0.0
        %6004 = vmatprep.subr.mxu0 0.0
        %6005 = vmatpush1.xpose.msra.mxu0 0.0
        %6006 = vmatprep.subr.mxu0 0.0
        %6007 = vmatpush1.xpose.msra.mxu0 0.0
        %6008 = vmatprep.mubr.f32.mxu0 0.0
        %6009 = vmatmul.mubr.f32.gmra.mrb[0].mxu0 %v5940
        %v6010 = vpop.f32.mrb[0].mxu0
        %v6011 = vadd.f32 0.0, %v6010
        %v6012 = vpop.f32.mrb[0].mxu0
        %6013 = vdwg.mxu0
        %v6014 = vmul.f32 %v6011, 2.828427
        %v6015 = vsel %vm697, %v6014, -inf
        %6016 = vmax.xlane.f32.xlu0 %v6015
        %v6017 = vpop.xlane.xlu0 %6016
        %v6018 = vsub.f32 %v6014, %v6017
        %v6019 = vmul.f32 %v6018, 1.442695
        %v6020 = vpow.pop %v6019
        %v6021 = vsel %vm697, %v6020, 0.0
        %6022 = vadd.xlane.f32.xlu0 %v6021
        %v6023 = vpop.xlane.xlu0 %6022
        %v6024 = vrcp.pop %v6023
        %v6025 = vmul.f32 %v6020, %v6024
        %6026 = vrot.lane.b32.xlu0 %v5769, 88
        %v6027 = vpop.permute.xlu0 %6026
        %v6030 = vsel %vm697, %v6025, 0
        %6032 = vmatprep.subr.mxu0 0.0
        %6033 = vmatpush1.msra.mxu0 %v6027
        %6034 = vmatprep.subr.mxu0 0.0
        %6035 = vmatpush1.msra.mxu0 0.0
        %6036 = vmatprep.subr.mxu0 0.0
        %6037 = vmatpush1.msra.mxu0 0.0
        %6038 = vmatprep.subr.mxu0 0.0
        %6039 = vmatpush1.msra.mxu0 0.0
        %6040 = vmatprep.subr.mxu0 0.0
        %6041 = vmatpush1.msra.mxu0 0.0
        %6042 = vmatprep.subr.mxu0 0.0
        %6043 = vmatpush1.msra.mxu0 0.0
        %6044 = vmatprep.subr.mxu0 0.0
        %6045 = vmatpush1.msra.mxu0 0.0
        %6046 = vmatprep.subr.mxu0 0.0
        %6047 = vmatpush1.msra.mxu0 0.0
        %6048 = vmatprep.subr.mxu0 0.0
        %6049 = vmatpush1.msra.mxu0 0.0
        %6050 = vmatprep.subr.mxu0 0.0
        %6051 = vmatpush1.msra.mxu0 0.0
        %6052 = vmatprep.subr.mxu0 0.0
        %6053 = vmatpush1.msra.mxu0 0.0
        %6054 = vmatprep.subr.mxu0 0.0
        %6055 = vmatpush1.msra.mxu0 0.0
        %6056 = vmatprep.subr.mxu0 0.0
        %6057 = vmatpush1.msra.mxu0 0.0
        %6058 = vmatprep.subr.mxu0 0.0
        %6059 = vmatpush1.msra.mxu0 0.0
        %6060 = vmatprep.subr.mxu0 0.0
        %6061 = vmatpush1.msra.mxu0 0.0
        %6062 = vmatprep.subr.mxu0 0.0
        %6063 = vmatpush1.msra.mxu0 0.0
        %6064 = vmatprep.subr.mxu0 0.0
        %6065 = vmatpush1.msra.mxu0 0.0
        %6066 = vmatprep.subr.mxu0 0.0
        %6067 = vmatpush1.msra.mxu0 0.0
        %6068 = vmatprep.subr.mxu0 0.0
        %6069 = vmatpush1.msra.mxu0 0.0
        %6070 = vmatprep.subr.mxu0 0.0
        %6071 = vmatpush1.msra.mxu0 0.0
        %6072 = vmatprep.subr.mxu0 0.0
        %6073 = vmatpush1.msra.mxu0 0.0
        %6074 = vmatprep.subr.mxu0 0.0
        %6075 = vmatpush1.msra.mxu0 0.0
        %6076 = vmatprep.subr.mxu0 0.0
        %6077 = vmatpush1.msra.mxu0 0.0
        %6078 = vmatprep.subr.mxu0 0.0
        %6079 = vmatpush1.msra.mxu0 0.0
        %6080 = vmatprep.subr.mxu0 0.0
        %6081 = vmatpush1.msra.mxu0 0.0
        %6082 = vmatprep.subr.mxu0 0.0
        %6083 = vmatpush1.msra.mxu0 0.0
        %6084 = vmatprep.subr.mxu0 0.0
        %6085 = vmatpush1.msra.mxu0 0.0
        %6086 = vmatprep.subr.mxu0 0.0
        %6087 = vmatpush1.msra.mxu0 0.0
        %6088 = vmatprep.subr.mxu0 0.0
        %6089 = vmatpush1.msra.mxu0 0.0
        %6090 = vmatprep.subr.mxu0 0.0
        %6091 = vmatpush1.msra.mxu0 0.0
        %6092 = vmatprep.subr.mxu0 0.0
        %6093 = vmatpush1.msra.mxu0 0.0
        %6094 = vmatprep.subr.mxu0 0.0
        %6095 = vmatpush1.msra.mxu0 0.0
        %6096 = vmatprep.mubr.f32.mxu0 0.0
        %6097 = vmatmul.mubr.f32.gmra.mrb[0].mxu0 %v6030
        %v6098 = vpop.f32.mrb[0].mxu0
        %v6099 = vadd.f32 0.0, %v6098
        %v6100 = vpop.f32.mrb[0].mxu0
        %6101 = vdwg.mxu0
        %6102 = vrot.lane.b32.xlu0 %v5694, 112
        %v6103 = vpop.permute.xlu0 %6102
        %6104 = vrot.lane.b32.xlu0 %v5769, 112
        %v6105 = vpop.permute.xlu0 %6104
        %v6106 = vsel %vm697, %v6103, 0
        %v6108 = vsel %vm697, %v6105, 0
        %6110 = vmatprep.subr.mxu0 0.0
        %6111 = vmatpush1.xpose.msra.mxu0 %v6108
        %6112 = vmatprep.subr.mxu0 0.0
        %6113 = vmatpush1.xpose.msra.mxu0 0.0
        %6114 = vmatprep.subr.mxu0 0.0
        %6115 = vmatpush1.xpose.msra.mxu0 0.0
        %6116 = vmatprep.subr.mxu0 0.0
        %6117 = vmatpush1.xpose.msra.mxu0 0.0
        %6118 = vmatprep.subr.mxu0 0.0
        %6119 = vmatpush1.xpose.msra.mxu0 0.0
        %6120 = vmatprep.subr.mxu0 0.0
        %6121 = vmatpush1.xpose.msra.mxu0 0.0
        %6122 = vmatprep.subr.mxu0 0.0
        %6123 = vmatpush1.xpose.msra.mxu0 0.0
        %6124 = vmatprep.subr.mxu0 0.0
        %6125 = vmatpush1.xpose.msra.mxu0 0.0
        %6126 = vmatprep.subr.mxu0 0.0
        %6127 = vmatpush1.xpose.msra.mxu0 0.0
        %6128 = vmatprep.subr.mxu0 0.0
        %6129 = vmatpush1.xpose.msra.mxu0 0.0
        %6130 = vmatprep.subr.mxu0 0.0
        %6131 = vmatpush1.xpose.msra.mxu0 0.0
        %6132 = vmatprep.subr.mxu0 0.0
        %6133 = vmatpush1.xpose.msra.mxu0 0.0
        %6134 = vmatprep.subr.mxu0 0.0
        %6135 = vmatpush1.xpose.msra.mxu0 0.0
        %6136 = vmatprep.subr.mxu0 0.0
        %6137 = vmatpush1.xpose.msra.mxu0 0.0
        %6138 = vmatprep.subr.mxu0 0.0
        %6139 = vmatpush1.xpose.msra.mxu0 0.0
        %6140 = vmatprep.subr.mxu0 0.0
        %6141 = vmatpush1.xpose.msra.mxu0 0.0
        %6142 = vmatprep.subr.mxu0 0.0
        %6143 = vmatpush1.xpose.msra.mxu0 0.0
        %6144 = vmatprep.subr.mxu0 0.0
        %6145 = vmatpush1.xpose.msra.mxu0 0.0
        %6146 = vmatprep.subr.mxu0 0.0
        %6147 = vmatpush1.xpose.msra.mxu0 0.0
        %6148 = vmatprep.subr.mxu0 0.0
        %6149 = vmatpush1.xpose.msra.mxu0 0.0
        %6150 = vmatprep.subr.mxu0 0.0
        %6151 = vmatpush1.xpose.msra.mxu0 0.0
        %6152 = vmatprep.subr.mxu0 0.0
        %6153 = vmatpush1.xpose.msra.mxu0 0.0
        %6154 = vmatprep.subr.mxu0 0.0
        %6155 = vmatpush1.xpose.msra.mxu0 0.0
        %6156 = vmatprep.subr.mxu0 0.0
        %6157 = vmatpush1.xpose.msra.mxu0 0.0
        %6158 = vmatprep.subr.mxu0 0.0
        %6159 = vmatpush1.xpose.msra.mxu0 0.0
        %6160 = vmatprep.subr.mxu0 0.0
        %6161 = vmatpush1.xpose.msra.mxu0 0.0
        %6162 = vmatprep.subr.mxu0 0.0
        %6163 = vmatpush1.xpose.msra.mxu0 0.0
        %6164 = vmatprep.subr.mxu0 0.0
        %6165 = vmatpush1.xpose.msra.mxu0 0.0
        %6166 = vmatprep.subr.mxu0 0.0
        %6167 = vmatpush1.xpose.msra.mxu0 0.0
        %6168 = vmatprep.subr.mxu0 0.0
        %6169 = vmatpush1.xpose.msra.mxu0 0.0
        %6170 = vmatprep.subr.mxu0 0.0
        %6171 = vmatpush1.xpose.msra.mxu0 0.0
        %6172 = vmatprep.subr.mxu0 0.0
        %6173 = vmatpush1.xpose.msra.mxu0 0.0
        %6174 = vmatprep.mubr.f32.mxu0 0.0
        %6175 = vmatmul.mubr.f32.gmra.mrb[0].mxu0 %v6106
        %v6176 = vpop.f32.mrb[0].mxu0
        %v6177 = vadd.f32 0.0, %v6176
        %v6178 = vpop.f32.mrb[0].mxu0
        %6179 = vdwg.mxu0
        %v6180 = vmul.f32 %v6177, 2.828427
        %v6181 = vsel %vm697, %v6180, -inf
        %6182 = vmax.xlane.f32.xlu0 %v6181
        %v6183 = vpop.xlane.xlu0 %6182
        %v6184 = vsub.f32 %v6180, %v6183
        %v6185 = vmul.f32 %v6184, 1.442695
        %v6186 = vpow.pop %v6185
        %v6187 = vsel %vm697, %v6186, 0.0
        %6188 = vadd.xlane.f32.xlu0 %v6187
        %v6189 = vpop.xlane.xlu0 %6188
        %v6190 = vrcp.pop %v6189
        %v6191 = vmul.f32 %v6186, %v6190
        %6192 = vrot.lane.b32.xlu0 %v5769, 80
        %v6193 = vpop.permute.xlu0 %6192
        %v6196 = vsel %vm697, %v6191, 0
        %6198 = vmatprep.subr.mxu0 0.0
        %6199 = vmatpush1.msra.mxu0 %v6193
        %6200 = vmatprep.subr.mxu0 0.0
        %6201 = vmatpush1.msra.mxu0 0.0
        %6202 = vmatprep.subr.mxu0 0.0
        %6203 = vmatpush1.msra.mxu0 0.0
        %6204 = vmatprep.subr.mxu0 0.0
        %6205 = vmatpush1.msra.mxu0 0.0
        %6206 = vmatprep.subr.mxu0 0.0
        %6207 = vmatpush1.msra.mxu0 0.0
        %6208 = vmatprep.subr.mxu0 0.0
        %6209 = vmatpush1.msra.mxu0 0.0
        %6210 = vmatprep.subr.mxu0 0.0
        %6211 = vmatpush1.msra.mxu0 0.0
        %6212 = vmatprep.subr.mxu0 0.0
        %6213 = vmatpush1.msra.mxu0 0.0
        %6214 = vmatprep.subr.mxu0 0.0
        %6215 = vmatpush1.msra.mxu0 0.0
        %6216 = vmatprep.subr.mxu0 0.0
        %6217 = vmatpush1.msra.mxu0 0.0
        %6218 = vmatprep.subr.mxu0 0.0
        %6219 = vmatpush1.msra.mxu0 0.0
        %6220 = vmatprep.subr.mxu0 0.0
        %6221 = vmatpush1.msra.mxu0 0.0
        %6222 = vmatprep.subr.mxu0 0.0
        %6223 = vmatpush1.msra.mxu0 0.0
        %6224 = vmatprep.subr.mxu0 0.0
        %6225 = vmatpush1.msra.mxu0 0.0
        %6226 = vmatprep.subr.mxu0 0.0
        %6227 = vmatpush1.msra.mxu0 0.0
        %6228 = vmatprep.subr.mxu0 0.0
        %6229 = vmatpush1.msra.mxu0 0.0
        %6230 = vmatprep.subr.mxu0 0.0
        %6231 = vmatpush1.msra.mxu0 0.0
        %6232 = vmatprep.subr.mxu0 0.0
        %6233 = vmatpush1.msra.mxu0 0.0
        %6234 = vmatprep.subr.mxu0 0.0
        %6235 = vmatpush1.msra.mxu0 0.0
        %6236 = vmatprep.subr.mxu0 0.0
        %6237 = vmatpush1.msra.mxu0 0.0
        %6238 = vmatprep.subr.mxu0 0.0
        %6239 = vmatpush1.msra.mxu0 0.0
        %6240 = vmatprep.subr.mxu0 0.0
        %6241 = vmatpush1.msra.mxu0 0.0
        %6242 = vmatprep.subr.mxu0 0.0
        %6243 = vmatpush1.msra.mxu0 0.0
        %6244 = vmatprep.subr.mxu0 0.0
        %6245 = vmatpush1.msra.mxu0 0.0
        %6246 = vmatprep.subr.mxu0 0.0
        %6247 = vmatpush1.msra.mxu0 0.0
        %6248 = vmatprep.subr.mxu0 0.0
        %6249 = vmatpush1.msra.mxu0 0.0
        %6250 = vmatprep.subr.mxu0 0.0
        %6251 = vmatpush1.msra.mxu0 0.0
        %6252 = vmatprep.subr.mxu0 0.0
        %6253 = vmatpush1.msra.mxu0 0.0
        %6254 = vmatprep.subr.mxu0 0.0
        %6255 = vmatpush1.msra.mxu0 0.0
        %6256 = vmatprep.subr.mxu0 0.0
        %6257 = vmatpush1.msra.mxu0 0.0
        %6258 = vmatprep.subr.mxu0 0.0
        %6259 = vmatpush1.msra.mxu0 0.0
        %6260 = vmatprep.subr.mxu0 0.0
        %6261 = vmatpush1.msra.mxu0 0.0
        %6262 = vmatprep.mubr.f32.mxu0 0.0
        %6263 = vmatmul.mubr.f32.gmra.mrb[0].mxu0 %v6196
        %v6264 = vpop.f32.mrb[0].mxu0
        %v6265 = vadd.f32 0.0, %v6264
        %v6266 = vpop.f32.mrb[0].mxu0
        %6267 = vdwg.mxu0
        %6268 = vrot.lane.b32.xlu0 %v5694, 104
        %v6269 = vpop.permute.xlu0 %6268
        %6270 = vrot.lane.b32.xlu0 %v5769, 104
        %v6271 = vpop.permute.xlu0 %6270
        %v6272 = vsel %vm697, %v6269, 0
        %v6274 = vsel %vm697, %v6271, 0
        %6276 = vmatprep.subr.mxu0 0.0
        %6277 = vmatpush1.xpose.msra.mxu0 %v6274
        %6278 = vmatprep.subr.mxu0 0.0
        %6279 = vmatpush1.xpose.msra.mxu0 0.0
        %6280 = vmatprep.subr.mxu0 0.0
        %6281 = vmatpush1.xpose.msra.mxu0 0.0
        %6282 = vmatprep.subr.mxu0 0.0
        %6283 = vmatpush1.xpose.msra.mxu0 0.0
        %6284 = vmatprep.subr.mxu0 0.0
        %6285 = vmatpush1.xpose.msra.mxu0 0.0
        %6286 = vmatprep.subr.mxu0 0.0
        %6287 = vmatpush1.xpose.msra.mxu0 0.0
        %6288 = vmatprep.subr.mxu0 0.0
        %6289 = vmatpush1.xpose.msra.mxu0 0.0
        %6290 = vmatprep.subr.mxu0 0.0
        %6291 = vmatpush1.xpose.msra.mxu0 0.0
        %6292 = vmatprep.subr.mxu0 0.0
        %6293 = vmatpush1.xpose.msra.mxu0 0.0
        %6294 = vmatprep.subr.mxu0 0.0
        %6295 = vmatpush1.xpose.msra.mxu0 0.0
        %6296 = vmatprep.subr.mxu0 0.0
        %6297 = vmatpush1.xpose.msra.mxu0 0.0
        %6298 = vmatprep.subr.mxu0 0.0
        %6299 = vmatpush1.xpose.msra.mxu0 0.0
        %6300 = vmatprep.subr.mxu0 0.0
        %6301 = vmatpush1.xpose.msra.mxu0 0.0
        %6302 = vmatprep.subr.mxu0 0.0
        %6303 = vmatpush1.xpose.msra.mxu0 0.0
        %6304 = vmatprep.subr.mxu0 0.0
        %6305 = vmatpush1.xpose.msra.mxu0 0.0
        %6306 = vmatprep.subr.mxu0 0.0
        %6307 = vmatpush1.xpose.msra.mxu0 0.0
        %6308 = vmatprep.subr.mxu0 0.0
        %6309 = vmatpush1.xpose.msra.mxu0 0.0
        %6310 = vmatprep.subr.mxu0 0.0
        %6311 = vmatpush1.xpose.msra.mxu0 0.0
        %6312 = vmatprep.subr.mxu0 0.0
        %6313 = vmatpush1.xpose.msra.mxu0 0.0
        %6314 = vmatprep.subr.mxu0 0.0
        %6315 = vmatpush1.xpose.msra.mxu0 0.0
        %6316 = vmatprep.subr.mxu0 0.0
        %6317 = vmatpush1.xpose.msra.mxu0 0.0
        %6318 = vmatprep.subr.mxu0 0.0
        %6319 = vmatpush1.xpose.msra.mxu0 0.0
        %6320 = vmatprep.subr.mxu0 0.0
        %6321 = vmatpush1.xpose.msra.mxu0 0.0
        %6322 = vmatprep.subr.mxu0 0.0
        %6323 = vmatpush1.xpose.msra.mxu0 0.0
        %6324 = vmatprep.subr.mxu0 0.0
        %6325 = vmatpush1.xpose.msra.mxu0 0.0
        %6326 = vmatprep.subr.mxu0 0.0
        %6327 = vmatpush1.xpose.msra.mxu0 0.0
        %6328 = vmatprep.subr.mxu0 0.0
        %6329 = vmatpush1.xpose.msra.mxu0 0.0
        %6330 = vmatprep.subr.mxu0 0.0
        %6331 = vmatpush1.xpose.msra.mxu0 0.0
        %6332 = vmatprep.subr.mxu0 0.0
        %6333 = vmatpush1.xpose.msra.mxu0 0.0
        %6334 = vmatprep.subr.mxu0 0.0
        %6335 = vmatpush1.xpose.msra.mxu0 0.0
        %6336 = vmatprep.subr.mxu0 0.0
        %6337 = vmatpush1.xpose.msra.mxu0 0.0
        %6338 = vmatprep.subr.mxu0 0.0
        %6339 = vmatpush1.xpose.msra.mxu0 0.0
        %6340 = vmatprep.mubr.f32.mxu0 0.0
        %6341 = vmatmul.mubr.f32.gmra.mrb[0].mxu0 %v6272
        %v6342 = vpop.f32.mrb[0].mxu0
        %v6343 = vadd.f32 0.0, %v6342
        %v6344 = vpop.f32.mrb[0].mxu0
        %6345 = vdwg.mxu0
        %v6346 = vmul.f32 %v6343, 2.828427
        %v6347 = vsel %vm697, %v6346, -inf
        %6348 = vmax.xlane.f32.xlu0 %v6347
        %v6349 = vpop.xlane.xlu0 %6348
        %v6350 = vsub.f32 %v6346, %v6349
        %v6351 = vmul.f32 %v6350, 1.442695
        %v6352 = vpow.pop %v6351
        %v6353 = vsel %vm697, %v6352, 0.0
        %6354 = vadd.xlane.f32.xlu0 %v6353
        %v6355 = vpop.xlane.xlu0 %6354
        %v6356 = vrcp.pop %v6355
        %v6357 = vmul.f32 %v6352, %v6356
        %6358 = vrot.lane.b32.xlu0 %v5769, 72
        %v6359 = vpop.permute.xlu0 %6358
        %v6362 = vsel %vm697, %v6357, 0
        %6364 = vmatprep.subr.mxu0 0.0
        %6365 = vmatpush1.msra.mxu0 %v6359
        %6366 = vmatprep.subr.mxu0 0.0
        %6367 = vmatpush1.msra.mxu0 0.0
        %6368 = vmatprep.subr.mxu0 0.0
        %6369 = vmatpush1.msra.mxu0 0.0
        %6370 = vmatprep.subr.mxu0 0.0
        %6371 = vmatpush1.msra.mxu0 0.0
        %6372 = vmatprep.subr.mxu0 0.0
        %6373 = vmatpush1.msra.mxu0 0.0
        %6374 = vmatprep.subr.mxu0 0.0
        %6375 = vmatpush1.msra.mxu0 0.0
        %6376 = vmatprep.subr.mxu0 0.0
        %6377 = vmatpush1.msra.mxu0 0.0
        %6378 = vmatprep.subr.mxu0 0.0
        %6379 = vmatpush1.msra.mxu0 0.0
        %6380 = vmatprep.subr.mxu0 0.0
        %6381 = vmatpush1.msra.mxu0 0.0
        %6382 = vmatprep.subr.mxu0 0.0
        %6383 = vmatpush1.msra.mxu0 0.0
        %6384 = vmatprep.subr.mxu0 0.0
        %6385 = vmatpush1.msra.mxu0 0.0
        %6386 = vmatprep.subr.mxu0 0.0
        %6387 = vmatpush1.msra.mxu0 0.0
        %6388 = vmatprep.subr.mxu0 0.0
        %6389 = vmatpush1.msra.mxu0 0.0
        %6390 = vmatprep.subr.mxu0 0.0
        %6391 = vmatpush1.msra.mxu0 0.0
        %6392 = vmatprep.subr.mxu0 0.0
        %6393 = vmatpush1.msra.mxu0 0.0
        %6394 = vmatprep.subr.mxu0 0.0
        %6395 = vmatpush1.msra.mxu0 0.0
        %6396 = vmatprep.subr.mxu0 0.0
        %6397 = vmatpush1.msra.mxu0 0.0
        %6398 = vmatprep.subr.mxu0 0.0
        %6399 = vmatpush1.msra.mxu0 0.0
        %6400 = vmatprep.subr.mxu0 0.0
        %6401 = vmatpush1.msra.mxu0 0.0
        %6402 = vmatprep.subr.mxu0 0.0
        %6403 = vmatpush1.msra.mxu0 0.0
        %6404 = vmatprep.subr.mxu0 0.0
        %6405 = vmatpush1.msra.mxu0 0.0
        %6406 = vmatprep.subr.mxu0 0.0
        %6407 = vmatpush1.msra.mxu0 0.0
        %6408 = vmatprep.subr.mxu0 0.0
        %6409 = vmatpush1.msra.mxu0 0.0
        %6410 = vmatprep.subr.mxu0 0.0
        %6411 = vmatpush1.msra.mxu0 0.0
        %6412 = vmatprep.subr.mxu0 0.0
        %6413 = vmatpush1.msra.mxu0 0.0
        %6414 = vmatprep.subr.mxu0 0.0
        %6415 = vmatpush1.msra.mxu0 0.0
        %6416 = vmatprep.subr.mxu0 0.0
        %6417 = vmatpush1.msra.mxu0 0.0
        %6418 = vmatprep.subr.mxu0 0.0
        %6419 = vmatpush1.msra.mxu0 0.0
        %6420 = vmatprep.subr.mxu0 0.0
        %6421 = vmatpush1.msra.mxu0 0.0
        %6422 = vmatprep.subr.mxu0 0.0
        %6423 = vmatpush1.msra.mxu0 0.0
        %6424 = vmatprep.subr.mxu0 0.0
        %6425 = vmatpush1.msra.mxu0 0.0
        %6426 = vmatprep.subr.mxu0 0.0
        %6427 = vmatpush1.msra.mxu0 0.0
        %6428 = vmatprep.mubr.f32.mxu0 0.0
        %6429 = vmatmul.mubr.f32.gmra.mrb[0].mxu0 %v6362
        %v6430 = vpop.f32.mrb[0].mxu0
        %v6431 = vadd.f32 0.0, %v6430
        %v6432 = vpop.f32.mrb[0].mxu0
        %6433 = vdwg.mxu0
        %6435 = vrot.lane.b32.xlu0 %v6099, 8
        %v6436 = vpop.permute.xlu0 %6435
        %6439 = vrot.lane.b32.xlu0 %v6265, 16
        %v6440 = vpop.permute.xlu0 %6439
        %6443 = vrot.lane.b32.xlu0 %v6431, 24
        %v6444 = vpop.permute.xlu0 %6443
        %v6446 = vsel %vm697, %v5933, %v6436
        %v6447 = vsel %vm1371, %v6446, %v6440
        %v6448 = vsel %vm1373, %v6447, %v6444
        %s6449 = scalar_lea.vmem %s12, 32
        %v6450 = vld [vmem:[%s6449] sm:$0xff]
        %v6451 = vld [vmem:[%s6449 + $0x8] sm:$0xff]
        %v6452 = vld [vmem:[%s6449 + $0x10] sm:$0xff]
        %v6453 = vld [vmem:[%s6449 + $0x18] sm:$0xff]
        %v6454 = vld [vmem:[%s13 + $0xc] sm:$0x1]
        %v6455 = vlaneseq
        %v6456 = vshrl.u32 %v6455, 7
        %v6457 = vsub.s32 0, %v6456
        %v6458 = vrot.slane %v6454, %v6457
        %v6460 = vsel %vm620, %v6448, 0
        %6462 = vmatprep.subr.mxu0 0.0
        %6463 = vmatpush1.msra.mxu0 %v6450
        %6464 = vmatprep.subr.mxu0 0.0
        %6465 = vmatpush1.msra.mxu0 %v6451
        %6466 = vmatprep.subr.mxu0 0.0
        %6467 = vmatpush1.msra.mxu0 %v6452
        %6468 = vmatprep.subr.mxu0 0.0
        %6469 = vmatpush1.msra.mxu0 %v6453
        %6470 = vmatprep.subr.mxu0 0.0
        %6471 = vmatpush1.msra.mxu0 0.0
        %6472 = vmatprep.subr.mxu0 0.0
        %6473 = vmatpush1.msra.mxu0 0.0
        %6474 = vmatprep.subr.mxu0 0.0
        %6475 = vmatpush1.msra.mxu0 0.0
        %6476 = vmatprep.subr.mxu0 0.0
        %6477 = vmatpush1.msra.mxu0 0.0
        %6478 = vmatprep.subr.mxu0 0.0
        %6479 = vmatpush1.msra.mxu0 0.0
        %6480 = vmatprep.subr.mxu0 0.0
        %6481 = vmatpush1.msra.mxu0 0.0
        %6482 = vmatprep.subr.mxu0 0.0
        %6483 = vmatpush1.msra.mxu0 0.0
        %6484 = vmatprep.subr.mxu0 0.0
        %6485 = vmatpush1.msra.mxu0 0.0
        %6486 = vmatprep.subr.mxu0 0.0
        %6487 = vmatpush1.msra.mxu0 0.0
        %6488 = vmatprep.subr.mxu0 0.0
        %6489 = vmatpush1.msra.mxu0 0.0
        %6490 = vmatprep.subr.mxu0 0.0
        %6491 = vmatpush1.msra.mxu0 0.0
        %6492 = vmatprep.subr.mxu0 0.0
        %6493 = vmatpush1.msra.mxu0 0.0
        %6494 = vmatprep.subr.mxu0 0.0
        %6495 = vmatpush1.msra.mxu0 0.0
        %6496 = vmatprep.subr.mxu0 0.0
        %6497 = vmatpush1.msra.mxu0 0.0
        %6498 = vmatprep.subr.mxu0 0.0
        %6499 = vmatpush1.msra.mxu0 0.0
        %6500 = vmatprep.subr.mxu0 0.0
        %6501 = vmatpush1.msra.mxu0 0.0
        %6502 = vmatprep.subr.mxu0 0.0
        %6503 = vmatpush1.msra.mxu0 0.0
        %6504 = vmatprep.subr.mxu0 0.0
        %6505 = vmatpush1.msra.mxu0 0.0
        %6506 = vmatprep.subr.mxu0 0.0
        %6507 = vmatpush1.msra.mxu0 0.0
        %6508 = vmatprep.subr.mxu0 0.0
        %6509 = vmatpush1.msra.mxu0 0.0
        %6510 = vmatprep.subr.mxu0 0.0
        %6511 = vmatpush1.msra.mxu0 0.0
        %6512 = vmatprep.subr.mxu0 0.0
        %6513 = vmatpush1.msra.mxu0 0.0
        %6514 = vmatprep.subr.mxu0 0.0
        %6515 = vmatpush1.msra.mxu0 0.0
        %6516 = vmatprep.subr.mxu0 0.0
        %6517 = vmatpush1.msra.mxu0 0.0
        %6518 = vmatprep.subr.mxu0 0.0
        %6519 = vmatpush1.msra.mxu0 0.0
        %6520 = vmatprep.subr.mxu0 0.0
        %6521 = vmatpush1.msra.mxu0 0.0
        %6522 = vmatprep.subr.mxu0 0.0
        %6523 = vmatpush1.msra.mxu0 0.0
        %6524 = vmatprep.subr.mxu0 0.0
        %6525 = vmatpush1.msra.mxu0 0.0
        %6526 = vmatprep.mubr.f32.mxu0 0.0
        %6527 = vmatmul.mubr.f32.gmra.mrb[0].mxu0 %v6460
        %v6528 = vpop.f32.mrb[0].mxu0
        %v6529 = vadd.f32 %v6458, %v6528
        %v6530 = vpop.f32.mrb[0].mxu0
        %6531 = vdwg.mxu0
        %v6532 = vadd.f32 %v6529, %v5618
        %v6533 = vld [vmem:[%s13 + $0xd] sm:$0x1]
        %v6534 = vld [vmem:[%s13 + $0xe] sm:$0x1]
        %v6535 = vsel %vm620, %v6532, 0.0
        %6536 = vadd.xlane.f32.xlu0 %v6535
        %v6537 = vpop.xlane.xlu0 %6536
        %v6538 = vmul.f32 %v6537, %v1463
        %v6539 = vsub.f32 %v6532, %v6538
        %v6540 = vmul.f32 %v6539, %v6539
        %v6541 = vsel %vm620, %v6540, 0.0
        %6542 = vadd.xlane.f32.xlu0 %v6541
        %v6543 = vpop.xlane.xlu0 %6542
        %v6544 = vmul.f32 %v6543, %v1463
        %v6545 = vadd.f32 %v6544, 1e-05
        %v6546 = vrsqrt.pop %v6545
        %v6547 = vmul.f32 %v6539, %v6546
        %v6548 = vlaneseq
        %v6549 = vshrl.u32 %v6548, 7
        %v6550 = vsub.s32 0, %v6549
        %v6551 = vrot.slane %v6533, %v6550
        %v6552 = vmul.f32 %v6547, %v6551
        %v6553 = vlaneseq
        %v6554 = vshrl.u32 %v6553, 7
        %v6555 = vsub.s32 0, %v6554
        %v6556 = vrot.slane %v6534, %v6555
        %v6557 = vadd.f32 %v6552, %v6556
        %s6558 = scalar_lea.vmem %s14, 32
        %v6559 = vld [vmem:[%s6558] sm:$0xff]
        %v6560 = vld [vmem:[%s6558 + $0x8] sm:$0xff]
        %v6561 = vld [vmem:[%s6558 + $0x10] sm:$0xff]
        %v6562 = vld [vmem:[%s6558 + $0x18] sm:$0xff]
        %v6563 = vld [vmem:[%s15 + $0x1] sm:$0x1]
        %v6564 = vlaneseq
        %v6565 = vshrl.u32 %v6564, 7
        %v6566 = vsub.s32 0, %v6565
        %v6567 = vrot.slane %v6563, %v6566
        %v6569 = vsel %vm620, %v6557, 0
        %6571 = vmatprep.subr.mxu0 0.0
        %6572 = vmatpush1.msra.mxu0 %v6559
        %6573 = vmatprep.subr.mxu0 0.0
        %6574 = vmatpush1.msra.mxu0 %v6560
        %6575 = vmatprep.subr.mxu0 0.0
        %6576 = vmatpush1.msra.mxu0 %v6561
        %6577 = vmatprep.subr.mxu0 0.0
        %6578 = vmatpush1.msra.mxu0 %v6562
        %6579 = vmatprep.subr.mxu0 0.0
        %6580 = vmatpush1.msra.mxu0 0.0
        %6581 = vmatprep.subr.mxu0 0.0
        %6582 = vmatpush1.msra.mxu0 0.0
        %6583 = vmatprep.subr.mxu0 0.0
        %6584 = vmatpush1.msra.mxu0 0.0
        %6585 = vmatprep.subr.mxu0 0.0
        %6586 = vmatpush1.msra.mxu0 0.0
        %6587 = vmatprep.subr.mxu0 0.0
        %6588 = vmatpush1.msra.mxu0 0.0
        %6589 = vmatprep.subr.mxu0 0.0
        %6590 = vmatpush1.msra.mxu0 0.0
        %6591 = vmatprep.subr.mxu0 0.0
        %6592 = vmatpush1.msra.mxu0 0.0
        %6593 = vmatprep.subr.mxu0 0.0
        %6594 = vmatpush1.msra.mxu0 0.0
        %6595 = vmatprep.subr.mxu0 0.0
        %6596 = vmatpush1.msra.mxu0 0.0
        %6597 = vmatprep.subr.mxu0 0.0
        %6598 = vmatpush1.msra.mxu0 0.0
        %6599 = vmatprep.subr.mxu0 0.0
        %6600 = vmatpush1.msra.mxu0 0.0
        %6601 = vmatprep.subr.mxu0 0.0
        %6602 = vmatpush1.msra.mxu0 0.0
        %6603 = vmatprep.subr.mxu0 0.0
        %6604 = vmatpush1.msra.mxu0 0.0
        %6605 = vmatprep.subr.mxu0 0.0
        %6606 = vmatpush1.msra.mxu0 0.0
        %6607 = vmatprep.subr.mxu0 0.0
        %6608 = vmatpush1.msra.mxu0 0.0
        %6609 = vmatprep.subr.mxu0 0.0
        %6610 = vmatpush1.msra.mxu0 0.0
        %6611 = vmatprep.subr.mxu0 0.0
        %6612 = vmatpush1.msra.mxu0 0.0
        %6613 = vmatprep.subr.mxu0 0.0
        %6614 = vmatpush1.msra.mxu0 0.0
        %6615 = vmatprep.subr.mxu0 0.0
        %6616 = vmatpush1.msra.mxu0 0.0
        %6617 = vmatprep.subr.mxu0 0.0
        %6618 = vmatpush1.msra.mxu0 0.0
        %6619 = vmatprep.subr.mxu0 0.0
        %6620 = vmatpush1.msra.mxu0 0.0
        %6621 = vmatprep.subr.mxu0 0.0
        %6622 = vmatpush1.msra.mxu0 0.0
        %6623 = vmatprep.subr.mxu0 0.0
        %6624 = vmatpush1.msra.mxu0 0.0
        %6625 = vmatprep.subr.mxu0 0.0
        %6626 = vmatpush1.msra.mxu0 0.0
        %6627 = vmatprep.subr.mxu0 0.0
        %6628 = vmatpush1.msra.mxu0 0.0
        %6629 = vmatprep.subr.mxu0 0.0
        %6630 = vmatpush1.msra.mxu0 0.0
        %6631 = vmatprep.subr.mxu0 0.0
        %6632 = vmatpush1.msra.mxu0 0.0
        %6633 = vmatprep.subr.mxu0 0.0
        %6634 = vmatpush1.msra.mxu0 0.0
        %6635 = vmatprep.mubr.f32.mxu0 0.0
        %6636 = vmatmul.mubr.f32.gmra.mrb[0].mxu0 %v6569
        %v6637 = vpop.f32.mrb[0].mxu0
        %v6638 = vadd.f32 %v6567, %v6637
        %v6639 = vpop.f32.mrb[0].mxu0
        %6640 = vdwg.mxu0
        %v6641 = vmax.f32 %v6638, 0.0
        %s6642 = scalar_lea.vmem %s16, 128
        %v6643 = vld [vmem:[%s6642] sm:$0xff]
        %v6644 = vld [vmem:[%s6642 + $0x8] sm:$0xff]
        %v6645 = vld [vmem:[%s6642 + $0x10] sm:$0xff]
        %v6646 = vld [vmem:[%s6642 + $0x18] sm:$0xff]
        %v6647 = vld [vmem:[%s6642 + $0x20] sm:$0xff]
        %v6648 = vld [vmem:[%s6642 + $0x28] sm:$0xff]
        %v6649 = vld [vmem:[%s6642 + $0x30] sm:$0xff]
        %v6650 = vld [vmem:[%s6642 + $0x38] sm:$0xff]
        %v6651 = vld [vmem:[%s6642 + $0x40] sm:$0xff]
        %v6652 = vld [vmem:[%s6642 + $0x48] sm:$0xff]
        %v6653 = vld [vmem:[%s6642 + $0x50] sm:$0xff]
        %v6654 = vld [vmem:[%s6642 + $0x58] sm:$0xff]
        %v6655 = vld [vmem:[%s6642 + $0x60] sm:$0xff]
        %v6656 = vld [vmem:[%s6642 + $0x68] sm:$0xff]
        %v6657 = vld [vmem:[%s6642 + $0x70] sm:$0xff]
        %v6658 = vld [vmem:[%s6642 + $0x78] sm:$0xff]
        %v6659 = vld [vmem:[%s13 + $0xf] sm:$0x1]
        %v6660 = vlaneseq
        %v6661 = vshrl.u32 %v6660, 7
        %v6662 = vsub.s32 0, %v6661
        %v6663 = vrot.slane %v6659, %v6662
        %6664 = vmatprep.subr.mxu0 0.0
        %6665 = vmatpush1.msra.mxu0 %v6643
        %6666 = vmatprep.subr.mxu0 0.0
        %6667 = vmatpush1.msra.mxu0 %v6644
        %6668 = vmatprep.subr.mxu0 0.0
        %6669 = vmatpush1.msra.mxu0 %v6645
        %6670 = vmatprep.subr.mxu0 0.0
        %6671 = vmatpush1.msra.mxu0 %v6646
        %6672 = vmatprep.subr.mxu0 0.0
        %6673 = vmatpush1.msra.mxu0 %v6647
        %6674 = vmatprep.subr.mxu0 0.0
        %6675 = vmatpush1.msra.mxu0 %v6648
        %6676 = vmatprep.subr.mxu0 0.0
        %6677 = vmatpush1.msra.mxu0 %v6649
        %6678 = vmatprep.subr.mxu0 0.0
        %6679 = vmatpush1.msra.mxu0 %v6650
        %6680 = vmatprep.subr.mxu0 0.0
        %6681 = vmatpush1.msra.mxu0 %v6651
        %6682 = vmatprep.subr.mxu0 0.0
        %6683 = vmatpush1.msra.mxu0 %v6652
        %6684 = vmatprep.subr.mxu0 0.0
        %6685 = vmatpush1.msra.mxu0 %v6653
        %6686 = vmatprep.subr.mxu0 0.0
        %6687 = vmatpush1.msra.mxu0 %v6654
        %6688 = vmatprep.subr.mxu0 0.0
        %6689 = vmatpush1.msra.mxu0 %v6655
        %6690 = vmatprep.subr.mxu0 0.0
        %6691 = vmatpush1.msra.mxu0 %v6656
        %6692 = vmatprep.subr.mxu0 0.0
        %6693 = vmatpush1.msra.mxu0 %v6657
        %6694 = vmatprep.subr.mxu0 0.0
        %6695 = vmatpush1.msra.mxu0 %v6658
        %6696 = vmatprep.subr.mxu0 0.0
        %6697 = vmatpush1.msra.mxu0 0.0
        %6698 = vmatprep.subr.mxu0 0.0
        %6699 = vmatpush1.msra.mxu0 0.0
        %6700 = vmatprep.subr.mxu0 0.0
        %6701 = vmatpush1.msra.mxu0 0.0
        %6702 = vmatprep.subr.mxu0 0.0
        %6703 = vmatpush1.msra.mxu0 0.0
        %6704 = vmatprep.subr.mxu0 0.0
        %6705 = vmatpush1.msra.mxu0 0.0
        %6706 = vmatprep.subr.mxu0 0.0
        %6707 = vmatpush1.msra.mxu0 0.0
        %6708 = vmatprep.subr.mxu0 0.0
        %6709 = vmatpush1.msra.mxu0 0.0
        %6710 = vmatprep.subr.mxu0 0.0
        %6711 = vmatpush1.msra.mxu0 0.0
        %6712 = vmatprep.subr.mxu0 0.0
        %6713 = vmatpush1.msra.mxu0 0.0
        %6714 = vmatprep.subr.mxu0 0.0
        %6715 = vmatpush1.msra.mxu0 0.0
        %6716 = vmatprep.subr.mxu0 0.0
        %6717 = vmatpush1.msra.mxu0 0.0
        %6718 = vmatprep.subr.mxu0 0.0
        %6719 = vmatpush1.msra.mxu0 0.0
        %6720 = vmatprep.subr.mxu0 0.0
        %6721 = vmatpush1.msra.mxu0 0.0
        %6722 = vmatprep.subr.mxu0 0.0
        %6723 = vmatpush1.msra.mxu0 0.0
        %6724 = vmatprep.subr.mxu0 0.0
        %6725 = vmatpush1.msra.mxu0 0.0
        %6726 = vmatprep.subr.mxu0 0.0
        %6727 = vmatpush1.msra.mxu0 0.0
        %6728 = vmatprep.mubr.f32.mxu0 0.0
        %6729 = vmatmul.mubr.f32.gmra.mrb[0].mxu0 %v6641
        %v6730 = vpop.f32.mrb[0].mxu0
        %v6731 = vadd.f32 %v6663, %v6730
        %v6732 = vpop.f32.mrb[0].mxu0
        %6733 = vdwg.mxu0
        %v6734 = vadd.f32 %v6731, %v6557
        %v6735 = vld [vmem:[%s13 + $0x10] sm:$0x1]
        %v6736 = vld [vmem:[%s13 + $0x11] sm:$0x1]
        %v6737 = vsel %vm620, %v6734, 0.0
        %6738 = vadd.xlane.f32.xlu0 %v6737
        %v6739 = vpop.xlane.xlu0 %6738
        %v6740 = vmul.f32 %v6739, %v1463
        %v6741 = vsub.f32 %v6734, %v6740
        %v6742 = vmul.f32 %v6741, %v6741
        %v6743 = vsel %vm620, %v6742, 0.0
        %6744 = vadd.xlane.f32.xlu0 %v6743
        %v6745 = vpop.xlane.xlu0 %6744
        %v6746 = vmul.f32 %v6745, %v1463
        %v6747 = vadd.f32 %v6746, 1e-05
        %v6748 = vrsqrt.pop %v6747
        %v6749 = vmul.f32 %v6741, %v6748
        %v6750 = vlaneseq
        %v6751 = vshrl.u32 %v6750, 7
        %v6752 = vsub.s32 0, %v6751
        %v6753 = vrot.slane %v6735, %v6752
        %v6754 = vmul.f32 %v6749, %v6753
        %v6755 = vlaneseq
        %v6756 = vshrl.u32 %v6755, 7
        %v6757 = vsub.s32 0, %v6756
        %v6758 = vrot.slane %v6736, %v6757
        %v6759 = vadd.f32 %v6754, %v6758
        %v6760 = vld [vmem:[%s17] sm:$0xff]
        %v6761 = vld [vmem:[%s17 + $0x8] sm:$0xff]
        %v6762 = vld [vmem:[%s17 + $0x10] sm:$0xff]
        %v6763 = vld [vmem:[%s17 + $0x18] sm:$0xff]
        %v6764 = vld [vmem:[%s18] sm:$0x1]
        %v6766 = vlaneseq
        %v6767 = vshrl.u32 %v6766, 7
        %v6768 = vsub.s32 0, %v6767
        %v6769 = vrot.slane %v6764, %v6768
        %v6772 = vsel %vm620, %v6759, 0
        %6774 = vmatprep.subr.mxu0 0.0
        %6775 = vmatpush1.msra.mxu0 %v6760
        %6776 = vmatprep.subr.mxu0 0.0
        %6777 = vmatpush1.msra.mxu0 %v6761
        %6778 = vmatprep.subr.mxu0 0.0
        %6779 = vmatpush1.msra.mxu0 %v6762
        %6780 = vmatprep.subr.mxu0 0.0
        %6781 = vmatpush1.msra.mxu0 %v6763
        %6782 = vmatprep.subr.mxu0 0.0
        %6783 = vmatpush1.msra.mxu0 0.0
        %6784 = vmatprep.subr.mxu0 0.0
        %6785 = vmatpush1.msra.mxu0 0.0
        %6786 = vmatprep.subr.mxu0 0.0
        %6787 = vmatpush1.msra.mxu0 0.0
        %6788 = vmatprep.subr.mxu0 0.0
        %6789 = vmatpush1.msra.mxu0 0.0
        %6790 = vmatprep.subr.mxu0 0.0
        %6791 = vmatpush1.msra.mxu0 0.0
        %6792 = vmatprep.subr.mxu0 0.0
        %6793 = vmatpush1.msra.mxu0 0.0
        %6794 = vmatprep.subr.mxu0 0.0
        %6795 = vmatpush1.msra.mxu0 0.0
        %6796 = vmatprep.subr.mxu0 0.0
        %6797 = vmatpush1.msra.mxu0 0.0
        %6798 = vmatprep.subr.mxu0 0.0
        %6799 = vmatpush1.msra.mxu0 0.0
        %6800 = vmatprep.subr.mxu0 0.0
        %6801 = vmatpush1.msra.mxu0 0.0
        %6802 = vmatprep.subr.mxu0 0.0
        %6803 = vmatpush1.msra.mxu0 0.0
        %6804 = vmatprep.subr.mxu0 0.0
        %6805 = vmatpush1.msra.mxu0 0.0
        %6806 = vmatprep.subr.mxu0 0.0
        %6807 = vmatpush1.msra.mxu0 0.0
        %6808 = vmatprep.subr.mxu0 0.0
        %6809 = vmatpush1.msra.mxu0 0.0
        %6810 = vmatprep.subr.mxu0 0.0
        %6811 = vmatpush1.msra.mxu0 0.0
        %6812 = vmatprep.subr.mxu0 0.0
        %6813 = vmatpush1.msra.mxu0 0.0
        %6814 = vmatprep.subr.mxu0 0.0
        %6815 = vmatpush1.msra.mxu0 0.0
        %6816 = vmatprep.subr.mxu0 0.0
        %6817 = vmatpush1.msra.mxu0 0.0
        %6818 = vmatprep.subr.mxu0 0.0
        %6819 = vmatpush1.msra.mxu0 0.0
        %6820 = vmatprep.subr.mxu0 0.0
        %6821 = vmatpush1.msra.mxu0 0.0
        %6822 = vmatprep.subr.mxu0 0.0
        %6823 = vmatpush1.msra.mxu0 0.0
        %6824 = vmatprep.subr.mxu0 0.0
        %6825 = vmatpush1.msra.mxu0 0.0
        %6826 = vmatprep.subr.mxu0 0.0
        %6827 = vmatpush1.msra.mxu0 0.0
        %6828 = vmatprep.subr.mxu0 0.0
        %6829 = vmatpush1.msra.mxu0 0.0
        %6830 = vmatprep.subr.mxu0 0.0
        %6831 = vmatpush1.msra.mxu0 0.0
        %6832 = vmatprep.subr.mxu0 0.0
        %6833 = vmatpush1.msra.mxu0 0.0
        %6834 = vmatprep.subr.mxu0 0.0
        %6835 = vmatpush1.msra.mxu0 0.0
        %6836 = vmatprep.subr.mxu0 0.0
        %6837 = vmatpush1.msra.mxu0 0.0
        %6838 = vmatprep.mubr.f32.mxu0 0.0
        %6839 = vmatmul.mubr.f32.gmra.mrb[0].mxu0 %v6772
        %v6840 = vpop.f32.mrb[0].mxu0
        %v6841 = vadd.f32 %v6769, %v6840
        %v6842 = vpop.f32.mrb[0].mxu0
        %6843 = vdwg.mxu0
        %6844 = vst [vmem:[%s606] sm:$0xff] %v6841
        %s6845 = sand.u32 %s450, 1
        %s6846 = scalar_lea.sflag [#allocation3], %s6845
        %s6847 = sand.u32 %s450, 1
        %s6848 = smul.addr %s6847, 8
        %s6849 = scalar_lea.vmem [#allocation2], %s6848
        // Predicated region
        $region97: #{transformer_apply.1} parent=95 // pred_check
          %p6850 = pneg %p460
        $region98: #{transformer_apply.1} parent=95 // pred_check_branch
          %6852 = sbr.rel (%p6850) target = $region100
        $region99: #{transformer_apply.1} parent=95 // pred_region
          %s6854 = ssub.s32 128, 128
          %6855 = vsyncadd %s6846, %s6854
          %s6856 = smul.addr %s33, 128
          %s6857 = scalar_lea.hbm %s19, %s6856
          %s6859 = sshll.u32 %s6849, 4
          %s6860 = int_to_ptr.vmem [resolvable:$true] %s6859
          %6862 = dma.vmem_to_hbm [thread:$0]  %s6860, 128, %s6857, %s6846
        $region100: #{transformer_apply.1} parent=95 // pred_fallthru
          _
      $region96: #{transformer_apply.1} parent=5 // pred_fallthru
        _
      %p6863 = scmp.le.s32.totalorder 2, %s28
      // Predicated region
      $region101: #{transformer_apply.1} parent=5 // pred_check
        %p6864 = pneg %p6863
      $region102: #{transformer_apply.1} parent=5 // pred_check_branch
        %6866 = sbr.rel (%p6864) target = $region104
      $region103: #{transformer_apply.1} parent=5 // pred_region
        %s6867 = ssub.s32 %s28, 2
        // Predicated region
        $region105: #{transformer_apply.1} parent=103 // pred_check
          %p6868 = pneg %p466
        $region106: #{transformer_apply.1} parent=103 // pred_check_branch
          %6870 = sbr.rel (%p6868) target = $region108
        $region107: #{transformer_apply.1} parent=103 // pred_region
          %s6871 = sand.u32 %s451, 1
          %s6872 = scalar_lea.sflag [#allocation3], %s6871
          %s6873 = sand.u32 %s451, 1
          %s6874 = smul.addr %s6873, 8
          %s6875 = scalar_lea.vmem [#allocation2], %s6874
          %6876 = dma.done %s6872, 128
        $region108: #{transformer_apply.1} parent=103 // pred_fallthru
          _
      $region104: #{transformer_apply.1} parent=5 // pred_fallthru
        _
    $region6: #{transformer_apply.1} parent=1 // loop_footer
      %s32 = sadd.s32 1, %s28
    $region7: #{transformer_apply.1} parent=1 // loop_footer_branch
      %27 = sbr.rel target = $region3
    $region8: #{transformer_apply.1} parent=1 // loop_exit
      _
    %6877 = vsyncpa [#allocation3], 1
    %s6878 = scalar_lea.sflag [#allocation3], 1
    %6879 = vsyncpa %s6878, 1

</llo_original>
